<compile_context>
chip_gen: v7x
topology: tpu7x:2x2x1
jax: 0.10.0
libtpu: 0.0.40
codegen_flags: <defaults>
</compile_context>

<pallas_src>
import jax
import jax.numpy as jnp
import numpy as np
from jax.experimental import pallas as pl
from jax.experimental.pallas import tpu as pltpu


def _round_up(x, m):
    return (x + m - 1) // m * m


def make_kernel(H, W, Hs, Ws, C, PB, TN):
    Hf, Wf = float(H), float(W)
    Hs_i, Ws_i, C_i = int(Hs), int(Ws), int(C)
    Hs_f, Ws_f = float(Hs), float(Ws)

    def kernel(pts_ref, mt_ref, img_ref, out_ref):
        # pts_ref: (3, TN)         f32   rows = (x, y, z), points on lanes
        # mt_ref : (PB, 3, 4)      f32   K @ inverse(pose)[0:3] per plane
        # img_ref: (PB, C*Hs, Ws)  bf16  channel-major merged image rows
        # out_ref: (PB, C+2, TN)   f32   rows = [feat_0..feat_{C-1}, px, py]
        X = pts_ref[0:1, :]                              # (1, TN)
        Y = pts_ref[1:2, :]
        Z = pts_ref[2:3, :]

        # Plane-independent index grids, built once per point tile.
        col = jax.lax.broadcasted_iota(jnp.int32, (Ws_i, TN), 0)     # (Ws, TN)
        row = jax.lax.broadcasted_iota(jnp.int32, (Hs_i, TN), 0)     # (Hs, TN)

        for pb in range(PB):                             # static unrolled plane loop
            m = mt_ref[pb]                               # (3, 4) f32
            # Projection ps = M @ [x y z 1]^T as broadcast FMAs on the VPU (f32).
            ps = m[:, 0:1] * X + m[:, 1:2] * Y + m[:, 2:3] * Z + m[:, 3:4]  # (3, TN)
            inv_z = 1.0 / ps[2:3, :]
            px = jnp.clip(ps[0:1, :] * inv_z * (1.0 / Wf), 0.0, 1.0) * 2.0 - 1.0
            py = jnp.clip(ps[1:2, :] * inv_z * (1.0 / Hf), 0.0, 1.0) * 2.0 - 1.0

            # grid_sample(mode='bilinear', padding_mode='zeros', align_corners=False)
            ix = ((px + 1.0) * Ws_f - 1.0) * 0.5
            iy = ((py + 1.0) * Hs_f - 1.0) * 0.5
            x0f = jnp.floor(ix)
            y0f = jnp.floor(iy)
            x0 = x0f.astype(jnp.int32)
            y0 = y0f.astype(jnp.int32)
            wx1 = ix - x0f
            wx0 = 1.0 - wx1
            wy1 = iy - y0f
            wy0 = 1.0 - wy1

            # Separable one-hot weights.  OOB corners (x0 = -1, x1 = Ws, ...)
            # never match the iota, so padding_mode='zeros' comes for free.
            # wcol feeds the MXU (bf16); wrow stays f32 (applied after the
            # f32-accumulated matmul).
            wcol = (jnp.where(col == x0, wx0, 0.0)
                    + jnp.where(col == x0 + 1, wx1, 0.0)).astype(jnp.bfloat16)
            wrow = (jnp.where(row == y0, wy0, 0.0)
                    + jnp.where(row == y0 + 1, wy1, 0.0))             # (Hs, TN) f32

            # One merged (C*Hs, Ws) @ (Ws, TN) MXU matmul instead of C small ones.
            t = jnp.dot(img_ref[pb], wcol,
                        preferred_element_type=jnp.float32)           # (C*Hs, TN)

            for c in range(C_i):
                feat = jnp.sum(wrow * t[c * Hs_i:(c + 1) * Hs_i, :],
                               axis=0, keepdims=True)                 # (1, TN)
                out_ref[pb, c:c + 1, :] = feat                        # direct row store
            out_ref[pb, C_i:C_i + 1, :] = px
            out_ref[pb, C_i + 1:C_i + 2, :] = py

    return kernel


def llff_image_planes_forward(points, Mproj, image_plane, H, W):
    """points: (1, N, 3) or (N, 3); Mproj: (P, 3, 4) = K @ inverse(pose)[0:3];
    image_plane: NCHW (P, C, Hs, Ws).  Returns (N, P*C + 2*P) like the module."""
    if points.ndim == 3 and points.shape[0] == 1:
        points = points[0]
    N = points.shape[0]
    P, C, Hs, Ws = image_plane.shape

    # Fat point tiles: this kernel is per-grid-step-overhead bound.
    n128 = _round_up(N, 128)
    TN = min(1024, n128)
    N_pad = _round_up(N, TN)
    NT = N_pad // TN

    # Plane blocking: keep all planes VMEM-resident (fold P into the kernel)
    # when they fit comfortably even on v7x (64 MiB/TC, blocks double-buffered
    # and duplicated per core under megacore); otherwise one plane per step.
    plane_blk_bytes = P * _round_up(C * Hs, 16) * _round_up(Ws, 128) * 2  # bf16
    PB = P if plane_blk_bytes <= (12 << 20) else 1
    NPB = P // PB

    pts_t = jnp.transpose(points.astype(jnp.float32), (1, 0))        # (3, N)
    if N_pad > N:
        # Replicate the last valid point (avoids 1/z blowups in padded lanes).
        pts_t = jnp.pad(pts_t, ((0, 0), (0, N_pad - N)), mode='edge')

    img_bf16 = image_plane.astype(jnp.bfloat16).reshape(P, C * Hs, Ws)
    mt = Mproj.astype(jnp.float32)                                    # (P, 3, 4)

    # VMEM budget: double-buffered blocks + in-kernel working set + slack,
    # driven by the computed value (clamped to [16 MiB, 56 MiB] for v7x).
    img_blk = PB * _round_up(C * Hs, 16) * _round_up(Ws, 128) * 2
    pts_blk = 8 * TN * 4
    m_blk = PB * 8 * 128 * 4
    out_blk = PB * 8 * TN * 4
    work = (_round_up(Ws, 8) + _round_up(Hs, 8) + _round_up(C * Hs, 8) + 32) * TN * 4 * 2
    vmem_bytes = int(min(max(2 * (img_blk + pts_blk + m_blk + out_blk) + work
                             + (4 << 20), 16 << 20), 56 << 20))

    kernel = make_kernel(H, W, Hs, Ws, C, PB, TN)
    out = pl.pallas_call(
        kernel,
        out_shape=jax.ShapeDtypeStruct((P, C + 2, N_pad), jnp.float32),
        grid_spec=pltpu.PrefetchScalarGridSpec(
            num_scalar_prefetch=0,
            grid=(NPB, NT),                    # plane-block outer, point-tile inner
            in_specs=[
                pl.BlockSpec((3, TN), lambda pb, nt: (0, nt)),            # points
                pl.BlockSpec((PB, 3, 4), lambda pb, nt: (pb, 0, 0)),      # M per block
                pl.BlockSpec((PB, C * Hs, Ws),
                             lambda pb, nt: (pb, 0, 0)),   # planes, resident over nt
            ],
            out_specs=pl.BlockSpec((PB, C + 2, TN), lambda pb, nt: (pb, 0, nt)),
        ),
        compiler_params=pltpu.CompilerParams(
            dimension_semantics=("parallel", "parallel"),
            vmem_limit_bytes=vmem_bytes),
    )(pts_t, mt, img_bf16)

    # Single combined transpose to the module's plane-major output layout.
    tmp = jnp.transpose(out[:, :, :N], (2, 0, 1))                     # (N, P, C+2)
    feats_out = tmp[:, :, :C].reshape(N, P * C)
    pix_out = tmp[:, :, C:].reshape(N, 2 * P)
    return jnp.concatenate([feats_out, pix_out], axis=1)


def reference_forward(points, Mproj, image_plane, H, W):
    """Pure-JAX f32 reference (gather-based grid_sample) for validation."""
    if points.ndim == 3 and points.shape[0] == 1:
        points = points[0]
    N = points.shape[0]
    P, C, Hs, Ws = image_plane.shape
    pts = jnp.concatenate([points, jnp.ones((N, 1), points.dtype)], axis=1)
    ps = jnp.einsum('pij,nj->pni', Mproj, pts,
                    precision=jax.lax.Precision.HIGHEST)              # (P, N, 3)
    x = ps[..., 0] / ps[..., 2]
    y = ps[..., 1] / ps[..., 2]
    x = jnp.clip(x / W, 0.0, 1.0) * 2.0 - 1.0
    y = jnp.clip(y / H, 0.0, 1.0) * 2.0 - 1.0
    ix = ((x + 1.0) * Ws - 1.0) * 0.5
    iy = ((y + 1.0) * Hs - 1.0) * 0.5
    x0 = jnp.floor(ix)
    y0 = jnp.floor(iy)
    wx1 = ix - x0
    wx0 = 1.0 - wx1
    wy1 = iy - y0
    wy0 = 1.0 - wy1

    img_flat = jnp.transpose(image_plane, (0, 2, 3, 1)).reshape(P, Hs * Ws, C)

    def gather(xi, yi):
        xi_i = xi.astype(jnp.int32)
        yi_i = yi.astype(jnp.int32)
        valid = (xi_i >= 0) & (xi_i < Ws) & (yi_i >= 0) & (yi_i < Hs)
        idx = jnp.clip(yi_i, 0, Hs - 1) * Ws + jnp.clip(xi_i, 0, Ws - 1)
        idx3 = jnp.broadcast_to(idx[..., None], (P, N, C))
        vals = jnp.take_along_axis(img_flat, idx3, axis=1)
        return vals * valid[..., None].astype(jnp.float32)

    feat = (gather(x0, y0) * (wx0 * wy0)[..., None]
            + gather(x0 + 1, y0) * (wx1 * wy0)[..., None]
            + gather(x0, y0 + 1) * (wx0 * wy1)[..., None]
            + gather(x0 + 1, y0 + 1) * (wx1 * wy1)[..., None])        # (P, N, C)

    feats_out = jnp.transpose(feat, (1, 0, 2)).reshape(N, P * C)
    pix = jnp.stack([x, y], axis=-1)                                  # (P, N, 2)
    pix_out = jnp.transpose(pix, (1, 0, 2)).reshape(N, 2 * P)
    return jnp.concatenate([feats_out, pix_out], axis=1)


if __name__ == "__main__":
    key = jax.random.PRNGKey(0)
    P, C = 4, 3            # number of image planes, channels
    Hs = Ws = 16           # image plane spatial size
    H, W, focal = 16.0, 16.0, 20.0
    N = 1300               # query points: exercises TN=1024 tiling + edge padding

    k1, k2, k3 = jax.random.split(key, 3)

    # Synthetic "images" (count, Hs, Ws, C) in [0, 1]; module stores them NCHW.
    images = jax.random.uniform(k1, (P, Hs, Ws, C), dtype=jnp.float32)
    image_plane = jnp.transpose(images, (0, 3, 1, 2))                 # (P, C, Hs, Ws)

    # Synthetic LLFF poses (count, 3, 4): identity rotation + small translations.
    t = (jnp.arange(P, dtype=jnp.float32)[:, None] * 0.1
         * jnp.array([[1.0, -1.0, 0.5]], dtype=jnp.float32))          # (P, 3)
    eye = jnp.broadcast_to(jnp.eye(3, dtype=jnp.float32), (P, 3, 3))
    poses = jnp.concatenate([eye, t[:, :, None]], axis=2)             # (P, 3, 4)

    # Replicate the module's __init__ math (one-time host-side parameter setup).
    bottom = jnp.broadcast_to(
        jnp.array([[0.0, 0.0, 0.0, 1.0]], dtype=jnp.float32), (P, 1, 4))
    M4 = jnp.concatenate([poses, bottom], axis=1)                     # (P, 4, 4)
    flip = jnp.diag(jnp.array([-1.0, 1.0, 1.0, 1.0], dtype=jnp.float32))
    M4 = M4 @ flip
    Minv = jnp.linalg.inv(M4)[:, :3, :]                               # (P, 3, 4)
    K = jnp.array([[focal, 0.0, 0.5 * W],
                   [0.0, focal, 0.5 * H],
                   [0.0, 0.0, 1.0]], dtype=jnp.float32)
    Mproj = jnp.broadcast_to(K, (P, 3, 3)) @ Minv                     # (P, 3, 4)

    # Query points (in front of the cameras so z > 0), shaped (1, N, 3).
    xy = jax.random.uniform(k2, (N, 2), minval=-0.4, maxval=0.4, dtype=jnp.float32)
    z = jax.random.uniform(k3, (N, 1), minval=1.0, maxval=2.0, dtype=jnp.float32)
    points = jnp.concatenate([xy, z], axis=1)[None]                   # (1, N, 3)

    out = jax.block_until_ready(
        llff_image_planes_forward(points, Mproj, image_plane, H, W))
    ref = jax.block_until_ready(
        reference_forward(points, Mproj, image_plane, H, W))

    assert out.shape == (N, P * C + 2 * P), out.shape
    # Feature columns: sampled with a bf16 image / bf16 column weights
    # (f32 MXU accumulation) -> max abs error ~4e-3; validate at 1e-2.
    np.testing.assert_allclose(np.asarray(out[:, :P * C]),
                               np.asarray(ref[:, :P * C]),
                               atol=1e-2, rtol=1e-2)
    # Pixel columns: computed fully in f32 inside the kernel.
    np.testing.assert_allclose(np.asarray(out[:, P * C:]),
                               np.asarray(ref[:, P * C:]),
                               atol=2e-4, rtol=2e-4)
    print("KERNEL_OK")
</pallas_src>

<mosaic_0001>
module attributes {stable_mosaic.version = 11 : i64} {
  func.func @kernel(%arg0: i32, %arg1: i32, %arg2: memref<3x1024xf32, #tpu.memory_space<vmem>>, %arg3: memref<4x3x4xf32, #tpu.memory_space<vmem>>, %arg4: memref<4x48x16xbf16, #tpu.memory_space<vmem>>, %arg5: memref<4x5x1024xf32, #tpu.memory_space<vmem>>) attributes {dimension_semantics = [#tpu.dimension_semantics<parallel>, #tpu.dimension_semantics<parallel>], iteration_bounds = array<i64: 1, 2>, scalar_prefetch = 0 : i64, scratch_operands = 0 : i64, tpu.core_type = #tpu.core_type<tc>, window_params = [{transform_indices = @transform_0, window_bounds = array<i64: 3, 1024>}, {transform_indices = @transform_1, window_bounds = array<i64: 4, 3, 4>}, {transform_indices = @transform_2, window_bounds = array<i64: 4, 48, 16>}, {transform_indices = @transform_3, window_bounds = array<i64: 4, 5, 1024>}]} {
    %c0 = arith.constant 0 : index
    %c0_0 = arith.constant 0 : index
    %0 = vector.load %arg2[%c0, %c0_0] : memref<3x1024xf32, #tpu.memory_space<vmem>>, vector<1x1024xf32>
    %c1 = arith.constant 1 : index
    %c0_1 = arith.constant 0 : index
    %1 = vector.load %arg2[%c1, %c0_1] : memref<3x1024xf32, #tpu.memory_space<vmem>>, vector<1x1024xf32>
    %c2 = arith.constant 2 : index
    %c0_2 = arith.constant 0 : index
    %2 = vector.load %arg2[%c2, %c0_2] : memref<3x1024xf32, #tpu.memory_space<vmem>>, vector<1x1024xf32>
    %3 = tpu.iota {dimensions = array<i32: 0>} : vector<16x1024xi32>
    %4 = tpu.iota {dimensions = array<i32: 0>} : vector<16x1024xi32>
    %c0_3 = arith.constant 0 : index
    %c0_4 = arith.constant 0 : index
    %c0_5 = arith.constant 0 : index
    %5 = vector.load %arg3[%c0_3, %c0_4, %c0_5] : memref<4x3x4xf32, #tpu.memory_space<vmem>>, vector<1x3x4xf32>
    %6 = vector.shape_cast %5 : vector<1x3x4xf32> to vector<3x4xf32>
    %7 = vector.extract_strided_slice %6 {offsets = [0, 0], sizes = [3, 1], strides = [1, 1]} : vector<3x4xf32> to vector<3x1xf32>
    %8 = vector.broadcast %7 : vector<3x1xf32> to vector<3x1024xf32>
    %9 = vector.broadcast %0 : vector<1x1024xf32> to vector<3x1024xf32>
    %10 = arith.mulf %8, %9 : vector<3x1024xf32>
    %11 = vector.extract_strided_slice %6 {offsets = [0, 1], sizes = [3, 1], strides = [1, 1]} : vector<3x4xf32> to vector<3x1xf32>
    %12 = vector.broadcast %11 : vector<3x1xf32> to vector<3x1024xf32>
    %13 = vector.broadcast %1 : vector<1x1024xf32> to vector<3x1024xf32>
    %14 = arith.mulf %12, %13 : vector<3x1024xf32>
    %15 = arith.addf %10, %14 : vector<3x1024xf32>
    %16 = vector.extract_strided_slice %6 {offsets = [0, 2], sizes = [3, 1], strides = [1, 1]} : vector<3x4xf32> to vector<3x1xf32>
    %17 = vector.broadcast %16 : vector<3x1xf32> to vector<3x1024xf32>
    %18 = vector.broadcast %2 : vector<1x1024xf32> to vector<3x1024xf32>
    %19 = arith.mulf %17, %18 : vector<3x1024xf32>
    %20 = arith.addf %15, %19 : vector<3x1024xf32>
    %21 = vector.extract_strided_slice %6 {offsets = [0, 3], sizes = [3, 1], strides = [1, 1]} : vector<3x4xf32> to vector<3x1xf32>
    %22 = vector.broadcast %21 : vector<3x1xf32> to vector<3x1024xf32>
    %23 = arith.addf %20, %22 : vector<3x1024xf32>
    %24 = vector.extract_strided_slice %23 {offsets = [2, 0], sizes = [1, 1024], strides = [1, 1]} : vector<3x1024xf32> to vector<1x1024xf32>
    %cst = arith.constant 1.000000e+00 : f32
    %25 = vector.broadcast %cst : f32 to vector<1x1024xf32>
    %26 = arith.divf %25, %24 : vector<1x1024xf32>
    %27 = vector.extract_strided_slice %23 {offsets = [0, 0], sizes = [1, 1024], strides = [1, 1]} : vector<3x1024xf32> to vector<1x1024xf32>
    %28 = arith.mulf %27, %26 : vector<1x1024xf32>
    %cst_6 = arith.constant 6.250000e-02 : f32
    %29 = vector.broadcast %cst_6 : f32 to vector<1x1024xf32>
    %30 = arith.mulf %28, %29 : vector<1x1024xf32>
    %cst_7 = arith.constant 0.000000e+00 : f32
    %cst_8 = arith.constant 1.000000e+00 : f32
    %31 = vector.broadcast %cst_7 : f32 to vector<1x1024xf32>
    %32 = arith.maximumf %31, %30 : vector<1x1024xf32>
    %33 = vector.broadcast %cst_8 : f32 to vector<1x1024xf32>
    %34 = arith.minimumf %33, %32 : vector<1x1024xf32>
    %cst_9 = arith.constant 2.000000e+00 : f32
    %35 = vector.broadcast %cst_9 : f32 to vector<1x1024xf32>
    %36 = arith.mulf %34, %35 : vector<1x1024xf32>
    %cst_10 = arith.constant 1.000000e+00 : f32
    %37 = vector.broadcast %cst_10 : f32 to vector<1x1024xf32>
    %38 = arith.subf %36, %37 : vector<1x1024xf32>
    %39 = vector.extract_strided_slice %23 {offsets = [1, 0], sizes = [1, 1024], strides = [1, 1]} : vector<3x1024xf32> to vector<1x1024xf32>
    %40 = arith.mulf %39, %26 : vector<1x1024xf32>
    %cst_11 = arith.constant 6.250000e-02 : f32
    %41 = vector.broadcast %cst_11 : f32 to vector<1x1024xf32>
    %42 = arith.mulf %40, %41 : vector<1x1024xf32>
    %cst_12 = arith.constant 0.000000e+00 : f32
    %cst_13 = arith.constant 1.000000e+00 : f32
    %43 = vector.broadcast %cst_12 : f32 to vector<1x1024xf32>
    %44 = arith.maximumf %43, %42 : vector<1x1024xf32>
    %45 = vector.broadcast %cst_13 : f32 to vector<1x1024xf32>
    %46 = arith.minimumf %45, %44 : vector<1x1024xf32>
    %cst_14 = arith.constant 2.000000e+00 : f32
    %47 = vector.broadcast %cst_14 : f32 to vector<1x1024xf32>
    %48 = arith.mulf %46, %47 : vector<1x1024xf32>
    %cst_15 = arith.constant 1.000000e+00 : f32
    %49 = vector.broadcast %cst_15 : f32 to vector<1x1024xf32>
    %50 = arith.subf %48, %49 : vector<1x1024xf32>
    %cst_16 = arith.constant 1.000000e+00 : f32
    %51 = vector.broadcast %cst_16 : f32 to vector<1x1024xf32>
    %52 = arith.addf %38, %51 : vector<1x1024xf32>
    %cst_17 = arith.constant 1.600000e+01 : f32
    %53 = vector.broadcast %cst_17 : f32 to vector<1x1024xf32>
    %54 = arith.mulf %52, %53 : vector<1x1024xf32>
    %cst_18 = arith.constant 1.000000e+00 : f32
    %55 = vector.broadcast %cst_18 : f32 to vector<1x1024xf32>
    %56 = arith.subf %54, %55 : vector<1x1024xf32>
    %cst_19 = arith.constant 5.000000e-01 : f32
    %57 = vector.broadcast %cst_19 : f32 to vector<1x1024xf32>
    %58 = arith.mulf %56, %57 : vector<1x1024xf32>
    %cst_20 = arith.constant 1.000000e+00 : f32
    %59 = vector.broadcast %cst_20 : f32 to vector<1x1024xf32>
    %60 = arith.addf %50, %59 : vector<1x1024xf32>
    %cst_21 = arith.constant 1.600000e+01 : f32
    %61 = vector.broadcast %cst_21 : f32 to vector<1x1024xf32>
    %62 = arith.mulf %60, %61 : vector<1x1024xf32>
    %cst_22 = arith.constant 1.000000e+00 : f32
    %63 = vector.broadcast %cst_22 : f32 to vector<1x1024xf32>
    %64 = arith.subf %62, %63 : vector<1x1024xf32>
    %cst_23 = arith.constant 5.000000e-01 : f32
    %65 = vector.broadcast %cst_23 : f32 to vector<1x1024xf32>
    %66 = arith.mulf %64, %65 : vector<1x1024xf32>
    %67 = math.floor %58 : vector<1x1024xf32>
    %68 = math.floor %66 : vector<1x1024xf32>
    %69 = arith.fptosi %67 : vector<1x1024xf32> to vector<1x1024xi32>
    %70 = arith.fptosi %68 : vector<1x1024xf32> to vector<1x1024xi32>
    %71 = arith.subf %58, %67 : vector<1x1024xf32>
    %cst_24 = arith.constant 1.000000e+00 : f32
    %72 = vector.broadcast %cst_24 : f32 to vector<1x1024xf32>
    %73 = arith.subf %72, %71 : vector<1x1024xf32>
    %74 = arith.subf %66, %68 : vector<1x1024xf32>
    %cst_25 = arith.constant 1.000000e+00 : f32
    %75 = vector.broadcast %cst_25 : f32 to vector<1x1024xf32>
    %76 = arith.subf %75, %74 : vector<1x1024xf32>
    %77 = vector.broadcast %69 : vector<1x1024xi32> to vector<16x1024xi32>
    %78 = arith.cmpi eq, %3, %77 : vector<16x1024xi32>
    %cst_26 = arith.constant 0.000000e+00 : f32
    %79 = vector.shape_cast %73 : vector<1x1024xf32> to vector<1x1024xf32>
    %80 = vector.broadcast %79 : vector<1x1024xf32> to vector<16x1024xf32>
    %81 = vector.broadcast %cst_26 : f32 to vector<16x1024xf32>
    %82 = arith.select %78, %80, %81 : vector<16x1024xi1>, vector<16x1024xf32>
    %c1_i32 = arith.constant 1 : i32
    %83 = vector.broadcast %c1_i32 : i32 to vector<1x1024xi32>
    %84 = arith.addi %69, %83 : vector<1x1024xi32>
    %85 = vector.broadcast %84 : vector<1x1024xi32> to vector<16x1024xi32>
    %86 = arith.cmpi eq, %3, %85 : vector<16x1024xi32>
    %cst_27 = arith.constant 0.000000e+00 : f32
    %87 = vector.shape_cast %71 : vector<1x1024xf32> to vector<1x1024xf32>
    %88 = vector.broadcast %87 : vector<1x1024xf32> to vector<16x1024xf32>
    %89 = vector.broadcast %cst_27 : f32 to vector<16x1024xf32>
    %90 = arith.select %86, %88, %89 : vector<16x1024xi1>, vector<16x1024xf32>
    %91 = arith.addf %82, %90 : vector<16x1024xf32>
    %92 = arith.truncf %91 : vector<16x1024xf32> to vector<16x1024xbf16>
    %93 = vector.broadcast %70 : vector<1x1024xi32> to vector<16x1024xi32>
    %94 = arith.cmpi eq, %4, %93 : vector<16x1024xi32>
    %cst_28 = arith.constant 0.000000e+00 : f32
    %95 = vector.shape_cast %76 : vector<1x1024xf32> to vector<1x1024xf32>
    %96 = vector.broadcast %95 : vector<1x1024xf32> to vector<16x1024xf32>
    %97 = vector.broadcast %cst_28 : f32 to vector<16x1024xf32>
    %98 = arith.select %94, %96, %97 : vector<16x1024xi1>, vector<16x1024xf32>
    %c1_i32_29 = arith.constant 1 : i32
    %99 = vector.broadcast %c1_i32_29 : i32 to vector<1x1024xi32>
    %100 = arith.addi %70, %99 : vector<1x1024xi32>
    %101 = vector.broadcast %100 : vector<1x1024xi32> to vector<16x1024xi32>
    %102 = arith.cmpi eq, %4, %101 : vector<16x1024xi32>
    %cst_30 = arith.constant 0.000000e+00 : f32
    %103 = vector.shape_cast %74 : vector<1x1024xf32> to vector<1x1024xf32>
    %104 = vector.broadcast %103 : vector<1x1024xf32> to vector<16x1024xf32>
    %105 = vector.broadcast %cst_30 : f32 to vector<16x1024xf32>
    %106 = arith.select %102, %104, %105 : vector<16x1024xi1>, vector<16x1024xf32>
    %107 = arith.addf %98, %106 : vector<16x1024xf32>
    %c0_31 = arith.constant 0 : index
    %c0_32 = arith.constant 0 : index
    %c0_33 = arith.constant 0 : index
    %108 = vector.load %arg4[%c0_31, %c0_32, %c0_33] : memref<4x48x16xbf16, #tpu.memory_space<vmem>>, vector<1x48x16xbf16>
    %109 = vector.shape_cast %108 : vector<1x48x16xbf16> to vector<48x16xbf16>
    %cst_34 = arith.constant dense<0.000000e+00> : vector<48x1024xf32>
    %110 = tpu.matmul %109, %92, %cst_34 {dimension_numbers = #tpu.dot_dimension_numbers<[1], [0], [0], [1], [0, 0, 1, 1], [], []>} : vector<48x16xbf16>, vector<16x1024xbf16>, vector<48x1024xf32> -> vector<48x1024xf32>
    %111 = vector.extract_strided_slice %110 {offsets = [0, 0], sizes = [16, 1024], strides = [1, 1]} : vector<48x1024xf32> to vector<16x1024xf32>
    %112 = arith.mulf %107, %111 : vector<16x1024xf32>
    %cst_35 = arith.constant dense<0.000000e+00> : vector<1024xf32>
    %113 = vector.multi_reduction <add>, %112, %cst_35 [0] : vector<16x1024xf32> to vector<1024xf32>
    %114 = vector.shape_cast %113 : vector<1024xf32> to vector<1x1024xf32>
    %c0_36 = arith.constant 0 : index
    %c0_37 = arith.constant 0 : index
    %c0_38 = arith.constant 0 : index
    %115 = vector.load %arg5[%c0_36, %c0_37, %c0_38] : memref<4x5x1024xf32, #tpu.memory_space<vmem>>, vector<1x1x1024xf32>
    %116 = vector.shape_cast %115 : vector<1x1x1024xf32> to vector<1x1024xf32>
    %117 = vector.shape_cast %114 : vector<1x1024xf32> to vector<1x1x1024xf32>
    tpu.vector_store %arg5[%c0_36, %c0_37, %c0_38], %117 {strides = array<i32>} : memref<4x5x1024xf32, #tpu.memory_space<vmem>>, vector<1x1x1024xf32>,
    %118 = vector.extract_strided_slice %110 {offsets = [16, 0], sizes = [16, 1024], strides = [1, 1]} : vector<48x1024xf32> to vector<16x1024xf32>
    %119 = arith.mulf %107, %118 : vector<16x1024xf32>
    %cst_39 = arith.constant dense<0.000000e+00> : vector<1024xf32>
    %120 = vector.multi_reduction <add>, %119, %cst_39 [0] : vector<16x1024xf32> to vector<1024xf32>
    %121 = vector.shape_cast %120 : vector<1024xf32> to vector<1x1024xf32>
    %c0_40 = arith.constant 0 : index
    %c1_41 = arith.constant 1 : index
    %c0_42 = arith.constant 0 : index
    %122 = vector.load %arg5[%c0_40, %c1_41, %c0_42] : memref<4x5x1024xf32, #tpu.memory_space<vmem>>, vector<1x1x1024xf32>
    %123 = vector.shape_cast %122 : vector<1x1x1024xf32> to vector<1x1024xf32>
    %124 = vector.shape_cast %121 : vector<1x1024xf32> to vector<1x1x1024xf32>
    tpu.vector_store %arg5[%c0_40, %c1_41, %c0_42], %124 {strides = array<i32>} : memref<4x5x1024xf32, #tpu.memory_space<vmem>>, vector<1x1x1024xf32>,
    %125 = vector.extract_strided_slice %110 {offsets = [32, 0], sizes = [16, 1024], strides = [1, 1]} : vector<48x1024xf32> to vector<16x1024xf32>
    %126 = arith.mulf %107, %125 : vector<16x1024xf32>
    %cst_43 = arith.constant dense<0.000000e+00> : vector<1024xf32>
    %127 = vector.multi_reduction <add>, %126, %cst_43 [0] : vector<16x1024xf32> to vector<1024xf32>
    %128 = vector.shape_cast %127 : vector<1024xf32> to vector<1x1024xf32>
    %c0_44 = arith.constant 0 : index
    %c2_45 = arith.constant 2 : index
    %c0_46 = arith.constant 0 : index
    %129 = vector.load %arg5[%c0_44, %c2_45, %c0_46] : memref<4x5x1024xf32, #tpu.memory_space<vmem>>, vector<1x1x1024xf32>
    %130 = vector.shape_cast %129 : vector<1x1x1024xf32> to vector<1x1024xf32>
    %131 = vector.shape_cast %128 : vector<1x1024xf32> to vector<1x1x1024xf32>
    tpu.vector_store %arg5[%c0_44, %c2_45, %c0_46], %131 {strides = array<i32>} : memref<4x5x1024xf32, #tpu.memory_space<vmem>>, vector<1x1x1024xf32>,
    %c0_47 = arith.constant 0 : index
    %c3 = arith.constant 3 : index
    %c0_48 = arith.constant 0 : index
    %132 = vector.load %arg5[%c0_47, %c3, %c0_48] : memref<4x5x1024xf32, #tpu.memory_space<vmem>>, vector<1x1x1024xf32>
    %133 = vector.shape_cast %132 : vector<1x1x1024xf32> to vector<1x1024xf32>
    %134 = vector.shape_cast %38 : vector<1x1024xf32> to vector<1x1x1024xf32>
    tpu.vector_store %arg5[%c0_47, %c3, %c0_48], %134 {strides = array<i32>} : memref<4x5x1024xf32, #tpu.memory_space<vmem>>, vector<1x1x1024xf32>,
    %c0_49 = arith.constant 0 : index
    %c4 = arith.constant 4 : index
    %c0_50 = arith.constant 0 : index
    %135 = vector.load %arg5[%c0_49, %c4, %c0_50] : memref<4x5x1024xf32, #tpu.memory_space<vmem>>, vector<1x1x1024xf32>
    %136 = vector.shape_cast %135 : vector<1x1x1024xf32> to vector<1x1024xf32>
    %137 = vector.shape_cast %50 : vector<1x1024xf32> to vector<1x1x1024xf32>
    tpu.vector_store %arg5[%c0_49, %c4, %c0_50], %137 {strides = array<i32>} : memref<4x5x1024xf32, #tpu.memory_space<vmem>>, vector<1x1x1024xf32>,
    %c1_51 = arith.constant 1 : index
    %c0_52 = arith.constant 0 : index
    %c0_53 = arith.constant 0 : index
    %138 = vector.load %arg3[%c1_51, %c0_52, %c0_53] : memref<4x3x4xf32, #tpu.memory_space<vmem>>, vector<1x3x4xf32>
    %139 = vector.shape_cast %138 : vector<1x3x4xf32> to vector<3x4xf32>
    %140 = vector.extract_strided_slice %139 {offsets = [0, 0], sizes = [3, 1], strides = [1, 1]} : vector<3x4xf32> to vector<3x1xf32>
    %141 = vector.broadcast %140 : vector<3x1xf32> to vector<3x1024xf32>
    %142 = vector.broadcast %0 : vector<1x1024xf32> to vector<3x1024xf32>
    %143 = arith.mulf %141, %142 : vector<3x1024xf32>
    %144 = vector.extract_strided_slice %139 {offsets = [0, 1], sizes = [3, 1], strides = [1, 1]} : vector<3x4xf32> to vector<3x1xf32>
    %145 = vector.broadcast %144 : vector<3x1xf32> to vector<3x1024xf32>
    %146 = vector.broadcast %1 : vector<1x1024xf32> to vector<3x1024xf32>
    %147 = arith.mulf %145, %146 : vector<3x1024xf32>
    %148 = arith.addf %143, %147 : vector<3x1024xf32>
    %149 = vector.extract_strided_slice %139 {offsets = [0, 2], sizes = [3, 1], strides = [1, 1]} : vector<3x4xf32> to vector<3x1xf32>
    %150 = vector.broadcast %149 : vector<3x1xf32> to vector<3x1024xf32>
    %151 = vector.broadcast %2 : vector<1x1024xf32> to vector<3x1024xf32>
    %152 = arith.mulf %150, %151 : vector<3x1024xf32>
    %153 = arith.addf %148, %152 : vector<3x1024xf32>
    %154 = vector.extract_strided_slice %139 {offsets = [0, 3], sizes = [3, 1], strides = [1, 1]} : vector<3x4xf32> to vector<3x1xf32>
    %155 = vector.broadcast %154 : vector<3x1xf32> to vector<3x1024xf32>
    %156 = arith.addf %153, %155 : vector<3x1024xf32>
    %157 = vector.extract_strided_slice %156 {offsets = [2, 0], sizes = [1, 1024], strides = [1, 1]} : vector<3x1024xf32> to vector<1x1024xf32>
    %cst_54 = arith.constant 1.000000e+00 : f32
    %158 = vector.broadcast %cst_54 : f32 to vector<1x1024xf32>
    %159 = arith.divf %158, %157 : vector<1x1024xf32>
    %160 = vector.extract_strided_slice %156 {offsets = [0, 0], sizes = [1, 1024], strides = [1, 1]} : vector<3x1024xf32> to vector<1x1024xf32>
    %161 = arith.mulf %160, %159 : vector<1x1024xf32>
    %cst_55 = arith.constant 6.250000e-02 : f32
    %162 = vector.broadcast %cst_55 : f32 to vector<1x1024xf32>
    %163 = arith.mulf %161, %162 : vector<1x1024xf32>
    %cst_56 = arith.constant 0.000000e+00 : f32
    %cst_57 = arith.constant 1.000000e+00 : f32
    %164 = vector.broadcast %cst_56 : f32 to vector<1x1024xf32>
    %165 = arith.maximumf %164, %163 : vector<1x1024xf32>
    %166 = vector.broadcast %cst_57 : f32 to vector<1x1024xf32>
    %167 = arith.minimumf %166, %165 : vector<1x1024xf32>
    %cst_58 = arith.constant 2.000000e+00 : f32
    %168 = vector.broadcast %cst_58 : f32 to vector<1x1024xf32>
    %169 = arith.mulf %167, %168 : vector<1x1024xf32>
    %cst_59 = arith.constant 1.000000e+00 : f32
    %170 = vector.broadcast %cst_59 : f32 to vector<1x1024xf32>
    %171 = arith.subf %169, %170 : vector<1x1024xf32>
    %172 = vector.extract_strided_slice %156 {offsets = [1, 0], sizes = [1, 1024], strides = [1, 1]} : vector<3x1024xf32> to vector<1x1024xf32>
    %173 = arith.mulf %172, %159 : vector<1x1024xf32>
    %cst_60 = arith.constant 6.250000e-02 : f32
    %174 = vector.broadcast %cst_60 : f32 to vector<1x1024xf32>
    %175 = arith.mulf %173, %174 : vector<1x1024xf32>
    %cst_61 = arith.constant 0.000000e+00 : f32
    %cst_62 = arith.constant 1.000000e+00 : f32
    %176 = vector.broadcast %cst_61 : f32 to vector<1x1024xf32>
    %177 = arith.maximumf %176, %175 : vector<1x1024xf32>
    %178 = vector.broadcast %cst_62 : f32 to vector<1x1024xf32>
    %179 = arith.minimumf %178, %177 : vector<1x1024xf32>
    %cst_63 = arith.constant 2.000000e+00 : f32
    %180 = vector.broadcast %cst_63 : f32 to vector<1x1024xf32>
    %181 = arith.mulf %179, %180 : vector<1x1024xf32>
    %cst_64 = arith.constant 1.000000e+00 : f32
    %182 = vector.broadcast %cst_64 : f32 to vector<1x1024xf32>
    %183 = arith.subf %181, %182 : vector<1x1024xf32>
    %cst_65 = arith.constant 1.000000e+00 : f32
    %184 = vector.broadcast %cst_65 : f32 to vector<1x1024xf32>
    %185 = arith.addf %171, %184 : vector<1x1024xf32>
    %cst_66 = arith.constant 1.600000e+01 : f32
    %186 = vector.broadcast %cst_66 : f32 to vector<1x1024xf32>
    %187 = arith.mulf %185, %186 : vector<1x1024xf32>
    %cst_67 = arith.constant 1.000000e+00 : f32
    %188 = vector.broadcast %cst_67 : f32 to vector<1x1024xf32>
    %189 = arith.subf %187, %188 : vector<1x1024xf32>
    %cst_68 = arith.constant 5.000000e-01 : f32
    %190 = vector.broadcast %cst_68 : f32 to vector<1x1024xf32>
    %191 = arith.mulf %189, %190 : vector<1x1024xf32>
    %cst_69 = arith.constant 1.000000e+00 : f32
    %192 = vector.broadcast %cst_69 : f32 to vector<1x1024xf32>
    %193 = arith.addf %183, %192 : vector<1x1024xf32>
    %cst_70 = arith.constant 1.600000e+01 : f32
    %194 = vector.broadcast %cst_70 : f32 to vector<1x1024xf32>
    %195 = arith.mulf %193, %194 : vector<1x1024xf32>
    %cst_71 = arith.constant 1.000000e+00 : f32
    %196 = vector.broadcast %cst_71 : f32 to vector<1x1024xf32>
    %197 = arith.subf %195, %196 : vector<1x1024xf32>
    %cst_72 = arith.constant 5.000000e-01 : f32
    %198 = vector.broadcast %cst_72 : f32 to vector<1x1024xf32>
    %199 = arith.mulf %197, %198 : vector<1x1024xf32>
    %200 = math.floor %191 : vector<1x1024xf32>
    %201 = math.floor %199 : vector<1x1024xf32>
    %202 = arith.fptosi %200 : vector<1x1024xf32> to vector<1x1024xi32>
    %203 = arith.fptosi %201 : vector<1x1024xf32> to vector<1x1024xi32>
    %204 = arith.subf %191, %200 : vector<1x1024xf32>
    %cst_73 = arith.constant 1.000000e+00 : f32
    %205 = vector.broadcast %cst_73 : f32 to vector<1x1024xf32>
    %206 = arith.subf %205, %204 : vector<1x1024xf32>
    %207 = arith.subf %199, %201 : vector<1x1024xf32>
    %cst_74 = arith.constant 1.000000e+00 : f32
    %208 = vector.broadcast %cst_74 : f32 to vector<1x1024xf32>
    %209 = arith.subf %208, %207 : vector<1x1024xf32>
    %210 = vector.broadcast %202 : vector<1x1024xi32> to vector<16x1024xi32>
    %211 = arith.cmpi eq, %3, %210 : vector<16x1024xi32>
    %cst_75 = arith.constant 0.000000e+00 : f32
    %212 = vector.shape_cast %206 : vector<1x1024xf32> to vector<1x1024xf32>
    %213 = vector.broadcast %212 : vector<1x1024xf32> to vector<16x1024xf32>
    %214 = vector.broadcast %cst_75 : f32 to vector<16x1024xf32>
    %215 = arith.select %211, %213, %214 : vector<16x1024xi1>, vector<16x1024xf32>
    %c1_i32_76 = arith.constant 1 : i32
    %216 = vector.broadcast %c1_i32_76 : i32 to vector<1x1024xi32>
    %217 = arith.addi %202, %216 : vector<1x1024xi32>
    %218 = vector.broadcast %217 : vector<1x1024xi32> to vector<16x1024xi32>
    %219 = arith.cmpi eq, %3, %218 : vector<16x1024xi32>
    %cst_77 = arith.constant 0.000000e+00 : f32
    %220 = vector.shape_cast %204 : vector<1x1024xf32> to vector<1x1024xf32>
    %221 = vector.broadcast %220 : vector<1x1024xf32> to vector<16x1024xf32>
    %222 = vector.broadcast %cst_77 : f32 to vector<16x1024xf32>
    %223 = arith.select %219, %221, %222 : vector<16x1024xi1>, vector<16x1024xf32>
    %224 = arith.addf %215, %223 : vector<16x1024xf32>
    %225 = arith.truncf %224 : vector<16x1024xf32> to vector<16x1024xbf16>
    %226 = vector.broadcast %203 : vector<1x1024xi32> to vector<16x1024xi32>
    %227 = arith.cmpi eq, %4, %226 : vector<16x1024xi32>
    %cst_78 = arith.constant 0.000000e+00 : f32
    %228 = vector.shape_cast %209 : vector<1x1024xf32> to vector<1x1024xf32>
    %229 = vector.broadcast %228 : vector<1x1024xf32> to vector<16x1024xf32>
    %230 = vector.broadcast %cst_78 : f32 to vector<16x1024xf32>
    %231 = arith.select %227, %229, %230 : vector<16x1024xi1>, vector<16x1024xf32>
    %c1_i32_79 = arith.constant 1 : i32
    %232 = vector.broadcast %c1_i32_79 : i32 to vector<1x1024xi32>
    %233 = arith.addi %203, %232 : vector<1x1024xi32>
    %234 = vector.broadcast %233 : vector<1x1024xi32> to vector<16x1024xi32>
    %235 = arith.cmpi eq, %4, %234 : vector<16x1024xi32>
    %cst_80 = arith.constant 0.000000e+00 : f32
    %236 = vector.shape_cast %207 : vector<1x1024xf32> to vector<1x1024xf32>
    %237 = vector.broadcast %236 : vector<1x1024xf32> to vector<16x1024xf32>
    %238 = vector.broadcast %cst_80 : f32 to vector<16x1024xf32>
    %239 = arith.select %235, %237, %238 : vector<16x1024xi1>, vector<16x1024xf32>
    %240 = arith.addf %231, %239 : vector<16x1024xf32>
    %c1_81 = arith.constant 1 : index
    %c0_82 = arith.constant 0 : index
    %c0_83 = arith.constant 0 : index
    %241 = vector.load %arg4[%c1_81, %c0_82, %c0_83] : memref<4x48x16xbf16, #tpu.memory_space<vmem>>, vector<1x48x16xbf16>
    %242 = vector.shape_cast %241 : vector<1x48x16xbf16> to vector<48x16xbf16>
    %cst_84 = arith.constant dense<0.000000e+00> : vector<48x1024xf32>
    %243 = tpu.matmul %242, %225, %cst_84 {dimension_numbers = #tpu.dot_dimension_numbers<[1], [0], [0], [1], [0, 0, 1, 1], [], []>} : vector<48x16xbf16>, vector<16x1024xbf16>, vector<48x1024xf32> -> vector<48x1024xf32>
    %244 = vector.extract_strided_slice %243 {offsets = [0, 0], sizes = [16, 1024], strides = [1, 1]} : vector<48x1024xf32> to vector<16x1024xf32>
    %245 = arith.mulf %240, %244 : vector<16x1024xf32>
    %cst_85 = arith.constant dense<0.000000e+00> : vector<1024xf32>
    %246 = vector.multi_reduction <add>, %245, %cst_85 [0] : vector<16x1024xf32> to vector<1024xf32>
    %247 = vector.shape_cast %246 : vector<1024xf32> to vector<1x1024xf32>
    %c1_86 = arith.constant 1 : index
    %c0_87 = arith.constant 0 : index
    %c0_88 = arith.constant 0 : index
    %248 = vector.load %arg5[%c1_86, %c0_87, %c0_88] : memref<4x5x1024xf32, #tpu.memory_space<vmem>>, vector<1x1x1024xf32>
    %249 = vector.shape_cast %248 : vector<1x1x1024xf32> to vector<1x1024xf32>
    %250 = vector.shape_cast %247 : vector<1x1024xf32> to vector<1x1x1024xf32>
    tpu.vector_store %arg5[%c1_86, %c0_87, %c0_88], %250 {strides = array<i32>} : memref<4x5x1024xf32, #tpu.memory_space<vmem>>, vector<1x1x1024xf32>,
    %251 = vector.extract_strided_slice %243 {offsets = [16, 0], sizes = [16, 1024], strides = [1, 1]} : vector<48x1024xf32> to vector<16x1024xf32>
    %252 = arith.mulf %240, %251 : vector<16x1024xf32>
    %cst_89 = arith.constant dense<0.000000e+00> : vector<1024xf32>
    %253 = vector.multi_reduction <add>, %252, %cst_89 [0] : vector<16x1024xf32> to vector<1024xf32>
    %254 = vector.shape_cast %253 : vector<1024xf32> to vector<1x1024xf32>
    %c1_90 = arith.constant 1 : index
    %c1_91 = arith.constant 1 : index
    %c0_92 = arith.constant 0 : index
    %255 = vector.load %arg5[%c1_90, %c1_91, %c0_92] : memref<4x5x1024xf32, #tpu.memory_space<vmem>>, vector<1x1x1024xf32>
    %256 = vector.shape_cast %255 : vector<1x1x1024xf32> to vector<1x1024xf32>
    %257 = vector.shape_cast %254 : vector<1x1024xf32> to vector<1x1x1024xf32>
    tpu.vector_store %arg5[%c1_90, %c1_91, %c0_92], %257 {strides = array<i32>} : memref<4x5x1024xf32, #tpu.memory_space<vmem>>, vector<1x1x1024xf32>,
    %258 = vector.extract_strided_slice %243 {offsets = [32, 0], sizes = [16, 1024], strides = [1, 1]} : vector<48x1024xf32> to vector<16x1024xf32>
    %259 = arith.mulf %240, %258 : vector<16x1024xf32>
    %cst_93 = arith.constant dense<0.000000e+00> : vector<1024xf32>
    %260 = vector.multi_reduction <add>, %259, %cst_93 [0] : vector<16x1024xf32> to vector<1024xf32>
    %261 = vector.shape_cast %260 : vector<1024xf32> to vector<1x1024xf32>
    %c1_94 = arith.constant 1 : index
    %c2_95 = arith.constant 2 : index
    %c0_96 = arith.constant 0 : index
    %262 = vector.load %arg5[%c1_94, %c2_95, %c0_96] : memref<4x5x1024xf32, #tpu.memory_space<vmem>>, vector<1x1x1024xf32>
    %263 = vector.shape_cast %262 : vector<1x1x1024xf32> to vector<1x1024xf32>
    %264 = vector.shape_cast %261 : vector<1x1024xf32> to vector<1x1x1024xf32>
    tpu.vector_store %arg5[%c1_94, %c2_95, %c0_96], %264 {strides = array<i32>} : memref<4x5x1024xf32, #tpu.memory_space<vmem>>, vector<1x1x1024xf32>,
    %c1_97 = arith.constant 1 : index
    %c3_98 = arith.constant 3 : index
    %c0_99 = arith.constant 0 : index
    %265 = vector.load %arg5[%c1_97, %c3_98, %c0_99] : memref<4x5x1024xf32, #tpu.memory_space<vmem>>, vector<1x1x1024xf32>
    %266 = vector.shape_cast %265 : vector<1x1x1024xf32> to vector<1x1024xf32>
    %267 = vector.shape_cast %171 : vector<1x1024xf32> to vector<1x1x1024xf32>
    tpu.vector_store %arg5[%c1_97, %c3_98, %c0_99], %267 {strides = array<i32>} : memref<4x5x1024xf32, #tpu.memory_space<vmem>>, vector<1x1x1024xf32>,
    %c1_100 = arith.constant 1 : index
    %c4_101 = arith.constant 4 : index
    %c0_102 = arith.constant 0 : index
    %268 = vector.load %arg5[%c1_100, %c4_101, %c0_102] : memref<4x5x1024xf32, #tpu.memory_space<vmem>>, vector<1x1x1024xf32>
    %269 = vector.shape_cast %268 : vector<1x1x1024xf32> to vector<1x1024xf32>
    %270 = vector.shape_cast %183 : vector<1x1024xf32> to vector<1x1x1024xf32>
    tpu.vector_store %arg5[%c1_100, %c4_101, %c0_102], %270 {strides = array<i32>} : memref<4x5x1024xf32, #tpu.memory_space<vmem>>, vector<1x1x1024xf32>,
    %c2_103 = arith.constant 2 : index
    %c0_104 = arith.constant 0 : index
    %c0_105 = arith.constant 0 : index
    %271 = vector.load %arg3[%c2_103, %c0_104, %c0_105] : memref<4x3x4xf32, #tpu.memory_space<vmem>>, vector<1x3x4xf32>
    %272 = vector.shape_cast %271 : vector<1x3x4xf32> to vector<3x4xf32>
    %273 = vector.extract_strided_slice %272 {offsets = [0, 0], sizes = [3, 1], strides = [1, 1]} : vector<3x4xf32> to vector<3x1xf32>
    %274 = vector.broadcast %273 : vector<3x1xf32> to vector<3x1024xf32>
    %275 = vector.broadcast %0 : vector<1x1024xf32> to vector<3x1024xf32>
    %276 = arith.mulf %274, %275 : vector<3x1024xf32>
    %277 = vector.extract_strided_slice %272 {offsets = [0, 1], sizes = [3, 1], strides = [1, 1]} : vector<3x4xf32> to vector<3x1xf32>
    %278 = vector.broadcast %277 : vector<3x1xf32> to vector<3x1024xf32>
    %279 = vector.broadcast %1 : vector<1x1024xf32> to vector<3x1024xf32>
    %280 = arith.mulf %278, %279 : vector<3x1024xf32>
    %281 = arith.addf %276, %280 : vector<3x1024xf32>
    %282 = vector.extract_strided_slice %272 {offsets = [0, 2], sizes = [3, 1], strides = [1, 1]} : vector<3x4xf32> to vector<3x1xf32>
    %283 = vector.broadcast %282 : vector<3x1xf32> to vector<3x1024xf32>
    %284 = vector.broadcast %2 : vector<1x1024xf32> to vector<3x1024xf32>
    %285 = arith.mulf %283, %284 : vector<3x1024xf32>
    %286 = arith.addf %281, %285 : vector<3x1024xf32>
    %287 = vector.extract_strided_slice %272 {offsets = [0, 3], sizes = [3, 1], strides = [1, 1]} : vector<3x4xf32> to vector<3x1xf32>
    %288 = vector.broadcast %287 : vector<3x1xf32> to vector<3x1024xf32>
    %289 = arith.addf %286, %288 : vector<3x1024xf32>
    %290 = vector.extract_strided_slice %289 {offsets = [2, 0], sizes = [1, 1024], strides = [1, 1]} : vector<3x1024xf32> to vector<1x1024xf32>
    %cst_106 = arith.constant 1.000000e+00 : f32
    %291 = vector.broadcast %cst_106 : f32 to vector<1x1024xf32>
    %292 = arith.divf %291, %290 : vector<1x1024xf32>
    %293 = vector.extract_strided_slice %289 {offsets = [0, 0], sizes = [1, 1024], strides = [1, 1]} : vector<3x1024xf32> to vector<1x1024xf32>
    %294 = arith.mulf %293, %292 : vector<1x1024xf32>
    %cst_107 = arith.constant 6.250000e-02 : f32
    %295 = vector.broadcast %cst_107 : f32 to vector<1x1024xf32>
    %296 = arith.mulf %294, %295 : vector<1x1024xf32>
    %cst_108 = arith.constant 0.000000e+00 : f32
    %cst_109 = arith.constant 1.000000e+00 : f32
    %297 = vector.broadcast %cst_108 : f32 to vector<1x1024xf32>
    %298 = arith.maximumf %297, %296 : vector<1x1024xf32>
    %299 = vector.broadcast %cst_109 : f32 to vector<1x1024xf32>
    %300 = arith.minimumf %299, %298 : vector<1x1024xf32>
    %cst_110 = arith.constant 2.000000e+00 : f32
    %301 = vector.broadcast %cst_110 : f32 to vector<1x1024xf32>
    %302 = arith.mulf %300, %301 : vector<1x1024xf32>
    %cst_111 = arith.constant 1.000000e+00 : f32
    %303 = vector.broadcast %cst_111 : f32 to vector<1x1024xf32>
    %304 = arith.subf %302, %303 : vector<1x1024xf32>
    %305 = vector.extract_strided_slice %289 {offsets = [1, 0], sizes = [1, 1024], strides = [1, 1]} : vector<3x1024xf32> to vector<1x1024xf32>
    %306 = arith.mulf %305, %292 : vector<1x1024xf32>
    %cst_112 = arith.constant 6.250000e-02 : f32
    %307 = vector.broadcast %cst_112 : f32 to vector<1x1024xf32>
    %308 = arith.mulf %306, %307 : vector<1x1024xf32>
    %cst_113 = arith.constant 0.000000e+00 : f32
    %cst_114 = arith.constant 1.000000e+00 : f32
    %309 = vector.broadcast %cst_113 : f32 to vector<1x1024xf32>
    %310 = arith.maximumf %309, %308 : vector<1x1024xf32>
    %311 = vector.broadcast %cst_114 : f32 to vector<1x1024xf32>
    %312 = arith.minimumf %311, %310 : vector<1x1024xf32>
    %cst_115 = arith.constant 2.000000e+00 : f32
    %313 = vector.broadcast %cst_115 : f32 to vector<1x1024xf32>
    %314 = arith.mulf %312, %313 : vector<1x1024xf32>
    %cst_116 = arith.constant 1.000000e+00 : f32
    %315 = vector.broadcast %cst_116 : f32 to vector<1x1024xf32>
    %316 = arith.subf %314, %315 : vector<1x1024xf32>
    %cst_117 = arith.constant 1.000000e+00 : f32
    %317 = vector.broadcast %cst_117 : f32 to vector<1x1024xf32>
    %318 = arith.addf %304, %317 : vector<1x1024xf32>
    %cst_118 = arith.constant 1.600000e+01 : f32
    %319 = vector.broadcast %cst_118 : f32 to vector<1x1024xf32>
    %320 = arith.mulf %318, %319 : vector<1x1024xf32>
    %cst_119 = arith.constant 1.000000e+00 : f32
    %321 = vector.broadcast %cst_119 : f32 to vector<1x1024xf32>
    %322 = arith.subf %320, %321 : vector<1x1024xf32>
    %cst_120 = arith.constant 5.000000e-01 : f32
    %323 = vector.broadcast %cst_120 : f32 to vector<1x1024xf32>
    %324 = arith.mulf %322, %323 : vector<1x1024xf32>
    %cst_121 = arith.constant 1.000000e+00 : f32
    %325 = vector.broadcast %cst_121 : f32 to vector<1x1024xf32>
    %326 = arith.addf %316, %325 : vector<1x1024xf32>
    %cst_122 = arith.constant 1.600000e+01 : f32
    %327 = vector.broadcast %cst_122 : f32 to vector<1x1024xf32>
    %328 = arith.mulf %326, %327 : vector<1x1024xf32>
    %cst_123 = arith.constant 1.000000e+00 : f32
    %329 = vector.broadcast %cst_123 : f32 to vector<1x1024xf32>
    %330 = arith.subf %328, %329 : vector<1x1024xf32>
    %cst_124 = arith.constant 5.000000e-01 : f32
    %331 = vector.broadcast %cst_124 : f32 to vector<1x1024xf32>
    %332 = arith.mulf %330, %331 : vector<1x1024xf32>
    %333 = math.floor %324 : vector<1x1024xf32>
    %334 = math.floor %332 : vector<1x1024xf32>
    %335 = arith.fptosi %333 : vector<1x1024xf32> to vector<1x1024xi32>
    %336 = arith.fptosi %334 : vector<1x1024xf32> to vector<1x1024xi32>
    %337 = arith.subf %324, %333 : vector<1x1024xf32>
    %cst_125 = arith.constant 1.000000e+00 : f32
    %338 = vector.broadcast %cst_125 : f32 to vector<1x1024xf32>
    %339 = arith.subf %338, %337 : vector<1x1024xf32>
    %340 = arith.subf %332, %334 : vector<1x1024xf32>
    %cst_126 = arith.constant 1.000000e+00 : f32
    %341 = vector.broadcast %cst_126 : f32 to vector<1x1024xf32>
    %342 = arith.subf %341, %340 : vector<1x1024xf32>
    %343 = vector.broadcast %335 : vector<1x1024xi32> to vector<16x1024xi32>
    %344 = arith.cmpi eq, %3, %343 : vector<16x1024xi32>
    %cst_127 = arith.constant 0.000000e+00 : f32
    %345 = vector.shape_cast %339 : vector<1x1024xf32> to vector<1x1024xf32>
    %346 = vector.broadcast %345 : vector<1x1024xf32> to vector<16x1024xf32>
    %347 = vector.broadcast %cst_127 : f32 to vector<16x1024xf32>
    %348 = arith.select %344, %346, %347 : vector<16x1024xi1>, vector<16x1024xf32>
    %c1_i32_128 = arith.constant 1 : i32
    %349 = vector.broadcast %c1_i32_128 : i32 to vector<1x1024xi32>
    %350 = arith.addi %335, %349 : vector<1x1024xi32>
    %351 = vector.broadcast %350 : vector<1x1024xi32> to vector<16x1024xi32>
    %352 = arith.cmpi eq, %3, %351 : vector<16x1024xi32>
    %cst_129 = arith.constant 0.000000e+00 : f32
    %353 = vector.shape_cast %337 : vector<1x1024xf32> to vector<1x1024xf32>
    %354 = vector.broadcast %353 : vector<1x1024xf32> to vector<16x1024xf32>
    %355 = vector.broadcast %cst_129 : f32 to vector<16x1024xf32>
    %356 = arith.select %352, %354, %355 : vector<16x1024xi1>, vector<16x1024xf32>
    %357 = arith.addf %348, %356 : vector<16x1024xf32>
    %358 = arith.truncf %357 : vector<16x1024xf32> to vector<16x1024xbf16>
    %359 = vector.broadcast %336 : vector<1x1024xi32> to vector<16x1024xi32>
    %360 = arith.cmpi eq, %4, %359 : vector<16x1024xi32>
    %cst_130 = arith.constant 0.000000e+00 : f32
    %361 = vector.shape_cast %342 : vector<1x1024xf32> to vector<1x1024xf32>
    %362 = vector.broadcast %361 : vector<1x1024xf32> to vector<16x1024xf32>
    %363 = vector.broadcast %cst_130 : f32 to vector<16x1024xf32>
    %364 = arith.select %360, %362, %363 : vector<16x1024xi1>, vector<16x1024xf32>
    %c1_i32_131 = arith.constant 1 : i32
    %365 = vector.broadcast %c1_i32_131 : i32 to vector<1x1024xi32>
    %366 = arith.addi %336, %365 : vector<1x1024xi32>
    %367 = vector.broadcast %366 : vector<1x1024xi32> to vector<16x1024xi32>
    %368 = arith.cmpi eq, %4, %367 : vector<16x1024xi32>
    %cst_132 = arith.constant 0.000000e+00 : f32
    %369 = vector.shape_cast %340 : vector<1x1024xf32> to vector<1x1024xf32>
    %370 = vector.broadcast %369 : vector<1x1024xf32> to vector<16x1024xf32>
    %371 = vector.broadcast %cst_132 : f32 to vector<16x1024xf32>
    %372 = arith.select %368, %370, %371 : vector<16x1024xi1>, vector<16x1024xf32>
    %373 = arith.addf %364, %372 : vector<16x1024xf32>
    %c2_133 = arith.constant 2 : index
    %c0_134 = arith.constant 0 : index
    %c0_135 = arith.constant 0 : index
    %374 = vector.load %arg4[%c2_133, %c0_134, %c0_135] : memref<4x48x16xbf16, #tpu.memory_space<vmem>>, vector<1x48x16xbf16>
    %375 = vector.shape_cast %374 : vector<1x48x16xbf16> to vector<48x16xbf16>
    %cst_136 = arith.constant dense<0.000000e+00> : vector<48x1024xf32>
    %376 = tpu.matmul %375, %358, %cst_136 {dimension_numbers = #tpu.dot_dimension_numbers<[1], [0], [0], [1], [0, 0, 1, 1], [], []>} : vector<48x16xbf16>, vector<16x1024xbf16>, vector<48x1024xf32> -> vector<48x1024xf32>
    %377 = vector.extract_strided_slice %376 {offsets = [0, 0], sizes = [16, 1024], strides = [1, 1]} : vector<48x1024xf32> to vector<16x1024xf32>
    %378 = arith.mulf %373, %377 : vector<16x1024xf32>
    %cst_137 = arith.constant dense<0.000000e+00> : vector<1024xf32>
    %379 = vector.multi_reduction <add>, %378, %cst_137 [0] : vector<16x1024xf32> to vector<1024xf32>
    %380 = vector.shape_cast %379 : vector<1024xf32> to vector<1x1024xf32>
    %c2_138 = arith.constant 2 : index
    %c0_139 = arith.constant 0 : index
    %c0_140 = arith.constant 0 : index
    %381 = vector.load %arg5[%c2_138, %c0_139, %c0_140] : memref<4x5x1024xf32, #tpu.memory_space<vmem>>, vector<1x1x1024xf32>
    %382 = vector.shape_cast %381 : vector<1x1x1024xf32> to vector<1x1024xf32>
    %383 = vector.shape_cast %380 : vector<1x1024xf32> to vector<1x1x1024xf32>
    tpu.vector_store %arg5[%c2_138, %c0_139, %c0_140], %383 {strides = array<i32>} : memref<4x5x1024xf32, #tpu.memory_space<vmem>>, vector<1x1x1024xf32>,
    %384 = vector.extract_strided_slice %376 {offsets = [16, 0], sizes = [16, 1024], strides = [1, 1]} : vector<48x1024xf32> to vector<16x1024xf32>
    %385 = arith.mulf %373, %384 : vector<16x1024xf32>
    %cst_141 = arith.constant dense<0.000000e+00> : vector<1024xf32>
    %386 = vector.multi_reduction <add>, %385, %cst_141 [0] : vector<16x1024xf32> to vector<1024xf32>
    %387 = vector.shape_cast %386 : vector<1024xf32> to vector<1x1024xf32>
    %c2_142 = arith.constant 2 : index
    %c1_143 = arith.constant 1 : index
    %c0_144 = arith.constant 0 : index
    %388 = vector.load %arg5[%c2_142, %c1_143, %c0_144] : memref<4x5x1024xf32, #tpu.memory_space<vmem>>, vector<1x1x1024xf32>
    %389 = vector.shape_cast %388 : vector<1x1x1024xf32> to vector<1x1024xf32>
    %390 = vector.shape_cast %387 : vector<1x1024xf32> to vector<1x1x1024xf32>
    tpu.vector_store %arg5[%c2_142, %c1_143, %c0_144], %390 {strides = array<i32>} : memref<4x5x1024xf32, #tpu.memory_space<vmem>>, vector<1x1x1024xf32>,
    %391 = vector.extract_strided_slice %376 {offsets = [32, 0], sizes = [16, 1024], strides = [1, 1]} : vector<48x1024xf32> to vector<16x1024xf32>
    %392 = arith.mulf %373, %391 : vector<16x1024xf32>
    %cst_145 = arith.constant dense<0.000000e+00> : vector<1024xf32>
    %393 = vector.multi_reduction <add>, %392, %cst_145 [0] : vector<16x1024xf32> to vector<1024xf32>
    %394 = vector.shape_cast %393 : vector<1024xf32> to vector<1x1024xf32>
    %c2_146 = arith.constant 2 : index
    %c2_147 = arith.constant 2 : index
    %c0_148 = arith.constant 0 : index
    %395 = vector.load %arg5[%c2_146, %c2_147, %c0_148] : memref<4x5x1024xf32, #tpu.memory_space<vmem>>, vector<1x1x1024xf32>
    %396 = vector.shape_cast %395 : vector<1x1x1024xf32> to vector<1x1024xf32>
    %397 = vector.shape_cast %394 : vector<1x1024xf32> to vector<1x1x1024xf32>
    tpu.vector_store %arg5[%c2_146, %c2_147, %c0_148], %397 {strides = array<i32>} : memref<4x5x1024xf32, #tpu.memory_space<vmem>>, vector<1x1x1024xf32>,
    %c2_149 = arith.constant 2 : index
    %c3_150 = arith.constant 3 : index
    %c0_151 = arith.constant 0 : index
    %398 = vector.load %arg5[%c2_149, %c3_150, %c0_151] : memref<4x5x1024xf32, #tpu.memory_space<vmem>>, vector<1x1x1024xf32>
    %399 = vector.shape_cast %398 : vector<1x1x1024xf32> to vector<1x1024xf32>
    %400 = vector.shape_cast %304 : vector<1x1024xf32> to vector<1x1x1024xf32>
    tpu.vector_store %arg5[%c2_149, %c3_150, %c0_151], %400 {strides = array<i32>} : memref<4x5x1024xf32, #tpu.memory_space<vmem>>, vector<1x1x1024xf32>,
    %c2_152 = arith.constant 2 : index
    %c4_153 = arith.constant 4 : index
    %c0_154 = arith.constant 0 : index
    %401 = vector.load %arg5[%c2_152, %c4_153, %c0_154] : memref<4x5x1024xf32, #tpu.memory_space<vmem>>, vector<1x1x1024xf32>
    %402 = vector.shape_cast %401 : vector<1x1x1024xf32> to vector<1x1024xf32>
    %403 = vector.shape_cast %316 : vector<1x1024xf32> to vector<1x1x1024xf32>
    tpu.vector_store %arg5[%c2_152, %c4_153, %c0_154], %403 {strides = array<i32>} : memref<4x5x1024xf32, #tpu.memory_space<vmem>>, vector<1x1x1024xf32>,
    %c3_155 = arith.constant 3 : index
    %c0_156 = arith.constant 0 : index
    %c0_157 = arith.constant 0 : index
    %404 = vector.load %arg3[%c3_155, %c0_156, %c0_157] : memref<4x3x4xf32, #tpu.memory_space<vmem>>, vector<1x3x4xf32>
    %405 = vector.shape_cast %404 : vector<1x3x4xf32> to vector<3x4xf32>
    %406 = vector.extract_strided_slice %405 {offsets = [0, 0], sizes = [3, 1], strides = [1, 1]} : vector<3x4xf32> to vector<3x1xf32>
    %407 = vector.broadcast %406 : vector<3x1xf32> to vector<3x1024xf32>
    %408 = vector.broadcast %0 : vector<1x1024xf32> to vector<3x1024xf32>
    %409 = arith.mulf %407, %408 : vector<3x1024xf32>
    %410 = vector.extract_strided_slice %405 {offsets = [0, 1], sizes = [3, 1], strides = [1, 1]} : vector<3x4xf32> to vector<3x1xf32>
    %411 = vector.broadcast %410 : vector<3x1xf32> to vector<3x1024xf32>
    %412 = vector.broadcast %1 : vector<1x1024xf32> to vector<3x1024xf32>
    %413 = arith.mulf %411, %412 : vector<3x1024xf32>
    %414 = arith.addf %409, %413 : vector<3x1024xf32>
    %415 = vector.extract_strided_slice %405 {offsets = [0, 2], sizes = [3, 1], strides = [1, 1]} : vector<3x4xf32> to vector<3x1xf32>
    %416 = vector.broadcast %415 : vector<3x1xf32> to vector<3x1024xf32>
    %417 = vector.broadcast %2 : vector<1x1024xf32> to vector<3x1024xf32>
    %418 = arith.mulf %416, %417 : vector<3x1024xf32>
    %419 = arith.addf %414, %418 : vector<3x1024xf32>
    %420 = vector.extract_strided_slice %405 {offsets = [0, 3], sizes = [3, 1], strides = [1, 1]} : vector<3x4xf32> to vector<3x1xf32>
    %421 = vector.broadcast %420 : vector<3x1xf32> to vector<3x1024xf32>
    %422 = arith.addf %419, %421 : vector<3x1024xf32>
    %423 = vector.extract_strided_slice %422 {offsets = [2, 0], sizes = [1, 1024], strides = [1, 1]} : vector<3x1024xf32> to vector<1x1024xf32>
    %cst_158 = arith.constant 1.000000e+00 : f32
    %424 = vector.broadcast %cst_158 : f32 to vector<1x1024xf32>
    %425 = arith.divf %424, %423 : vector<1x1024xf32>
    %426 = vector.extract_strided_slice %422 {offsets = [0, 0], sizes = [1, 1024], strides = [1, 1]} : vector<3x1024xf32> to vector<1x1024xf32>
    %427 = arith.mulf %426, %425 : vector<1x1024xf32>
    %cst_159 = arith.constant 6.250000e-02 : f32
    %428 = vector.broadcast %cst_159 : f32 to vector<1x1024xf32>
    %429 = arith.mulf %427, %428 : vector<1x1024xf32>
    %cst_160 = arith.constant 0.000000e+00 : f32
    %cst_161 = arith.constant 1.000000e+00 : f32
    %430 = vector.broadcast %cst_160 : f32 to vector<1x1024xf32>
    %431 = arith.maximumf %430, %429 : vector<1x1024xf32>
    %432 = vector.broadcast %cst_161 : f32 to vector<1x1024xf32>
    %433 = arith.minimumf %432, %431 : vector<1x1024xf32>
    %cst_162 = arith.constant 2.000000e+00 : f32
    %434 = vector.broadcast %cst_162 : f32 to vector<1x1024xf32>
    %435 = arith.mulf %433, %434 : vector<1x1024xf32>
    %cst_163 = arith.constant 1.000000e+00 : f32
    %436 = vector.broadcast %cst_163 : f32 to vector<1x1024xf32>
    %437 = arith.subf %435, %436 : vector<1x1024xf32>
    %438 = vector.extract_strided_slice %422 {offsets = [1, 0], sizes = [1, 1024], strides = [1, 1]} : vector<3x1024xf32> to vector<1x1024xf32>
    %439 = arith.mulf %438, %425 : vector<1x1024xf32>
    %cst_164 = arith.constant 6.250000e-02 : f32
    %440 = vector.broadcast %cst_164 : f32 to vector<1x1024xf32>
    %441 = arith.mulf %439, %440 : vector<1x1024xf32>
    %cst_165 = arith.constant 0.000000e+00 : f32
    %cst_166 = arith.constant 1.000000e+00 : f32
    %442 = vector.broadcast %cst_165 : f32 to vector<1x1024xf32>
    %443 = arith.maximumf %442, %441 : vector<1x1024xf32>
    %444 = vector.broadcast %cst_166 : f32 to vector<1x1024xf32>
    %445 = arith.minimumf %444, %443 : vector<1x1024xf32>
    %cst_167 = arith.constant 2.000000e+00 : f32
    %446 = vector.broadcast %cst_167 : f32 to vector<1x1024xf32>
    %447 = arith.mulf %445, %446 : vector<1x1024xf32>
    %cst_168 = arith.constant 1.000000e+00 : f32
    %448 = vector.broadcast %cst_168 : f32 to vector<1x1024xf32>
    %449 = arith.subf %447, %448 : vector<1x1024xf32>
    %cst_169 = arith.constant 1.000000e+00 : f32
    %450 = vector.broadcast %cst_169 : f32 to vector<1x1024xf32>
    %451 = arith.addf %437, %450 : vector<1x1024xf32>
    %cst_170 = arith.constant 1.600000e+01 : f32
    %452 = vector.broadcast %cst_170 : f32 to vector<1x1024xf32>
    %453 = arith.mulf %451, %452 : vector<1x1024xf32>
    %cst_171 = arith.constant 1.000000e+00 : f32
    %454 = vector.broadcast %cst_171 : f32 to vector<1x1024xf32>
    %455 = arith.subf %453, %454 : vector<1x1024xf32>
    %cst_172 = arith.constant 5.000000e-01 : f32
    %456 = vector.broadcast %cst_172 : f32 to vector<1x1024xf32>
    %457 = arith.mulf %455, %456 : vector<1x1024xf32>
    %cst_173 = arith.constant 1.000000e+00 : f32
    %458 = vector.broadcast %cst_173 : f32 to vector<1x1024xf32>
    %459 = arith.addf %449, %458 : vector<1x1024xf32>
    %cst_174 = arith.constant 1.600000e+01 : f32
    %460 = vector.broadcast %cst_174 : f32 to vector<1x1024xf32>
    %461 = arith.mulf %459, %460 : vector<1x1024xf32>
    %cst_175 = arith.constant 1.000000e+00 : f32
    %462 = vector.broadcast %cst_175 : f32 to vector<1x1024xf32>
    %463 = arith.subf %461, %462 : vector<1x1024xf32>
    %cst_176 = arith.constant 5.000000e-01 : f32
    %464 = vector.broadcast %cst_176 : f32 to vector<1x1024xf32>
    %465 = arith.mulf %463, %464 : vector<1x1024xf32>
    %466 = math.floor %457 : vector<1x1024xf32>
    %467 = math.floor %465 : vector<1x1024xf32>
    %468 = arith.fptosi %466 : vector<1x1024xf32> to vector<1x1024xi32>
    %469 = arith.fptosi %467 : vector<1x1024xf32> to vector<1x1024xi32>
    %470 = arith.subf %457, %466 : vector<1x1024xf32>
    %cst_177 = arith.constant 1.000000e+00 : f32
    %471 = vector.broadcast %cst_177 : f32 to vector<1x1024xf32>
    %472 = arith.subf %471, %470 : vector<1x1024xf32>
    %473 = arith.subf %465, %467 : vector<1x1024xf32>
    %cst_178 = arith.constant 1.000000e+00 : f32
    %474 = vector.broadcast %cst_178 : f32 to vector<1x1024xf32>
    %475 = arith.subf %474, %473 : vector<1x1024xf32>
    %476 = vector.broadcast %468 : vector<1x1024xi32> to vector<16x1024xi32>
    %477 = arith.cmpi eq, %3, %476 : vector<16x1024xi32>
    %cst_179 = arith.constant 0.000000e+00 : f32
    %478 = vector.shape_cast %472 : vector<1x1024xf32> to vector<1x1024xf32>
    %479 = vector.broadcast %478 : vector<1x1024xf32> to vector<16x1024xf32>
    %480 = vector.broadcast %cst_179 : f32 to vector<16x1024xf32>
    %481 = arith.select %477, %479, %480 : vector<16x1024xi1>, vector<16x1024xf32>
    %c1_i32_180 = arith.constant 1 : i32
    %482 = vector.broadcast %c1_i32_180 : i32 to vector<1x1024xi32>
    %483 = arith.addi %468, %482 : vector<1x1024xi32>
    %484 = vector.broadcast %483 : vector<1x1024xi32> to vector<16x1024xi32>
    %485 = arith.cmpi eq, %3, %484 : vector<16x1024xi32>
    %cst_181 = arith.constant 0.000000e+00 : f32
    %486 = vector.shape_cast %470 : vector<1x1024xf32> to vector<1x1024xf32>
    %487 = vector.broadcast %486 : vector<1x1024xf32> to vector<16x1024xf32>
    %488 = vector.broadcast %cst_181 : f32 to vector<16x1024xf32>
    %489 = arith.select %485, %487, %488 : vector<16x1024xi1>, vector<16x1024xf32>
    %490 = arith.addf %481, %489 : vector<16x1024xf32>
    %491 = arith.truncf %490 : vector<16x1024xf32> to vector<16x1024xbf16>
    %492 = vector.broadcast %469 : vector<1x1024xi32> to vector<16x1024xi32>
    %493 = arith.cmpi eq, %4, %492 : vector<16x1024xi32>
    %cst_182 = arith.constant 0.000000e+00 : f32
    %494 = vector.shape_cast %475 : vector<1x1024xf32> to vector<1x1024xf32>
    %495 = vector.broadcast %494 : vector<1x1024xf32> to vector<16x1024xf32>
    %496 = vector.broadcast %cst_182 : f32 to vector<16x1024xf32>
    %497 = arith.select %493, %495, %496 : vector<16x1024xi1>, vector<16x1024xf32>
    %c1_i32_183 = arith.constant 1 : i32
    %498 = vector.broadcast %c1_i32_183 : i32 to vector<1x1024xi32>
    %499 = arith.addi %469, %498 : vector<1x1024xi32>
    %500 = vector.broadcast %499 : vector<1x1024xi32> to vector<16x1024xi32>
    %501 = arith.cmpi eq, %4, %500 : vector<16x1024xi32>
    %cst_184 = arith.constant 0.000000e+00 : f32
    %502 = vector.shape_cast %473 : vector<1x1024xf32> to vector<1x1024xf32>
    %503 = vector.broadcast %502 : vector<1x1024xf32> to vector<16x1024xf32>
    %504 = vector.broadcast %cst_184 : f32 to vector<16x1024xf32>
    %505 = arith.select %501, %503, %504 : vector<16x1024xi1>, vector<16x1024xf32>
    %506 = arith.addf %497, %505 : vector<16x1024xf32>
    %c3_185 = arith.constant 3 : index
    %c0_186 = arith.constant 0 : index
    %c0_187 = arith.constant 0 : index
    %507 = vector.load %arg4[%c3_185, %c0_186, %c0_187] : memref<4x48x16xbf16, #tpu.memory_space<vmem>>, vector<1x48x16xbf16>
    %508 = vector.shape_cast %507 : vector<1x48x16xbf16> to vector<48x16xbf16>
    %cst_188 = arith.constant dense<0.000000e+00> : vector<48x1024xf32>
    %509 = tpu.matmul %508, %491, %cst_188 {dimension_numbers = #tpu.dot_dimension_numbers<[1], [0], [0], [1], [0, 0, 1, 1], [], []>} : vector<48x16xbf16>, vector<16x1024xbf16>, vector<48x1024xf32> -> vector<48x1024xf32>
    %510 = vector.extract_strided_slice %509 {offsets = [0, 0], sizes = [16, 1024], strides = [1, 1]} : vector<48x1024xf32> to vector<16x1024xf32>
    %511 = arith.mulf %506, %510 : vector<16x1024xf32>
    %cst_189 = arith.constant dense<0.000000e+00> : vector<1024xf32>
    %512 = vector.multi_reduction <add>, %511, %cst_189 [0] : vector<16x1024xf32> to vector<1024xf32>
    %513 = vector.shape_cast %512 : vector<1024xf32> to vector<1x1024xf32>
    %c3_190 = arith.constant 3 : index
    %c0_191 = arith.constant 0 : index
    %c0_192 = arith.constant 0 : index
    %514 = vector.load %arg5[%c3_190, %c0_191, %c0_192] : memref<4x5x1024xf32, #tpu.memory_space<vmem>>, vector<1x1x1024xf32>
    %515 = vector.shape_cast %514 : vector<1x1x1024xf32> to vector<1x1024xf32>
    %516 = vector.shape_cast %513 : vector<1x1024xf32> to vector<1x1x1024xf32>
    tpu.vector_store %arg5[%c3_190, %c0_191, %c0_192], %516 {strides = array<i32>} : memref<4x5x1024xf32, #tpu.memory_space<vmem>>, vector<1x1x1024xf32>,
    %517 = vector.extract_strided_slice %509 {offsets = [16, 0], sizes = [16, 1024], strides = [1, 1]} : vector<48x1024xf32> to vector<16x1024xf32>
    %518 = arith.mulf %506, %517 : vector<16x1024xf32>
    %cst_193 = arith.constant dense<0.000000e+00> : vector<1024xf32>
    %519 = vector.multi_reduction <add>, %518, %cst_193 [0] : vector<16x1024xf32> to vector<1024xf32>
    %520 = vector.shape_cast %519 : vector<1024xf32> to vector<1x1024xf32>
    %c3_194 = arith.constant 3 : index
    %c1_195 = arith.constant 1 : index
    %c0_196 = arith.constant 0 : index
    %521 = vector.load %arg5[%c3_194, %c1_195, %c0_196] : memref<4x5x1024xf32, #tpu.memory_space<vmem>>, vector<1x1x1024xf32>
    %522 = vector.shape_cast %521 : vector<1x1x1024xf32> to vector<1x1024xf32>
    %523 = vector.shape_cast %520 : vector<1x1024xf32> to vector<1x1x1024xf32>
    tpu.vector_store %arg5[%c3_194, %c1_195, %c0_196], %523 {strides = array<i32>} : memref<4x5x1024xf32, #tpu.memory_space<vmem>>, vector<1x1x1024xf32>,
    %524 = vector.extract_strided_slice %509 {offsets = [32, 0], sizes = [16, 1024], strides = [1, 1]} : vector<48x1024xf32> to vector<16x1024xf32>
    %525 = arith.mulf %506, %524 : vector<16x1024xf32>
    %cst_197 = arith.constant dense<0.000000e+00> : vector<1024xf32>
    %526 = vector.multi_reduction <add>, %525, %cst_197 [0] : vector<16x1024xf32> to vector<1024xf32>
    %527 = vector.shape_cast %526 : vector<1024xf32> to vector<1x1024xf32>
    %c3_198 = arith.constant 3 : index
    %c2_199 = arith.constant 2 : index
    %c0_200 = arith.constant 0 : index
    %528 = vector.load %arg5[%c3_198, %c2_199, %c0_200] : memref<4x5x1024xf32, #tpu.memory_space<vmem>>, vector<1x1x1024xf32>
    %529 = vector.shape_cast %528 : vector<1x1x1024xf32> to vector<1x1024xf32>
    %530 = vector.shape_cast %527 : vector<1x1024xf32> to vector<1x1x1024xf32>
    tpu.vector_store %arg5[%c3_198, %c2_199, %c0_200], %530 {strides = array<i32>} : memref<4x5x1024xf32, #tpu.memory_space<vmem>>, vector<1x1x1024xf32>,
    %c3_201 = arith.constant 3 : index
    %c3_202 = arith.constant 3 : index
    %c0_203 = arith.constant 0 : index
    %531 = vector.load %arg5[%c3_201, %c3_202, %c0_203] : memref<4x5x1024xf32, #tpu.memory_space<vmem>>, vector<1x1x1024xf32>
    %532 = vector.shape_cast %531 : vector<1x1x1024xf32> to vector<1x1024xf32>
    %533 = vector.shape_cast %437 : vector<1x1024xf32> to vector<1x1x1024xf32>
    tpu.vector_store %arg5[%c3_201, %c3_202, %c0_203], %533 {strides = array<i32>} : memref<4x5x1024xf32, #tpu.memory_space<vmem>>, vector<1x1x1024xf32>,
    %c3_204 = arith.constant 3 : index
    %c4_205 = arith.constant 4 : index
    %c0_206 = arith.constant 0 : index
    %534 = vector.load %arg5[%c3_204, %c4_205, %c0_206] : memref<4x5x1024xf32, #tpu.memory_space<vmem>>, vector<1x1x1024xf32>
    %535 = vector.shape_cast %534 : vector<1x1x1024xf32> to vector<1x1024xf32>
    %536 = vector.shape_cast %449 : vector<1x1024xf32> to vector<1x1x1024xf32>
    tpu.vector_store %arg5[%c3_204, %c4_205, %c0_206], %536 {strides = array<i32>} : memref<4x5x1024xf32, #tpu.memory_space<vmem>>, vector<1x1x1024xf32>,
    return
  }
  func.func @transform_0(%arg0: i32, %arg1: i32) -> (i32, i32) {
    %c0_i32 = arith.constant 0 : i32
    %c0_i32_0 = arith.constant 0 : i32
    return %c0_i32, %arg1 : i32, i32
  }
  func.func @transform_1(%arg0: i32, %arg1: i32) -> (i32, i32, i32) {
    %c0_i32 = arith.constant 0 : i32
    %c0_i32_0 = arith.constant 0 : i32
    %c0_i32_1 = arith.constant 0 : i32
    return %arg0, %c0_i32, %c0_i32_0 : i32, i32, i32
  }
  func.func @transform_2(%arg0: i32, %arg1: i32) -> (i32, i32, i32) {
    %c0_i32 = arith.constant 0 : i32
    %c0_i32_0 = arith.constant 0 : i32
    %c0_i32_1 = arith.constant 0 : i32
    return %arg0, %c0_i32, %c0_i32_0 : i32, i32, i32
  }
  func.func @transform_3(%arg0: i32, %arg1: i32) -> (i32, i32, i32) {
    %c0_i32 = arith.constant 0 : i32
    %c0_i32_0 = arith.constant 0 : i32
    return %arg0, %c0_i32, %arg1 : i32, i32, i32
  }
}

</mosaic_0001>

<llo_original>
// kernel: tpu_custom_call.1
$region0: #{tpu_custom_call.1}
  #allocation0 [shape = 'u32[]', space=smem, size = 0x4, offset = 0x4, fixed_abs, tag = 'smem constant byte address 0x4 - core index']
  #allocation1 [shape = 'u32[144,128]{1,0:T(1,128)}', space=vmem, size = 0x12000, scoped, tag = 'internal scratch']
  %s0 = inlined_call_operand.vmem [shape: f32[3,2048], index: 0, kind: input, shape index: {}]
  %s1 = inlined_call_operand.vmem [shape: f32[4,3,4], index: 1, kind: input, shape index: {}]
  %s2 = inlined_call_operand.vmem [shape: bf16[4,48,16], index: 2, kind: input, shape index: {}]
  %s3 = inlined_call_operand.vmem [shape: f32[4,5,2048], index: 3, kind: output, shape index: {}]
  %s4 = sld [smem:[#allocation0]]
  $region64: #{tpu_custom_call.1} parent=0
    _
  %s6 = ssub.s32 1, %s4
  %s7 = scalar_select 0, %s6, %s4
  $region1: #{tpu_custom_call.1} parent=0
    #allocation2 [shape = 'u8[262144]{0}', space=vmem, size = 0x40000, scoped, tag = 'output window, operand 0']
    loop: start=0, step=1, limit=4
    $region2: #{tpu_custom_call.1} parent=1 // loop_pre_header
      _
    $region3: #{tpu_custom_call.1} parent=1 // loop_header
      %s9 = sphi 0, %s13
      %p10 = scmp.ge.s32.totalorder %s9, 4
      %s16 = sphi 0, %s28
      %s17 = sphi 0, %s24
      %s18 = sphi 0, %s16
      %s19 = sphi 0, %s17
      %s20 = sphi 0, %s18
      %s21 = sphi 0, %s19
      %s31 = sphi 0, %s33
      %s34 = sphi 0, %s31
      %s35 = sphi 0, %s34
      %s51 = sphi 0, %s35
      %s57 = sphi 0, %s59
      %s60 = sphi 0, %s57
      %s61 = sphi 0, %s60
      %s77 = sphi 0, %s61
      %s83 = sphi 0, %s85
      %s86 = sphi 0, %s83
      %s87 = sphi 0, %s86
      %s103 = sphi 0, %s87
      %s111 = sphi 0, %s113
      %s114 = sphi 0, %s111
      %s115 = sphi 0, %s114
      %s131 = sphi 0, %s115
    $region4: #{tpu_custom_call.1} parent=1 // loop_header_branch
      %12 = sbr.rel (%p10) target = $region8
    $region5: #{tpu_custom_call.1} parent=1 // loop_body
      %s14 = ssub.s32 %s9, 1
      %s15 = ssub.s32 %s9, 2
      %s22 = sadd.s32 1, %s17
      %p23 = scmp.ge.s32.totalorder %s22, 2
      %s24 = scalar_select %p23, 0, %s22
      %s25 = sadd.s32 1, %s16
      %s26 = scalar_select %p23, %s25, %s16
      %p27 = scmp.ge.s32.totalorder %s26, 1
      %s28 = scalar_select %p27, 0, %s26
      %s29 = ssub.s32 %s17, %s24
      %p30 = scmp.eq.s32.totalorder %s29, 0
      %s32 = sadd.s32 %s31, 1
      %s33 = scalar_select %p30, %s31, %s32
      %p36 = pneg %p30
      %p37 = scmp.eq.s32.totalorder %s9, 1
      %p38 = por %p36, %p37
      %p39 = scmp.ne.s32.totalorder %s31, %s34
      %p40 = scmp.eq.s32.totalorder %s9, 0
      %p41 = por %p39, %p40
      %p42 = scmp.ne.s32.totalorder %s31, %s34
      %p43 = scmp.eq.s32.totalorder %s14, 1
      %p44 = por %p42, %p43
      %p45 = scmp.ne.s32.totalorder %s34, %s35
      %p46 = scmp.eq.s32.totalorder %s14, 0
      %p47 = por %p45, %p46
      %p48 = scmp.ne.s32.totalorder %s34, %s35
      %p49 = scmp.eq.s32.totalorder %s15, 1
      %p50 = por %p48, %p49
      %p52 = scmp.ne.s32.totalorder %s35, %s51
      %p53 = scmp.eq.s32.totalorder %s15, 0
      %p54 = por %p52, %p53
      %s55 = ssub.s32 %s16, %s28
      %p56 = scmp.eq.s32.totalorder %s55, 0
      %s58 = sadd.s32 %s57, 1
      %s59 = scalar_select %p56, %s57, %s58
      %p62 = pneg %p56
      %p63 = scmp.eq.s32.totalorder %s9, 1
      %p64 = por %p62, %p63
      %p65 = scmp.ne.s32.totalorder %s57, %s60
      %p66 = scmp.eq.s32.totalorder %s9, 0
      %p67 = por %p65, %p66
      %p68 = scmp.ne.s32.totalorder %s57, %s60
      %p69 = scmp.eq.s32.totalorder %s14, 1
      %p70 = por %p68, %p69
      %p71 = scmp.ne.s32.totalorder %s60, %s61
      %p72 = scmp.eq.s32.totalorder %s14, 0
      %p73 = por %p71, %p72
      %p74 = scmp.ne.s32.totalorder %s60, %s61
      %p75 = scmp.eq.s32.totalorder %s15, 1
      %p76 = por %p74, %p75
      %p78 = scmp.ne.s32.totalorder %s61, %s77
      %p79 = scmp.eq.s32.totalorder %s15, 0
      %p80 = por %p78, %p79
      %s81 = ssub.s32 %s16, %s28
      %p82 = scmp.eq.s32.totalorder %s81, 0
      %s84 = sadd.s32 %s83, 1
      %s85 = scalar_select %p82, %s83, %s84
      %p88 = pneg %p82
      %p89 = scmp.eq.s32.totalorder %s9, 1
      %p90 = por %p88, %p89
      %p91 = scmp.ne.s32.totalorder %s83, %s86
      %p92 = scmp.eq.s32.totalorder %s9, 0
      %p93 = por %p91, %p92
      %p94 = scmp.ne.s32.totalorder %s83, %s86
      %p95 = scmp.eq.s32.totalorder %s14, 1
      %p96 = por %p94, %p95
      %p97 = scmp.ne.s32.totalorder %s86, %s87
      %p98 = scmp.eq.s32.totalorder %s14, 0
      %p99 = por %p97, %p98
      %p100 = scmp.ne.s32.totalorder %s86, %s87
      %p101 = scmp.eq.s32.totalorder %s15, 1
      %p102 = por %p100, %p101
      %p104 = scmp.ne.s32.totalorder %s87, %s103
      %p105 = scmp.eq.s32.totalorder %s15, 0
      %p106 = por %p104, %p105
      %s107 = ssub.s32 %s16, %s28
      %s108 = ssub.s32 %s17, %s24
      %s109 = sor.u32 %s107, %s108
      %p110 = scmp.eq.s32.totalorder %s109, 0
      %s112 = sadd.s32 %s111, 1
      %s113 = scalar_select %p110, %s111, %s112
      %p116 = pneg %p110
      %p117 = scmp.eq.s32.totalorder %s9, 1
      %p118 = por %p116, %p117
      %p119 = scmp.ne.s32.totalorder %s111, %s114
      %p120 = scmp.eq.s32.totalorder %s9, 0
      %p121 = por %p119, %p120
      %p122 = scmp.ne.s32.totalorder %s111, %s114
      %p123 = scmp.eq.s32.totalorder %s14, 1
      %p124 = por %p122, %p123
      %p125 = scmp.ne.s32.totalorder %s114, %s115
      %p126 = scmp.eq.s32.totalorder %s14, 0
      %p127 = por %p125, %p126
      %p128 = scmp.ne.s32.totalorder %s114, %s115
      %p129 = scmp.eq.s32.totalorder %s15, 1
      %p130 = por %p128, %p129
      %p132 = scmp.ne.s32.totalorder %s115, %s131
      %p133 = scmp.eq.s32.totalorder %s15, 0
      %p134 = por %p132, %p133
      %p135 = scmp.le.s32.totalorder 1, %s9
      %p136 = scmp.lt.s32.totalorder %s9, 3
      %p137 = pnand %p135, %p136
      %p138 = pneg %p137
      // Predicated region
      $region9: #{tpu_custom_call.1} parent=5 // pred_check
        _
      $region10: #{tpu_custom_call.1} parent=5 // pred_check_branch
        %140 = sbr.rel (%p137) target = $region12
      $region11: #{tpu_custom_call.1} parent=5 // pred_region
        %s141 = ssub.s32 %s9, 1
        // Predicated region
        $region13: #{tpu_custom_call.1} parent=11 // pred_check
          %p142 = pneg %p73
        $region14: #{tpu_custom_call.1} parent=11 // pred_check_branch
          %144 = sbr.rel (%p142) target = $region16
        $region15: #{tpu_custom_call.1} parent=11 // pred_region
          %s145 = smul.u32 4, %s18
          %p146 = scmp.lt.s32.totalorder %s145, 3
          %s147 = scalar_select %p146, %s145, 3
          %s148 = smul.addr %s147, 4
          %s149 = scalar_lea.vmem %s1, %s148
          %s150 = smul.u32 4, %s18
        $region16: #{tpu_custom_call.1} parent=11 // pred_fallthru
          _
        // Predicated region
        $region17: #{tpu_custom_call.1} parent=11 // pred_check
          %p151 = pneg %p99
        $region18: #{tpu_custom_call.1} parent=11 // pred_check_branch
          %153 = sbr.rel (%p151) target = $region20
        $region19: #{tpu_custom_call.1} parent=11 // pred_region
          %s154 = smul.u32 4, %s18
          %p155 = scmp.lt.s32.totalorder %s154, 3
          %s156 = scalar_select %p155, %s154, 3
          %s157 = smul.addr %s156, 6
          %s158 = smul.addr %s157, 4
          %s159 = scalar_lea.vmem %s2, %s158
          %s160 = smul.u32 4, %s18
        $region20: #{tpu_custom_call.1} parent=11 // pred_fallthru
          _
      $region12: #{tpu_custom_call.1} parent=5 // pred_fallthru
        _
      %p161 = scmp.lt.s32.totalorder %s9, 2
      // Predicated region
      $region21: #{tpu_custom_call.1} parent=5 // pred_check
        %p162 = pneg %p161
      $region22: #{tpu_custom_call.1} parent=5 // pred_check_branch
        %164 = sbr.rel (%p162) target = $region24
      $region23: #{tpu_custom_call.1} parent=5 // pred_region
        // Predicated region
        $region25: #{tpu_custom_call.1} parent=23 // pred_check
          %p165 = pneg %p41
        $region26: #{tpu_custom_call.1} parent=23 // pred_check_branch
          %167 = sbr.rel (%p165) target = $region28
        $region27: #{tpu_custom_call.1} parent=23 // pred_region
          %s168 = smul.u32 8, %s17
          %p169 = scmp.lt.s32.totalorder %s168, 15
          %s170 = scalar_select %p169, %s168, 15
          %s171 = smul.addr %s170, 4
          %s172 = scalar_lea.vmem %s0, %s171
          %s173 = smul.u32 8, %s17
        $region28: #{tpu_custom_call.1} parent=23 // pred_fallthru
          _
      $region24: #{tpu_custom_call.1} parent=5 // pred_fallthru
        _
      %p174 = scmp.le.s32.totalorder 1, %s9
      %p175 = scmp.lt.s32.totalorder %s9, 3
      %p176 = pnand %p174, %p175
      %p177 = pneg %p176
      // Predicated region
      $region29: #{tpu_custom_call.1} parent=5 // pred_check
        _
      $region30: #{tpu_custom_call.1} parent=5 // pred_check_branch
        %179 = sbr.rel (%p176) target = $region32
      $region31: #{tpu_custom_call.1} parent=5 // pred_region
        %s180 = ssub.s32 %s9, 1
        %s181 = smul.u32 8, %s19
        %p182 = scmp.lt.s32.totalorder %s181, 15
        %s183 = scalar_select %p182, %s181, 15
        %s184 = smul.addr %s183, 4
        %s185 = scalar_lea.vmem %s0, %s184
        %p186 = pneg %p47
        %p187 = pneg %p44
        %s188 = smul.u32 4, %s18
        %p189 = scmp.lt.s32.totalorder %s188, 3
        %s190 = scalar_select %p189, %s188, 3
        %s191 = smul.addr %s190, 4
        %s192 = scalar_lea.vmem %s1, %s191
        %p193 = pneg %p73
        %p194 = pneg %p70
        %s195 = smul.u32 4, %s18
        %p196 = scmp.lt.s32.totalorder %s195, 3
        %s197 = scalar_select %p196, %s195, 3
        %s198 = smul.addr %s197, 6
        %s199 = smul.addr %s198, 4
        %s200 = scalar_lea.vmem %s2, %s199
        %p201 = pneg %p99
        %p202 = pneg %p96
        %p203 = pneg %p127
        %p204 = pneg %p124
        %s205 = sand.u32 %s114, 1
        %s206 = sand.u32 %s114, 1
        %s207 = smul.addr %s206, 256
        %s208 = scalar_lea.vmem [#allocation2], %s207
        %s209 = smul.u32 8, %s19
        %p210 = scmp.lt.s32.totalorder %s209, 15
        %s211 = scalar_select %p210, %s209, 15
        %s212 = smul.addr %s211, 4
        %s213 = scalar_lea.vmem %s0, %s212
        %s214 = smul.u32 8, %s19
        %s215 = smul.u32 4, %s18
        %p216 = scmp.lt.s32.totalorder %s215, 3
        %s217 = scalar_select %p216, %s215, 3
        %s218 = smul.addr %s217, 4
        %s219 = scalar_lea.vmem %s1, %s218
        %s220 = smul.u32 4, %s18
        %s221 = smul.u32 4, %s18
        %p222 = scmp.lt.s32.totalorder %s221, 3
        %s223 = scalar_select %p222, %s221, 3
        %s224 = smul.addr %s223, 6
        %s225 = smul.addr %s224, 4
        %s226 = scalar_lea.vmem %s2, %s225
        %s227 = smul.u32 4, %s18
        %s228 = smul.u32 4, %s18
        %s229 = smul.u32 8, %s19
        %v231 = vld [vmem:[%s213] ss:$4 sm:$0xff]
        %s232 = scalar_lea.vmem %s213, 1
        %v233 = vld [vmem:[%s232] ss:$4 sm:$0xff]
        %s234 = scalar_lea.vmem %s213, 2
        %v235 = vld [vmem:[%s234] ss:$4 sm:$0xff]
        %v236 = vlaneseq
        %v237 = vshrl.u32 %v236, 7
        %v238 = vadd.s32 %v237, 8
        %v239 = vld [vmem:[%s219] sm:$0x7]
        %241 = vset.pattern.permute.xlu0 0
        %242 = vperm.xlu0 %241, %v239
        %v243 = vpop.permute.xlu0 %242
        %v246 = vlaneseq
        %v247 = vshrl.u32 %v246, 7
        %v248 = vsub.s32 0, %v247
        %v249 = vrot.slane %v231, %v248
        %v250 = vlaneseq
        %v251 = vshrl.u32 %v250, 7
        %v252 = vsub.s32 1, %v251
        %v253 = vrot.slane %v231, %v252
        %v254 = vlaneseq
        %v255 = vshrl.u32 %v254, 7
        %v256 = vsub.s32 2, %v255
        %v257 = vrot.slane %v231, %v256
        %v258 = vlaneseq
        %v259 = vshrl.u32 %v258, 7
        %v260 = vsub.s32 3, %v259
        %v261 = vrot.slane %v231, %v260
        %v262 = vlaneseq
        %v263 = vshrl.u32 %v262, 7
        %v264 = vsub.s32 4, %v263
        %v265 = vrot.slane %v231, %v264
        %v266 = vlaneseq
        %v267 = vshrl.u32 %v266, 7
        %v268 = vsub.s32 5, %v267
        %v269 = vrot.slane %v231, %v268
        %v270 = vlaneseq
        %v271 = vshrl.u32 %v270, 7
        %v272 = vsub.s32 6, %v271
        %v273 = vrot.slane %v231, %v272
        %v274 = vlaneseq
        %v275 = vshrl.u32 %v274, 7
        %v276 = vsub.s32 7, %v275
        %v277 = vrot.slane %v231, %v276
        %v286 = vmul.f32 %v243, %v249
        %v287 = vmul.f32 %v243, %v253
        %v288 = vmul.f32 %v243, %v257
        %v289 = vmul.f32 %v243, %v261
        %v290 = vmul.f32 %v243, %v265
        %v291 = vmul.f32 %v243, %v269
        %v292 = vmul.f32 %v243, %v273
        %v293 = vmul.f32 %v243, %v277
        %294 = vset.pattern.permute.xlu0 1
        %295 = vperm.xlu0 %294, %v239
        %v296 = vpop.permute.xlu0 %295
        %v299 = vlaneseq
        %v300 = vshrl.u32 %v299, 7
        %v301 = vsub.s32 0, %v300
        %v302 = vrot.slane %v233, %v301
        %v303 = vlaneseq
        %v304 = vshrl.u32 %v303, 7
        %v305 = vsub.s32 1, %v304
        %v306 = vrot.slane %v233, %v305
        %v307 = vlaneseq
        %v308 = vshrl.u32 %v307, 7
        %v309 = vsub.s32 2, %v308
        %v310 = vrot.slane %v233, %v309
        %v311 = vlaneseq
        %v312 = vshrl.u32 %v311, 7
        %v313 = vsub.s32 3, %v312
        %v314 = vrot.slane %v233, %v313
        %v315 = vlaneseq
        %v316 = vshrl.u32 %v315, 7
        %v317 = vsub.s32 4, %v316
        %v318 = vrot.slane %v233, %v317
        %v319 = vlaneseq
        %v320 = vshrl.u32 %v319, 7
        %v321 = vsub.s32 5, %v320
        %v322 = vrot.slane %v233, %v321
        %v323 = vlaneseq
        %v324 = vshrl.u32 %v323, 7
        %v325 = vsub.s32 6, %v324
        %v326 = vrot.slane %v233, %v325
        %v327 = vlaneseq
        %v328 = vshrl.u32 %v327, 7
        %v329 = vsub.s32 7, %v328
        %v330 = vrot.slane %v233, %v329
        %v339 = vmul.f32 %v296, %v302
        %v340 = vmul.f32 %v296, %v306
        %v341 = vmul.f32 %v296, %v310
        %v342 = vmul.f32 %v296, %v314
        %v343 = vmul.f32 %v296, %v318
        %v344 = vmul.f32 %v296, %v322
        %v345 = vmul.f32 %v296, %v326
        %v346 = vmul.f32 %v296, %v330
        %v347 = vadd.f32 %v286, %v339
        %v348 = vadd.f32 %v287, %v340
        %v349 = vadd.f32 %v288, %v341
        %v350 = vadd.f32 %v289, %v342
        %v351 = vadd.f32 %v290, %v343
        %v352 = vadd.f32 %v291, %v344
        %v353 = vadd.f32 %v292, %v345
        %v354 = vadd.f32 %v293, %v346
        %355 = vset.pattern.permute.xlu0 2
        %356 = vperm.xlu0 %355, %v239
        %v357 = vpop.permute.xlu0 %356
        %v360 = vlaneseq
        %v361 = vshrl.u32 %v360, 7
        %v362 = vsub.s32 0, %v361
        %v363 = vrot.slane %v235, %v362
        %v364 = vlaneseq
        %v365 = vshrl.u32 %v364, 7
        %v366 = vsub.s32 1, %v365
        %v367 = vrot.slane %v235, %v366
        %v368 = vlaneseq
        %v369 = vshrl.u32 %v368, 7
        %v370 = vsub.s32 2, %v369
        %v371 = vrot.slane %v235, %v370
        %v372 = vlaneseq
        %v373 = vshrl.u32 %v372, 7
        %v374 = vsub.s32 3, %v373
        %v375 = vrot.slane %v235, %v374
        %v376 = vlaneseq
        %v377 = vshrl.u32 %v376, 7
        %v378 = vsub.s32 4, %v377
        %v379 = vrot.slane %v235, %v378
        %v380 = vlaneseq
        %v381 = vshrl.u32 %v380, 7
        %v382 = vsub.s32 5, %v381
        %v383 = vrot.slane %v235, %v382
        %v384 = vlaneseq
        %v385 = vshrl.u32 %v384, 7
        %v386 = vsub.s32 6, %v385
        %v387 = vrot.slane %v235, %v386
        %v388 = vlaneseq
        %v389 = vshrl.u32 %v388, 7
        %v390 = vsub.s32 7, %v389
        %v391 = vrot.slane %v235, %v390
        %v400 = vmul.f32 %v357, %v363
        %v401 = vmul.f32 %v357, %v367
        %v402 = vmul.f32 %v357, %v371
        %v403 = vmul.f32 %v357, %v375
        %v404 = vmul.f32 %v357, %v379
        %v405 = vmul.f32 %v357, %v383
        %v406 = vmul.f32 %v357, %v387
        %v407 = vmul.f32 %v357, %v391
        %v408 = vadd.f32 %v347, %v400
        %v409 = vadd.f32 %v348, %v401
        %v410 = vadd.f32 %v349, %v402
        %v411 = vadd.f32 %v350, %v403
        %v412 = vadd.f32 %v351, %v404
        %v413 = vadd.f32 %v352, %v405
        %v414 = vadd.f32 %v353, %v406
        %v415 = vadd.f32 %v354, %v407
        %416 = vset.pattern.permute.xlu0 3
        %417 = vperm.xlu0 %416, %v239
        %v418 = vpop.permute.xlu0 %417
        %v420 = vadd.f32 %v408, %v418
        %v421 = vadd.f32 %v409, %v418
        %v422 = vadd.f32 %v410, %v418
        %v423 = vadd.f32 %v411, %v418
        %v424 = vadd.f32 %v412, %v418
        %v425 = vadd.f32 %v413, %v418
        %v426 = vadd.f32 %v414, %v418
        %v427 = vadd.f32 %v415, %v418
        %v428 = vrcp.pop %v420
        %v429 = vmul.f32 1.0, %v428
        %v430 = vrcp.pop %v421
        %v431 = vmul.f32 1.0, %v430
        %v432 = vrcp.pop %v422
        %v433 = vmul.f32 1.0, %v432
        %v434 = vrcp.pop %v423
        %v435 = vmul.f32 1.0, %v434
        %v436 = vrcp.pop %v424
        %v437 = vmul.f32 1.0, %v436
        %v438 = vrcp.pop %v425
        %v439 = vmul.f32 1.0, %v438
        %v440 = vrcp.pop %v426
        %v441 = vmul.f32 1.0, %v440
        %v442 = vrcp.pop %v427
        %v443 = vmul.f32 1.0, %v442
        %v452 = vrot.slane %v429, 2
        %v453 = vrot.slane %v431, 2
        %v454 = vrot.slane %v433, 2
        %v455 = vrot.slane %v435, 2
        %v456 = vrot.slane %v437, 2
        %v457 = vrot.slane %v439, 2
        %v458 = vrot.slane %v441, 2
        %v459 = vrot.slane %v443, 2
        %v468 = vmul.f32 %v420, %v452
        %v469 = vmul.f32 %v421, %v453
        %v470 = vmul.f32 %v422, %v454
        %v471 = vmul.f32 %v423, %v455
        %v472 = vmul.f32 %v424, %v456
        %v473 = vmul.f32 %v425, %v457
        %v474 = vmul.f32 %v426, %v458
        %v475 = vmul.f32 %v427, %v459
        %v476 = vmul.f32 %v468, 0.0625
        %v477 = vmul.f32 %v469, 0.0625
        %v478 = vmul.f32 %v470, 0.0625
        %v479 = vmul.f32 %v471, 0.0625
        %v480 = vmul.f32 %v472, 0.0625
        %v481 = vmul.f32 %v473, 0.0625
        %v482 = vmul.f32 %v474, 0.0625
        %v483 = vmul.f32 %v475, 0.0625
        %v484 = vmax.f32 %v476, 0.0
        %v485 = vmax.f32 %v477, 0.0
        %v486 = vmax.f32 %v478, 0.0
        %v487 = vmax.f32 %v479, 0.0
        %v488 = vmax.f32 %v480, 0.0
        %v489 = vmax.f32 %v481, 0.0
        %v490 = vmax.f32 %v482, 0.0
        %v491 = vmax.f32 %v483, 0.0
        %v492 = vmin.f32 %v484, 1.0
        %v493 = vmin.f32 %v485, 1.0
        %v494 = vmin.f32 %v486, 1.0
        %v495 = vmin.f32 %v487, 1.0
        %v496 = vmin.f32 %v488, 1.0
        %v497 = vmin.f32 %v489, 1.0
        %v498 = vmin.f32 %v490, 1.0
        %v499 = vmin.f32 %v491, 1.0
        %v500 = vmul.f32 %v492, 2.0
        %v501 = vmul.f32 %v493, 2.0
        %v502 = vmul.f32 %v494, 2.0
        %v503 = vmul.f32 %v495, 2.0
        %v504 = vmul.f32 %v496, 2.0
        %v505 = vmul.f32 %v497, 2.0
        %v506 = vmul.f32 %v498, 2.0
        %v507 = vmul.f32 %v499, 2.0
        %v508 = vsub.f32 %v500, 1.0
        %v509 = vsub.f32 %v501, 1.0
        %v510 = vsub.f32 %v502, 1.0
        %v511 = vsub.f32 %v503, 1.0
        %v512 = vsub.f32 %v504, 1.0
        %v513 = vsub.f32 %v505, 1.0
        %v514 = vsub.f32 %v506, 1.0
        %v515 = vsub.f32 %v507, 1.0
        %v516 = vrot.slane %v429, 1
        %v517 = vrot.slane %v431, 1
        %v518 = vrot.slane %v433, 1
        %v519 = vrot.slane %v435, 1
        %v520 = vrot.slane %v437, 1
        %v521 = vrot.slane %v439, 1
        %v522 = vrot.slane %v441, 1
        %v523 = vrot.slane %v443, 1
        %v532 = vmul.f32 %v420, %v516
        %v533 = vmul.f32 %v421, %v517
        %v534 = vmul.f32 %v422, %v518
        %v535 = vmul.f32 %v423, %v519
        %v536 = vmul.f32 %v424, %v520
        %v537 = vmul.f32 %v425, %v521
        %v538 = vmul.f32 %v426, %v522
        %v539 = vmul.f32 %v427, %v523
        %v540 = vmul.f32 %v532, 0.0625
        %v541 = vmul.f32 %v533, 0.0625
        %v542 = vmul.f32 %v534, 0.0625
        %v543 = vmul.f32 %v535, 0.0625
        %v544 = vmul.f32 %v536, 0.0625
        %v545 = vmul.f32 %v537, 0.0625
        %v546 = vmul.f32 %v538, 0.0625
        %v547 = vmul.f32 %v539, 0.0625
        %v548 = vmax.f32 %v540, 0.0
        %v549 = vmax.f32 %v541, 0.0
        %v550 = vmax.f32 %v542, 0.0
        %v551 = vmax.f32 %v543, 0.0
        %v552 = vmax.f32 %v544, 0.0
        %v553 = vmax.f32 %v545, 0.0
        %v554 = vmax.f32 %v546, 0.0
        %v555 = vmax.f32 %v547, 0.0
        %v556 = vmin.f32 %v548, 1.0
        %v557 = vmin.f32 %v549, 1.0
        %v558 = vmin.f32 %v550, 1.0
        %v559 = vmin.f32 %v551, 1.0
        %v560 = vmin.f32 %v552, 1.0
        %v561 = vmin.f32 %v553, 1.0
        %v562 = vmin.f32 %v554, 1.0
        %v563 = vmin.f32 %v555, 1.0
        %v564 = vmul.f32 %v556, 2.0
        %v565 = vmul.f32 %v557, 2.0
        %v566 = vmul.f32 %v558, 2.0
        %v567 = vmul.f32 %v559, 2.0
        %v568 = vmul.f32 %v560, 2.0
        %v569 = vmul.f32 %v561, 2.0
        %v570 = vmul.f32 %v562, 2.0
        %v571 = vmul.f32 %v563, 2.0
        %v572 = vsub.f32 %v564, 1.0
        %v573 = vsub.f32 %v565, 1.0
        %v574 = vsub.f32 %v566, 1.0
        %v575 = vsub.f32 %v567, 1.0
        %v576 = vsub.f32 %v568, 1.0
        %v577 = vsub.f32 %v569, 1.0
        %v578 = vsub.f32 %v570, 1.0
        %v579 = vsub.f32 %v571, 1.0
        %v580 = vadd.f32 %v508, 1.0
        %v581 = vadd.f32 %v509, 1.0
        %v582 = vadd.f32 %v510, 1.0
        %v583 = vadd.f32 %v511, 1.0
        %v584 = vadd.f32 %v512, 1.0
        %v585 = vadd.f32 %v513, 1.0
        %v586 = vadd.f32 %v514, 1.0
        %v587 = vadd.f32 %v515, 1.0
        %v588 = vmul.f32 %v580, 16.0
        %v589 = vmul.f32 %v581, 16.0
        %v590 = vmul.f32 %v582, 16.0
        %v591 = vmul.f32 %v583, 16.0
        %v592 = vmul.f32 %v584, 16.0
        %v593 = vmul.f32 %v585, 16.0
        %v594 = vmul.f32 %v586, 16.0
        %v595 = vmul.f32 %v587, 16.0
        %v596 = vsub.f32 %v588, 1.0
        %v597 = vsub.f32 %v589, 1.0
        %v598 = vsub.f32 %v590, 1.0
        %v599 = vsub.f32 %v591, 1.0
        %v600 = vsub.f32 %v592, 1.0
        %v601 = vsub.f32 %v593, 1.0
        %v602 = vsub.f32 %v594, 1.0
        %v603 = vsub.f32 %v595, 1.0
        %v604 = vmul.f32 %v596, 0.5
        %v605 = vmul.f32 %v597, 0.5
        %v606 = vmul.f32 %v598, 0.5
        %v607 = vmul.f32 %v599, 0.5
        %v608 = vmul.f32 %v600, 0.5
        %v609 = vmul.f32 %v601, 0.5
        %v610 = vmul.f32 %v602, 0.5
        %v611 = vmul.f32 %v603, 0.5
        %v612 = vadd.f32 %v572, 1.0
        %v613 = vadd.f32 %v573, 1.0
        %v614 = vadd.f32 %v574, 1.0
        %v615 = vadd.f32 %v575, 1.0
        %v616 = vadd.f32 %v576, 1.0
        %v617 = vadd.f32 %v577, 1.0
        %v618 = vadd.f32 %v578, 1.0
        %v619 = vadd.f32 %v579, 1.0
        %v620 = vmul.f32 %v612, 16.0
        %v621 = vmul.f32 %v613, 16.0
        %v622 = vmul.f32 %v614, 16.0
        %v623 = vmul.f32 %v615, 16.0
        %v624 = vmul.f32 %v616, 16.0
        %v625 = vmul.f32 %v617, 16.0
        %v626 = vmul.f32 %v618, 16.0
        %v627 = vmul.f32 %v619, 16.0
        %v628 = vsub.f32 %v620, 1.0
        %v629 = vsub.f32 %v621, 1.0
        %v630 = vsub.f32 %v622, 1.0
        %v631 = vsub.f32 %v623, 1.0
        %v632 = vsub.f32 %v624, 1.0
        %v633 = vsub.f32 %v625, 1.0
        %v634 = vsub.f32 %v626, 1.0
        %v635 = vsub.f32 %v627, 1.0
        %v636 = vmul.f32 %v628, 0.5
        %v637 = vmul.f32 %v629, 0.5
        %v638 = vmul.f32 %v630, 0.5
        %v639 = vmul.f32 %v631, 0.5
        %v640 = vmul.f32 %v632, 0.5
        %v641 = vmul.f32 %v633, 0.5
        %v642 = vmul.f32 %v634, 0.5
        %v643 = vmul.f32 %v635, 0.5
        %v644 = vfloor.f32 %v604
        %v645 = vfloor.f32 %v605
        %v646 = vfloor.f32 %v606
        %v647 = vfloor.f32 %v607
        %v648 = vfloor.f32 %v608
        %v649 = vfloor.f32 %v609
        %v650 = vfloor.f32 %v610
        %v651 = vfloor.f32 %v611
        %v652 = vfloor.f32 %v636
        %v653 = vfloor.f32 %v637
        %v654 = vfloor.f32 %v638
        %v655 = vfloor.f32 %v639
        %v656 = vfloor.f32 %v640
        %v657 = vfloor.f32 %v641
        %v658 = vfloor.f32 %v642
        %v659 = vfloor.f32 %v643
        %v660 = vcvt.f32.s32.to.zero.pseudo %v644
        %v661 = vcvt.f32.s32.to.zero.pseudo %v645
        %v662 = vcvt.f32.s32.to.zero.pseudo %v646
        %v663 = vcvt.f32.s32.to.zero.pseudo %v647
        %v664 = vcvt.f32.s32.to.zero.pseudo %v648
        %v665 = vcvt.f32.s32.to.zero.pseudo %v649
        %v666 = vcvt.f32.s32.to.zero.pseudo %v650
        %v667 = vcvt.f32.s32.to.zero.pseudo %v651
        %v668 = vcvt.f32.s32.to.zero.pseudo %v652
        %v669 = vcvt.f32.s32.to.zero.pseudo %v653
        %v670 = vcvt.f32.s32.to.zero.pseudo %v654
        %v671 = vcvt.f32.s32.to.zero.pseudo %v655
        %v672 = vcvt.f32.s32.to.zero.pseudo %v656
        %v673 = vcvt.f32.s32.to.zero.pseudo %v657
        %v674 = vcvt.f32.s32.to.zero.pseudo %v658
        %v675 = vcvt.f32.s32.to.zero.pseudo %v659
        %v676 = vsub.f32 %v604, %v644
        %v677 = vsub.f32 %v605, %v645
        %v678 = vsub.f32 %v606, %v646
        %v679 = vsub.f32 %v607, %v647
        %v680 = vsub.f32 %v608, %v648
        %v681 = vsub.f32 %v609, %v649
        %v682 = vsub.f32 %v610, %v650
        %v683 = vsub.f32 %v611, %v651
        %v684 = vsub.f32 1.0, %v676
        %v685 = vsub.f32 1.0, %v677
        %v686 = vsub.f32 1.0, %v678
        %v687 = vsub.f32 1.0, %v679
        %v688 = vsub.f32 1.0, %v680
        %v689 = vsub.f32 1.0, %v681
        %v690 = vsub.f32 1.0, %v682
        %v691 = vsub.f32 1.0, %v683
        %v692 = vsub.f32 %v636, %v652
        %v693 = vsub.f32 %v637, %v653
        %v694 = vsub.f32 %v638, %v654
        %v695 = vsub.f32 %v639, %v655
        %v696 = vsub.f32 %v640, %v656
        %v697 = vsub.f32 %v641, %v657
        %v698 = vsub.f32 %v642, %v658
        %v699 = vsub.f32 %v643, %v659
        %v700 = vsub.f32 1.0, %v692
        %v701 = vsub.f32 1.0, %v693
        %v702 = vsub.f32 1.0, %v694
        %v703 = vsub.f32 1.0, %v695
        %v704 = vsub.f32 1.0, %v696
        %v705 = vsub.f32 1.0, %v697
        %v706 = vsub.f32 1.0, %v698
        %v707 = vsub.f32 1.0, %v699
        %v708 = vlaneseq
        %v709 = vshrl.u32 %v708, 7
        %v710 = vsub.s32 0, %v709
        %v711 = vrot.slane %v660, %v710
        %v712 = vlaneseq
        %v713 = vshrl.u32 %v712, 7
        %v714 = vsub.s32 0, %v713
        %v715 = vrot.slane %v661, %v714
        %v716 = vlaneseq
        %v717 = vshrl.u32 %v716, 7
        %v718 = vsub.s32 0, %v717
        %v719 = vrot.slane %v662, %v718
        %v720 = vlaneseq
        %v721 = vshrl.u32 %v720, 7
        %v722 = vsub.s32 0, %v721
        %v723 = vrot.slane %v663, %v722
        %v724 = vlaneseq
        %v725 = vshrl.u32 %v724, 7
        %v726 = vsub.s32 0, %v725
        %v727 = vrot.slane %v664, %v726
        %v728 = vlaneseq
        %v729 = vshrl.u32 %v728, 7
        %v730 = vsub.s32 0, %v729
        %v731 = vrot.slane %v665, %v730
        %v732 = vlaneseq
        %v733 = vshrl.u32 %v732, 7
        %v734 = vsub.s32 0, %v733
        %v735 = vrot.slane %v666, %v734
        %v736 = vlaneseq
        %v737 = vshrl.u32 %v736, 7
        %v738 = vsub.s32 0, %v737
        %v739 = vrot.slane %v667, %v738
        %vm740 = vcmp.eq.s32.totalorder %v237, %v711
        %vm741 = vcmp.eq.s32.totalorder %v237, %v715
        %vm742 = vcmp.eq.s32.totalorder %v237, %v719
        %vm743 = vcmp.eq.s32.totalorder %v237, %v723
        %vm744 = vcmp.eq.s32.totalorder %v237, %v727
        %vm745 = vcmp.eq.s32.totalorder %v237, %v731
        %vm746 = vcmp.eq.s32.totalorder %v237, %v735
        %vm747 = vcmp.eq.s32.totalorder %v237, %v739
        %vm748 = vcmp.eq.s32.totalorder %v238, %v711
        %vm749 = vcmp.eq.s32.totalorder %v238, %v715
        %vm750 = vcmp.eq.s32.totalorder %v238, %v719
        %vm751 = vcmp.eq.s32.totalorder %v238, %v723
        %vm752 = vcmp.eq.s32.totalorder %v238, %v727
        %vm753 = vcmp.eq.s32.totalorder %v238, %v731
        %vm754 = vcmp.eq.s32.totalorder %v238, %v735
        %vm755 = vcmp.eq.s32.totalorder %v238, %v739
        %v756 = vlaneseq
        %v757 = vshrl.u32 %v756, 7
        %v758 = vsub.s32 0, %v757
        %v759 = vrot.slane %v684, %v758
        %v760 = vlaneseq
        %v761 = vshrl.u32 %v760, 7
        %v762 = vsub.s32 0, %v761
        %v763 = vrot.slane %v685, %v762
        %v764 = vlaneseq
        %v765 = vshrl.u32 %v764, 7
        %v766 = vsub.s32 0, %v765
        %v767 = vrot.slane %v686, %v766
        %v768 = vlaneseq
        %v769 = vshrl.u32 %v768, 7
        %v770 = vsub.s32 0, %v769
        %v771 = vrot.slane %v687, %v770
        %v772 = vlaneseq
        %v773 = vshrl.u32 %v772, 7
        %v774 = vsub.s32 0, %v773
        %v775 = vrot.slane %v688, %v774
        %v776 = vlaneseq
        %v777 = vshrl.u32 %v776, 7
        %v778 = vsub.s32 0, %v777
        %v779 = vrot.slane %v689, %v778
        %v780 = vlaneseq
        %v781 = vshrl.u32 %v780, 7
        %v782 = vsub.s32 0, %v781
        %v783 = vrot.slane %v690, %v782
        %v784 = vlaneseq
        %v785 = vshrl.u32 %v784, 7
        %v786 = vsub.s32 0, %v785
        %v787 = vrot.slane %v691, %v786
        %v788 = vsel %vm740, %v759, 0.0
        %v789 = vsel %vm741, %v763, 0.0
        %v790 = vsel %vm742, %v767, 0.0
        %v791 = vsel %vm743, %v771, 0.0
        %v792 = vsel %vm744, %v775, 0.0
        %v793 = vsel %vm745, %v779, 0.0
        %v794 = vsel %vm746, %v783, 0.0
        %v795 = vsel %vm747, %v787, 0.0
        %v796 = vsel %vm748, %v759, 0.0
        %v797 = vsel %vm749, %v763, 0.0
        %v798 = vsel %vm750, %v767, 0.0
        %v799 = vsel %vm751, %v771, 0.0
        %v800 = vsel %vm752, %v775, 0.0
        %v801 = vsel %vm753, %v779, 0.0
        %v802 = vsel %vm754, %v783, 0.0
        %v803 = vsel %vm755, %v787, 0.0
        %v804 = vadd.s32 %v660, 1
        %v805 = vadd.s32 %v661, 1
        %v806 = vadd.s32 %v662, 1
        %v807 = vadd.s32 %v663, 1
        %v808 = vadd.s32 %v664, 1
        %v809 = vadd.s32 %v665, 1
        %v810 = vadd.s32 %v666, 1
        %v811 = vadd.s32 %v667, 1
        %v812 = vlaneseq
        %v813 = vshrl.u32 %v812, 7
        %v814 = vsub.s32 0, %v813
        %v815 = vrot.slane %v804, %v814
        %v816 = vlaneseq
        %v817 = vshrl.u32 %v816, 7
        %v818 = vsub.s32 0, %v817
        %v819 = vrot.slane %v805, %v818
        %v820 = vlaneseq
        %v821 = vshrl.u32 %v820, 7
        %v822 = vsub.s32 0, %v821
        %v823 = vrot.slane %v806, %v822
        %v824 = vlaneseq
        %v825 = vshrl.u32 %v824, 7
        %v826 = vsub.s32 0, %v825
        %v827 = vrot.slane %v807, %v826
        %v828 = vlaneseq
        %v829 = vshrl.u32 %v828, 7
        %v830 = vsub.s32 0, %v829
        %v831 = vrot.slane %v808, %v830
        %v832 = vlaneseq
        %v833 = vshrl.u32 %v832, 7
        %v834 = vsub.s32 0, %v833
        %v835 = vrot.slane %v809, %v834
        %v836 = vlaneseq
        %v837 = vshrl.u32 %v836, 7
        %v838 = vsub.s32 0, %v837
        %v839 = vrot.slane %v810, %v838
        %v840 = vlaneseq
        %v841 = vshrl.u32 %v840, 7
        %v842 = vsub.s32 0, %v841
        %v843 = vrot.slane %v811, %v842
        %vm844 = vcmp.eq.s32.totalorder %v237, %v815
        %vm845 = vcmp.eq.s32.totalorder %v237, %v819
        %vm846 = vcmp.eq.s32.totalorder %v237, %v823
        %vm847 = vcmp.eq.s32.totalorder %v237, %v827
        %vm848 = vcmp.eq.s32.totalorder %v237, %v831
        %vm849 = vcmp.eq.s32.totalorder %v237, %v835
        %vm850 = vcmp.eq.s32.totalorder %v237, %v839
        %vm851 = vcmp.eq.s32.totalorder %v237, %v843
        %vm852 = vcmp.eq.s32.totalorder %v238, %v815
        %vm853 = vcmp.eq.s32.totalorder %v238, %v819
        %vm854 = vcmp.eq.s32.totalorder %v238, %v823
        %vm855 = vcmp.eq.s32.totalorder %v238, %v827
        %vm856 = vcmp.eq.s32.totalorder %v238, %v831
        %vm857 = vcmp.eq.s32.totalorder %v238, %v835
        %vm858 = vcmp.eq.s32.totalorder %v238, %v839
        %vm859 = vcmp.eq.s32.totalorder %v238, %v843
        %v860 = vlaneseq
        %v861 = vshrl.u32 %v860, 7
        %v862 = vsub.s32 0, %v861
        %v863 = vrot.slane %v676, %v862
        %v864 = vlaneseq
        %v865 = vshrl.u32 %v864, 7
        %v866 = vsub.s32 0, %v865
        %v867 = vrot.slane %v677, %v866
        %v868 = vlaneseq
        %v869 = vshrl.u32 %v868, 7
        %v870 = vsub.s32 0, %v869
        %v871 = vrot.slane %v678, %v870
        %v872 = vlaneseq
        %v873 = vshrl.u32 %v872, 7
        %v874 = vsub.s32 0, %v873
        %v875 = vrot.slane %v679, %v874
        %v876 = vlaneseq
        %v877 = vshrl.u32 %v876, 7
        %v878 = vsub.s32 0, %v877
        %v879 = vrot.slane %v680, %v878
        %v880 = vlaneseq
        %v881 = vshrl.u32 %v880, 7
        %v882 = vsub.s32 0, %v881
        %v883 = vrot.slane %v681, %v882
        %v884 = vlaneseq
        %v885 = vshrl.u32 %v884, 7
        %v886 = vsub.s32 0, %v885
        %v887 = vrot.slane %v682, %v886
        %v888 = vlaneseq
        %v889 = vshrl.u32 %v888, 7
        %v890 = vsub.s32 0, %v889
        %v891 = vrot.slane %v683, %v890
        %v892 = vsel %vm844, %v863, 0.0
        %v893 = vsel %vm845, %v867, 0.0
        %v894 = vsel %vm846, %v871, 0.0
        %v895 = vsel %vm847, %v875, 0.0
        %v896 = vsel %vm848, %v879, 0.0
        %v897 = vsel %vm849, %v883, 0.0
        %v898 = vsel %vm850, %v887, 0.0
        %v899 = vsel %vm851, %v891, 0.0
        %v900 = vsel %vm852, %v863, 0.0
        %v901 = vsel %vm853, %v867, 0.0
        %v902 = vsel %vm854, %v871, 0.0
        %v903 = vsel %vm855, %v875, 0.0
        %v904 = vsel %vm856, %v879, 0.0
        %v905 = vsel %vm857, %v883, 0.0
        %v906 = vsel %vm858, %v887, 0.0
        %v907 = vsel %vm859, %v891, 0.0
        %v908 = vadd.f32 %v788, %v892
        %v909 = vadd.f32 %v789, %v893
        %v910 = vadd.f32 %v790, %v894
        %v911 = vadd.f32 %v791, %v895
        %v912 = vadd.f32 %v792, %v896
        %v913 = vadd.f32 %v793, %v897
        %v914 = vadd.f32 %v794, %v898
        %v915 = vadd.f32 %v795, %v899
        %v916 = vadd.f32 %v796, %v900
        %v917 = vadd.f32 %v797, %v901
        %v918 = vadd.f32 %v798, %v902
        %v919 = vadd.f32 %v799, %v903
        %v920 = vadd.f32 %v800, %v904
        %v921 = vadd.f32 %v801, %v905
        %v922 = vadd.f32 %v802, %v906
        %v923 = vadd.f32 %v803, %v907
        %v924 = vpack.c.bf16 %v916, %v908
        %v925 = vpack.c.bf16 %v917, %v909
        %v926 = vpack.c.bf16 %v918, %v910
        %v927 = vpack.c.bf16 %v919, %v911
        %v928 = vpack.c.bf16 %v920, %v912
        %v929 = vpack.c.bf16 %v921, %v913
        %v930 = vpack.c.bf16 %v922, %v914
        %v931 = vpack.c.bf16 %v923, %v915
        %v932 = vlaneseq
        %v933 = vshrl.u32 %v932, 7
        %v934 = vsub.s32 1, %v933
        %v935 = vrot.slane %v668, %v934
        %v936 = vlaneseq
        %v937 = vshrl.u32 %v936, 7
        %v938 = vsub.s32 1, %v937
        %v939 = vrot.slane %v669, %v938
        %v940 = vlaneseq
        %v941 = vshrl.u32 %v940, 7
        %v942 = vsub.s32 1, %v941
        %v943 = vrot.slane %v670, %v942
        %v944 = vlaneseq
        %v945 = vshrl.u32 %v944, 7
        %v946 = vsub.s32 1, %v945
        %v947 = vrot.slane %v671, %v946
        %v948 = vlaneseq
        %v949 = vshrl.u32 %v948, 7
        %v950 = vsub.s32 1, %v949
        %v951 = vrot.slane %v672, %v950
        %v952 = vlaneseq
        %v953 = vshrl.u32 %v952, 7
        %v954 = vsub.s32 1, %v953
        %v955 = vrot.slane %v673, %v954
        %v956 = vlaneseq
        %v957 = vshrl.u32 %v956, 7
        %v958 = vsub.s32 1, %v957
        %v959 = vrot.slane %v674, %v958
        %v960 = vlaneseq
        %v961 = vshrl.u32 %v960, 7
        %v962 = vsub.s32 1, %v961
        %v963 = vrot.slane %v675, %v962
        %vm964 = vcmp.eq.s32.totalorder %v237, %v935
        %vm965 = vcmp.eq.s32.totalorder %v237, %v939
        %vm966 = vcmp.eq.s32.totalorder %v237, %v943
        %vm967 = vcmp.eq.s32.totalorder %v237, %v947
        %vm968 = vcmp.eq.s32.totalorder %v237, %v951
        %vm969 = vcmp.eq.s32.totalorder %v237, %v955
        %vm970 = vcmp.eq.s32.totalorder %v237, %v959
        %vm971 = vcmp.eq.s32.totalorder %v237, %v963
        %vm972 = vcmp.eq.s32.totalorder %v238, %v935
        %vm973 = vcmp.eq.s32.totalorder %v238, %v939
        %vm974 = vcmp.eq.s32.totalorder %v238, %v943
        %vm975 = vcmp.eq.s32.totalorder %v238, %v947
        %vm976 = vcmp.eq.s32.totalorder %v238, %v951
        %vm977 = vcmp.eq.s32.totalorder %v238, %v955
        %vm978 = vcmp.eq.s32.totalorder %v238, %v959
        %vm979 = vcmp.eq.s32.totalorder %v238, %v963
        %v980 = vlaneseq
        %v981 = vshrl.u32 %v980, 7
        %v982 = vsub.s32 1, %v981
        %v983 = vrot.slane %v700, %v982
        %v984 = vlaneseq
        %v985 = vshrl.u32 %v984, 7
        %v986 = vsub.s32 1, %v985
        %v987 = vrot.slane %v701, %v986
        %v988 = vlaneseq
        %v989 = vshrl.u32 %v988, 7
        %v990 = vsub.s32 1, %v989
        %v991 = vrot.slane %v702, %v990
        %v992 = vlaneseq
        %v993 = vshrl.u32 %v992, 7
        %v994 = vsub.s32 1, %v993
        %v995 = vrot.slane %v703, %v994
        %v996 = vlaneseq
        %v997 = vshrl.u32 %v996, 7
        %v998 = vsub.s32 1, %v997
        %v999 = vrot.slane %v704, %v998
        %v1000 = vlaneseq
        %v1001 = vshrl.u32 %v1000, 7
        %v1002 = vsub.s32 1, %v1001
        %v1003 = vrot.slane %v705, %v1002
        %v1004 = vlaneseq
        %v1005 = vshrl.u32 %v1004, 7
        %v1006 = vsub.s32 1, %v1005
        %v1007 = vrot.slane %v706, %v1006
        %v1008 = vlaneseq
        %v1009 = vshrl.u32 %v1008, 7
        %v1010 = vsub.s32 1, %v1009
        %v1011 = vrot.slane %v707, %v1010
        %v1012 = vsel %vm964, %v983, 0.0
        %v1013 = vsel %vm965, %v987, 0.0
        %v1014 = vsel %vm966, %v991, 0.0
        %v1015 = vsel %vm967, %v995, 0.0
        %v1016 = vsel %vm968, %v999, 0.0
        %v1017 = vsel %vm969, %v1003, 0.0
        %v1018 = vsel %vm970, %v1007, 0.0
        %v1019 = vsel %vm971, %v1011, 0.0
        %v1020 = vsel %vm972, %v983, 0.0
        %v1021 = vsel %vm973, %v987, 0.0
        %v1022 = vsel %vm974, %v991, 0.0
        %v1023 = vsel %vm975, %v995, 0.0
        %v1024 = vsel %vm976, %v999, 0.0
        %v1025 = vsel %vm977, %v1003, 0.0
        %v1026 = vsel %vm978, %v1007, 0.0
        %v1027 = vsel %vm979, %v1011, 0.0
        %v1028 = vadd.s32 %v668, 1
        %v1029 = vadd.s32 %v669, 1
        %v1030 = vadd.s32 %v670, 1
        %v1031 = vadd.s32 %v671, 1
        %v1032 = vadd.s32 %v672, 1
        %v1033 = vadd.s32 %v673, 1
        %v1034 = vadd.s32 %v674, 1
        %v1035 = vadd.s32 %v675, 1
        %v1036 = vlaneseq
        %v1037 = vshrl.u32 %v1036, 7
        %v1038 = vsub.s32 1, %v1037
        %v1039 = vrot.slane %v1028, %v1038
        %v1040 = vlaneseq
        %v1041 = vshrl.u32 %v1040, 7
        %v1042 = vsub.s32 1, %v1041
        %v1043 = vrot.slane %v1029, %v1042
        %v1044 = vlaneseq
        %v1045 = vshrl.u32 %v1044, 7
        %v1046 = vsub.s32 1, %v1045
        %v1047 = vrot.slane %v1030, %v1046
        %v1048 = vlaneseq
        %v1049 = vshrl.u32 %v1048, 7
        %v1050 = vsub.s32 1, %v1049
        %v1051 = vrot.slane %v1031, %v1050
        %v1052 = vlaneseq
        %v1053 = vshrl.u32 %v1052, 7
        %v1054 = vsub.s32 1, %v1053
        %v1055 = vrot.slane %v1032, %v1054
        %v1056 = vlaneseq
        %v1057 = vshrl.u32 %v1056, 7
        %v1058 = vsub.s32 1, %v1057
        %v1059 = vrot.slane %v1033, %v1058
        %v1060 = vlaneseq
        %v1061 = vshrl.u32 %v1060, 7
        %v1062 = vsub.s32 1, %v1061
        %v1063 = vrot.slane %v1034, %v1062
        %v1064 = vlaneseq
        %v1065 = vshrl.u32 %v1064, 7
        %v1066 = vsub.s32 1, %v1065
        %v1067 = vrot.slane %v1035, %v1066
        %vm1068 = vcmp.eq.s32.totalorder %v237, %v1039
        %vm1069 = vcmp.eq.s32.totalorder %v237, %v1043
        %vm1070 = vcmp.eq.s32.totalorder %v237, %v1047
        %vm1071 = vcmp.eq.s32.totalorder %v237, %v1051
        %vm1072 = vcmp.eq.s32.totalorder %v237, %v1055
        %vm1073 = vcmp.eq.s32.totalorder %v237, %v1059
        %vm1074 = vcmp.eq.s32.totalorder %v237, %v1063
        %vm1075 = vcmp.eq.s32.totalorder %v237, %v1067
        %vm1076 = vcmp.eq.s32.totalorder %v238, %v1039
        %vm1077 = vcmp.eq.s32.totalorder %v238, %v1043
        %vm1078 = vcmp.eq.s32.totalorder %v238, %v1047
        %vm1079 = vcmp.eq.s32.totalorder %v238, %v1051
        %vm1080 = vcmp.eq.s32.totalorder %v238, %v1055
        %vm1081 = vcmp.eq.s32.totalorder %v238, %v1059
        %vm1082 = vcmp.eq.s32.totalorder %v238, %v1063
        %vm1083 = vcmp.eq.s32.totalorder %v238, %v1067
        %v1084 = vlaneseq
        %v1085 = vshrl.u32 %v1084, 7
        %v1086 = vsub.s32 1, %v1085
        %v1087 = vrot.slane %v692, %v1086
        %v1088 = vlaneseq
        %v1089 = vshrl.u32 %v1088, 7
        %v1090 = vsub.s32 1, %v1089
        %v1091 = vrot.slane %v693, %v1090
        %v1092 = vlaneseq
        %v1093 = vshrl.u32 %v1092, 7
        %v1094 = vsub.s32 1, %v1093
        %v1095 = vrot.slane %v694, %v1094
        %v1096 = vlaneseq
        %v1097 = vshrl.u32 %v1096, 7
        %v1098 = vsub.s32 1, %v1097
        %v1099 = vrot.slane %v695, %v1098
        %v1100 = vlaneseq
        %v1101 = vshrl.u32 %v1100, 7
        %v1102 = vsub.s32 1, %v1101
        %v1103 = vrot.slane %v696, %v1102
        %v1104 = vlaneseq
        %v1105 = vshrl.u32 %v1104, 7
        %v1106 = vsub.s32 1, %v1105
        %v1107 = vrot.slane %v697, %v1106
        %v1108 = vlaneseq
        %v1109 = vshrl.u32 %v1108, 7
        %v1110 = vsub.s32 1, %v1109
        %v1111 = vrot.slane %v698, %v1110
        %v1112 = vlaneseq
        %v1113 = vshrl.u32 %v1112, 7
        %v1114 = vsub.s32 1, %v1113
        %v1115 = vrot.slane %v699, %v1114
        %v1116 = vsel %vm1068, %v1087, 0.0
        %v1117 = vsel %vm1069, %v1091, 0.0
        %v1118 = vsel %vm1070, %v1095, 0.0
        %v1119 = vsel %vm1071, %v1099, 0.0
        %v1120 = vsel %vm1072, %v1103, 0.0
        %v1121 = vsel %vm1073, %v1107, 0.0
        %v1122 = vsel %vm1074, %v1111, 0.0
        %v1123 = vsel %vm1075, %v1115, 0.0
        %v1124 = vsel %vm1076, %v1087, 0.0
        %v1125 = vsel %vm1077, %v1091, 0.0
        %v1126 = vsel %vm1078, %v1095, 0.0
        %v1127 = vsel %vm1079, %v1099, 0.0
        %v1128 = vsel %vm1080, %v1103, 0.0
        %v1129 = vsel %vm1081, %v1107, 0.0
        %v1130 = vsel %vm1082, %v1111, 0.0
        %v1131 = vsel %vm1083, %v1115, 0.0
        %v1132 = vadd.f32 %v1012, %v1116
        %v1133 = vadd.f32 %v1013, %v1117
        %v1134 = vadd.f32 %v1014, %v1118
        %v1135 = vadd.f32 %v1015, %v1119
        %v1136 = vadd.f32 %v1016, %v1120
        %v1137 = vadd.f32 %v1017, %v1121
        %v1138 = vadd.f32 %v1018, %v1122
        %v1139 = vadd.f32 %v1019, %v1123
        %v1140 = vadd.f32 %v1020, %v1124
        %v1141 = vadd.f32 %v1021, %v1125
        %v1142 = vadd.f32 %v1022, %v1126
        %v1143 = vadd.f32 %v1023, %v1127
        %v1144 = vadd.f32 %v1024, %v1128
        %v1145 = vadd.f32 %v1025, %v1129
        %v1146 = vadd.f32 %v1026, %v1130
        %v1147 = vadd.f32 %v1027, %v1131
        %v1148 = vld [vmem:[%s226] sm:$0xf]
        %v1149 = vld [vmem:[%s226 + $0x4] sm:$0xf]
        %v1150 = vld [vmem:[%s226 + $0x8] sm:$0xf]
        %v1151 = vld [vmem:[%s226 + $0xc] sm:$0xf]
        %v1152 = vld [vmem:[%s226 + $0x10] sm:$0xf]
        %v1153 = vld [vmem:[%s226 + $0x14] sm:$0xf]
        %v1160 = vunpack.c.l.b16 %v1148
        %v1161 = vunpack.c.l.b16 %v1149
        %v1162 = vunpack.c.l.b16 %v1150
        %v1163 = vunpack.c.l.b16 %v1151
        %v1164 = vunpack.c.l.b16 %v1152
        %v1165 = vunpack.c.l.b16 %v1153
        %v1166 = vpack.c.b16 %v1161, %v1160
        %v1167 = vpack.c.b16 %v1163, %v1162
        %v1168 = vpack.c.b16 %v1165, %v1164
        %vm1169 = vcmask 130048
        %v1171 = vsel %vm1169, %v1166, 0
        %v1174 = vsel %vm1169, %v1167, 0
        %v1177 = vsel %vm1169, %v1168, 0
        %1179 = vmatprep.subr.bf16.mxu0 %v925
        %1180 = vmatpush1.bf16.msra.mxu0 %v924
        %1181 = vmatprep.subr.bf16.mxu0 0
        %1182 = vmatpush1.bf16.msra.mxu0 0
        %1183 = vmatprep.subr.bf16.mxu0 0
        %1184 = vmatpush1.bf16.msra.mxu0 0
        %1185 = vmatprep.subr.bf16.mxu0 0
        %1186 = vmatpush1.bf16.msra.mxu0 0
        %1187 = vmatprep.subr.bf16.mxu0 0
        %1188 = vmatpush1.bf16.msra.mxu0 0
        %1189 = vmatprep.subr.bf16.mxu0 0
        %1190 = vmatpush1.bf16.msra.mxu0 0
        %1191 = vmatprep.subr.bf16.mxu0 0
        %1192 = vmatpush1.bf16.msra.mxu0 0
        %1193 = vmatprep.subr.bf16.mxu0 0
        %1194 = vmatpush1.bf16.msra.mxu0 0
        %1195 = vmatprep.subr.bf16.mxu0 0
        %1196 = vmatpush1.bf16.msra.mxu0 0
        %1197 = vmatprep.subr.bf16.mxu0 0
        %1198 = vmatpush1.bf16.msra.mxu0 0
        %1199 = vmatprep.subr.bf16.mxu0 0
        %1200 = vmatpush1.bf16.msra.mxu0 0
        %1201 = vmatprep.subr.bf16.mxu0 0
        %1202 = vmatpush1.bf16.msra.mxu0 0
        %1203 = vmatprep.subr.bf16.mxu0 0
        %1204 = vmatpush1.bf16.msra.mxu0 0
        %1205 = vmatprep.subr.bf16.mxu0 0
        %1206 = vmatpush1.bf16.msra.mxu0 0
        %1207 = vmatprep.subr.bf16.mxu0 0
        %1208 = vmatpush1.bf16.msra.mxu0 0
        %1209 = vmatprep.subr.bf16.mxu0 0
        %1210 = vmatpush1.bf16.msra.mxu0 0
        %1211 = vmatprep.mubr.bf16.mxu0 0
        %1212 = vmatmul.mubr.bf16.gmra.mrb[0].mxu0 %v1171
        %v1213 = vpop.f32.mrb[0].mxu0
        %v1214 = vadd.f32 0.0, %v1213
        %v1215 = vpop.f32.mrb[0].mxu0
        %v1216 = vadd.f32 0.0, %v1215
        %v1217 = vpop.f32.mrb[0].mxu0
        %v1218 = vadd.f32 0.0, %v1217
        %v1219 = vpop.f32.mrb[0].mxu0
        %v1220 = vadd.f32 0.0, %v1219
        %1221 = vmatprep.mubr.bf16.mxu0 0
        %1222 = vmatmul.mubr.bf16.gmra.mrb[0].mxu0 %v1174
        %v1223 = vpop.f32.mrb[0].mxu0
        %v1224 = vadd.f32 0.0, %v1223
        %v1225 = vpop.f32.mrb[0].mxu0
        %v1226 = vadd.f32 0.0, %v1225
        %v1227 = vpop.f32.mrb[0].mxu0
        %v1228 = vadd.f32 0.0, %v1227
        %v1229 = vpop.f32.mrb[0].mxu0
        %v1230 = vadd.f32 0.0, %v1229
        %1231 = vmatprep.mubr.bf16.mxu0 0
        %1232 = vmatmul.mubr.bf16.gmra.mrb[0].mxu0 %v1177
        %v1233 = vpop.f32.mrb[0].mxu0
        %v1234 = vadd.f32 0.0, %v1233
        %v1235 = vpop.f32.mrb[0].mxu0
        %v1236 = vadd.f32 0.0, %v1235
        %v1237 = vpop.f32.mrb[0].mxu0
        %v1238 = vadd.f32 0.0, %v1237
        %v1239 = vpop.f32.mrb[0].mxu0
        %v1240 = vadd.f32 0.0, %v1239
        %1241 = vdwg.mxu0
        %1242 = vmatprep.subr.bf16.mxu0 %v927
        %1243 = vmatpush1.bf16.msra.mxu0 %v926
        %1244 = vmatprep.subr.bf16.mxu0 0
        %1245 = vmatpush1.bf16.msra.mxu0 0
        %1246 = vmatprep.subr.bf16.mxu0 0
        %1247 = vmatpush1.bf16.msra.mxu0 0
        %1248 = vmatprep.subr.bf16.mxu0 0
        %1249 = vmatpush1.bf16.msra.mxu0 0
        %1250 = vmatprep.subr.bf16.mxu0 0
        %1251 = vmatpush1.bf16.msra.mxu0 0
        %1252 = vmatprep.subr.bf16.mxu0 0
        %1253 = vmatpush1.bf16.msra.mxu0 0
        %1254 = vmatprep.subr.bf16.mxu0 0
        %1255 = vmatpush1.bf16.msra.mxu0 0
        %1256 = vmatprep.subr.bf16.mxu0 0
        %1257 = vmatpush1.bf16.msra.mxu0 0
        %1258 = vmatprep.subr.bf16.mxu0 0
        %1259 = vmatpush1.bf16.msra.mxu0 0
        %1260 = vmatprep.subr.bf16.mxu0 0
        %1261 = vmatpush1.bf16.msra.mxu0 0
        %1262 = vmatprep.subr.bf16.mxu0 0
        %1263 = vmatpush1.bf16.msra.mxu0 0
        %1264 = vmatprep.subr.bf16.mxu0 0
        %1265 = vmatpush1.bf16.msra.mxu0 0
        %1266 = vmatprep.subr.bf16.mxu0 0
        %1267 = vmatpush1.bf16.msra.mxu0 0
        %1268 = vmatprep.subr.bf16.mxu0 0
        %1269 = vmatpush1.bf16.msra.mxu0 0
        %1270 = vmatprep.subr.bf16.mxu0 0
        %1271 = vmatpush1.bf16.msra.mxu0 0
        %1272 = vmatprep.subr.bf16.mxu0 0
        %1273 = vmatpush1.bf16.msra.mxu0 0
        %1274 = vmatprep.mubr.bf16.mxu0 0
        %1275 = vmatmul.mubr.bf16.gmra.mrb[0].mxu0 %v1171
        %v1276 = vpop.f32.mrb[0].mxu0
        %v1277 = vadd.f32 0.0, %v1276
        %v1278 = vpop.f32.mrb[0].mxu0
        %v1279 = vadd.f32 0.0, %v1278
        %v1280 = vpop.f32.mrb[0].mxu0
        %v1281 = vadd.f32 0.0, %v1280
        %v1282 = vpop.f32.mrb[0].mxu0
        %v1283 = vadd.f32 0.0, %v1282
        %1284 = vmatprep.mubr.bf16.mxu0 0
        %1285 = vmatmul.mubr.bf16.gmra.mrb[0].mxu0 %v1174
        %v1286 = vpop.f32.mrb[0].mxu0
        %v1287 = vadd.f32 0.0, %v1286
        %v1288 = vpop.f32.mrb[0].mxu0
        %v1289 = vadd.f32 0.0, %v1288
        %v1290 = vpop.f32.mrb[0].mxu0
        %v1291 = vadd.f32 0.0, %v1290
        %v1292 = vpop.f32.mrb[0].mxu0
        %v1293 = vadd.f32 0.0, %v1292
        %1294 = vmatprep.mubr.bf16.mxu0 0
        %1295 = vmatmul.mubr.bf16.gmra.mrb[0].mxu0 %v1177
        %v1296 = vpop.f32.mrb[0].mxu0
        %v1297 = vadd.f32 0.0, %v1296
        %v1298 = vpop.f32.mrb[0].mxu0
        %v1299 = vadd.f32 0.0, %v1298
        %v1300 = vpop.f32.mrb[0].mxu0
        %v1301 = vadd.f32 0.0, %v1300
        %v1302 = vpop.f32.mrb[0].mxu0
        %v1303 = vadd.f32 0.0, %v1302
        %1304 = vdwg.mxu0
        %1305 = vmatprep.subr.bf16.mxu0 %v929
        %1306 = vmatpush1.bf16.msra.mxu0 %v928
        %1307 = vmatprep.subr.bf16.mxu0 0
        %1308 = vmatpush1.bf16.msra.mxu0 0
        %1309 = vmatprep.subr.bf16.mxu0 0
        %1310 = vmatpush1.bf16.msra.mxu0 0
        %1311 = vmatprep.subr.bf16.mxu0 0
        %1312 = vmatpush1.bf16.msra.mxu0 0
        %1313 = vmatprep.subr.bf16.mxu0 0
        %1314 = vmatpush1.bf16.msra.mxu0 0
        %1315 = vmatprep.subr.bf16.mxu0 0
        %1316 = vmatpush1.bf16.msra.mxu0 0
        %1317 = vmatprep.subr.bf16.mxu0 0
        %1318 = vmatpush1.bf16.msra.mxu0 0
        %1319 = vmatprep.subr.bf16.mxu0 0
        %1320 = vmatpush1.bf16.msra.mxu0 0
        %1321 = vmatprep.subr.bf16.mxu0 0
        %1322 = vmatpush1.bf16.msra.mxu0 0
        %1323 = vmatprep.subr.bf16.mxu0 0
        %1324 = vmatpush1.bf16.msra.mxu0 0
        %1325 = vmatprep.subr.bf16.mxu0 0
        %1326 = vmatpush1.bf16.msra.mxu0 0
        %1327 = vmatprep.subr.bf16.mxu0 0
        %1328 = vmatpush1.bf16.msra.mxu0 0
        %1329 = vmatprep.subr.bf16.mxu0 0
        %1330 = vmatpush1.bf16.msra.mxu0 0
        %1331 = vmatprep.subr.bf16.mxu0 0
        %1332 = vmatpush1.bf16.msra.mxu0 0
        %1333 = vmatprep.subr.bf16.mxu0 0
        %1334 = vmatpush1.bf16.msra.mxu0 0
        %1335 = vmatprep.subr.bf16.mxu0 0
        %1336 = vmatpush1.bf16.msra.mxu0 0
        %1337 = vmatprep.mubr.bf16.mxu0 0
        %1338 = vmatmul.mubr.bf16.gmra.mrb[0].mxu0 %v1171
        %v1339 = vpop.f32.mrb[0].mxu0
        %v1340 = vadd.f32 0.0, %v1339
        %v1341 = vpop.f32.mrb[0].mxu0
        %v1342 = vadd.f32 0.0, %v1341
        %v1343 = vpop.f32.mrb[0].mxu0
        %v1344 = vadd.f32 0.0, %v1343
        %v1345 = vpop.f32.mrb[0].mxu0
        %v1346 = vadd.f32 0.0, %v1345
        %1347 = vmatprep.mubr.bf16.mxu0 0
        %1348 = vmatmul.mubr.bf16.gmra.mrb[0].mxu0 %v1174
        %v1349 = vpop.f32.mrb[0].mxu0
        %v1350 = vadd.f32 0.0, %v1349
        %v1351 = vpop.f32.mrb[0].mxu0
        %v1352 = vadd.f32 0.0, %v1351
        %v1353 = vpop.f32.mrb[0].mxu0
        %v1354 = vadd.f32 0.0, %v1353
        %v1355 = vpop.f32.mrb[0].mxu0
        %v1356 = vadd.f32 0.0, %v1355
        %1357 = vmatprep.mubr.bf16.mxu0 0
        %1358 = vmatmul.mubr.bf16.gmra.mrb[0].mxu0 %v1177
        %v1359 = vpop.f32.mrb[0].mxu0
        %v1360 = vadd.f32 0.0, %v1359
        %v1361 = vpop.f32.mrb[0].mxu0
        %v1362 = vadd.f32 0.0, %v1361
        %v1363 = vpop.f32.mrb[0].mxu0
        %v1364 = vadd.f32 0.0, %v1363
        %v1365 = vpop.f32.mrb[0].mxu0
        %v1366 = vadd.f32 0.0, %v1365
        %1367 = vdwg.mxu0
        %1368 = vmatprep.subr.bf16.mxu0 %v931
        %1369 = vmatpush1.bf16.msra.mxu0 %v930
        %1370 = vmatprep.subr.bf16.mxu0 0
        %1371 = vmatpush1.bf16.msra.mxu0 0
        %1372 = vmatprep.subr.bf16.mxu0 0
        %1373 = vmatpush1.bf16.msra.mxu0 0
        %1374 = vmatprep.subr.bf16.mxu0 0
        %1375 = vmatpush1.bf16.msra.mxu0 0
        %1376 = vmatprep.subr.bf16.mxu0 0
        %1377 = vmatpush1.bf16.msra.mxu0 0
        %1378 = vmatprep.subr.bf16.mxu0 0
        %1379 = vmatpush1.bf16.msra.mxu0 0
        %1380 = vmatprep.subr.bf16.mxu0 0
        %1381 = vmatpush1.bf16.msra.mxu0 0
        %1382 = vmatprep.subr.bf16.mxu0 0
        %1383 = vmatpush1.bf16.msra.mxu0 0
        %1384 = vmatprep.subr.bf16.mxu0 0
        %1385 = vmatpush1.bf16.msra.mxu0 0
        %1386 = vmatprep.subr.bf16.mxu0 0
        %1387 = vmatpush1.bf16.msra.mxu0 0
        %1388 = vmatprep.subr.bf16.mxu0 0
        %1389 = vmatpush1.bf16.msra.mxu0 0
        %1390 = vmatprep.subr.bf16.mxu0 0
        %1391 = vmatpush1.bf16.msra.mxu0 0
        %1392 = vmatprep.subr.bf16.mxu0 0
        %1393 = vmatpush1.bf16.msra.mxu0 0
        %1394 = vmatprep.subr.bf16.mxu0 0
        %1395 = vmatpush1.bf16.msra.mxu0 0
        %1396 = vmatprep.subr.bf16.mxu0 0
        %1397 = vmatpush1.bf16.msra.mxu0 0
        %1398 = vmatprep.subr.bf16.mxu0 0
        %1399 = vmatpush1.bf16.msra.mxu0 0
        %1400 = vmatprep.mubr.bf16.mxu0 0
        %1401 = vmatmul.mubr.bf16.gmra.mrb[0].mxu0 %v1171
        %v1402 = vpop.f32.mrb[0].mxu0
        %v1403 = vadd.f32 0.0, %v1402
        %v1404 = vpop.f32.mrb[0].mxu0
        %v1405 = vadd.f32 0.0, %v1404
        %v1406 = vpop.f32.mrb[0].mxu0
        %v1407 = vadd.f32 0.0, %v1406
        %v1408 = vpop.f32.mrb[0].mxu0
        %v1409 = vadd.f32 0.0, %v1408
        %1410 = vmatprep.mubr.bf16.mxu0 0
        %1411 = vmatmul.mubr.bf16.gmra.mrb[0].mxu0 %v1174
        %v1412 = vpop.f32.mrb[0].mxu0
        %v1413 = vadd.f32 0.0, %v1412
        %v1414 = vpop.f32.mrb[0].mxu0
        %v1415 = vadd.f32 0.0, %v1414
        %v1416 = vpop.f32.mrb[0].mxu0
        %v1417 = vadd.f32 0.0, %v1416
        %v1418 = vpop.f32.mrb[0].mxu0
        %v1419 = vadd.f32 0.0, %v1418
        %1420 = vmatprep.mubr.bf16.mxu0 0
        %1421 = vmatmul.mubr.bf16.gmra.mrb[0].mxu0 %v1177
        %v1422 = vpop.f32.mrb[0].mxu0
        %v1423 = vadd.f32 0.0, %v1422
        %v1424 = vpop.f32.mrb[0].mxu0
        %v1425 = vadd.f32 0.0, %v1424
        %v1426 = vpop.f32.mrb[0].mxu0
        %v1427 = vadd.f32 0.0, %v1426
        %v1428 = vpop.f32.mrb[0].mxu0
        %v1429 = vadd.f32 0.0, %v1428
        %1430 = vdwg.mxu0
        %v1431 = vmul.f32 %v1132, %v1214
        %v1432 = vmul.f32 %v1133, %v1216
        %v1433 = vmul.f32 %v1134, %v1277
        %v1434 = vmul.f32 %v1135, %v1279
        %v1435 = vmul.f32 %v1136, %v1340
        %v1436 = vmul.f32 %v1137, %v1342
        %v1437 = vmul.f32 %v1138, %v1403
        %v1438 = vmul.f32 %v1139, %v1405
        %v1439 = vmul.f32 %v1140, %v1218
        %v1440 = vmul.f32 %v1141, %v1220
        %v1441 = vmul.f32 %v1142, %v1281
        %v1442 = vmul.f32 %v1143, %v1283
        %v1443 = vmul.f32 %v1144, %v1344
        %v1444 = vmul.f32 %v1145, %v1346
        %v1445 = vmul.f32 %v1146, %v1407
        %v1446 = vmul.f32 %v1147, %v1409
        %v1447 = vadd.f32 %v1431, %v1439
        %v1448 = vrot.slane %v1447, 4
        %v1449 = vadd.f32 %v1447, %v1448
        %v1450 = vrot.slane %v1449, 2
        %v1451 = vadd.f32 %v1449, %v1450
        %v1452 = vrot.slane %v1451, 1
        %v1453 = vadd.f32 %v1451, %v1452
        %v1454 = vadd.f32 %v1432, %v1440
        %v1455 = vrot.slane %v1454, 4
        %v1456 = vadd.f32 %v1454, %v1455
        %v1457 = vrot.slane %v1456, 2
        %v1458 = vadd.f32 %v1456, %v1457
        %v1459 = vrot.slane %v1458, 1
        %v1460 = vadd.f32 %v1458, %v1459
        %v1461 = vadd.f32 %v1433, %v1441
        %v1462 = vrot.slane %v1461, 4
        %v1463 = vadd.f32 %v1461, %v1462
        %v1464 = vrot.slane %v1463, 2
        %v1465 = vadd.f32 %v1463, %v1464
        %v1466 = vrot.slane %v1465, 1
        %v1467 = vadd.f32 %v1465, %v1466
        %v1468 = vadd.f32 %v1434, %v1442
        %v1469 = vrot.slane %v1468, 4
        %v1470 = vadd.f32 %v1468, %v1469
        %v1471 = vrot.slane %v1470, 2
        %v1472 = vadd.f32 %v1470, %v1471
        %v1473 = vrot.slane %v1472, 1
        %v1474 = vadd.f32 %v1472, %v1473
        %v1475 = vadd.f32 %v1435, %v1443
        %v1476 = vrot.slane %v1475, 4
        %v1477 = vadd.f32 %v1475, %v1476
        %v1478 = vrot.slane %v1477, 2
        %v1479 = vadd.f32 %v1477, %v1478
        %v1480 = vrot.slane %v1479, 1
        %v1481 = vadd.f32 %v1479, %v1480
        %v1482 = vadd.f32 %v1436, %v1444
        %v1483 = vrot.slane %v1482, 4
        %v1484 = vadd.f32 %v1482, %v1483
        %v1485 = vrot.slane %v1484, 2
        %v1486 = vadd.f32 %v1484, %v1485
        %v1487 = vrot.slane %v1486, 1
        %v1488 = vadd.f32 %v1486, %v1487
        %v1489 = vadd.f32 %v1437, %v1445
        %v1490 = vrot.slane %v1489, 4
        %v1491 = vadd.f32 %v1489, %v1490
        %v1492 = vrot.slane %v1491, 2
        %v1493 = vadd.f32 %v1491, %v1492
        %v1494 = vrot.slane %v1493, 1
        %v1495 = vadd.f32 %v1493, %v1494
        %v1496 = vadd.f32 %v1438, %v1446
        %v1497 = vrot.slane %v1496, 4
        %v1498 = vadd.f32 %v1496, %v1497
        %v1499 = vrot.slane %v1498, 2
        %v1500 = vadd.f32 %v1498, %v1499
        %v1501 = vrot.slane %v1500, 1
        %v1502 = vadd.f32 %v1500, %v1501
        %v1511 = vcombine.low %v1453, %v1460
        %v1512 = vcombine.low %v1467, %v1474
        %v1513 = vcombine.low %v1481, %v1488
        %v1514 = vcombine.low %v1495, %v1502
        %v1516 = vunpack.c.l.s4 1966171168
        %v1517 = vunpack.c.0.s8 %v1516
        %v1518 = vlaneseq
        %v1519 = vshrl.u32 %v1518, 7
        %v1520 = vsub.s32 %v1517, %v1519
        %v1521 = vrot.slane %v1511, %v1520
        %v1523 = vunpack.c.l.s4 1966171168
        %v1524 = vunpack.c.0.s8 %v1523
        %v1525 = vlaneseq
        %v1526 = vshrl.u32 %v1525, 7
        %v1527 = vsub.s32 %v1524, %v1526
        %v1528 = vrot.slane %v1512, %v1527
        %v1530 = vunpack.c.l.s4 1966171168
        %v1531 = vunpack.c.0.s8 %v1530
        %v1532 = vlaneseq
        %v1533 = vshrl.u32 %v1532, 7
        %v1534 = vsub.s32 %v1531, %v1533
        %v1535 = vrot.slane %v1513, %v1534
        %v1537 = vunpack.c.l.s4 1966171168
        %v1538 = vunpack.c.0.s8 %v1537
        %v1539 = vlaneseq
        %v1540 = vshrl.u32 %v1539, 7
        %v1541 = vsub.s32 %v1538, %v1540
        %v1542 = vrot.slane %v1514, %v1541
        %v1543 = vcombine.low %v1521, %v1528
        %v1544 = vcombine.low %v1535, %v1542
        %v1546 = vunpack.c.l.s4 1966171168
        %v1547 = vunpack.c.0.s8 %v1546
        %v1548 = vlaneseq
        %v1549 = vshrl.u32 %v1548, 7
        %v1550 = vsub.s32 %v1547, %v1549
        %v1551 = vrot.slane %v1543, %v1550
        %v1553 = vunpack.c.l.s4 1966171168
        %v1554 = vunpack.c.0.s8 %v1553
        %v1555 = vlaneseq
        %v1556 = vshrl.u32 %v1555, 7
        %v1557 = vsub.s32 %v1554, %v1556
        %v1558 = vrot.slane %v1544, %v1557
        %v1559 = vcombine.low %v1551, %v1558
        %1561 = vst [vmem:[%s208] ss:$8 sm:$0xf] %v1559
        %1562 = vst [vmem:[%s208] ss:$8 sm:$0xf0] %v1559
        %v1563 = vmul.f32 %v1132, %v1224
        %v1564 = vmul.f32 %v1133, %v1226
        %v1565 = vmul.f32 %v1134, %v1287
        %v1566 = vmul.f32 %v1135, %v1289
        %v1567 = vmul.f32 %v1136, %v1350
        %v1568 = vmul.f32 %v1137, %v1352
        %v1569 = vmul.f32 %v1138, %v1413
        %v1570 = vmul.f32 %v1139, %v1415
        %v1571 = vmul.f32 %v1140, %v1228
        %v1572 = vmul.f32 %v1141, %v1230
        %v1573 = vmul.f32 %v1142, %v1291
        %v1574 = vmul.f32 %v1143, %v1293
        %v1575 = vmul.f32 %v1144, %v1354
        %v1576 = vmul.f32 %v1145, %v1356
        %v1577 = vmul.f32 %v1146, %v1417
        %v1578 = vmul.f32 %v1147, %v1419
        %v1579 = vadd.f32 %v1563, %v1571
        %v1580 = vrot.slane %v1579, 4
        %v1581 = vadd.f32 %v1579, %v1580
        %v1582 = vrot.slane %v1581, 2
        %v1583 = vadd.f32 %v1581, %v1582
        %v1584 = vrot.slane %v1583, 1
        %v1585 = vadd.f32 %v1583, %v1584
        %v1586 = vadd.f32 %v1564, %v1572
        %v1587 = vrot.slane %v1586, 4
        %v1588 = vadd.f32 %v1586, %v1587
        %v1589 = vrot.slane %v1588, 2
        %v1590 = vadd.f32 %v1588, %v1589
        %v1591 = vrot.slane %v1590, 1
        %v1592 = vadd.f32 %v1590, %v1591
        %v1593 = vadd.f32 %v1565, %v1573
        %v1594 = vrot.slane %v1593, 4
        %v1595 = vadd.f32 %v1593, %v1594
        %v1596 = vrot.slane %v1595, 2
        %v1597 = vadd.f32 %v1595, %v1596
        %v1598 = vrot.slane %v1597, 1
        %v1599 = vadd.f32 %v1597, %v1598
        %v1600 = vadd.f32 %v1566, %v1574
        %v1601 = vrot.slane %v1600, 4
        %v1602 = vadd.f32 %v1600, %v1601
        %v1603 = vrot.slane %v1602, 2
        %v1604 = vadd.f32 %v1602, %v1603
        %v1605 = vrot.slane %v1604, 1
        %v1606 = vadd.f32 %v1604, %v1605
        %v1607 = vadd.f32 %v1567, %v1575
        %v1608 = vrot.slane %v1607, 4
        %v1609 = vadd.f32 %v1607, %v1608
        %v1610 = vrot.slane %v1609, 2
        %v1611 = vadd.f32 %v1609, %v1610
        %v1612 = vrot.slane %v1611, 1
        %v1613 = vadd.f32 %v1611, %v1612
        %v1614 = vadd.f32 %v1568, %v1576
        %v1615 = vrot.slane %v1614, 4
        %v1616 = vadd.f32 %v1614, %v1615
        %v1617 = vrot.slane %v1616, 2
        %v1618 = vadd.f32 %v1616, %v1617
        %v1619 = vrot.slane %v1618, 1
        %v1620 = vadd.f32 %v1618, %v1619
        %v1621 = vadd.f32 %v1569, %v1577
        %v1622 = vrot.slane %v1621, 4
        %v1623 = vadd.f32 %v1621, %v1622
        %v1624 = vrot.slane %v1623, 2
        %v1625 = vadd.f32 %v1623, %v1624
        %v1626 = vrot.slane %v1625, 1
        %v1627 = vadd.f32 %v1625, %v1626
        %v1628 = vadd.f32 %v1570, %v1578
        %v1629 = vrot.slane %v1628, 4
        %v1630 = vadd.f32 %v1628, %v1629
        %v1631 = vrot.slane %v1630, 2
        %v1632 = vadd.f32 %v1630, %v1631
        %v1633 = vrot.slane %v1632, 1
        %v1634 = vadd.f32 %v1632, %v1633
        %v1643 = vcombine.low %v1585, %v1592
        %v1644 = vcombine.low %v1599, %v1606
        %v1645 = vcombine.low %v1613, %v1620
        %v1646 = vcombine.low %v1627, %v1634
        %v1648 = vunpack.c.l.s4 1966171168
        %v1649 = vunpack.c.0.s8 %v1648
        %v1650 = vlaneseq
        %v1651 = vshrl.u32 %v1650, 7
        %v1652 = vsub.s32 %v1649, %v1651
        %v1653 = vrot.slane %v1643, %v1652
        %v1655 = vunpack.c.l.s4 1966171168
        %v1656 = vunpack.c.0.s8 %v1655
        %v1657 = vlaneseq
        %v1658 = vshrl.u32 %v1657, 7
        %v1659 = vsub.s32 %v1656, %v1658
        %v1660 = vrot.slane %v1644, %v1659
        %v1662 = vunpack.c.l.s4 1966171168
        %v1663 = vunpack.c.0.s8 %v1662
        %v1664 = vlaneseq
        %v1665 = vshrl.u32 %v1664, 7
        %v1666 = vsub.s32 %v1663, %v1665
        %v1667 = vrot.slane %v1645, %v1666
        %v1669 = vunpack.c.l.s4 1966171168
        %v1670 = vunpack.c.0.s8 %v1669
        %v1671 = vlaneseq
        %v1672 = vshrl.u32 %v1671, 7
        %v1673 = vsub.s32 %v1670, %v1672
        %v1674 = vrot.slane %v1646, %v1673
        %v1675 = vcombine.low %v1653, %v1660
        %v1676 = vcombine.low %v1667, %v1674
        %v1678 = vunpack.c.l.s4 1966171168
        %v1679 = vunpack.c.0.s8 %v1678
        %v1680 = vlaneseq
        %v1681 = vshrl.u32 %v1680, 7
        %v1682 = vsub.s32 %v1679, %v1681
        %v1683 = vrot.slane %v1675, %v1682
        %v1685 = vunpack.c.l.s4 1966171168
        %v1686 = vunpack.c.0.s8 %v1685
        %v1687 = vlaneseq
        %v1688 = vshrl.u32 %v1687, 7
        %v1689 = vsub.s32 %v1686, %v1688
        %v1690 = vrot.slane %v1676, %v1689
        %v1691 = vcombine.low %v1683, %v1690
        %s1693 = scalar_lea.vmem %s208, 1 [#allocation2]
        %1694 = vst [vmem:[%s1693] ss:$8 sm:$0xf] %v1691
        %1695 = vst [vmem:[%s1693] ss:$8 sm:$0xf0] %v1691
        %v1696 = vmul.f32 %v1132, %v1234
        %v1697 = vmul.f32 %v1133, %v1236
        %v1698 = vmul.f32 %v1134, %v1297
        %v1699 = vmul.f32 %v1135, %v1299
        %v1700 = vmul.f32 %v1136, %v1360
        %v1701 = vmul.f32 %v1137, %v1362
        %v1702 = vmul.f32 %v1138, %v1423
        %v1703 = vmul.f32 %v1139, %v1425
        %v1704 = vmul.f32 %v1140, %v1238
        %v1705 = vmul.f32 %v1141, %v1240
        %v1706 = vmul.f32 %v1142, %v1301
        %v1707 = vmul.f32 %v1143, %v1303
        %v1708 = vmul.f32 %v1144, %v1364
        %v1709 = vmul.f32 %v1145, %v1366
        %v1710 = vmul.f32 %v1146, %v1427
        %v1711 = vmul.f32 %v1147, %v1429
        %v1712 = vadd.f32 %v1696, %v1704
        %v1713 = vrot.slane %v1712, 4
        %v1714 = vadd.f32 %v1712, %v1713
        %v1715 = vrot.slane %v1714, 2
        %v1716 = vadd.f32 %v1714, %v1715
        %v1717 = vrot.slane %v1716, 1
        %v1718 = vadd.f32 %v1716, %v1717
        %v1719 = vadd.f32 %v1697, %v1705
        %v1720 = vrot.slane %v1719, 4
        %v1721 = vadd.f32 %v1719, %v1720
        %v1722 = vrot.slane %v1721, 2
        %v1723 = vadd.f32 %v1721, %v1722
        %v1724 = vrot.slane %v1723, 1
        %v1725 = vadd.f32 %v1723, %v1724
        %v1726 = vadd.f32 %v1698, %v1706
        %v1727 = vrot.slane %v1726, 4
        %v1728 = vadd.f32 %v1726, %v1727
        %v1729 = vrot.slane %v1728, 2
        %v1730 = vadd.f32 %v1728, %v1729
        %v1731 = vrot.slane %v1730, 1
        %v1732 = vadd.f32 %v1730, %v1731
        %v1733 = vadd.f32 %v1699, %v1707
        %v1734 = vrot.slane %v1733, 4
        %v1735 = vadd.f32 %v1733, %v1734
        %v1736 = vrot.slane %v1735, 2
        %v1737 = vadd.f32 %v1735, %v1736
        %v1738 = vrot.slane %v1737, 1
        %v1739 = vadd.f32 %v1737, %v1738
        %v1740 = vadd.f32 %v1700, %v1708
        %v1741 = vrot.slane %v1740, 4
        %v1742 = vadd.f32 %v1740, %v1741
        %v1743 = vrot.slane %v1742, 2
        %v1744 = vadd.f32 %v1742, %v1743
        %v1745 = vrot.slane %v1744, 1
        %v1746 = vadd.f32 %v1744, %v1745
        %v1747 = vadd.f32 %v1701, %v1709
        %v1748 = vrot.slane %v1747, 4
        %v1749 = vadd.f32 %v1747, %v1748
        %v1750 = vrot.slane %v1749, 2
        %v1751 = vadd.f32 %v1749, %v1750
        %v1752 = vrot.slane %v1751, 1
        %v1753 = vadd.f32 %v1751, %v1752
        %v1754 = vadd.f32 %v1702, %v1710
        %v1755 = vrot.slane %v1754, 4
        %v1756 = vadd.f32 %v1754, %v1755
        %v1757 = vrot.slane %v1756, 2
        %v1758 = vadd.f32 %v1756, %v1757
        %v1759 = vrot.slane %v1758, 1
        %v1760 = vadd.f32 %v1758, %v1759
        %v1761 = vadd.f32 %v1703, %v1711
        %v1762 = vrot.slane %v1761, 4
        %v1763 = vadd.f32 %v1761, %v1762
        %v1764 = vrot.slane %v1763, 2
        %v1765 = vadd.f32 %v1763, %v1764
        %v1766 = vrot.slane %v1765, 1
        %v1767 = vadd.f32 %v1765, %v1766
        %v1776 = vcombine.low %v1718, %v1725
        %v1777 = vcombine.low %v1732, %v1739
        %v1778 = vcombine.low %v1746, %v1753
        %v1779 = vcombine.low %v1760, %v1767
        %v1781 = vunpack.c.l.s4 1966171168
        %v1782 = vunpack.c.0.s8 %v1781
        %v1783 = vlaneseq
        %v1784 = vshrl.u32 %v1783, 7
        %v1785 = vsub.s32 %v1782, %v1784
        %v1786 = vrot.slane %v1776, %v1785
        %v1788 = vunpack.c.l.s4 1966171168
        %v1789 = vunpack.c.0.s8 %v1788
        %v1790 = vlaneseq
        %v1791 = vshrl.u32 %v1790, 7
        %v1792 = vsub.s32 %v1789, %v1791
        %v1793 = vrot.slane %v1777, %v1792
        %v1795 = vunpack.c.l.s4 1966171168
        %v1796 = vunpack.c.0.s8 %v1795
        %v1797 = vlaneseq
        %v1798 = vshrl.u32 %v1797, 7
        %v1799 = vsub.s32 %v1796, %v1798
        %v1800 = vrot.slane %v1778, %v1799
        %v1802 = vunpack.c.l.s4 1966171168
        %v1803 = vunpack.c.0.s8 %v1802
        %v1804 = vlaneseq
        %v1805 = vshrl.u32 %v1804, 7
        %v1806 = vsub.s32 %v1803, %v1805
        %v1807 = vrot.slane %v1779, %v1806
        %v1808 = vcombine.low %v1786, %v1793
        %v1809 = vcombine.low %v1800, %v1807
        %v1811 = vunpack.c.l.s4 1966171168
        %v1812 = vunpack.c.0.s8 %v1811
        %v1813 = vlaneseq
        %v1814 = vshrl.u32 %v1813, 7
        %v1815 = vsub.s32 %v1812, %v1814
        %v1816 = vrot.slane %v1808, %v1815
        %v1818 = vunpack.c.l.s4 1966171168
        %v1819 = vunpack.c.0.s8 %v1818
        %v1820 = vlaneseq
        %v1821 = vshrl.u32 %v1820, 7
        %v1822 = vsub.s32 %v1819, %v1821
        %v1823 = vrot.slane %v1809, %v1822
        %v1824 = vcombine.low %v1816, %v1823
        %s1826 = scalar_lea.vmem %s208, 2 [#allocation2]
        %1827 = vst [vmem:[%s1826] ss:$8 sm:$0xf] %v1824
        %1828 = vst [vmem:[%s1826] ss:$8 sm:$0xf0] %v1824
        %v1837 = vcombine.low %v508, %v509
        %v1838 = vcombine.low %v510, %v511
        %v1839 = vcombine.low %v512, %v513
        %v1840 = vcombine.low %v514, %v515
        %v1842 = vunpack.c.l.s4 1966171168
        %v1843 = vunpack.c.0.s8 %v1842
        %v1844 = vlaneseq
        %v1845 = vshrl.u32 %v1844, 7
        %v1846 = vsub.s32 %v1843, %v1845
        %v1847 = vrot.slane %v1837, %v1846
        %v1849 = vunpack.c.l.s4 1966171168
        %v1850 = vunpack.c.0.s8 %v1849
        %v1851 = vlaneseq
        %v1852 = vshrl.u32 %v1851, 7
        %v1853 = vsub.s32 %v1850, %v1852
        %v1854 = vrot.slane %v1838, %v1853
        %v1856 = vunpack.c.l.s4 1966171168
        %v1857 = vunpack.c.0.s8 %v1856
        %v1858 = vlaneseq
        %v1859 = vshrl.u32 %v1858, 7
        %v1860 = vsub.s32 %v1857, %v1859
        %v1861 = vrot.slane %v1839, %v1860
        %v1863 = vunpack.c.l.s4 1966171168
        %v1864 = vunpack.c.0.s8 %v1863
        %v1865 = vlaneseq
        %v1866 = vshrl.u32 %v1865, 7
        %v1867 = vsub.s32 %v1864, %v1866
        %v1868 = vrot.slane %v1840, %v1867
        %v1869 = vcombine.low %v1847, %v1854
        %v1870 = vcombine.low %v1861, %v1868
        %v1872 = vunpack.c.l.s4 1966171168
        %v1873 = vunpack.c.0.s8 %v1872
        %v1874 = vlaneseq
        %v1875 = vshrl.u32 %v1874, 7
        %v1876 = vsub.s32 %v1873, %v1875
        %v1877 = vrot.slane %v1869, %v1876
        %v1879 = vunpack.c.l.s4 1966171168
        %v1880 = vunpack.c.0.s8 %v1879
        %v1881 = vlaneseq
        %v1882 = vshrl.u32 %v1881, 7
        %v1883 = vsub.s32 %v1880, %v1882
        %v1884 = vrot.slane %v1870, %v1883
        %v1885 = vcombine.low %v1877, %v1884
        %s1887 = scalar_lea.vmem %s208, 3 [#allocation2]
        %1888 = vst [vmem:[%s1887] ss:$8 sm:$0xf] %v1885
        %1889 = vst [vmem:[%s1887] ss:$8 sm:$0xf0] %v1885
        %v1898 = vcombine.low %v572, %v573
        %v1899 = vcombine.low %v574, %v575
        %v1900 = vcombine.low %v576, %v577
        %v1901 = vcombine.low %v578, %v579
        %v1903 = vunpack.c.l.s4 1966171168
        %v1904 = vunpack.c.0.s8 %v1903
        %v1905 = vlaneseq
        %v1906 = vshrl.u32 %v1905, 7
        %v1907 = vsub.s32 %v1904, %v1906
        %v1908 = vrot.slane %v1898, %v1907
        %v1910 = vunpack.c.l.s4 1966171168
        %v1911 = vunpack.c.0.s8 %v1910
        %v1912 = vlaneseq
        %v1913 = vshrl.u32 %v1912, 7
        %v1914 = vsub.s32 %v1911, %v1913
        %v1915 = vrot.slane %v1899, %v1914
        %v1917 = vunpack.c.l.s4 1966171168
        %v1918 = vunpack.c.0.s8 %v1917
        %v1919 = vlaneseq
        %v1920 = vshrl.u32 %v1919, 7
        %v1921 = vsub.s32 %v1918, %v1920
        %v1922 = vrot.slane %v1900, %v1921
        %v1924 = vunpack.c.l.s4 1966171168
        %v1925 = vunpack.c.0.s8 %v1924
        %v1926 = vlaneseq
        %v1927 = vshrl.u32 %v1926, 7
        %v1928 = vsub.s32 %v1925, %v1927
        %v1929 = vrot.slane %v1901, %v1928
        %v1930 = vcombine.high %v1908, %v1915
        %v1931 = vcombine.high %v1922, %v1929
        %v1933 = vunpack.c.l.s4 1966171168
        %v1934 = vunpack.c.0.s8 %v1933
        %v1935 = vlaneseq
        %v1936 = vshrl.u32 %v1935, 7
        %v1937 = vsub.s32 %v1934, %v1936
        %v1938 = vrot.slane %v1930, %v1937
        %v1940 = vunpack.c.l.s4 1966171168
        %v1941 = vunpack.c.0.s8 %v1940
        %v1942 = vlaneseq
        %v1943 = vshrl.u32 %v1942, 7
        %v1944 = vsub.s32 %v1941, %v1943
        %v1945 = vrot.slane %v1931, %v1944
        %v1946 = vcombine.low %v1938, %v1945
        %s1948 = scalar_lea.vmem %s208, 4 [#allocation2]
        %1949 = vst [vmem:[%s1948] ss:$8 sm:$0xf] %v1946
        %1950 = vst [vmem:[%s1948] ss:$8 sm:$0xf0] %v1946
        %s1951 = scalar_lea.vmem %s219, 4
        %v1952 = vld [vmem:[%s1951] sm:$0x7]
        %1954 = vset.pattern.permute.xlu0 0
        %1955 = vperm.xlu0 %1954, %v1952
        %v1956 = vpop.permute.xlu0 %1955
        %v1958 = vmul.f32 %v1956, %v249
        %v1959 = vmul.f32 %v1956, %v253
        %v1960 = vmul.f32 %v1956, %v257
        %v1961 = vmul.f32 %v1956, %v261
        %v1962 = vmul.f32 %v1956, %v265
        %v1963 = vmul.f32 %v1956, %v269
        %v1964 = vmul.f32 %v1956, %v273
        %v1965 = vmul.f32 %v1956, %v277
        %1966 = vset.pattern.permute.xlu0 1
        %1967 = vperm.xlu0 %1966, %v1952
        %v1968 = vpop.permute.xlu0 %1967
        %v1970 = vmul.f32 %v1968, %v302
        %v1971 = vmul.f32 %v1968, %v306
        %v1972 = vmul.f32 %v1968, %v310
        %v1973 = vmul.f32 %v1968, %v314
        %v1974 = vmul.f32 %v1968, %v318
        %v1975 = vmul.f32 %v1968, %v322
        %v1976 = vmul.f32 %v1968, %v326
        %v1977 = vmul.f32 %v1968, %v330
        %v1978 = vadd.f32 %v1958, %v1970
        %v1979 = vadd.f32 %v1959, %v1971
        %v1980 = vadd.f32 %v1960, %v1972
        %v1981 = vadd.f32 %v1961, %v1973
        %v1982 = vadd.f32 %v1962, %v1974
        %v1983 = vadd.f32 %v1963, %v1975
        %v1984 = vadd.f32 %v1964, %v1976
        %v1985 = vadd.f32 %v1965, %v1977
        %1986 = vset.pattern.permute.xlu0 2
        %1987 = vperm.xlu0 %1986, %v1952
        %v1988 = vpop.permute.xlu0 %1987
        %v1990 = vmul.f32 %v1988, %v363
        %v1991 = vmul.f32 %v1988, %v367
        %v1992 = vmul.f32 %v1988, %v371
        %v1993 = vmul.f32 %v1988, %v375
        %v1994 = vmul.f32 %v1988, %v379
        %v1995 = vmul.f32 %v1988, %v383
        %v1996 = vmul.f32 %v1988, %v387
        %v1997 = vmul.f32 %v1988, %v391
        %v1998 = vadd.f32 %v1978, %v1990
        %v1999 = vadd.f32 %v1979, %v1991
        %v2000 = vadd.f32 %v1980, %v1992
        %v2001 = vadd.f32 %v1981, %v1993
        %v2002 = vadd.f32 %v1982, %v1994
        %v2003 = vadd.f32 %v1983, %v1995
        %v2004 = vadd.f32 %v1984, %v1996
        %v2005 = vadd.f32 %v1985, %v1997
        %2006 = vset.pattern.permute.xlu0 3
        %2007 = vperm.xlu0 %2006, %v1952
        %v2008 = vpop.permute.xlu0 %2007
        %v2010 = vadd.f32 %v1998, %v2008
        %v2011 = vadd.f32 %v1999, %v2008
        %v2012 = vadd.f32 %v2000, %v2008
        %v2013 = vadd.f32 %v2001, %v2008
        %v2014 = vadd.f32 %v2002, %v2008
        %v2015 = vadd.f32 %v2003, %v2008
        %v2016 = vadd.f32 %v2004, %v2008
        %v2017 = vadd.f32 %v2005, %v2008
        %v2018 = vrcp.pop %v2010
        %v2019 = vmul.f32 1.0, %v2018
        %v2020 = vrcp.pop %v2011
        %v2021 = vmul.f32 1.0, %v2020
        %v2022 = vrcp.pop %v2012
        %v2023 = vmul.f32 1.0, %v2022
        %v2024 = vrcp.pop %v2013
        %v2025 = vmul.f32 1.0, %v2024
        %v2026 = vrcp.pop %v2014
        %v2027 = vmul.f32 1.0, %v2026
        %v2028 = vrcp.pop %v2015
        %v2029 = vmul.f32 1.0, %v2028
        %v2030 = vrcp.pop %v2016
        %v2031 = vmul.f32 1.0, %v2030
        %v2032 = vrcp.pop %v2017
        %v2033 = vmul.f32 1.0, %v2032
        %v2042 = vrot.slane %v2019, 2
        %v2043 = vrot.slane %v2021, 2
        %v2044 = vrot.slane %v2023, 2
        %v2045 = vrot.slane %v2025, 2
        %v2046 = vrot.slane %v2027, 2
        %v2047 = vrot.slane %v2029, 2
        %v2048 = vrot.slane %v2031, 2
        %v2049 = vrot.slane %v2033, 2
        %v2058 = vmul.f32 %v2010, %v2042
        %v2059 = vmul.f32 %v2011, %v2043
        %v2060 = vmul.f32 %v2012, %v2044
        %v2061 = vmul.f32 %v2013, %v2045
        %v2062 = vmul.f32 %v2014, %v2046
        %v2063 = vmul.f32 %v2015, %v2047
        %v2064 = vmul.f32 %v2016, %v2048
        %v2065 = vmul.f32 %v2017, %v2049
        %v2066 = vmul.f32 %v2058, 0.0625
        %v2067 = vmul.f32 %v2059, 0.0625
        %v2068 = vmul.f32 %v2060, 0.0625
        %v2069 = vmul.f32 %v2061, 0.0625
        %v2070 = vmul.f32 %v2062, 0.0625
        %v2071 = vmul.f32 %v2063, 0.0625
        %v2072 = vmul.f32 %v2064, 0.0625
        %v2073 = vmul.f32 %v2065, 0.0625
        %v2074 = vmax.f32 %v2066, 0.0
        %v2075 = vmax.f32 %v2067, 0.0
        %v2076 = vmax.f32 %v2068, 0.0
        %v2077 = vmax.f32 %v2069, 0.0
        %v2078 = vmax.f32 %v2070, 0.0
        %v2079 = vmax.f32 %v2071, 0.0
        %v2080 = vmax.f32 %v2072, 0.0
        %v2081 = vmax.f32 %v2073, 0.0
        %v2082 = vmin.f32 %v2074, 1.0
        %v2083 = vmin.f32 %v2075, 1.0
        %v2084 = vmin.f32 %v2076, 1.0
        %v2085 = vmin.f32 %v2077, 1.0
        %v2086 = vmin.f32 %v2078, 1.0
        %v2087 = vmin.f32 %v2079, 1.0
        %v2088 = vmin.f32 %v2080, 1.0
        %v2089 = vmin.f32 %v2081, 1.0
        %v2090 = vmul.f32 %v2082, 2.0
        %v2091 = vmul.f32 %v2083, 2.0
        %v2092 = vmul.f32 %v2084, 2.0
        %v2093 = vmul.f32 %v2085, 2.0
        %v2094 = vmul.f32 %v2086, 2.0
        %v2095 = vmul.f32 %v2087, 2.0
        %v2096 = vmul.f32 %v2088, 2.0
        %v2097 = vmul.f32 %v2089, 2.0
        %v2098 = vsub.f32 %v2090, 1.0
        %v2099 = vsub.f32 %v2091, 1.0
        %v2100 = vsub.f32 %v2092, 1.0
        %v2101 = vsub.f32 %v2093, 1.0
        %v2102 = vsub.f32 %v2094, 1.0
        %v2103 = vsub.f32 %v2095, 1.0
        %v2104 = vsub.f32 %v2096, 1.0
        %v2105 = vsub.f32 %v2097, 1.0
        %v2106 = vrot.slane %v2019, 1
        %v2107 = vrot.slane %v2021, 1
        %v2108 = vrot.slane %v2023, 1
        %v2109 = vrot.slane %v2025, 1
        %v2110 = vrot.slane %v2027, 1
        %v2111 = vrot.slane %v2029, 1
        %v2112 = vrot.slane %v2031, 1
        %v2113 = vrot.slane %v2033, 1
        %v2122 = vmul.f32 %v2010, %v2106
        %v2123 = vmul.f32 %v2011, %v2107
        %v2124 = vmul.f32 %v2012, %v2108
        %v2125 = vmul.f32 %v2013, %v2109
        %v2126 = vmul.f32 %v2014, %v2110
        %v2127 = vmul.f32 %v2015, %v2111
        %v2128 = vmul.f32 %v2016, %v2112
        %v2129 = vmul.f32 %v2017, %v2113
        %v2130 = vmul.f32 %v2122, 0.0625
        %v2131 = vmul.f32 %v2123, 0.0625
        %v2132 = vmul.f32 %v2124, 0.0625
        %v2133 = vmul.f32 %v2125, 0.0625
        %v2134 = vmul.f32 %v2126, 0.0625
        %v2135 = vmul.f32 %v2127, 0.0625
        %v2136 = vmul.f32 %v2128, 0.0625
        %v2137 = vmul.f32 %v2129, 0.0625
        %v2138 = vmax.f32 %v2130, 0.0
        %v2139 = vmax.f32 %v2131, 0.0
        %v2140 = vmax.f32 %v2132, 0.0
        %v2141 = vmax.f32 %v2133, 0.0
        %v2142 = vmax.f32 %v2134, 0.0
        %v2143 = vmax.f32 %v2135, 0.0
        %v2144 = vmax.f32 %v2136, 0.0
        %v2145 = vmax.f32 %v2137, 0.0
        %v2146 = vmin.f32 %v2138, 1.0
        %v2147 = vmin.f32 %v2139, 1.0
        %v2148 = vmin.f32 %v2140, 1.0
        %v2149 = vmin.f32 %v2141, 1.0
        %v2150 = vmin.f32 %v2142, 1.0
        %v2151 = vmin.f32 %v2143, 1.0
        %v2152 = vmin.f32 %v2144, 1.0
        %v2153 = vmin.f32 %v2145, 1.0
        %v2154 = vmul.f32 %v2146, 2.0
        %v2155 = vmul.f32 %v2147, 2.0
        %v2156 = vmul.f32 %v2148, 2.0
        %v2157 = vmul.f32 %v2149, 2.0
        %v2158 = vmul.f32 %v2150, 2.0
        %v2159 = vmul.f32 %v2151, 2.0
        %v2160 = vmul.f32 %v2152, 2.0
        %v2161 = vmul.f32 %v2153, 2.0
        %v2162 = vsub.f32 %v2154, 1.0
        %v2163 = vsub.f32 %v2155, 1.0
        %v2164 = vsub.f32 %v2156, 1.0
        %v2165 = vsub.f32 %v2157, 1.0
        %v2166 = vsub.f32 %v2158, 1.0
        %v2167 = vsub.f32 %v2159, 1.0
        %v2168 = vsub.f32 %v2160, 1.0
        %v2169 = vsub.f32 %v2161, 1.0
        %v2170 = vadd.f32 %v2098, 1.0
        %v2171 = vadd.f32 %v2099, 1.0
        %v2172 = vadd.f32 %v2100, 1.0
        %v2173 = vadd.f32 %v2101, 1.0
        %v2174 = vadd.f32 %v2102, 1.0
        %v2175 = vadd.f32 %v2103, 1.0
        %v2176 = vadd.f32 %v2104, 1.0
        %v2177 = vadd.f32 %v2105, 1.0
        %v2178 = vmul.f32 %v2170, 16.0
        %v2179 = vmul.f32 %v2171, 16.0
        %v2180 = vmul.f32 %v2172, 16.0
        %v2181 = vmul.f32 %v2173, 16.0
        %v2182 = vmul.f32 %v2174, 16.0
        %v2183 = vmul.f32 %v2175, 16.0
        %v2184 = vmul.f32 %v2176, 16.0
        %v2185 = vmul.f32 %v2177, 16.0
        %v2186 = vsub.f32 %v2178, 1.0
        %v2187 = vsub.f32 %v2179, 1.0
        %v2188 = vsub.f32 %v2180, 1.0
        %v2189 = vsub.f32 %v2181, 1.0
        %v2190 = vsub.f32 %v2182, 1.0
        %v2191 = vsub.f32 %v2183, 1.0
        %v2192 = vsub.f32 %v2184, 1.0
        %v2193 = vsub.f32 %v2185, 1.0
        %v2194 = vmul.f32 %v2186, 0.5
        %v2195 = vmul.f32 %v2187, 0.5
        %v2196 = vmul.f32 %v2188, 0.5
        %v2197 = vmul.f32 %v2189, 0.5
        %v2198 = vmul.f32 %v2190, 0.5
        %v2199 = vmul.f32 %v2191, 0.5
        %v2200 = vmul.f32 %v2192, 0.5
        %v2201 = vmul.f32 %v2193, 0.5
        %v2202 = vadd.f32 %v2162, 1.0
        %v2203 = vadd.f32 %v2163, 1.0
        %v2204 = vadd.f32 %v2164, 1.0
        %v2205 = vadd.f32 %v2165, 1.0
        %v2206 = vadd.f32 %v2166, 1.0
        %v2207 = vadd.f32 %v2167, 1.0
        %v2208 = vadd.f32 %v2168, 1.0
        %v2209 = vadd.f32 %v2169, 1.0
        %v2210 = vmul.f32 %v2202, 16.0
        %v2211 = vmul.f32 %v2203, 16.0
        %v2212 = vmul.f32 %v2204, 16.0
        %v2213 = vmul.f32 %v2205, 16.0
        %v2214 = vmul.f32 %v2206, 16.0
        %v2215 = vmul.f32 %v2207, 16.0
        %v2216 = vmul.f32 %v2208, 16.0
        %v2217 = vmul.f32 %v2209, 16.0
        %v2218 = vsub.f32 %v2210, 1.0
        %v2219 = vsub.f32 %v2211, 1.0
        %v2220 = vsub.f32 %v2212, 1.0
        %v2221 = vsub.f32 %v2213, 1.0
        %v2222 = vsub.f32 %v2214, 1.0
        %v2223 = vsub.f32 %v2215, 1.0
        %v2224 = vsub.f32 %v2216, 1.0
        %v2225 = vsub.f32 %v2217, 1.0
        %v2226 = vmul.f32 %v2218, 0.5
        %v2227 = vmul.f32 %v2219, 0.5
        %v2228 = vmul.f32 %v2220, 0.5
        %v2229 = vmul.f32 %v2221, 0.5
        %v2230 = vmul.f32 %v2222, 0.5
        %v2231 = vmul.f32 %v2223, 0.5
        %v2232 = vmul.f32 %v2224, 0.5
        %v2233 = vmul.f32 %v2225, 0.5
        %v2234 = vfloor.f32 %v2194
        %v2235 = vfloor.f32 %v2195
        %v2236 = vfloor.f32 %v2196
        %v2237 = vfloor.f32 %v2197
        %v2238 = vfloor.f32 %v2198
        %v2239 = vfloor.f32 %v2199
        %v2240 = vfloor.f32 %v2200
        %v2241 = vfloor.f32 %v2201
        %v2242 = vfloor.f32 %v2226
        %v2243 = vfloor.f32 %v2227
        %v2244 = vfloor.f32 %v2228
        %v2245 = vfloor.f32 %v2229
        %v2246 = vfloor.f32 %v2230
        %v2247 = vfloor.f32 %v2231
        %v2248 = vfloor.f32 %v2232
        %v2249 = vfloor.f32 %v2233
        %v2250 = vcvt.f32.s32.to.zero.pseudo %v2234
        %v2251 = vcvt.f32.s32.to.zero.pseudo %v2235
        %v2252 = vcvt.f32.s32.to.zero.pseudo %v2236
        %v2253 = vcvt.f32.s32.to.zero.pseudo %v2237
        %v2254 = vcvt.f32.s32.to.zero.pseudo %v2238
        %v2255 = vcvt.f32.s32.to.zero.pseudo %v2239
        %v2256 = vcvt.f32.s32.to.zero.pseudo %v2240
        %v2257 = vcvt.f32.s32.to.zero.pseudo %v2241
        %v2258 = vcvt.f32.s32.to.zero.pseudo %v2242
        %v2259 = vcvt.f32.s32.to.zero.pseudo %v2243
        %v2260 = vcvt.f32.s32.to.zero.pseudo %v2244
        %v2261 = vcvt.f32.s32.to.zero.pseudo %v2245
        %v2262 = vcvt.f32.s32.to.zero.pseudo %v2246
        %v2263 = vcvt.f32.s32.to.zero.pseudo %v2247
        %v2264 = vcvt.f32.s32.to.zero.pseudo %v2248
        %v2265 = vcvt.f32.s32.to.zero.pseudo %v2249
        %v2266 = vsub.f32 %v2194, %v2234
        %v2267 = vsub.f32 %v2195, %v2235
        %v2268 = vsub.f32 %v2196, %v2236
        %v2269 = vsub.f32 %v2197, %v2237
        %v2270 = vsub.f32 %v2198, %v2238
        %v2271 = vsub.f32 %v2199, %v2239
        %v2272 = vsub.f32 %v2200, %v2240
        %v2273 = vsub.f32 %v2201, %v2241
        %v2274 = vsub.f32 1.0, %v2266
        %v2275 = vsub.f32 1.0, %v2267
        %v2276 = vsub.f32 1.0, %v2268
        %v2277 = vsub.f32 1.0, %v2269
        %v2278 = vsub.f32 1.0, %v2270
        %v2279 = vsub.f32 1.0, %v2271
        %v2280 = vsub.f32 1.0, %v2272
        %v2281 = vsub.f32 1.0, %v2273
        %v2282 = vsub.f32 %v2226, %v2242
        %v2283 = vsub.f32 %v2227, %v2243
        %v2284 = vsub.f32 %v2228, %v2244
        %v2285 = vsub.f32 %v2229, %v2245
        %v2286 = vsub.f32 %v2230, %v2246
        %v2287 = vsub.f32 %v2231, %v2247
        %v2288 = vsub.f32 %v2232, %v2248
        %v2289 = vsub.f32 %v2233, %v2249
        %v2290 = vsub.f32 1.0, %v2282
        %v2291 = vsub.f32 1.0, %v2283
        %v2292 = vsub.f32 1.0, %v2284
        %v2293 = vsub.f32 1.0, %v2285
        %v2294 = vsub.f32 1.0, %v2286
        %v2295 = vsub.f32 1.0, %v2287
        %v2296 = vsub.f32 1.0, %v2288
        %v2297 = vsub.f32 1.0, %v2289
        %v2298 = vlaneseq
        %v2299 = vshrl.u32 %v2298, 7
        %v2300 = vsub.s32 0, %v2299
        %v2301 = vrot.slane %v2250, %v2300
        %v2302 = vlaneseq
        %v2303 = vshrl.u32 %v2302, 7
        %v2304 = vsub.s32 0, %v2303
        %v2305 = vrot.slane %v2251, %v2304
        %v2306 = vlaneseq
        %v2307 = vshrl.u32 %v2306, 7
        %v2308 = vsub.s32 0, %v2307
        %v2309 = vrot.slane %v2252, %v2308
        %v2310 = vlaneseq
        %v2311 = vshrl.u32 %v2310, 7
        %v2312 = vsub.s32 0, %v2311
        %v2313 = vrot.slane %v2253, %v2312
        %v2314 = vlaneseq
        %v2315 = vshrl.u32 %v2314, 7
        %v2316 = vsub.s32 0, %v2315
        %v2317 = vrot.slane %v2254, %v2316
        %v2318 = vlaneseq
        %v2319 = vshrl.u32 %v2318, 7
        %v2320 = vsub.s32 0, %v2319
        %v2321 = vrot.slane %v2255, %v2320
        %v2322 = vlaneseq
        %v2323 = vshrl.u32 %v2322, 7
        %v2324 = vsub.s32 0, %v2323
        %v2325 = vrot.slane %v2256, %v2324
        %v2326 = vlaneseq
        %v2327 = vshrl.u32 %v2326, 7
        %v2328 = vsub.s32 0, %v2327
        %v2329 = vrot.slane %v2257, %v2328
        %vm2330 = vcmp.eq.s32.totalorder %v237, %v2301
        %vm2331 = vcmp.eq.s32.totalorder %v237, %v2305
        %vm2332 = vcmp.eq.s32.totalorder %v237, %v2309
        %vm2333 = vcmp.eq.s32.totalorder %v237, %v2313
        %vm2334 = vcmp.eq.s32.totalorder %v237, %v2317
        %vm2335 = vcmp.eq.s32.totalorder %v237, %v2321
        %vm2336 = vcmp.eq.s32.totalorder %v237, %v2325
        %vm2337 = vcmp.eq.s32.totalorder %v237, %v2329
        %vm2338 = vcmp.eq.s32.totalorder %v238, %v2301
        %vm2339 = vcmp.eq.s32.totalorder %v238, %v2305
        %vm2340 = vcmp.eq.s32.totalorder %v238, %v2309
        %vm2341 = vcmp.eq.s32.totalorder %v238, %v2313
        %vm2342 = vcmp.eq.s32.totalorder %v238, %v2317
        %vm2343 = vcmp.eq.s32.totalorder %v238, %v2321
        %vm2344 = vcmp.eq.s32.totalorder %v238, %v2325
        %vm2345 = vcmp.eq.s32.totalorder %v238, %v2329
        %v2346 = vlaneseq
        %v2347 = vshrl.u32 %v2346, 7
        %v2348 = vsub.s32 0, %v2347
        %v2349 = vrot.slane %v2274, %v2348
        %v2350 = vlaneseq
        %v2351 = vshrl.u32 %v2350, 7
        %v2352 = vsub.s32 0, %v2351
        %v2353 = vrot.slane %v2275, %v2352
        %v2354 = vlaneseq
        %v2355 = vshrl.u32 %v2354, 7
        %v2356 = vsub.s32 0, %v2355
        %v2357 = vrot.slane %v2276, %v2356
        %v2358 = vlaneseq
        %v2359 = vshrl.u32 %v2358, 7
        %v2360 = vsub.s32 0, %v2359
        %v2361 = vrot.slane %v2277, %v2360
        %v2362 = vlaneseq
        %v2363 = vshrl.u32 %v2362, 7
        %v2364 = vsub.s32 0, %v2363
        %v2365 = vrot.slane %v2278, %v2364
        %v2366 = vlaneseq
        %v2367 = vshrl.u32 %v2366, 7
        %v2368 = vsub.s32 0, %v2367
        %v2369 = vrot.slane %v2279, %v2368
        %v2370 = vlaneseq
        %v2371 = vshrl.u32 %v2370, 7
        %v2372 = vsub.s32 0, %v2371
        %v2373 = vrot.slane %v2280, %v2372
        %v2374 = vlaneseq
        %v2375 = vshrl.u32 %v2374, 7
        %v2376 = vsub.s32 0, %v2375
        %v2377 = vrot.slane %v2281, %v2376
        %v2378 = vsel %vm2330, %v2349, 0.0
        %v2379 = vsel %vm2331, %v2353, 0.0
        %v2380 = vsel %vm2332, %v2357, 0.0
        %v2381 = vsel %vm2333, %v2361, 0.0
        %v2382 = vsel %vm2334, %v2365, 0.0
        %v2383 = vsel %vm2335, %v2369, 0.0
        %v2384 = vsel %vm2336, %v2373, 0.0
        %v2385 = vsel %vm2337, %v2377, 0.0
        %v2386 = vsel %vm2338, %v2349, 0.0
        %v2387 = vsel %vm2339, %v2353, 0.0
        %v2388 = vsel %vm2340, %v2357, 0.0
        %v2389 = vsel %vm2341, %v2361, 0.0
        %v2390 = vsel %vm2342, %v2365, 0.0
        %v2391 = vsel %vm2343, %v2369, 0.0
        %v2392 = vsel %vm2344, %v2373, 0.0
        %v2393 = vsel %vm2345, %v2377, 0.0
        %v2394 = vadd.s32 %v2250, 1
        %v2395 = vadd.s32 %v2251, 1
        %v2396 = vadd.s32 %v2252, 1
        %v2397 = vadd.s32 %v2253, 1
        %v2398 = vadd.s32 %v2254, 1
        %v2399 = vadd.s32 %v2255, 1
        %v2400 = vadd.s32 %v2256, 1
        %v2401 = vadd.s32 %v2257, 1
        %v2402 = vlaneseq
        %v2403 = vshrl.u32 %v2402, 7
        %v2404 = vsub.s32 0, %v2403
        %v2405 = vrot.slane %v2394, %v2404
        %v2406 = vlaneseq
        %v2407 = vshrl.u32 %v2406, 7
        %v2408 = vsub.s32 0, %v2407
        %v2409 = vrot.slane %v2395, %v2408
        %v2410 = vlaneseq
        %v2411 = vshrl.u32 %v2410, 7
        %v2412 = vsub.s32 0, %v2411
        %v2413 = vrot.slane %v2396, %v2412
        %v2414 = vlaneseq
        %v2415 = vshrl.u32 %v2414, 7
        %v2416 = vsub.s32 0, %v2415
        %v2417 = vrot.slane %v2397, %v2416
        %v2418 = vlaneseq
        %v2419 = vshrl.u32 %v2418, 7
        %v2420 = vsub.s32 0, %v2419
        %v2421 = vrot.slane %v2398, %v2420
        %v2422 = vlaneseq
        %v2423 = vshrl.u32 %v2422, 7
        %v2424 = vsub.s32 0, %v2423
        %v2425 = vrot.slane %v2399, %v2424
        %v2426 = vlaneseq
        %v2427 = vshrl.u32 %v2426, 7
        %v2428 = vsub.s32 0, %v2427
        %v2429 = vrot.slane %v2400, %v2428
        %v2430 = vlaneseq
        %v2431 = vshrl.u32 %v2430, 7
        %v2432 = vsub.s32 0, %v2431
        %v2433 = vrot.slane %v2401, %v2432
        %vm2434 = vcmp.eq.s32.totalorder %v237, %v2405
        %vm2435 = vcmp.eq.s32.totalorder %v237, %v2409
        %vm2436 = vcmp.eq.s32.totalorder %v237, %v2413
        %vm2437 = vcmp.eq.s32.totalorder %v237, %v2417
        %vm2438 = vcmp.eq.s32.totalorder %v237, %v2421
        %vm2439 = vcmp.eq.s32.totalorder %v237, %v2425
        %vm2440 = vcmp.eq.s32.totalorder %v237, %v2429
        %vm2441 = vcmp.eq.s32.totalorder %v237, %v2433
        %vm2442 = vcmp.eq.s32.totalorder %v238, %v2405
        %vm2443 = vcmp.eq.s32.totalorder %v238, %v2409
        %vm2444 = vcmp.eq.s32.totalorder %v238, %v2413
        %vm2445 = vcmp.eq.s32.totalorder %v238, %v2417
        %vm2446 = vcmp.eq.s32.totalorder %v238, %v2421
        %vm2447 = vcmp.eq.s32.totalorder %v238, %v2425
        %vm2448 = vcmp.eq.s32.totalorder %v238, %v2429
        %vm2449 = vcmp.eq.s32.totalorder %v238, %v2433
        %v2450 = vlaneseq
        %v2451 = vshrl.u32 %v2450, 7
        %v2452 = vsub.s32 0, %v2451
        %v2453 = vrot.slane %v2266, %v2452
        %v2454 = vlaneseq
        %v2455 = vshrl.u32 %v2454, 7
        %v2456 = vsub.s32 0, %v2455
        %v2457 = vrot.slane %v2267, %v2456
        %v2458 = vlaneseq
        %v2459 = vshrl.u32 %v2458, 7
        %v2460 = vsub.s32 0, %v2459
        %v2461 = vrot.slane %v2268, %v2460
        %v2462 = vlaneseq
        %v2463 = vshrl.u32 %v2462, 7
        %v2464 = vsub.s32 0, %v2463
        %v2465 = vrot.slane %v2269, %v2464
        %v2466 = vlaneseq
        %v2467 = vshrl.u32 %v2466, 7
        %v2468 = vsub.s32 0, %v2467
        %v2469 = vrot.slane %v2270, %v2468
        %v2470 = vlaneseq
        %v2471 = vshrl.u32 %v2470, 7
        %v2472 = vsub.s32 0, %v2471
        %v2473 = vrot.slane %v2271, %v2472
        %v2474 = vlaneseq
        %v2475 = vshrl.u32 %v2474, 7
        %v2476 = vsub.s32 0, %v2475
        %v2477 = vrot.slane %v2272, %v2476
        %v2478 = vlaneseq
        %v2479 = vshrl.u32 %v2478, 7
        %v2480 = vsub.s32 0, %v2479
        %v2481 = vrot.slane %v2273, %v2480
        %v2482 = vsel %vm2434, %v2453, 0.0
        %v2483 = vsel %vm2435, %v2457, 0.0
        %v2484 = vsel %vm2436, %v2461, 0.0
        %v2485 = vsel %vm2437, %v2465, 0.0
        %v2486 = vsel %vm2438, %v2469, 0.0
        %v2487 = vsel %vm2439, %v2473, 0.0
        %v2488 = vsel %vm2440, %v2477, 0.0
        %v2489 = vsel %vm2441, %v2481, 0.0
        %v2490 = vsel %vm2442, %v2453, 0.0
        %v2491 = vsel %vm2443, %v2457, 0.0
        %v2492 = vsel %vm2444, %v2461, 0.0
        %v2493 = vsel %vm2445, %v2465, 0.0
        %v2494 = vsel %vm2446, %v2469, 0.0
        %v2495 = vsel %vm2447, %v2473, 0.0
        %v2496 = vsel %vm2448, %v2477, 0.0
        %v2497 = vsel %vm2449, %v2481, 0.0
        %v2498 = vadd.f32 %v2378, %v2482
        %v2499 = vadd.f32 %v2379, %v2483
        %v2500 = vadd.f32 %v2380, %v2484
        %v2501 = vadd.f32 %v2381, %v2485
        %v2502 = vadd.f32 %v2382, %v2486
        %v2503 = vadd.f32 %v2383, %v2487
        %v2504 = vadd.f32 %v2384, %v2488
        %v2505 = vadd.f32 %v2385, %v2489
        %v2506 = vadd.f32 %v2386, %v2490
        %v2507 = vadd.f32 %v2387, %v2491
        %v2508 = vadd.f32 %v2388, %v2492
        %v2509 = vadd.f32 %v2389, %v2493
        %v2510 = vadd.f32 %v2390, %v2494
        %v2511 = vadd.f32 %v2391, %v2495
        %v2512 = vadd.f32 %v2392, %v2496
        %v2513 = vadd.f32 %v2393, %v2497
        %v2514 = vpack.c.bf16 %v2506, %v2498
        %v2515 = vpack.c.bf16 %v2507, %v2499
        %v2516 = vpack.c.bf16 %v2508, %v2500
        %v2517 = vpack.c.bf16 %v2509, %v2501
        %v2518 = vpack.c.bf16 %v2510, %v2502
        %v2519 = vpack.c.bf16 %v2511, %v2503
        %v2520 = vpack.c.bf16 %v2512, %v2504
        %v2521 = vpack.c.bf16 %v2513, %v2505
        %v2522 = vlaneseq
        %v2523 = vshrl.u32 %v2522, 7
        %v2524 = vsub.s32 1, %v2523
        %v2525 = vrot.slane %v2258, %v2524
        %v2526 = vlaneseq
        %v2527 = vshrl.u32 %v2526, 7
        %v2528 = vsub.s32 1, %v2527
        %v2529 = vrot.slane %v2259, %v2528
        %v2530 = vlaneseq
        %v2531 = vshrl.u32 %v2530, 7
        %v2532 = vsub.s32 1, %v2531
        %v2533 = vrot.slane %v2260, %v2532
        %v2534 = vlaneseq
        %v2535 = vshrl.u32 %v2534, 7
        %v2536 = vsub.s32 1, %v2535
        %v2537 = vrot.slane %v2261, %v2536
        %v2538 = vlaneseq
        %v2539 = vshrl.u32 %v2538, 7
        %v2540 = vsub.s32 1, %v2539
        %v2541 = vrot.slane %v2262, %v2540
        %v2542 = vlaneseq
        %v2543 = vshrl.u32 %v2542, 7
        %v2544 = vsub.s32 1, %v2543
        %v2545 = vrot.slane %v2263, %v2544
        %v2546 = vlaneseq
        %v2547 = vshrl.u32 %v2546, 7
        %v2548 = vsub.s32 1, %v2547
        %v2549 = vrot.slane %v2264, %v2548
        %v2550 = vlaneseq
        %v2551 = vshrl.u32 %v2550, 7
        %v2552 = vsub.s32 1, %v2551
        %v2553 = vrot.slane %v2265, %v2552
        %vm2554 = vcmp.eq.s32.totalorder %v237, %v2525
        %vm2555 = vcmp.eq.s32.totalorder %v237, %v2529
        %vm2556 = vcmp.eq.s32.totalorder %v237, %v2533
        %vm2557 = vcmp.eq.s32.totalorder %v237, %v2537
        %vm2558 = vcmp.eq.s32.totalorder %v237, %v2541
        %vm2559 = vcmp.eq.s32.totalorder %v237, %v2545
        %vm2560 = vcmp.eq.s32.totalorder %v237, %v2549
        %vm2561 = vcmp.eq.s32.totalorder %v237, %v2553
        %vm2562 = vcmp.eq.s32.totalorder %v238, %v2525
        %vm2563 = vcmp.eq.s32.totalorder %v238, %v2529
        %vm2564 = vcmp.eq.s32.totalorder %v238, %v2533
        %vm2565 = vcmp.eq.s32.totalorder %v238, %v2537
        %vm2566 = vcmp.eq.s32.totalorder %v238, %v2541
        %vm2567 = vcmp.eq.s32.totalorder %v238, %v2545
        %vm2568 = vcmp.eq.s32.totalorder %v238, %v2549
        %vm2569 = vcmp.eq.s32.totalorder %v238, %v2553
        %v2570 = vlaneseq
        %v2571 = vshrl.u32 %v2570, 7
        %v2572 = vsub.s32 1, %v2571
        %v2573 = vrot.slane %v2290, %v2572
        %v2574 = vlaneseq
        %v2575 = vshrl.u32 %v2574, 7
        %v2576 = vsub.s32 1, %v2575
        %v2577 = vrot.slane %v2291, %v2576
        %v2578 = vlaneseq
        %v2579 = vshrl.u32 %v2578, 7
        %v2580 = vsub.s32 1, %v2579
        %v2581 = vrot.slane %v2292, %v2580
        %v2582 = vlaneseq
        %v2583 = vshrl.u32 %v2582, 7
        %v2584 = vsub.s32 1, %v2583
        %v2585 = vrot.slane %v2293, %v2584
        %v2586 = vlaneseq
        %v2587 = vshrl.u32 %v2586, 7
        %v2588 = vsub.s32 1, %v2587
        %v2589 = vrot.slane %v2294, %v2588
        %v2590 = vlaneseq
        %v2591 = vshrl.u32 %v2590, 7
        %v2592 = vsub.s32 1, %v2591
        %v2593 = vrot.slane %v2295, %v2592
        %v2594 = vlaneseq
        %v2595 = vshrl.u32 %v2594, 7
        %v2596 = vsub.s32 1, %v2595
        %v2597 = vrot.slane %v2296, %v2596
        %v2598 = vlaneseq
        %v2599 = vshrl.u32 %v2598, 7
        %v2600 = vsub.s32 1, %v2599
        %v2601 = vrot.slane %v2297, %v2600
        %v2602 = vsel %vm2554, %v2573, 0.0
        %v2603 = vsel %vm2555, %v2577, 0.0
        %v2604 = vsel %vm2556, %v2581, 0.0
        %v2605 = vsel %vm2557, %v2585, 0.0
        %v2606 = vsel %vm2558, %v2589, 0.0
        %v2607 = vsel %vm2559, %v2593, 0.0
        %v2608 = vsel %vm2560, %v2597, 0.0
        %v2609 = vsel %vm2561, %v2601, 0.0
        %v2610 = vsel %vm2562, %v2573, 0.0
        %v2611 = vsel %vm2563, %v2577, 0.0
        %v2612 = vsel %vm2564, %v2581, 0.0
        %v2613 = vsel %vm2565, %v2585, 0.0
        %v2614 = vsel %vm2566, %v2589, 0.0
        %v2615 = vsel %vm2567, %v2593, 0.0
        %v2616 = vsel %vm2568, %v2597, 0.0
        %v2617 = vsel %vm2569, %v2601, 0.0
        %v2618 = vadd.s32 %v2258, 1
        %v2619 = vadd.s32 %v2259, 1
        %v2620 = vadd.s32 %v2260, 1
        %v2621 = vadd.s32 %v2261, 1
        %v2622 = vadd.s32 %v2262, 1
        %v2623 = vadd.s32 %v2263, 1
        %v2624 = vadd.s32 %v2264, 1
        %v2625 = vadd.s32 %v2265, 1
        %v2626 = vlaneseq
        %v2627 = vshrl.u32 %v2626, 7
        %v2628 = vsub.s32 1, %v2627
        %v2629 = vrot.slane %v2618, %v2628
        %v2630 = vlaneseq
        %v2631 = vshrl.u32 %v2630, 7
        %v2632 = vsub.s32 1, %v2631
        %v2633 = vrot.slane %v2619, %v2632
        %v2634 = vlaneseq
        %v2635 = vshrl.u32 %v2634, 7
        %v2636 = vsub.s32 1, %v2635
        %v2637 = vrot.slane %v2620, %v2636
        %v2638 = vlaneseq
        %v2639 = vshrl.u32 %v2638, 7
        %v2640 = vsub.s32 1, %v2639
        %v2641 = vrot.slane %v2621, %v2640
        %v2642 = vlaneseq
        %v2643 = vshrl.u32 %v2642, 7
        %v2644 = vsub.s32 1, %v2643
        %v2645 = vrot.slane %v2622, %v2644
        %v2646 = vlaneseq
        %v2647 = vshrl.u32 %v2646, 7
        %v2648 = vsub.s32 1, %v2647
        %v2649 = vrot.slane %v2623, %v2648
        %v2650 = vlaneseq
        %v2651 = vshrl.u32 %v2650, 7
        %v2652 = vsub.s32 1, %v2651
        %v2653 = vrot.slane %v2624, %v2652
        %v2654 = vlaneseq
        %v2655 = vshrl.u32 %v2654, 7
        %v2656 = vsub.s32 1, %v2655
        %v2657 = vrot.slane %v2625, %v2656
        %vm2658 = vcmp.eq.s32.totalorder %v237, %v2629
        %vm2659 = vcmp.eq.s32.totalorder %v237, %v2633
        %vm2660 = vcmp.eq.s32.totalorder %v237, %v2637
        %vm2661 = vcmp.eq.s32.totalorder %v237, %v2641
        %vm2662 = vcmp.eq.s32.totalorder %v237, %v2645
        %vm2663 = vcmp.eq.s32.totalorder %v237, %v2649
        %vm2664 = vcmp.eq.s32.totalorder %v237, %v2653
        %vm2665 = vcmp.eq.s32.totalorder %v237, %v2657
        %vm2666 = vcmp.eq.s32.totalorder %v238, %v2629
        %vm2667 = vcmp.eq.s32.totalorder %v238, %v2633
        %vm2668 = vcmp.eq.s32.totalorder %v238, %v2637
        %vm2669 = vcmp.eq.s32.totalorder %v238, %v2641
        %vm2670 = vcmp.eq.s32.totalorder %v238, %v2645
        %vm2671 = vcmp.eq.s32.totalorder %v238, %v2649
        %vm2672 = vcmp.eq.s32.totalorder %v238, %v2653
        %vm2673 = vcmp.eq.s32.totalorder %v238, %v2657
        %v2674 = vlaneseq
        %v2675 = vshrl.u32 %v2674, 7
        %v2676 = vsub.s32 1, %v2675
        %v2677 = vrot.slane %v2282, %v2676
        %v2678 = vlaneseq
        %v2679 = vshrl.u32 %v2678, 7
        %v2680 = vsub.s32 1, %v2679
        %v2681 = vrot.slane %v2283, %v2680
        %v2682 = vlaneseq
        %v2683 = vshrl.u32 %v2682, 7
        %v2684 = vsub.s32 1, %v2683
        %v2685 = vrot.slane %v2284, %v2684
        %v2686 = vlaneseq
        %v2687 = vshrl.u32 %v2686, 7
        %v2688 = vsub.s32 1, %v2687
        %v2689 = vrot.slane %v2285, %v2688
        %v2690 = vlaneseq
        %v2691 = vshrl.u32 %v2690, 7
        %v2692 = vsub.s32 1, %v2691
        %v2693 = vrot.slane %v2286, %v2692
        %v2694 = vlaneseq
        %v2695 = vshrl.u32 %v2694, 7
        %v2696 = vsub.s32 1, %v2695
        %v2697 = vrot.slane %v2287, %v2696
        %v2698 = vlaneseq
        %v2699 = vshrl.u32 %v2698, 7
        %v2700 = vsub.s32 1, %v2699
        %v2701 = vrot.slane %v2288, %v2700
        %v2702 = vlaneseq
        %v2703 = vshrl.u32 %v2702, 7
        %v2704 = vsub.s32 1, %v2703
        %v2705 = vrot.slane %v2289, %v2704
        %v2706 = vsel %vm2658, %v2677, 0.0
        %v2707 = vsel %vm2659, %v2681, 0.0
        %v2708 = vsel %vm2660, %v2685, 0.0
        %v2709 = vsel %vm2661, %v2689, 0.0
        %v2710 = vsel %vm2662, %v2693, 0.0
        %v2711 = vsel %vm2663, %v2697, 0.0
        %v2712 = vsel %vm2664, %v2701, 0.0
        %v2713 = vsel %vm2665, %v2705, 0.0
        %v2714 = vsel %vm2666, %v2677, 0.0
        %v2715 = vsel %vm2667, %v2681, 0.0
        %v2716 = vsel %vm2668, %v2685, 0.0
        %v2717 = vsel %vm2669, %v2689, 0.0
        %v2718 = vsel %vm2670, %v2693, 0.0
        %v2719 = vsel %vm2671, %v2697, 0.0
        %v2720 = vsel %vm2672, %v2701, 0.0
        %v2721 = vsel %vm2673, %v2705, 0.0
        %v2722 = vadd.f32 %v2602, %v2706
        %v2723 = vadd.f32 %v2603, %v2707
        %v2724 = vadd.f32 %v2604, %v2708
        %v2725 = vadd.f32 %v2605, %v2709
        %v2726 = vadd.f32 %v2606, %v2710
        %v2727 = vadd.f32 %v2607, %v2711
        %v2728 = vadd.f32 %v2608, %v2712
        %v2729 = vadd.f32 %v2609, %v2713
        %v2730 = vadd.f32 %v2610, %v2714
        %v2731 = vadd.f32 %v2611, %v2715
        %v2732 = vadd.f32 %v2612, %v2716
        %v2733 = vadd.f32 %v2613, %v2717
        %v2734 = vadd.f32 %v2614, %v2718
        %v2735 = vadd.f32 %v2615, %v2719
        %v2736 = vadd.f32 %v2616, %v2720
        %v2737 = vadd.f32 %v2617, %v2721
        %s2738 = scalar_lea.vmem %s226, 24
        %v2739 = vld [vmem:[%s2738] sm:$0xf]
        %v2740 = vld [vmem:[%s2738 + $0x4] sm:$0xf]
        %v2741 = vld [vmem:[%s2738 + $0x8] sm:$0xf]
        %v2742 = vld [vmem:[%s2738 + $0xc] sm:$0xf]
        %v2743 = vld [vmem:[%s2738 + $0x10] sm:$0xf]
        %v2744 = vld [vmem:[%s2738 + $0x14] sm:$0xf]
        %v2751 = vunpack.c.l.b16 %v2739
        %v2752 = vunpack.c.l.b16 %v2740
        %v2753 = vunpack.c.l.b16 %v2741
        %v2754 = vunpack.c.l.b16 %v2742
        %v2755 = vunpack.c.l.b16 %v2743
        %v2756 = vunpack.c.l.b16 %v2744
        %v2757 = vpack.c.b16 %v2752, %v2751
        %v2758 = vpack.c.b16 %v2754, %v2753
        %v2759 = vpack.c.b16 %v2756, %v2755
        %v2761 = vsel %vm1169, %v2757, 0
        %v2764 = vsel %vm1169, %v2758, 0
        %v2767 = vsel %vm1169, %v2759, 0
        %2769 = vmatprep.subr.bf16.mxu0 %v2515
        %2770 = vmatpush1.bf16.msra.mxu0 %v2514
        %2771 = vmatprep.subr.bf16.mxu0 0
        %2772 = vmatpush1.bf16.msra.mxu0 0
        %2773 = vmatprep.subr.bf16.mxu0 0
        %2774 = vmatpush1.bf16.msra.mxu0 0
        %2775 = vmatprep.subr.bf16.mxu0 0
        %2776 = vmatpush1.bf16.msra.mxu0 0
        %2777 = vmatprep.subr.bf16.mxu0 0
        %2778 = vmatpush1.bf16.msra.mxu0 0
        %2779 = vmatprep.subr.bf16.mxu0 0
        %2780 = vmatpush1.bf16.msra.mxu0 0
        %2781 = vmatprep.subr.bf16.mxu0 0
        %2782 = vmatpush1.bf16.msra.mxu0 0
        %2783 = vmatprep.subr.bf16.mxu0 0
        %2784 = vmatpush1.bf16.msra.mxu0 0
        %2785 = vmatprep.subr.bf16.mxu0 0
        %2786 = vmatpush1.bf16.msra.mxu0 0
        %2787 = vmatprep.subr.bf16.mxu0 0
        %2788 = vmatpush1.bf16.msra.mxu0 0
        %2789 = vmatprep.subr.bf16.mxu0 0
        %2790 = vmatpush1.bf16.msra.mxu0 0
        %2791 = vmatprep.subr.bf16.mxu0 0
        %2792 = vmatpush1.bf16.msra.mxu0 0
        %2793 = vmatprep.subr.bf16.mxu0 0
        %2794 = vmatpush1.bf16.msra.mxu0 0
        %2795 = vmatprep.subr.bf16.mxu0 0
        %2796 = vmatpush1.bf16.msra.mxu0 0
        %2797 = vmatprep.subr.bf16.mxu0 0
        %2798 = vmatpush1.bf16.msra.mxu0 0
        %2799 = vmatprep.subr.bf16.mxu0 0
        %2800 = vmatpush1.bf16.msra.mxu0 0
        %2801 = vmatprep.mubr.bf16.mxu0 0
        %2802 = vmatmul.mubr.bf16.gmra.mrb[0].mxu0 %v2761
        %v2803 = vpop.f32.mrb[0].mxu0
        %v2804 = vadd.f32 0.0, %v2803
        %v2805 = vpop.f32.mrb[0].mxu0
        %v2806 = vadd.f32 0.0, %v2805
        %v2807 = vpop.f32.mrb[0].mxu0
        %v2808 = vadd.f32 0.0, %v2807
        %v2809 = vpop.f32.mrb[0].mxu0
        %v2810 = vadd.f32 0.0, %v2809
        %2811 = vmatprep.mubr.bf16.mxu0 0
        %2812 = vmatmul.mubr.bf16.gmra.mrb[0].mxu0 %v2764
        %v2813 = vpop.f32.mrb[0].mxu0
        %v2814 = vadd.f32 0.0, %v2813
        %v2815 = vpop.f32.mrb[0].mxu0
        %v2816 = vadd.f32 0.0, %v2815
        %v2817 = vpop.f32.mrb[0].mxu0
        %v2818 = vadd.f32 0.0, %v2817
        %v2819 = vpop.f32.mrb[0].mxu0
        %v2820 = vadd.f32 0.0, %v2819
        %2821 = vmatprep.mubr.bf16.mxu0 0
        %2822 = vmatmul.mubr.bf16.gmra.mrb[0].mxu0 %v2767
        %v2823 = vpop.f32.mrb[0].mxu0
        %v2824 = vadd.f32 0.0, %v2823
        %v2825 = vpop.f32.mrb[0].mxu0
        %v2826 = vadd.f32 0.0, %v2825
        %v2827 = vpop.f32.mrb[0].mxu0
        %v2828 = vadd.f32 0.0, %v2827
        %v2829 = vpop.f32.mrb[0].mxu0
        %v2830 = vadd.f32 0.0, %v2829
        %2831 = vdwg.mxu0
        %2832 = vmatprep.subr.bf16.mxu0 %v2517
        %2833 = vmatpush1.bf16.msra.mxu0 %v2516
        %2834 = vmatprep.subr.bf16.mxu0 0
        %2835 = vmatpush1.bf16.msra.mxu0 0
        %2836 = vmatprep.subr.bf16.mxu0 0
        %2837 = vmatpush1.bf16.msra.mxu0 0
        %2838 = vmatprep.subr.bf16.mxu0 0
        %2839 = vmatpush1.bf16.msra.mxu0 0
        %2840 = vmatprep.subr.bf16.mxu0 0
        %2841 = vmatpush1.bf16.msra.mxu0 0
        %2842 = vmatprep.subr.bf16.mxu0 0
        %2843 = vmatpush1.bf16.msra.mxu0 0
        %2844 = vmatprep.subr.bf16.mxu0 0
        %2845 = vmatpush1.bf16.msra.mxu0 0
        %2846 = vmatprep.subr.bf16.mxu0 0
        %2847 = vmatpush1.bf16.msra.mxu0 0
        %2848 = vmatprep.subr.bf16.mxu0 0
        %2849 = vmatpush1.bf16.msra.mxu0 0
        %2850 = vmatprep.subr.bf16.mxu0 0
        %2851 = vmatpush1.bf16.msra.mxu0 0
        %2852 = vmatprep.subr.bf16.mxu0 0
        %2853 = vmatpush1.bf16.msra.mxu0 0
        %2854 = vmatprep.subr.bf16.mxu0 0
        %2855 = vmatpush1.bf16.msra.mxu0 0
        %2856 = vmatprep.subr.bf16.mxu0 0
        %2857 = vmatpush1.bf16.msra.mxu0 0
        %2858 = vmatprep.subr.bf16.mxu0 0
        %2859 = vmatpush1.bf16.msra.mxu0 0
        %2860 = vmatprep.subr.bf16.mxu0 0
        %2861 = vmatpush1.bf16.msra.mxu0 0
        %2862 = vmatprep.subr.bf16.mxu0 0
        %2863 = vmatpush1.bf16.msra.mxu0 0
        %2864 = vmatprep.mubr.bf16.mxu0 0
        %2865 = vmatmul.mubr.bf16.gmra.mrb[0].mxu0 %v2761
        %v2866 = vpop.f32.mrb[0].mxu0
        %v2867 = vadd.f32 0.0, %v2866
        %v2868 = vpop.f32.mrb[0].mxu0
        %v2869 = vadd.f32 0.0, %v2868
        %v2870 = vpop.f32.mrb[0].mxu0
        %v2871 = vadd.f32 0.0, %v2870
        %v2872 = vpop.f32.mrb[0].mxu0
        %v2873 = vadd.f32 0.0, %v2872
        %2874 = vmatprep.mubr.bf16.mxu0 0
        %2875 = vmatmul.mubr.bf16.gmra.mrb[0].mxu0 %v2764
        %v2876 = vpop.f32.mrb[0].mxu0
        %v2877 = vadd.f32 0.0, %v2876
        %v2878 = vpop.f32.mrb[0].mxu0
        %v2879 = vadd.f32 0.0, %v2878
        %v2880 = vpop.f32.mrb[0].mxu0
        %v2881 = vadd.f32 0.0, %v2880
        %v2882 = vpop.f32.mrb[0].mxu0
        %v2883 = vadd.f32 0.0, %v2882
        %2884 = vmatprep.mubr.bf16.mxu0 0
        %2885 = vmatmul.mubr.bf16.gmra.mrb[0].mxu0 %v2767
        %v2886 = vpop.f32.mrb[0].mxu0
        %v2887 = vadd.f32 0.0, %v2886
        %v2888 = vpop.f32.mrb[0].mxu0
        %v2889 = vadd.f32 0.0, %v2888
        %v2890 = vpop.f32.mrb[0].mxu0
        %v2891 = vadd.f32 0.0, %v2890
        %v2892 = vpop.f32.mrb[0].mxu0
        %v2893 = vadd.f32 0.0, %v2892
        %2894 = vdwg.mxu0
        %2895 = vmatprep.subr.bf16.mxu0 %v2519
        %2896 = vmatpush1.bf16.msra.mxu0 %v2518
        %2897 = vmatprep.subr.bf16.mxu0 0
        %2898 = vmatpush1.bf16.msra.mxu0 0
        %2899 = vmatprep.subr.bf16.mxu0 0
        %2900 = vmatpush1.bf16.msra.mxu0 0
        %2901 = vmatprep.subr.bf16.mxu0 0
        %2902 = vmatpush1.bf16.msra.mxu0 0
        %2903 = vmatprep.subr.bf16.mxu0 0
        %2904 = vmatpush1.bf16.msra.mxu0 0
        %2905 = vmatprep.subr.bf16.mxu0 0
        %2906 = vmatpush1.bf16.msra.mxu0 0
        %2907 = vmatprep.subr.bf16.mxu0 0
        %2908 = vmatpush1.bf16.msra.mxu0 0
        %2909 = vmatprep.subr.bf16.mxu0 0
        %2910 = vmatpush1.bf16.msra.mxu0 0
        %2911 = vmatprep.subr.bf16.mxu0 0
        %2912 = vmatpush1.bf16.msra.mxu0 0
        %2913 = vmatprep.subr.bf16.mxu0 0
        %2914 = vmatpush1.bf16.msra.mxu0 0
        %2915 = vmatprep.subr.bf16.mxu0 0
        %2916 = vmatpush1.bf16.msra.mxu0 0
        %2917 = vmatprep.subr.bf16.mxu0 0
        %2918 = vmatpush1.bf16.msra.mxu0 0
        %2919 = vmatprep.subr.bf16.mxu0 0
        %2920 = vmatpush1.bf16.msra.mxu0 0
        %2921 = vmatprep.subr.bf16.mxu0 0
        %2922 = vmatpush1.bf16.msra.mxu0 0
        %2923 = vmatprep.subr.bf16.mxu0 0
        %2924 = vmatpush1.bf16.msra.mxu0 0
        %2925 = vmatprep.subr.bf16.mxu0 0
        %2926 = vmatpush1.bf16.msra.mxu0 0
        %2927 = vmatprep.mubr.bf16.mxu0 0
        %2928 = vmatmul.mubr.bf16.gmra.mrb[0].mxu0 %v2761
        %v2929 = vpop.f32.mrb[0].mxu0
        %v2930 = vadd.f32 0.0, %v2929
        %v2931 = vpop.f32.mrb[0].mxu0
        %v2932 = vadd.f32 0.0, %v2931
        %v2933 = vpop.f32.mrb[0].mxu0
        %v2934 = vadd.f32 0.0, %v2933
        %v2935 = vpop.f32.mrb[0].mxu0
        %v2936 = vadd.f32 0.0, %v2935
        %2937 = vmatprep.mubr.bf16.mxu0 0
        %2938 = vmatmul.mubr.bf16.gmra.mrb[0].mxu0 %v2764
        %v2939 = vpop.f32.mrb[0].mxu0
        %v2940 = vadd.f32 0.0, %v2939
        %v2941 = vpop.f32.mrb[0].mxu0
        %v2942 = vadd.f32 0.0, %v2941
        %v2943 = vpop.f32.mrb[0].mxu0
        %v2944 = vadd.f32 0.0, %v2943
        %v2945 = vpop.f32.mrb[0].mxu0
        %v2946 = vadd.f32 0.0, %v2945
        %2947 = vmatprep.mubr.bf16.mxu0 0
        %2948 = vmatmul.mubr.bf16.gmra.mrb[0].mxu0 %v2767
        %v2949 = vpop.f32.mrb[0].mxu0
        %v2950 = vadd.f32 0.0, %v2949
        %v2951 = vpop.f32.mrb[0].mxu0
        %v2952 = vadd.f32 0.0, %v2951
        %v2953 = vpop.f32.mrb[0].mxu0
        %v2954 = vadd.f32 0.0, %v2953
        %v2955 = vpop.f32.mrb[0].mxu0
        %v2956 = vadd.f32 0.0, %v2955
        %2957 = vdwg.mxu0
        %2958 = vmatprep.subr.bf16.mxu0 %v2521
        %2959 = vmatpush1.bf16.msra.mxu0 %v2520
        %2960 = vmatprep.subr.bf16.mxu0 0
        %2961 = vmatpush1.bf16.msra.mxu0 0
        %2962 = vmatprep.subr.bf16.mxu0 0
        %2963 = vmatpush1.bf16.msra.mxu0 0
        %2964 = vmatprep.subr.bf16.mxu0 0
        %2965 = vmatpush1.bf16.msra.mxu0 0
        %2966 = vmatprep.subr.bf16.mxu0 0
        %2967 = vmatpush1.bf16.msra.mxu0 0
        %2968 = vmatprep.subr.bf16.mxu0 0
        %2969 = vmatpush1.bf16.msra.mxu0 0
        %2970 = vmatprep.subr.bf16.mxu0 0
        %2971 = vmatpush1.bf16.msra.mxu0 0
        %2972 = vmatprep.subr.bf16.mxu0 0
        %2973 = vmatpush1.bf16.msra.mxu0 0
        %2974 = vmatprep.subr.bf16.mxu0 0
        %2975 = vmatpush1.bf16.msra.mxu0 0
        %2976 = vmatprep.subr.bf16.mxu0 0
        %2977 = vmatpush1.bf16.msra.mxu0 0
        %2978 = vmatprep.subr.bf16.mxu0 0
        %2979 = vmatpush1.bf16.msra.mxu0 0
        %2980 = vmatprep.subr.bf16.mxu0 0
        %2981 = vmatpush1.bf16.msra.mxu0 0
        %2982 = vmatprep.subr.bf16.mxu0 0
        %2983 = vmatpush1.bf16.msra.mxu0 0
        %2984 = vmatprep.subr.bf16.mxu0 0
        %2985 = vmatpush1.bf16.msra.mxu0 0
        %2986 = vmatprep.subr.bf16.mxu0 0
        %2987 = vmatpush1.bf16.msra.mxu0 0
        %2988 = vmatprep.subr.bf16.mxu0 0
        %2989 = vmatpush1.bf16.msra.mxu0 0
        %2990 = vmatprep.mubr.bf16.mxu0 0
        %2991 = vmatmul.mubr.bf16.gmra.mrb[0].mxu0 %v2761
        %v2992 = vpop.f32.mrb[0].mxu0
        %v2993 = vadd.f32 0.0, %v2992
        %v2994 = vpop.f32.mrb[0].mxu0
        %v2995 = vadd.f32 0.0, %v2994
        %v2996 = vpop.f32.mrb[0].mxu0
        %v2997 = vadd.f32 0.0, %v2996
        %v2998 = vpop.f32.mrb[0].mxu0
        %v2999 = vadd.f32 0.0, %v2998
        %3000 = vmatprep.mubr.bf16.mxu0 0
        %3001 = vmatmul.mubr.bf16.gmra.mrb[0].mxu0 %v2764
        %v3002 = vpop.f32.mrb[0].mxu0
        %v3003 = vadd.f32 0.0, %v3002
        %v3004 = vpop.f32.mrb[0].mxu0
        %v3005 = vadd.f32 0.0, %v3004
        %v3006 = vpop.f32.mrb[0].mxu0
        %v3007 = vadd.f32 0.0, %v3006
        %v3008 = vpop.f32.mrb[0].mxu0
        %v3009 = vadd.f32 0.0, %v3008
        %3010 = vmatprep.mubr.bf16.mxu0 0
        %3011 = vmatmul.mubr.bf16.gmra.mrb[0].mxu0 %v2767
        %v3012 = vpop.f32.mrb[0].mxu0
        %v3013 = vadd.f32 0.0, %v3012
        %v3014 = vpop.f32.mrb[0].mxu0
        %v3015 = vadd.f32 0.0, %v3014
        %v3016 = vpop.f32.mrb[0].mxu0
        %v3017 = vadd.f32 0.0, %v3016
        %v3018 = vpop.f32.mrb[0].mxu0
        %v3019 = vadd.f32 0.0, %v3018
        %3020 = vdwg.mxu0
        %v3021 = vmul.f32 %v2722, %v2804
        %v3022 = vmul.f32 %v2723, %v2806
        %v3023 = vmul.f32 %v2724, %v2867
        %v3024 = vmul.f32 %v2725, %v2869
        %v3025 = vmul.f32 %v2726, %v2930
        %v3026 = vmul.f32 %v2727, %v2932
        %v3027 = vmul.f32 %v2728, %v2993
        %v3028 = vmul.f32 %v2729, %v2995
        %v3029 = vmul.f32 %v2730, %v2808
        %v3030 = vmul.f32 %v2731, %v2810
        %v3031 = vmul.f32 %v2732, %v2871
        %v3032 = vmul.f32 %v2733, %v2873
        %v3033 = vmul.f32 %v2734, %v2934
        %v3034 = vmul.f32 %v2735, %v2936
        %v3035 = vmul.f32 %v2736, %v2997
        %v3036 = vmul.f32 %v2737, %v2999
        %v3037 = vadd.f32 %v3021, %v3029
        %v3038 = vrot.slane %v3037, 4
        %v3039 = vadd.f32 %v3037, %v3038
        %v3040 = vrot.slane %v3039, 2
        %v3041 = vadd.f32 %v3039, %v3040
        %v3042 = vrot.slane %v3041, 1
        %v3043 = vadd.f32 %v3041, %v3042
        %v3044 = vadd.f32 %v3022, %v3030
        %v3045 = vrot.slane %v3044, 4
        %v3046 = vadd.f32 %v3044, %v3045
        %v3047 = vrot.slane %v3046, 2
        %v3048 = vadd.f32 %v3046, %v3047
        %v3049 = vrot.slane %v3048, 1
        %v3050 = vadd.f32 %v3048, %v3049
        %v3051 = vadd.f32 %v3023, %v3031
        %v3052 = vrot.slane %v3051, 4
        %v3053 = vadd.f32 %v3051, %v3052
        %v3054 = vrot.slane %v3053, 2
        %v3055 = vadd.f32 %v3053, %v3054
        %v3056 = vrot.slane %v3055, 1
        %v3057 = vadd.f32 %v3055, %v3056
        %v3058 = vadd.f32 %v3024, %v3032
        %v3059 = vrot.slane %v3058, 4
        %v3060 = vadd.f32 %v3058, %v3059
        %v3061 = vrot.slane %v3060, 2
        %v3062 = vadd.f32 %v3060, %v3061
        %v3063 = vrot.slane %v3062, 1
        %v3064 = vadd.f32 %v3062, %v3063
        %v3065 = vadd.f32 %v3025, %v3033
        %v3066 = vrot.slane %v3065, 4
        %v3067 = vadd.f32 %v3065, %v3066
        %v3068 = vrot.slane %v3067, 2
        %v3069 = vadd.f32 %v3067, %v3068
        %v3070 = vrot.slane %v3069, 1
        %v3071 = vadd.f32 %v3069, %v3070
        %v3072 = vadd.f32 %v3026, %v3034
        %v3073 = vrot.slane %v3072, 4
        %v3074 = vadd.f32 %v3072, %v3073
        %v3075 = vrot.slane %v3074, 2
        %v3076 = vadd.f32 %v3074, %v3075
        %v3077 = vrot.slane %v3076, 1
        %v3078 = vadd.f32 %v3076, %v3077
        %v3079 = vadd.f32 %v3027, %v3035
        %v3080 = vrot.slane %v3079, 4
        %v3081 = vadd.f32 %v3079, %v3080
        %v3082 = vrot.slane %v3081, 2
        %v3083 = vadd.f32 %v3081, %v3082
        %v3084 = vrot.slane %v3083, 1
        %v3085 = vadd.f32 %v3083, %v3084
        %v3086 = vadd.f32 %v3028, %v3036
        %v3087 = vrot.slane %v3086, 4
        %v3088 = vadd.f32 %v3086, %v3087
        %v3089 = vrot.slane %v3088, 2
        %v3090 = vadd.f32 %v3088, %v3089
        %v3091 = vrot.slane %v3090, 1
        %v3092 = vadd.f32 %v3090, %v3091
        %v3101 = vcombine.low %v3043, %v3050
        %v3102 = vcombine.low %v3057, %v3064
        %v3103 = vcombine.low %v3071, %v3078
        %v3104 = vcombine.low %v3085, %v3092
        %v3106 = vunpack.c.l.s4 1966171168
        %v3107 = vunpack.c.0.s8 %v3106
        %v3108 = vlaneseq
        %v3109 = vshrl.u32 %v3108, 7
        %v3110 = vsub.s32 %v3107, %v3109
        %v3111 = vrot.slane %v3101, %v3110
        %v3113 = vunpack.c.l.s4 1966171168
        %v3114 = vunpack.c.0.s8 %v3113
        %v3115 = vlaneseq
        %v3116 = vshrl.u32 %v3115, 7
        %v3117 = vsub.s32 %v3114, %v3116
        %v3118 = vrot.slane %v3102, %v3117
        %v3120 = vunpack.c.l.s4 1966171168
        %v3121 = vunpack.c.0.s8 %v3120
        %v3122 = vlaneseq
        %v3123 = vshrl.u32 %v3122, 7
        %v3124 = vsub.s32 %v3121, %v3123
        %v3125 = vrot.slane %v3103, %v3124
        %v3127 = vunpack.c.l.s4 1966171168
        %v3128 = vunpack.c.0.s8 %v3127
        %v3129 = vlaneseq
        %v3130 = vshrl.u32 %v3129, 7
        %v3131 = vsub.s32 %v3128, %v3130
        %v3132 = vrot.slane %v3104, %v3131
        %v3133 = vcombine.low %v3111, %v3118
        %v3134 = vcombine.low %v3125, %v3132
        %v3136 = vunpack.c.l.s4 1966171168
        %v3137 = vunpack.c.0.s8 %v3136
        %v3138 = vlaneseq
        %v3139 = vshrl.u32 %v3138, 7
        %v3140 = vsub.s32 %v3137, %v3139
        %v3141 = vrot.slane %v3133, %v3140
        %v3143 = vunpack.c.l.s4 1966171168
        %v3144 = vunpack.c.0.s8 %v3143
        %v3145 = vlaneseq
        %v3146 = vshrl.u32 %v3145, 7
        %v3147 = vsub.s32 %v3144, %v3146
        %v3148 = vrot.slane %v3134, %v3147
        %v3149 = vcombine.low %v3141, %v3148
        %s3151 = scalar_lea.vmem %s208, 64 [#allocation2]
        %3152 = vst [vmem:[%s3151] ss:$8 sm:$0xf] %v3149
        %3153 = vst [vmem:[%s3151] ss:$8 sm:$0xf0] %v3149
        %v3154 = vmul.f32 %v2722, %v2814
        %v3155 = vmul.f32 %v2723, %v2816
        %v3156 = vmul.f32 %v2724, %v2877
        %v3157 = vmul.f32 %v2725, %v2879
        %v3158 = vmul.f32 %v2726, %v2940
        %v3159 = vmul.f32 %v2727, %v2942
        %v3160 = vmul.f32 %v2728, %v3003
        %v3161 = vmul.f32 %v2729, %v3005
        %v3162 = vmul.f32 %v2730, %v2818
        %v3163 = vmul.f32 %v2731, %v2820
        %v3164 = vmul.f32 %v2732, %v2881
        %v3165 = vmul.f32 %v2733, %v2883
        %v3166 = vmul.f32 %v2734, %v2944
        %v3167 = vmul.f32 %v2735, %v2946
        %v3168 = vmul.f32 %v2736, %v3007
        %v3169 = vmul.f32 %v2737, %v3009
        %v3170 = vadd.f32 %v3154, %v3162
        %v3171 = vrot.slane %v3170, 4
        %v3172 = vadd.f32 %v3170, %v3171
        %v3173 = vrot.slane %v3172, 2
        %v3174 = vadd.f32 %v3172, %v3173
        %v3175 = vrot.slane %v3174, 1
        %v3176 = vadd.f32 %v3174, %v3175
        %v3177 = vadd.f32 %v3155, %v3163
        %v3178 = vrot.slane %v3177, 4
        %v3179 = vadd.f32 %v3177, %v3178
        %v3180 = vrot.slane %v3179, 2
        %v3181 = vadd.f32 %v3179, %v3180
        %v3182 = vrot.slane %v3181, 1
        %v3183 = vadd.f32 %v3181, %v3182
        %v3184 = vadd.f32 %v3156, %v3164
        %v3185 = vrot.slane %v3184, 4
        %v3186 = vadd.f32 %v3184, %v3185
        %v3187 = vrot.slane %v3186, 2
        %v3188 = vadd.f32 %v3186, %v3187
        %v3189 = vrot.slane %v3188, 1
        %v3190 = vadd.f32 %v3188, %v3189
        %v3191 = vadd.f32 %v3157, %v3165
        %v3192 = vrot.slane %v3191, 4
        %v3193 = vadd.f32 %v3191, %v3192
        %v3194 = vrot.slane %v3193, 2
        %v3195 = vadd.f32 %v3193, %v3194
        %v3196 = vrot.slane %v3195, 1
        %v3197 = vadd.f32 %v3195, %v3196
        %v3198 = vadd.f32 %v3158, %v3166
        %v3199 = vrot.slane %v3198, 4
        %v3200 = vadd.f32 %v3198, %v3199
        %v3201 = vrot.slane %v3200, 2
        %v3202 = vadd.f32 %v3200, %v3201
        %v3203 = vrot.slane %v3202, 1
        %v3204 = vadd.f32 %v3202, %v3203
        %v3205 = vadd.f32 %v3159, %v3167
        %v3206 = vrot.slane %v3205, 4
        %v3207 = vadd.f32 %v3205, %v3206
        %v3208 = vrot.slane %v3207, 2
        %v3209 = vadd.f32 %v3207, %v3208
        %v3210 = vrot.slane %v3209, 1
        %v3211 = vadd.f32 %v3209, %v3210
        %v3212 = vadd.f32 %v3160, %v3168
        %v3213 = vrot.slane %v3212, 4
        %v3214 = vadd.f32 %v3212, %v3213
        %v3215 = vrot.slane %v3214, 2
        %v3216 = vadd.f32 %v3214, %v3215
        %v3217 = vrot.slane %v3216, 1
        %v3218 = vadd.f32 %v3216, %v3217
        %v3219 = vadd.f32 %v3161, %v3169
        %v3220 = vrot.slane %v3219, 4
        %v3221 = vadd.f32 %v3219, %v3220
        %v3222 = vrot.slane %v3221, 2
        %v3223 = vadd.f32 %v3221, %v3222
        %v3224 = vrot.slane %v3223, 1
        %v3225 = vadd.f32 %v3223, %v3224
        %v3234 = vcombine.low %v3176, %v3183
        %v3235 = vcombine.low %v3190, %v3197
        %v3236 = vcombine.low %v3204, %v3211
        %v3237 = vcombine.low %v3218, %v3225
        %v3239 = vunpack.c.l.s4 1966171168
        %v3240 = vunpack.c.0.s8 %v3239
        %v3241 = vlaneseq
        %v3242 = vshrl.u32 %v3241, 7
        %v3243 = vsub.s32 %v3240, %v3242
        %v3244 = vrot.slane %v3234, %v3243
        %v3246 = vunpack.c.l.s4 1966171168
        %v3247 = vunpack.c.0.s8 %v3246
        %v3248 = vlaneseq
        %v3249 = vshrl.u32 %v3248, 7
        %v3250 = vsub.s32 %v3247, %v3249
        %v3251 = vrot.slane %v3235, %v3250
        %v3253 = vunpack.c.l.s4 1966171168
        %v3254 = vunpack.c.0.s8 %v3253
        %v3255 = vlaneseq
        %v3256 = vshrl.u32 %v3255, 7
        %v3257 = vsub.s32 %v3254, %v3256
        %v3258 = vrot.slane %v3236, %v3257
        %v3260 = vunpack.c.l.s4 1966171168
        %v3261 = vunpack.c.0.s8 %v3260
        %v3262 = vlaneseq
        %v3263 = vshrl.u32 %v3262, 7
        %v3264 = vsub.s32 %v3261, %v3263
        %v3265 = vrot.slane %v3237, %v3264
        %v3266 = vcombine.low %v3244, %v3251
        %v3267 = vcombine.low %v3258, %v3265
        %v3269 = vunpack.c.l.s4 1966171168
        %v3270 = vunpack.c.0.s8 %v3269
        %v3271 = vlaneseq
        %v3272 = vshrl.u32 %v3271, 7
        %v3273 = vsub.s32 %v3270, %v3272
        %v3274 = vrot.slane %v3266, %v3273
        %v3276 = vunpack.c.l.s4 1966171168
        %v3277 = vunpack.c.0.s8 %v3276
        %v3278 = vlaneseq
        %v3279 = vshrl.u32 %v3278, 7
        %v3280 = vsub.s32 %v3277, %v3279
        %v3281 = vrot.slane %v3267, %v3280
        %v3282 = vcombine.low %v3274, %v3281
        %s3284 = scalar_lea.vmem %s3151, 1 [#allocation2]
        %3285 = vst [vmem:[%s3284] ss:$8 sm:$0xf] %v3282
        %3286 = vst [vmem:[%s3284] ss:$8 sm:$0xf0] %v3282
        %v3287 = vmul.f32 %v2722, %v2824
        %v3288 = vmul.f32 %v2723, %v2826
        %v3289 = vmul.f32 %v2724, %v2887
        %v3290 = vmul.f32 %v2725, %v2889
        %v3291 = vmul.f32 %v2726, %v2950
        %v3292 = vmul.f32 %v2727, %v2952
        %v3293 = vmul.f32 %v2728, %v3013
        %v3294 = vmul.f32 %v2729, %v3015
        %v3295 = vmul.f32 %v2730, %v2828
        %v3296 = vmul.f32 %v2731, %v2830
        %v3297 = vmul.f32 %v2732, %v2891
        %v3298 = vmul.f32 %v2733, %v2893
        %v3299 = vmul.f32 %v2734, %v2954
        %v3300 = vmul.f32 %v2735, %v2956
        %v3301 = vmul.f32 %v2736, %v3017
        %v3302 = vmul.f32 %v2737, %v3019
        %v3303 = vadd.f32 %v3287, %v3295
        %v3304 = vrot.slane %v3303, 4
        %v3305 = vadd.f32 %v3303, %v3304
        %v3306 = vrot.slane %v3305, 2
        %v3307 = vadd.f32 %v3305, %v3306
        %v3308 = vrot.slane %v3307, 1
        %v3309 = vadd.f32 %v3307, %v3308
        %v3310 = vadd.f32 %v3288, %v3296
        %v3311 = vrot.slane %v3310, 4
        %v3312 = vadd.f32 %v3310, %v3311
        %v3313 = vrot.slane %v3312, 2
        %v3314 = vadd.f32 %v3312, %v3313
        %v3315 = vrot.slane %v3314, 1
        %v3316 = vadd.f32 %v3314, %v3315
        %v3317 = vadd.f32 %v3289, %v3297
        %v3318 = vrot.slane %v3317, 4
        %v3319 = vadd.f32 %v3317, %v3318
        %v3320 = vrot.slane %v3319, 2
        %v3321 = vadd.f32 %v3319, %v3320
        %v3322 = vrot.slane %v3321, 1
        %v3323 = vadd.f32 %v3321, %v3322
        %v3324 = vadd.f32 %v3290, %v3298
        %v3325 = vrot.slane %v3324, 4
        %v3326 = vadd.f32 %v3324, %v3325
        %v3327 = vrot.slane %v3326, 2
        %v3328 = vadd.f32 %v3326, %v3327
        %v3329 = vrot.slane %v3328, 1
        %v3330 = vadd.f32 %v3328, %v3329
        %v3331 = vadd.f32 %v3291, %v3299
        %v3332 = vrot.slane %v3331, 4
        %v3333 = vadd.f32 %v3331, %v3332
        %v3334 = vrot.slane %v3333, 2
        %v3335 = vadd.f32 %v3333, %v3334
        %v3336 = vrot.slane %v3335, 1
        %v3337 = vadd.f32 %v3335, %v3336
        %v3338 = vadd.f32 %v3292, %v3300
        %v3339 = vrot.slane %v3338, 4
        %v3340 = vadd.f32 %v3338, %v3339
        %v3341 = vrot.slane %v3340, 2
        %v3342 = vadd.f32 %v3340, %v3341
        %v3343 = vrot.slane %v3342, 1
        %v3344 = vadd.f32 %v3342, %v3343
        %v3345 = vadd.f32 %v3293, %v3301
        %v3346 = vrot.slane %v3345, 4
        %v3347 = vadd.f32 %v3345, %v3346
        %v3348 = vrot.slane %v3347, 2
        %v3349 = vadd.f32 %v3347, %v3348
        %v3350 = vrot.slane %v3349, 1
        %v3351 = vadd.f32 %v3349, %v3350
        %v3352 = vadd.f32 %v3294, %v3302
        %v3353 = vrot.slane %v3352, 4
        %v3354 = vadd.f32 %v3352, %v3353
        %v3355 = vrot.slane %v3354, 2
        %v3356 = vadd.f32 %v3354, %v3355
        %v3357 = vrot.slane %v3356, 1
        %v3358 = vadd.f32 %v3356, %v3357
        %v3367 = vcombine.low %v3309, %v3316
        %v3368 = vcombine.low %v3323, %v3330
        %v3369 = vcombine.low %v3337, %v3344
        %v3370 = vcombine.low %v3351, %v3358
        %v3372 = vunpack.c.l.s4 1966171168
        %v3373 = vunpack.c.0.s8 %v3372
        %v3374 = vlaneseq
        %v3375 = vshrl.u32 %v3374, 7
        %v3376 = vsub.s32 %v3373, %v3375
        %v3377 = vrot.slane %v3367, %v3376
        %v3379 = vunpack.c.l.s4 1966171168
        %v3380 = vunpack.c.0.s8 %v3379
        %v3381 = vlaneseq
        %v3382 = vshrl.u32 %v3381, 7
        %v3383 = vsub.s32 %v3380, %v3382
        %v3384 = vrot.slane %v3368, %v3383
        %v3386 = vunpack.c.l.s4 1966171168
        %v3387 = vunpack.c.0.s8 %v3386
        %v3388 = vlaneseq
        %v3389 = vshrl.u32 %v3388, 7
        %v3390 = vsub.s32 %v3387, %v3389
        %v3391 = vrot.slane %v3369, %v3390
        %v3393 = vunpack.c.l.s4 1966171168
        %v3394 = vunpack.c.0.s8 %v3393
        %v3395 = vlaneseq
        %v3396 = vshrl.u32 %v3395, 7
        %v3397 = vsub.s32 %v3394, %v3396
        %v3398 = vrot.slane %v3370, %v3397
        %v3399 = vcombine.low %v3377, %v3384
        %v3400 = vcombine.low %v3391, %v3398
        %v3402 = vunpack.c.l.s4 1966171168
        %v3403 = vunpack.c.0.s8 %v3402
        %v3404 = vlaneseq
        %v3405 = vshrl.u32 %v3404, 7
        %v3406 = vsub.s32 %v3403, %v3405
        %v3407 = vrot.slane %v3399, %v3406
        %v3409 = vunpack.c.l.s4 1966171168
        %v3410 = vunpack.c.0.s8 %v3409
        %v3411 = vlaneseq
        %v3412 = vshrl.u32 %v3411, 7
        %v3413 = vsub.s32 %v3410, %v3412
        %v3414 = vrot.slane %v3400, %v3413
        %v3415 = vcombine.low %v3407, %v3414
        %s3417 = scalar_lea.vmem %s3151, 2 [#allocation2]
        %3418 = vst [vmem:[%s3417] ss:$8 sm:$0xf] %v3415
        %3419 = vst [vmem:[%s3417] ss:$8 sm:$0xf0] %v3415
        %v3428 = vcombine.low %v2098, %v2099
        %v3429 = vcombine.low %v2100, %v2101
        %v3430 = vcombine.low %v2102, %v2103
        %v3431 = vcombine.low %v2104, %v2105
        %v3433 = vunpack.c.l.s4 1966171168
        %v3434 = vunpack.c.0.s8 %v3433
        %v3435 = vlaneseq
        %v3436 = vshrl.u32 %v3435, 7
        %v3437 = vsub.s32 %v3434, %v3436
        %v3438 = vrot.slane %v3428, %v3437
        %v3440 = vunpack.c.l.s4 1966171168
        %v3441 = vunpack.c.0.s8 %v3440
        %v3442 = vlaneseq
        %v3443 = vshrl.u32 %v3442, 7
        %v3444 = vsub.s32 %v3441, %v3443
        %v3445 = vrot.slane %v3429, %v3444
        %v3447 = vunpack.c.l.s4 1966171168
        %v3448 = vunpack.c.0.s8 %v3447
        %v3449 = vlaneseq
        %v3450 = vshrl.u32 %v3449, 7
        %v3451 = vsub.s32 %v3448, %v3450
        %v3452 = vrot.slane %v3430, %v3451
        %v3454 = vunpack.c.l.s4 1966171168
        %v3455 = vunpack.c.0.s8 %v3454
        %v3456 = vlaneseq
        %v3457 = vshrl.u32 %v3456, 7
        %v3458 = vsub.s32 %v3455, %v3457
        %v3459 = vrot.slane %v3431, %v3458
        %v3460 = vcombine.low %v3438, %v3445
        %v3461 = vcombine.low %v3452, %v3459
        %v3463 = vunpack.c.l.s4 1966171168
        %v3464 = vunpack.c.0.s8 %v3463
        %v3465 = vlaneseq
        %v3466 = vshrl.u32 %v3465, 7
        %v3467 = vsub.s32 %v3464, %v3466
        %v3468 = vrot.slane %v3460, %v3467
        %v3470 = vunpack.c.l.s4 1966171168
        %v3471 = vunpack.c.0.s8 %v3470
        %v3472 = vlaneseq
        %v3473 = vshrl.u32 %v3472, 7
        %v3474 = vsub.s32 %v3471, %v3473
        %v3475 = vrot.slane %v3461, %v3474
        %v3476 = vcombine.low %v3468, %v3475
        %s3478 = scalar_lea.vmem %s3151, 3 [#allocation2]
        %3479 = vst [vmem:[%s3478] ss:$8 sm:$0xf] %v3476
        %3480 = vst [vmem:[%s3478] ss:$8 sm:$0xf0] %v3476
        %v3489 = vcombine.low %v2162, %v2163
        %v3490 = vcombine.low %v2164, %v2165
        %v3491 = vcombine.low %v2166, %v2167
        %v3492 = vcombine.low %v2168, %v2169
        %v3494 = vunpack.c.l.s4 1966171168
        %v3495 = vunpack.c.0.s8 %v3494
        %v3496 = vlaneseq
        %v3497 = vshrl.u32 %v3496, 7
        %v3498 = vsub.s32 %v3495, %v3497
        %v3499 = vrot.slane %v3489, %v3498
        %v3501 = vunpack.c.l.s4 1966171168
        %v3502 = vunpack.c.0.s8 %v3501
        %v3503 = vlaneseq
        %v3504 = vshrl.u32 %v3503, 7
        %v3505 = vsub.s32 %v3502, %v3504
        %v3506 = vrot.slane %v3490, %v3505
        %v3508 = vunpack.c.l.s4 1966171168
        %v3509 = vunpack.c.0.s8 %v3508
        %v3510 = vlaneseq
        %v3511 = vshrl.u32 %v3510, 7
        %v3512 = vsub.s32 %v3509, %v3511
        %v3513 = vrot.slane %v3491, %v3512
        %v3515 = vunpack.c.l.s4 1966171168
        %v3516 = vunpack.c.0.s8 %v3515
        %v3517 = vlaneseq
        %v3518 = vshrl.u32 %v3517, 7
        %v3519 = vsub.s32 %v3516, %v3518
        %v3520 = vrot.slane %v3492, %v3519
        %v3521 = vcombine.high %v3499, %v3506
        %v3522 = vcombine.high %v3513, %v3520
        %v3524 = vunpack.c.l.s4 1966171168
        %v3525 = vunpack.c.0.s8 %v3524
        %v3526 = vlaneseq
        %v3527 = vshrl.u32 %v3526, 7
        %v3528 = vsub.s32 %v3525, %v3527
        %v3529 = vrot.slane %v3521, %v3528
        %v3531 = vunpack.c.l.s4 1966171168
        %v3532 = vunpack.c.0.s8 %v3531
        %v3533 = vlaneseq
        %v3534 = vshrl.u32 %v3533, 7
        %v3535 = vsub.s32 %v3532, %v3534
        %v3536 = vrot.slane %v3522, %v3535
        %v3537 = vcombine.low %v3529, %v3536
        %s3539 = scalar_lea.vmem %s3151, 4 [#allocation2]
        %3540 = vst [vmem:[%s3539] ss:$8 sm:$0xf] %v3537
        %3541 = vst [vmem:[%s3539] ss:$8 sm:$0xf0] %v3537
        %s3542 = scalar_lea.vmem %s219, 8
        %v3543 = vld [vmem:[%s3542] sm:$0x7]
        %3545 = vset.pattern.permute.xlu0 0
        %3546 = vperm.xlu0 %3545, %v3543
        %v3547 = vpop.permute.xlu0 %3546
        %v3549 = vmul.f32 %v3547, %v249
        %v3550 = vmul.f32 %v3547, %v253
        %v3551 = vmul.f32 %v3547, %v257
        %v3552 = vmul.f32 %v3547, %v261
        %v3553 = vmul.f32 %v3547, %v265
        %v3554 = vmul.f32 %v3547, %v269
        %v3555 = vmul.f32 %v3547, %v273
        %v3556 = vmul.f32 %v3547, %v277
        %3557 = vset.pattern.permute.xlu0 1
        %3558 = vperm.xlu0 %3557, %v3543
        %v3559 = vpop.permute.xlu0 %3558
        %v3561 = vmul.f32 %v3559, %v302
        %v3562 = vmul.f32 %v3559, %v306
        %v3563 = vmul.f32 %v3559, %v310
        %v3564 = vmul.f32 %v3559, %v314
        %v3565 = vmul.f32 %v3559, %v318
        %v3566 = vmul.f32 %v3559, %v322
        %v3567 = vmul.f32 %v3559, %v326
        %v3568 = vmul.f32 %v3559, %v330
        %v3569 = vadd.f32 %v3549, %v3561
        %v3570 = vadd.f32 %v3550, %v3562
        %v3571 = vadd.f32 %v3551, %v3563
        %v3572 = vadd.f32 %v3552, %v3564
        %v3573 = vadd.f32 %v3553, %v3565
        %v3574 = vadd.f32 %v3554, %v3566
        %v3575 = vadd.f32 %v3555, %v3567
        %v3576 = vadd.f32 %v3556, %v3568
        %3577 = vset.pattern.permute.xlu0 2
        %3578 = vperm.xlu0 %3577, %v3543
        %v3579 = vpop.permute.xlu0 %3578
        %v3581 = vmul.f32 %v3579, %v363
        %v3582 = vmul.f32 %v3579, %v367
        %v3583 = vmul.f32 %v3579, %v371
        %v3584 = vmul.f32 %v3579, %v375
        %v3585 = vmul.f32 %v3579, %v379
        %v3586 = vmul.f32 %v3579, %v383
        %v3587 = vmul.f32 %v3579, %v387
        %v3588 = vmul.f32 %v3579, %v391
        %v3589 = vadd.f32 %v3569, %v3581
        %v3590 = vadd.f32 %v3570, %v3582
        %v3591 = vadd.f32 %v3571, %v3583
        %v3592 = vadd.f32 %v3572, %v3584
        %v3593 = vadd.f32 %v3573, %v3585
        %v3594 = vadd.f32 %v3574, %v3586
        %v3595 = vadd.f32 %v3575, %v3587
        %v3596 = vadd.f32 %v3576, %v3588
        %3597 = vset.pattern.permute.xlu0 3
        %3598 = vperm.xlu0 %3597, %v3543
        %v3599 = vpop.permute.xlu0 %3598
        %v3601 = vadd.f32 %v3589, %v3599
        %v3602 = vadd.f32 %v3590, %v3599
        %v3603 = vadd.f32 %v3591, %v3599
        %v3604 = vadd.f32 %v3592, %v3599
        %v3605 = vadd.f32 %v3593, %v3599
        %v3606 = vadd.f32 %v3594, %v3599
        %v3607 = vadd.f32 %v3595, %v3599
        %v3608 = vadd.f32 %v3596, %v3599
        %v3609 = vrcp.pop %v3601
        %v3610 = vmul.f32 1.0, %v3609
        %v3611 = vrcp.pop %v3602
        %v3612 = vmul.f32 1.0, %v3611
        %v3613 = vrcp.pop %v3603
        %v3614 = vmul.f32 1.0, %v3613
        %v3615 = vrcp.pop %v3604
        %v3616 = vmul.f32 1.0, %v3615
        %v3617 = vrcp.pop %v3605
        %v3618 = vmul.f32 1.0, %v3617
        %v3619 = vrcp.pop %v3606
        %v3620 = vmul.f32 1.0, %v3619
        %v3621 = vrcp.pop %v3607
        %v3622 = vmul.f32 1.0, %v3621
        %v3623 = vrcp.pop %v3608
        %v3624 = vmul.f32 1.0, %v3623
        %v3633 = vrot.slane %v3610, 2
        %v3634 = vrot.slane %v3612, 2
        %v3635 = vrot.slane %v3614, 2
        %v3636 = vrot.slane %v3616, 2
        %v3637 = vrot.slane %v3618, 2
        %v3638 = vrot.slane %v3620, 2
        %v3639 = vrot.slane %v3622, 2
        %v3640 = vrot.slane %v3624, 2
        %v3649 = vmul.f32 %v3601, %v3633
        %v3650 = vmul.f32 %v3602, %v3634
        %v3651 = vmul.f32 %v3603, %v3635
        %v3652 = vmul.f32 %v3604, %v3636
        %v3653 = vmul.f32 %v3605, %v3637
        %v3654 = vmul.f32 %v3606, %v3638
        %v3655 = vmul.f32 %v3607, %v3639
        %v3656 = vmul.f32 %v3608, %v3640
        %v3657 = vmul.f32 %v3649, 0.0625
        %v3658 = vmul.f32 %v3650, 0.0625
        %v3659 = vmul.f32 %v3651, 0.0625
        %v3660 = vmul.f32 %v3652, 0.0625
        %v3661 = vmul.f32 %v3653, 0.0625
        %v3662 = vmul.f32 %v3654, 0.0625
        %v3663 = vmul.f32 %v3655, 0.0625
        %v3664 = vmul.f32 %v3656, 0.0625
        %v3665 = vmax.f32 %v3657, 0.0
        %v3666 = vmax.f32 %v3658, 0.0
        %v3667 = vmax.f32 %v3659, 0.0
        %v3668 = vmax.f32 %v3660, 0.0
        %v3669 = vmax.f32 %v3661, 0.0
        %v3670 = vmax.f32 %v3662, 0.0
        %v3671 = vmax.f32 %v3663, 0.0
        %v3672 = vmax.f32 %v3664, 0.0
        %v3673 = vmin.f32 %v3665, 1.0
        %v3674 = vmin.f32 %v3666, 1.0
        %v3675 = vmin.f32 %v3667, 1.0
        %v3676 = vmin.f32 %v3668, 1.0
        %v3677 = vmin.f32 %v3669, 1.0
        %v3678 = vmin.f32 %v3670, 1.0
        %v3679 = vmin.f32 %v3671, 1.0
        %v3680 = vmin.f32 %v3672, 1.0
        %v3681 = vmul.f32 %v3673, 2.0
        %v3682 = vmul.f32 %v3674, 2.0
        %v3683 = vmul.f32 %v3675, 2.0
        %v3684 = vmul.f32 %v3676, 2.0
        %v3685 = vmul.f32 %v3677, 2.0
        %v3686 = vmul.f32 %v3678, 2.0
        %v3687 = vmul.f32 %v3679, 2.0
        %v3688 = vmul.f32 %v3680, 2.0
        %v3689 = vsub.f32 %v3681, 1.0
        %v3690 = vsub.f32 %v3682, 1.0
        %v3691 = vsub.f32 %v3683, 1.0
        %v3692 = vsub.f32 %v3684, 1.0
        %v3693 = vsub.f32 %v3685, 1.0
        %v3694 = vsub.f32 %v3686, 1.0
        %v3695 = vsub.f32 %v3687, 1.0
        %v3696 = vsub.f32 %v3688, 1.0
        %v3697 = vrot.slane %v3610, 1
        %v3698 = vrot.slane %v3612, 1
        %v3699 = vrot.slane %v3614, 1
        %v3700 = vrot.slane %v3616, 1
        %v3701 = vrot.slane %v3618, 1
        %v3702 = vrot.slane %v3620, 1
        %v3703 = vrot.slane %v3622, 1
        %v3704 = vrot.slane %v3624, 1
        %v3713 = vmul.f32 %v3601, %v3697
        %v3714 = vmul.f32 %v3602, %v3698
        %v3715 = vmul.f32 %v3603, %v3699
        %v3716 = vmul.f32 %v3604, %v3700
        %v3717 = vmul.f32 %v3605, %v3701
        %v3718 = vmul.f32 %v3606, %v3702
        %v3719 = vmul.f32 %v3607, %v3703
        %v3720 = vmul.f32 %v3608, %v3704
        %v3721 = vmul.f32 %v3713, 0.0625
        %v3722 = vmul.f32 %v3714, 0.0625
        %v3723 = vmul.f32 %v3715, 0.0625
        %v3724 = vmul.f32 %v3716, 0.0625
        %v3725 = vmul.f32 %v3717, 0.0625
        %v3726 = vmul.f32 %v3718, 0.0625
        %v3727 = vmul.f32 %v3719, 0.0625
        %v3728 = vmul.f32 %v3720, 0.0625
        %v3729 = vmax.f32 %v3721, 0.0
        %v3730 = vmax.f32 %v3722, 0.0
        %v3731 = vmax.f32 %v3723, 0.0
        %v3732 = vmax.f32 %v3724, 0.0
        %v3733 = vmax.f32 %v3725, 0.0
        %v3734 = vmax.f32 %v3726, 0.0
        %v3735 = vmax.f32 %v3727, 0.0
        %v3736 = vmax.f32 %v3728, 0.0
        %v3737 = vmin.f32 %v3729, 1.0
        %v3738 = vmin.f32 %v3730, 1.0
        %v3739 = vmin.f32 %v3731, 1.0
        %v3740 = vmin.f32 %v3732, 1.0
        %v3741 = vmin.f32 %v3733, 1.0
        %v3742 = vmin.f32 %v3734, 1.0
        %v3743 = vmin.f32 %v3735, 1.0
        %v3744 = vmin.f32 %v3736, 1.0
        %v3745 = vmul.f32 %v3737, 2.0
        %v3746 = vmul.f32 %v3738, 2.0
        %v3747 = vmul.f32 %v3739, 2.0
        %v3748 = vmul.f32 %v3740, 2.0
        %v3749 = vmul.f32 %v3741, 2.0
        %v3750 = vmul.f32 %v3742, 2.0
        %v3751 = vmul.f32 %v3743, 2.0
        %v3752 = vmul.f32 %v3744, 2.0
        %v3753 = vsub.f32 %v3745, 1.0
        %v3754 = vsub.f32 %v3746, 1.0
        %v3755 = vsub.f32 %v3747, 1.0
        %v3756 = vsub.f32 %v3748, 1.0
        %v3757 = vsub.f32 %v3749, 1.0
        %v3758 = vsub.f32 %v3750, 1.0
        %v3759 = vsub.f32 %v3751, 1.0
        %v3760 = vsub.f32 %v3752, 1.0
        %v3761 = vadd.f32 %v3689, 1.0
        %v3762 = vadd.f32 %v3690, 1.0
        %v3763 = vadd.f32 %v3691, 1.0
        %v3764 = vadd.f32 %v3692, 1.0
        %v3765 = vadd.f32 %v3693, 1.0
        %v3766 = vadd.f32 %v3694, 1.0
        %v3767 = vadd.f32 %v3695, 1.0
        %v3768 = vadd.f32 %v3696, 1.0
        %v3769 = vmul.f32 %v3761, 16.0
        %v3770 = vmul.f32 %v3762, 16.0
        %v3771 = vmul.f32 %v3763, 16.0
        %v3772 = vmul.f32 %v3764, 16.0
        %v3773 = vmul.f32 %v3765, 16.0
        %v3774 = vmul.f32 %v3766, 16.0
        %v3775 = vmul.f32 %v3767, 16.0
        %v3776 = vmul.f32 %v3768, 16.0
        %v3777 = vsub.f32 %v3769, 1.0
        %v3778 = vsub.f32 %v3770, 1.0
        %v3779 = vsub.f32 %v3771, 1.0
        %v3780 = vsub.f32 %v3772, 1.0
        %v3781 = vsub.f32 %v3773, 1.0
        %v3782 = vsub.f32 %v3774, 1.0
        %v3783 = vsub.f32 %v3775, 1.0
        %v3784 = vsub.f32 %v3776, 1.0
        %v3785 = vmul.f32 %v3777, 0.5
        %v3786 = vmul.f32 %v3778, 0.5
        %v3787 = vmul.f32 %v3779, 0.5
        %v3788 = vmul.f32 %v3780, 0.5
        %v3789 = vmul.f32 %v3781, 0.5
        %v3790 = vmul.f32 %v3782, 0.5
        %v3791 = vmul.f32 %v3783, 0.5
        %v3792 = vmul.f32 %v3784, 0.5
        %v3793 = vadd.f32 %v3753, 1.0
        %v3794 = vadd.f32 %v3754, 1.0
        %v3795 = vadd.f32 %v3755, 1.0
        %v3796 = vadd.f32 %v3756, 1.0
        %v3797 = vadd.f32 %v3757, 1.0
        %v3798 = vadd.f32 %v3758, 1.0
        %v3799 = vadd.f32 %v3759, 1.0
        %v3800 = vadd.f32 %v3760, 1.0
        %v3801 = vmul.f32 %v3793, 16.0
        %v3802 = vmul.f32 %v3794, 16.0
        %v3803 = vmul.f32 %v3795, 16.0
        %v3804 = vmul.f32 %v3796, 16.0
        %v3805 = vmul.f32 %v3797, 16.0
        %v3806 = vmul.f32 %v3798, 16.0
        %v3807 = vmul.f32 %v3799, 16.0
        %v3808 = vmul.f32 %v3800, 16.0
        %v3809 = vsub.f32 %v3801, 1.0
        %v3810 = vsub.f32 %v3802, 1.0
        %v3811 = vsub.f32 %v3803, 1.0
        %v3812 = vsub.f32 %v3804, 1.0
        %v3813 = vsub.f32 %v3805, 1.0
        %v3814 = vsub.f32 %v3806, 1.0
        %v3815 = vsub.f32 %v3807, 1.0
        %v3816 = vsub.f32 %v3808, 1.0
        %v3817 = vmul.f32 %v3809, 0.5
        %v3818 = vmul.f32 %v3810, 0.5
        %v3819 = vmul.f32 %v3811, 0.5
        %v3820 = vmul.f32 %v3812, 0.5
        %v3821 = vmul.f32 %v3813, 0.5
        %v3822 = vmul.f32 %v3814, 0.5
        %v3823 = vmul.f32 %v3815, 0.5
        %v3824 = vmul.f32 %v3816, 0.5
        %v3825 = vfloor.f32 %v3785
        %v3826 = vfloor.f32 %v3786
        %v3827 = vfloor.f32 %v3787
        %v3828 = vfloor.f32 %v3788
        %v3829 = vfloor.f32 %v3789
        %v3830 = vfloor.f32 %v3790
        %v3831 = vfloor.f32 %v3791
        %v3832 = vfloor.f32 %v3792
        %v3833 = vfloor.f32 %v3817
        %v3834 = vfloor.f32 %v3818
        %v3835 = vfloor.f32 %v3819
        %v3836 = vfloor.f32 %v3820
        %v3837 = vfloor.f32 %v3821
        %v3838 = vfloor.f32 %v3822
        %v3839 = vfloor.f32 %v3823
        %v3840 = vfloor.f32 %v3824
        %v3841 = vcvt.f32.s32.to.zero.pseudo %v3825
        %v3842 = vcvt.f32.s32.to.zero.pseudo %v3826
        %v3843 = vcvt.f32.s32.to.zero.pseudo %v3827
        %v3844 = vcvt.f32.s32.to.zero.pseudo %v3828
        %v3845 = vcvt.f32.s32.to.zero.pseudo %v3829
        %v3846 = vcvt.f32.s32.to.zero.pseudo %v3830
        %v3847 = vcvt.f32.s32.to.zero.pseudo %v3831
        %v3848 = vcvt.f32.s32.to.zero.pseudo %v3832
        %v3849 = vcvt.f32.s32.to.zero.pseudo %v3833
        %v3850 = vcvt.f32.s32.to.zero.pseudo %v3834
        %v3851 = vcvt.f32.s32.to.zero.pseudo %v3835
        %v3852 = vcvt.f32.s32.to.zero.pseudo %v3836
        %v3853 = vcvt.f32.s32.to.zero.pseudo %v3837
        %v3854 = vcvt.f32.s32.to.zero.pseudo %v3838
        %v3855 = vcvt.f32.s32.to.zero.pseudo %v3839
        %v3856 = vcvt.f32.s32.to.zero.pseudo %v3840
        %v3857 = vsub.f32 %v3785, %v3825
        %v3858 = vsub.f32 %v3786, %v3826
        %v3859 = vsub.f32 %v3787, %v3827
        %v3860 = vsub.f32 %v3788, %v3828
        %v3861 = vsub.f32 %v3789, %v3829
        %v3862 = vsub.f32 %v3790, %v3830
        %v3863 = vsub.f32 %v3791, %v3831
        %v3864 = vsub.f32 %v3792, %v3832
        %v3865 = vsub.f32 1.0, %v3857
        %v3866 = vsub.f32 1.0, %v3858
        %v3867 = vsub.f32 1.0, %v3859
        %v3868 = vsub.f32 1.0, %v3860
        %v3869 = vsub.f32 1.0, %v3861
        %v3870 = vsub.f32 1.0, %v3862
        %v3871 = vsub.f32 1.0, %v3863
        %v3872 = vsub.f32 1.0, %v3864
        %v3873 = vsub.f32 %v3817, %v3833
        %v3874 = vsub.f32 %v3818, %v3834
        %v3875 = vsub.f32 %v3819, %v3835
        %v3876 = vsub.f32 %v3820, %v3836
        %v3877 = vsub.f32 %v3821, %v3837
        %v3878 = vsub.f32 %v3822, %v3838
        %v3879 = vsub.f32 %v3823, %v3839
        %v3880 = vsub.f32 %v3824, %v3840
        %v3881 = vsub.f32 1.0, %v3873
        %v3882 = vsub.f32 1.0, %v3874
        %v3883 = vsub.f32 1.0, %v3875
        %v3884 = vsub.f32 1.0, %v3876
        %v3885 = vsub.f32 1.0, %v3877
        %v3886 = vsub.f32 1.0, %v3878
        %v3887 = vsub.f32 1.0, %v3879
        %v3888 = vsub.f32 1.0, %v3880
        %v3889 = vlaneseq
        %v3890 = vshrl.u32 %v3889, 7
        %v3891 = vsub.s32 0, %v3890
        %v3892 = vrot.slane %v3841, %v3891
        %v3893 = vlaneseq
        %v3894 = vshrl.u32 %v3893, 7
        %v3895 = vsub.s32 0, %v3894
        %v3896 = vrot.slane %v3842, %v3895
        %v3897 = vlaneseq
        %v3898 = vshrl.u32 %v3897, 7
        %v3899 = vsub.s32 0, %v3898
        %v3900 = vrot.slane %v3843, %v3899
        %v3901 = vlaneseq
        %v3902 = vshrl.u32 %v3901, 7
        %v3903 = vsub.s32 0, %v3902
        %v3904 = vrot.slane %v3844, %v3903
        %v3905 = vlaneseq
        %v3906 = vshrl.u32 %v3905, 7
        %v3907 = vsub.s32 0, %v3906
        %v3908 = vrot.slane %v3845, %v3907
        %v3909 = vlaneseq
        %v3910 = vshrl.u32 %v3909, 7
        %v3911 = vsub.s32 0, %v3910
        %v3912 = vrot.slane %v3846, %v3911
        %v3913 = vlaneseq
        %v3914 = vshrl.u32 %v3913, 7
        %v3915 = vsub.s32 0, %v3914
        %v3916 = vrot.slane %v3847, %v3915
        %v3917 = vlaneseq
        %v3918 = vshrl.u32 %v3917, 7
        %v3919 = vsub.s32 0, %v3918
        %v3920 = vrot.slane %v3848, %v3919
        %vm3921 = vcmp.eq.s32.totalorder %v237, %v3892
        %vm3922 = vcmp.eq.s32.totalorder %v237, %v3896
        %vm3923 = vcmp.eq.s32.totalorder %v237, %v3900
        %vm3924 = vcmp.eq.s32.totalorder %v237, %v3904
        %vm3925 = vcmp.eq.s32.totalorder %v237, %v3908
        %vm3926 = vcmp.eq.s32.totalorder %v237, %v3912
        %vm3927 = vcmp.eq.s32.totalorder %v237, %v3916
        %vm3928 = vcmp.eq.s32.totalorder %v237, %v3920
        %vm3929 = vcmp.eq.s32.totalorder %v238, %v3892
        %vm3930 = vcmp.eq.s32.totalorder %v238, %v3896
        %vm3931 = vcmp.eq.s32.totalorder %v238, %v3900
        %vm3932 = vcmp.eq.s32.totalorder %v238, %v3904
        %vm3933 = vcmp.eq.s32.totalorder %v238, %v3908
        %vm3934 = vcmp.eq.s32.totalorder %v238, %v3912
        %vm3935 = vcmp.eq.s32.totalorder %v238, %v3916
        %vm3936 = vcmp.eq.s32.totalorder %v238, %v3920
        %v3937 = vlaneseq
        %v3938 = vshrl.u32 %v3937, 7
        %v3939 = vsub.s32 0, %v3938
        %v3940 = vrot.slane %v3865, %v3939
        %v3941 = vlaneseq
        %v3942 = vshrl.u32 %v3941, 7
        %v3943 = vsub.s32 0, %v3942
        %v3944 = vrot.slane %v3866, %v3943
        %v3945 = vlaneseq
        %v3946 = vshrl.u32 %v3945, 7
        %v3947 = vsub.s32 0, %v3946
        %v3948 = vrot.slane %v3867, %v3947
        %v3949 = vlaneseq
        %v3950 = vshrl.u32 %v3949, 7
        %v3951 = vsub.s32 0, %v3950
        %v3952 = vrot.slane %v3868, %v3951
        %v3953 = vlaneseq
        %v3954 = vshrl.u32 %v3953, 7
        %v3955 = vsub.s32 0, %v3954
        %v3956 = vrot.slane %v3869, %v3955
        %v3957 = vlaneseq
        %v3958 = vshrl.u32 %v3957, 7
        %v3959 = vsub.s32 0, %v3958
        %v3960 = vrot.slane %v3870, %v3959
        %v3961 = vlaneseq
        %v3962 = vshrl.u32 %v3961, 7
        %v3963 = vsub.s32 0, %v3962
        %v3964 = vrot.slane %v3871, %v3963
        %v3965 = vlaneseq
        %v3966 = vshrl.u32 %v3965, 7
        %v3967 = vsub.s32 0, %v3966
        %v3968 = vrot.slane %v3872, %v3967
        %v3969 = vsel %vm3921, %v3940, 0.0
        %v3970 = vsel %vm3922, %v3944, 0.0
        %v3971 = vsel %vm3923, %v3948, 0.0
        %v3972 = vsel %vm3924, %v3952, 0.0
        %v3973 = vsel %vm3925, %v3956, 0.0
        %v3974 = vsel %vm3926, %v3960, 0.0
        %v3975 = vsel %vm3927, %v3964, 0.0
        %v3976 = vsel %vm3928, %v3968, 0.0
        %v3977 = vsel %vm3929, %v3940, 0.0
        %v3978 = vsel %vm3930, %v3944, 0.0
        %v3979 = vsel %vm3931, %v3948, 0.0
        %v3980 = vsel %vm3932, %v3952, 0.0
        %v3981 = vsel %vm3933, %v3956, 0.0
        %v3982 = vsel %vm3934, %v3960, 0.0
        %v3983 = vsel %vm3935, %v3964, 0.0
        %v3984 = vsel %vm3936, %v3968, 0.0
        %v3985 = vadd.s32 %v3841, 1
        %v3986 = vadd.s32 %v3842, 1
        %v3987 = vadd.s32 %v3843, 1
        %v3988 = vadd.s32 %v3844, 1
        %v3989 = vadd.s32 %v3845, 1
        %v3990 = vadd.s32 %v3846, 1
        %v3991 = vadd.s32 %v3847, 1
        %v3992 = vadd.s32 %v3848, 1
        %v3993 = vlaneseq
        %v3994 = vshrl.u32 %v3993, 7
        %v3995 = vsub.s32 0, %v3994
        %v3996 = vrot.slane %v3985, %v3995
        %v3997 = vlaneseq
        %v3998 = vshrl.u32 %v3997, 7
        %v3999 = vsub.s32 0, %v3998
        %v4000 = vrot.slane %v3986, %v3999
        %v4001 = vlaneseq
        %v4002 = vshrl.u32 %v4001, 7
        %v4003 = vsub.s32 0, %v4002
        %v4004 = vrot.slane %v3987, %v4003
        %v4005 = vlaneseq
        %v4006 = vshrl.u32 %v4005, 7
        %v4007 = vsub.s32 0, %v4006
        %v4008 = vrot.slane %v3988, %v4007
        %v4009 = vlaneseq
        %v4010 = vshrl.u32 %v4009, 7
        %v4011 = vsub.s32 0, %v4010
        %v4012 = vrot.slane %v3989, %v4011
        %v4013 = vlaneseq
        %v4014 = vshrl.u32 %v4013, 7
        %v4015 = vsub.s32 0, %v4014
        %v4016 = vrot.slane %v3990, %v4015
        %v4017 = vlaneseq
        %v4018 = vshrl.u32 %v4017, 7
        %v4019 = vsub.s32 0, %v4018
        %v4020 = vrot.slane %v3991, %v4019
        %v4021 = vlaneseq
        %v4022 = vshrl.u32 %v4021, 7
        %v4023 = vsub.s32 0, %v4022
        %v4024 = vrot.slane %v3992, %v4023
        %vm4025 = vcmp.eq.s32.totalorder %v237, %v3996
        %vm4026 = vcmp.eq.s32.totalorder %v237, %v4000
        %vm4027 = vcmp.eq.s32.totalorder %v237, %v4004
        %vm4028 = vcmp.eq.s32.totalorder %v237, %v4008
        %vm4029 = vcmp.eq.s32.totalorder %v237, %v4012
        %vm4030 = vcmp.eq.s32.totalorder %v237, %v4016
        %vm4031 = vcmp.eq.s32.totalorder %v237, %v4020
        %vm4032 = vcmp.eq.s32.totalorder %v237, %v4024
        %vm4033 = vcmp.eq.s32.totalorder %v238, %v3996
        %vm4034 = vcmp.eq.s32.totalorder %v238, %v4000
        %vm4035 = vcmp.eq.s32.totalorder %v238, %v4004
        %vm4036 = vcmp.eq.s32.totalorder %v238, %v4008
        %vm4037 = vcmp.eq.s32.totalorder %v238, %v4012
        %vm4038 = vcmp.eq.s32.totalorder %v238, %v4016
        %vm4039 = vcmp.eq.s32.totalorder %v238, %v4020
        %vm4040 = vcmp.eq.s32.totalorder %v238, %v4024
        %v4041 = vlaneseq
        %v4042 = vshrl.u32 %v4041, 7
        %v4043 = vsub.s32 0, %v4042
        %v4044 = vrot.slane %v3857, %v4043
        %v4045 = vlaneseq
        %v4046 = vshrl.u32 %v4045, 7
        %v4047 = vsub.s32 0, %v4046
        %v4048 = vrot.slane %v3858, %v4047
        %v4049 = vlaneseq
        %v4050 = vshrl.u32 %v4049, 7
        %v4051 = vsub.s32 0, %v4050
        %v4052 = vrot.slane %v3859, %v4051
        %v4053 = vlaneseq
        %v4054 = vshrl.u32 %v4053, 7
        %v4055 = vsub.s32 0, %v4054
        %v4056 = vrot.slane %v3860, %v4055
        %v4057 = vlaneseq
        %v4058 = vshrl.u32 %v4057, 7
        %v4059 = vsub.s32 0, %v4058
        %v4060 = vrot.slane %v3861, %v4059
        %v4061 = vlaneseq
        %v4062 = vshrl.u32 %v4061, 7
        %v4063 = vsub.s32 0, %v4062
        %v4064 = vrot.slane %v3862, %v4063
        %v4065 = vlaneseq
        %v4066 = vshrl.u32 %v4065, 7
        %v4067 = vsub.s32 0, %v4066
        %v4068 = vrot.slane %v3863, %v4067
        %v4069 = vlaneseq
        %v4070 = vshrl.u32 %v4069, 7
        %v4071 = vsub.s32 0, %v4070
        %v4072 = vrot.slane %v3864, %v4071
        %v4073 = vsel %vm4025, %v4044, 0.0
        %v4074 = vsel %vm4026, %v4048, 0.0
        %v4075 = vsel %vm4027, %v4052, 0.0
        %v4076 = vsel %vm4028, %v4056, 0.0
        %v4077 = vsel %vm4029, %v4060, 0.0
        %v4078 = vsel %vm4030, %v4064, 0.0
        %v4079 = vsel %vm4031, %v4068, 0.0
        %v4080 = vsel %vm4032, %v4072, 0.0
        %v4081 = vsel %vm4033, %v4044, 0.0
        %v4082 = vsel %vm4034, %v4048, 0.0
        %v4083 = vsel %vm4035, %v4052, 0.0
        %v4084 = vsel %vm4036, %v4056, 0.0
        %v4085 = vsel %vm4037, %v4060, 0.0
        %v4086 = vsel %vm4038, %v4064, 0.0
        %v4087 = vsel %vm4039, %v4068, 0.0
        %v4088 = vsel %vm4040, %v4072, 0.0
        %v4089 = vadd.f32 %v3969, %v4073
        %v4090 = vadd.f32 %v3970, %v4074
        %v4091 = vadd.f32 %v3971, %v4075
        %v4092 = vadd.f32 %v3972, %v4076
        %v4093 = vadd.f32 %v3973, %v4077
        %v4094 = vadd.f32 %v3974, %v4078
        %v4095 = vadd.f32 %v3975, %v4079
        %v4096 = vadd.f32 %v3976, %v4080
        %v4097 = vadd.f32 %v3977, %v4081
        %v4098 = vadd.f32 %v3978, %v4082
        %v4099 = vadd.f32 %v3979, %v4083
        %v4100 = vadd.f32 %v3980, %v4084
        %v4101 = vadd.f32 %v3981, %v4085
        %v4102 = vadd.f32 %v3982, %v4086
        %v4103 = vadd.f32 %v3983, %v4087
        %v4104 = vadd.f32 %v3984, %v4088
        %v4105 = vpack.c.bf16 %v4097, %v4089
        %v4106 = vpack.c.bf16 %v4098, %v4090
        %v4107 = vpack.c.bf16 %v4099, %v4091
        %v4108 = vpack.c.bf16 %v4100, %v4092
        %v4109 = vpack.c.bf16 %v4101, %v4093
        %v4110 = vpack.c.bf16 %v4102, %v4094
        %v4111 = vpack.c.bf16 %v4103, %v4095
        %v4112 = vpack.c.bf16 %v4104, %v4096
        %v4113 = vlaneseq
        %v4114 = vshrl.u32 %v4113, 7
        %v4115 = vsub.s32 1, %v4114
        %v4116 = vrot.slane %v3849, %v4115
        %v4117 = vlaneseq
        %v4118 = vshrl.u32 %v4117, 7
        %v4119 = vsub.s32 1, %v4118
        %v4120 = vrot.slane %v3850, %v4119
        %v4121 = vlaneseq
        %v4122 = vshrl.u32 %v4121, 7
        %v4123 = vsub.s32 1, %v4122
        %v4124 = vrot.slane %v3851, %v4123
        %v4125 = vlaneseq
        %v4126 = vshrl.u32 %v4125, 7
        %v4127 = vsub.s32 1, %v4126
        %v4128 = vrot.slane %v3852, %v4127
        %v4129 = vlaneseq
        %v4130 = vshrl.u32 %v4129, 7
        %v4131 = vsub.s32 1, %v4130
        %v4132 = vrot.slane %v3853, %v4131
        %v4133 = vlaneseq
        %v4134 = vshrl.u32 %v4133, 7
        %v4135 = vsub.s32 1, %v4134
        %v4136 = vrot.slane %v3854, %v4135
        %v4137 = vlaneseq
        %v4138 = vshrl.u32 %v4137, 7
        %v4139 = vsub.s32 1, %v4138
        %v4140 = vrot.slane %v3855, %v4139
        %v4141 = vlaneseq
        %v4142 = vshrl.u32 %v4141, 7
        %v4143 = vsub.s32 1, %v4142
        %v4144 = vrot.slane %v3856, %v4143
        %vm4145 = vcmp.eq.s32.totalorder %v237, %v4116
        %vm4146 = vcmp.eq.s32.totalorder %v237, %v4120
        %vm4147 = vcmp.eq.s32.totalorder %v237, %v4124
        %vm4148 = vcmp.eq.s32.totalorder %v237, %v4128
        %vm4149 = vcmp.eq.s32.totalorder %v237, %v4132
        %vm4150 = vcmp.eq.s32.totalorder %v237, %v4136
        %vm4151 = vcmp.eq.s32.totalorder %v237, %v4140
        %vm4152 = vcmp.eq.s32.totalorder %v237, %v4144
        %vm4153 = vcmp.eq.s32.totalorder %v238, %v4116
        %vm4154 = vcmp.eq.s32.totalorder %v238, %v4120
        %vm4155 = vcmp.eq.s32.totalorder %v238, %v4124
        %vm4156 = vcmp.eq.s32.totalorder %v238, %v4128
        %vm4157 = vcmp.eq.s32.totalorder %v238, %v4132
        %vm4158 = vcmp.eq.s32.totalorder %v238, %v4136
        %vm4159 = vcmp.eq.s32.totalorder %v238, %v4140
        %vm4160 = vcmp.eq.s32.totalorder %v238, %v4144
        %v4161 = vlaneseq
        %v4162 = vshrl.u32 %v4161, 7
        %v4163 = vsub.s32 1, %v4162
        %v4164 = vrot.slane %v3881, %v4163
        %v4165 = vlaneseq
        %v4166 = vshrl.u32 %v4165, 7
        %v4167 = vsub.s32 1, %v4166
        %v4168 = vrot.slane %v3882, %v4167
        %v4169 = vlaneseq
        %v4170 = vshrl.u32 %v4169, 7
        %v4171 = vsub.s32 1, %v4170
        %v4172 = vrot.slane %v3883, %v4171
        %v4173 = vlaneseq
        %v4174 = vshrl.u32 %v4173, 7
        %v4175 = vsub.s32 1, %v4174
        %v4176 = vrot.slane %v3884, %v4175
        %v4177 = vlaneseq
        %v4178 = vshrl.u32 %v4177, 7
        %v4179 = vsub.s32 1, %v4178
        %v4180 = vrot.slane %v3885, %v4179
        %v4181 = vlaneseq
        %v4182 = vshrl.u32 %v4181, 7
        %v4183 = vsub.s32 1, %v4182
        %v4184 = vrot.slane %v3886, %v4183
        %v4185 = vlaneseq
        %v4186 = vshrl.u32 %v4185, 7
        %v4187 = vsub.s32 1, %v4186
        %v4188 = vrot.slane %v3887, %v4187
        %v4189 = vlaneseq
        %v4190 = vshrl.u32 %v4189, 7
        %v4191 = vsub.s32 1, %v4190
        %v4192 = vrot.slane %v3888, %v4191
        %v4193 = vsel %vm4145, %v4164, 0.0
        %v4194 = vsel %vm4146, %v4168, 0.0
        %v4195 = vsel %vm4147, %v4172, 0.0
        %v4196 = vsel %vm4148, %v4176, 0.0
        %v4197 = vsel %vm4149, %v4180, 0.0
        %v4198 = vsel %vm4150, %v4184, 0.0
        %v4199 = vsel %vm4151, %v4188, 0.0
        %v4200 = vsel %vm4152, %v4192, 0.0
        %v4201 = vsel %vm4153, %v4164, 0.0
        %v4202 = vsel %vm4154, %v4168, 0.0
        %v4203 = vsel %vm4155, %v4172, 0.0
        %v4204 = vsel %vm4156, %v4176, 0.0
        %v4205 = vsel %vm4157, %v4180, 0.0
        %v4206 = vsel %vm4158, %v4184, 0.0
        %v4207 = vsel %vm4159, %v4188, 0.0
        %v4208 = vsel %vm4160, %v4192, 0.0
        %v4209 = vadd.s32 %v3849, 1
        %v4210 = vadd.s32 %v3850, 1
        %v4211 = vadd.s32 %v3851, 1
        %v4212 = vadd.s32 %v3852, 1
        %v4213 = vadd.s32 %v3853, 1
        %v4214 = vadd.s32 %v3854, 1
        %v4215 = vadd.s32 %v3855, 1
        %v4216 = vadd.s32 %v3856, 1
        %v4217 = vlaneseq
        %v4218 = vshrl.u32 %v4217, 7
        %v4219 = vsub.s32 1, %v4218
        %v4220 = vrot.slane %v4209, %v4219
        %v4221 = vlaneseq
        %v4222 = vshrl.u32 %v4221, 7
        %v4223 = vsub.s32 1, %v4222
        %v4224 = vrot.slane %v4210, %v4223
        %v4225 = vlaneseq
        %v4226 = vshrl.u32 %v4225, 7
        %v4227 = vsub.s32 1, %v4226
        %v4228 = vrot.slane %v4211, %v4227
        %v4229 = vlaneseq
        %v4230 = vshrl.u32 %v4229, 7
        %v4231 = vsub.s32 1, %v4230
        %v4232 = vrot.slane %v4212, %v4231
        %v4233 = vlaneseq
        %v4234 = vshrl.u32 %v4233, 7
        %v4235 = vsub.s32 1, %v4234
        %v4236 = vrot.slane %v4213, %v4235
        %v4237 = vlaneseq
        %v4238 = vshrl.u32 %v4237, 7
        %v4239 = vsub.s32 1, %v4238
        %v4240 = vrot.slane %v4214, %v4239
        %v4241 = vlaneseq
        %v4242 = vshrl.u32 %v4241, 7
        %v4243 = vsub.s32 1, %v4242
        %v4244 = vrot.slane %v4215, %v4243
        %v4245 = vlaneseq
        %v4246 = vshrl.u32 %v4245, 7
        %v4247 = vsub.s32 1, %v4246
        %v4248 = vrot.slane %v4216, %v4247
        %vm4249 = vcmp.eq.s32.totalorder %v237, %v4220
        %vm4250 = vcmp.eq.s32.totalorder %v237, %v4224
        %vm4251 = vcmp.eq.s32.totalorder %v237, %v4228
        %vm4252 = vcmp.eq.s32.totalorder %v237, %v4232
        %vm4253 = vcmp.eq.s32.totalorder %v237, %v4236
        %vm4254 = vcmp.eq.s32.totalorder %v237, %v4240
        %vm4255 = vcmp.eq.s32.totalorder %v237, %v4244
        %vm4256 = vcmp.eq.s32.totalorder %v237, %v4248
        %vm4257 = vcmp.eq.s32.totalorder %v238, %v4220
        %vm4258 = vcmp.eq.s32.totalorder %v238, %v4224
        %vm4259 = vcmp.eq.s32.totalorder %v238, %v4228
        %vm4260 = vcmp.eq.s32.totalorder %v238, %v4232
        %vm4261 = vcmp.eq.s32.totalorder %v238, %v4236
        %vm4262 = vcmp.eq.s32.totalorder %v238, %v4240
        %vm4263 = vcmp.eq.s32.totalorder %v238, %v4244
        %vm4264 = vcmp.eq.s32.totalorder %v238, %v4248
        %v4265 = vlaneseq
        %v4266 = vshrl.u32 %v4265, 7
        %v4267 = vsub.s32 1, %v4266
        %v4268 = vrot.slane %v3873, %v4267
        %v4269 = vlaneseq
        %v4270 = vshrl.u32 %v4269, 7
        %v4271 = vsub.s32 1, %v4270
        %v4272 = vrot.slane %v3874, %v4271
        %v4273 = vlaneseq
        %v4274 = vshrl.u32 %v4273, 7
        %v4275 = vsub.s32 1, %v4274
        %v4276 = vrot.slane %v3875, %v4275
        %v4277 = vlaneseq
        %v4278 = vshrl.u32 %v4277, 7
        %v4279 = vsub.s32 1, %v4278
        %v4280 = vrot.slane %v3876, %v4279
        %v4281 = vlaneseq
        %v4282 = vshrl.u32 %v4281, 7
        %v4283 = vsub.s32 1, %v4282
        %v4284 = vrot.slane %v3877, %v4283
        %v4285 = vlaneseq
        %v4286 = vshrl.u32 %v4285, 7
        %v4287 = vsub.s32 1, %v4286
        %v4288 = vrot.slane %v3878, %v4287
        %v4289 = vlaneseq
        %v4290 = vshrl.u32 %v4289, 7
        %v4291 = vsub.s32 1, %v4290
        %v4292 = vrot.slane %v3879, %v4291
        %v4293 = vlaneseq
        %v4294 = vshrl.u32 %v4293, 7
        %v4295 = vsub.s32 1, %v4294
        %v4296 = vrot.slane %v3880, %v4295
        %v4297 = vsel %vm4249, %v4268, 0.0
        %v4298 = vsel %vm4250, %v4272, 0.0
        %v4299 = vsel %vm4251, %v4276, 0.0
        %v4300 = vsel %vm4252, %v4280, 0.0
        %v4301 = vsel %vm4253, %v4284, 0.0
        %v4302 = vsel %vm4254, %v4288, 0.0
        %v4303 = vsel %vm4255, %v4292, 0.0
        %v4304 = vsel %vm4256, %v4296, 0.0
        %v4305 = vsel %vm4257, %v4268, 0.0
        %v4306 = vsel %vm4258, %v4272, 0.0
        %v4307 = vsel %vm4259, %v4276, 0.0
        %v4308 = vsel %vm4260, %v4280, 0.0
        %v4309 = vsel %vm4261, %v4284, 0.0
        %v4310 = vsel %vm4262, %v4288, 0.0
        %v4311 = vsel %vm4263, %v4292, 0.0
        %v4312 = vsel %vm4264, %v4296, 0.0
        %v4313 = vadd.f32 %v4193, %v4297
        %v4314 = vadd.f32 %v4194, %v4298
        %v4315 = vadd.f32 %v4195, %v4299
        %v4316 = vadd.f32 %v4196, %v4300
        %v4317 = vadd.f32 %v4197, %v4301
        %v4318 = vadd.f32 %v4198, %v4302
        %v4319 = vadd.f32 %v4199, %v4303
        %v4320 = vadd.f32 %v4200, %v4304
        %v4321 = vadd.f32 %v4201, %v4305
        %v4322 = vadd.f32 %v4202, %v4306
        %v4323 = vadd.f32 %v4203, %v4307
        %v4324 = vadd.f32 %v4204, %v4308
        %v4325 = vadd.f32 %v4205, %v4309
        %v4326 = vadd.f32 %v4206, %v4310
        %v4327 = vadd.f32 %v4207, %v4311
        %v4328 = vadd.f32 %v4208, %v4312
        %s4329 = scalar_lea.vmem %s226, 48
        %v4330 = vld [vmem:[%s4329] sm:$0xf]
        %v4331 = vld [vmem:[%s4329 + $0x4] sm:$0xf]
        %v4332 = vld [vmem:[%s4329 + $0x8] sm:$0xf]
        %v4333 = vld [vmem:[%s4329 + $0xc] sm:$0xf]
        %v4334 = vld [vmem:[%s4329 + $0x10] sm:$0xf]
        %v4335 = vld [vmem:[%s4329 + $0x14] sm:$0xf]
        %v4342 = vunpack.c.l.b16 %v4330
        %v4343 = vunpack.c.l.b16 %v4331
        %v4344 = vunpack.c.l.b16 %v4332
        %v4345 = vunpack.c.l.b16 %v4333
        %v4346 = vunpack.c.l.b16 %v4334
        %v4347 = vunpack.c.l.b16 %v4335
        %v4348 = vpack.c.b16 %v4343, %v4342
        %v4349 = vpack.c.b16 %v4345, %v4344
        %v4350 = vpack.c.b16 %v4347, %v4346
        %v4352 = vsel %vm1169, %v4348, 0
        %v4355 = vsel %vm1169, %v4349, 0
        %v4358 = vsel %vm1169, %v4350, 0
        %4360 = vmatprep.subr.bf16.mxu0 %v4106
        %4361 = vmatpush1.bf16.msra.mxu0 %v4105
        %4362 = vmatprep.subr.bf16.mxu0 0
        %4363 = vmatpush1.bf16.msra.mxu0 0
        %4364 = vmatprep.subr.bf16.mxu0 0
        %4365 = vmatpush1.bf16.msra.mxu0 0
        %4366 = vmatprep.subr.bf16.mxu0 0
        %4367 = vmatpush1.bf16.msra.mxu0 0
        %4368 = vmatprep.subr.bf16.mxu0 0
        %4369 = vmatpush1.bf16.msra.mxu0 0
        %4370 = vmatprep.subr.bf16.mxu0 0
        %4371 = vmatpush1.bf16.msra.mxu0 0
        %4372 = vmatprep.subr.bf16.mxu0 0
        %4373 = vmatpush1.bf16.msra.mxu0 0
        %4374 = vmatprep.subr.bf16.mxu0 0
        %4375 = vmatpush1.bf16.msra.mxu0 0
        %4376 = vmatprep.subr.bf16.mxu0 0
        %4377 = vmatpush1.bf16.msra.mxu0 0
        %4378 = vmatprep.subr.bf16.mxu0 0
        %4379 = vmatpush1.bf16.msra.mxu0 0
        %4380 = vmatprep.subr.bf16.mxu0 0
        %4381 = vmatpush1.bf16.msra.mxu0 0
        %4382 = vmatprep.subr.bf16.mxu0 0
        %4383 = vmatpush1.bf16.msra.mxu0 0
        %4384 = vmatprep.subr.bf16.mxu0 0
        %4385 = vmatpush1.bf16.msra.mxu0 0
        %4386 = vmatprep.subr.bf16.mxu0 0
        %4387 = vmatpush1.bf16.msra.mxu0 0
        %4388 = vmatprep.subr.bf16.mxu0 0
        %4389 = vmatpush1.bf16.msra.mxu0 0
        %4390 = vmatprep.subr.bf16.mxu0 0
        %4391 = vmatpush1.bf16.msra.mxu0 0
        %4392 = vmatprep.mubr.bf16.mxu0 0
        %4393 = vmatmul.mubr.bf16.gmra.mrb[0].mxu0 %v4352
        %v4394 = vpop.f32.mrb[0].mxu0
        %v4395 = vadd.f32 0.0, %v4394
        %v4396 = vpop.f32.mrb[0].mxu0
        %v4397 = vadd.f32 0.0, %v4396
        %v4398 = vpop.f32.mrb[0].mxu0
        %v4399 = vadd.f32 0.0, %v4398
        %v4400 = vpop.f32.mrb[0].mxu0
        %v4401 = vadd.f32 0.0, %v4400
        %4402 = vmatprep.mubr.bf16.mxu0 0
        %4403 = vmatmul.mubr.bf16.gmra.mrb[0].mxu0 %v4355
        %v4404 = vpop.f32.mrb[0].mxu0
        %v4405 = vadd.f32 0.0, %v4404
        %v4406 = vpop.f32.mrb[0].mxu0
        %v4407 = vadd.f32 0.0, %v4406
        %v4408 = vpop.f32.mrb[0].mxu0
        %v4409 = vadd.f32 0.0, %v4408
        %v4410 = vpop.f32.mrb[0].mxu0
        %v4411 = vadd.f32 0.0, %v4410
        %4412 = vmatprep.mubr.bf16.mxu0 0
        %4413 = vmatmul.mubr.bf16.gmra.mrb[0].mxu0 %v4358
        %v4414 = vpop.f32.mrb[0].mxu0
        %v4415 = vadd.f32 0.0, %v4414
        %v4416 = vpop.f32.mrb[0].mxu0
        %v4417 = vadd.f32 0.0, %v4416
        %v4418 = vpop.f32.mrb[0].mxu0
        %v4419 = vadd.f32 0.0, %v4418
        %v4420 = vpop.f32.mrb[0].mxu0
        %v4421 = vadd.f32 0.0, %v4420
        %4422 = vdwg.mxu0
        %4423 = vmatprep.subr.bf16.mxu0 %v4108
        %4424 = vmatpush1.bf16.msra.mxu0 %v4107
        %4425 = vmatprep.subr.bf16.mxu0 0
        %4426 = vmatpush1.bf16.msra.mxu0 0
        %4427 = vmatprep.subr.bf16.mxu0 0
        %4428 = vmatpush1.bf16.msra.mxu0 0
        %4429 = vmatprep.subr.bf16.mxu0 0
        %4430 = vmatpush1.bf16.msra.mxu0 0
        %4431 = vmatprep.subr.bf16.mxu0 0
        %4432 = vmatpush1.bf16.msra.mxu0 0
        %4433 = vmatprep.subr.bf16.mxu0 0
        %4434 = vmatpush1.bf16.msra.mxu0 0
        %4435 = vmatprep.subr.bf16.mxu0 0
        %4436 = vmatpush1.bf16.msra.mxu0 0
        %4437 = vmatprep.subr.bf16.mxu0 0
        %4438 = vmatpush1.bf16.msra.mxu0 0
        %4439 = vmatprep.subr.bf16.mxu0 0
        %4440 = vmatpush1.bf16.msra.mxu0 0
        %4441 = vmatprep.subr.bf16.mxu0 0
        %4442 = vmatpush1.bf16.msra.mxu0 0
        %4443 = vmatprep.subr.bf16.mxu0 0
        %4444 = vmatpush1.bf16.msra.mxu0 0
        %4445 = vmatprep.subr.bf16.mxu0 0
        %4446 = vmatpush1.bf16.msra.mxu0 0
        %4447 = vmatprep.subr.bf16.mxu0 0
        %4448 = vmatpush1.bf16.msra.mxu0 0
        %4449 = vmatprep.subr.bf16.mxu0 0
        %4450 = vmatpush1.bf16.msra.mxu0 0
        %4451 = vmatprep.subr.bf16.mxu0 0
        %4452 = vmatpush1.bf16.msra.mxu0 0
        %4453 = vmatprep.subr.bf16.mxu0 0
        %4454 = vmatpush1.bf16.msra.mxu0 0
        %4455 = vmatprep.mubr.bf16.mxu0 0
        %4456 = vmatmul.mubr.bf16.gmra.mrb[0].mxu0 %v4352
        %v4457 = vpop.f32.mrb[0].mxu0
        %v4458 = vadd.f32 0.0, %v4457
        %v4459 = vpop.f32.mrb[0].mxu0
        %v4460 = vadd.f32 0.0, %v4459
        %v4461 = vpop.f32.mrb[0].mxu0
        %v4462 = vadd.f32 0.0, %v4461
        %v4463 = vpop.f32.mrb[0].mxu0
        %v4464 = vadd.f32 0.0, %v4463
        %4465 = vmatprep.mubr.bf16.mxu0 0
        %4466 = vmatmul.mubr.bf16.gmra.mrb[0].mxu0 %v4355
        %v4467 = vpop.f32.mrb[0].mxu0
        %v4468 = vadd.f32 0.0, %v4467
        %v4469 = vpop.f32.mrb[0].mxu0
        %v4470 = vadd.f32 0.0, %v4469
        %v4471 = vpop.f32.mrb[0].mxu0
        %v4472 = vadd.f32 0.0, %v4471
        %v4473 = vpop.f32.mrb[0].mxu0
        %v4474 = vadd.f32 0.0, %v4473
        %4475 = vmatprep.mubr.bf16.mxu0 0
        %4476 = vmatmul.mubr.bf16.gmra.mrb[0].mxu0 %v4358
        %v4477 = vpop.f32.mrb[0].mxu0
        %v4478 = vadd.f32 0.0, %v4477
        %v4479 = vpop.f32.mrb[0].mxu0
        %v4480 = vadd.f32 0.0, %v4479
        %v4481 = vpop.f32.mrb[0].mxu0
        %v4482 = vadd.f32 0.0, %v4481
        %v4483 = vpop.f32.mrb[0].mxu0
        %v4484 = vadd.f32 0.0, %v4483
        %4485 = vdwg.mxu0
        %4486 = vmatprep.subr.bf16.mxu0 %v4110
        %4487 = vmatpush1.bf16.msra.mxu0 %v4109
        %4488 = vmatprep.subr.bf16.mxu0 0
        %4489 = vmatpush1.bf16.msra.mxu0 0
        %4490 = vmatprep.subr.bf16.mxu0 0
        %4491 = vmatpush1.bf16.msra.mxu0 0
        %4492 = vmatprep.subr.bf16.mxu0 0
        %4493 = vmatpush1.bf16.msra.mxu0 0
        %4494 = vmatprep.subr.bf16.mxu0 0
        %4495 = vmatpush1.bf16.msra.mxu0 0
        %4496 = vmatprep.subr.bf16.mxu0 0
        %4497 = vmatpush1.bf16.msra.mxu0 0
        %4498 = vmatprep.subr.bf16.mxu0 0
        %4499 = vmatpush1.bf16.msra.mxu0 0
        %4500 = vmatprep.subr.bf16.mxu0 0
        %4501 = vmatpush1.bf16.msra.mxu0 0
        %4502 = vmatprep.subr.bf16.mxu0 0
        %4503 = vmatpush1.bf16.msra.mxu0 0
        %4504 = vmatprep.subr.bf16.mxu0 0
        %4505 = vmatpush1.bf16.msra.mxu0 0
        %4506 = vmatprep.subr.bf16.mxu0 0
        %4507 = vmatpush1.bf16.msra.mxu0 0
        %4508 = vmatprep.subr.bf16.mxu0 0
        %4509 = vmatpush1.bf16.msra.mxu0 0
        %4510 = vmatprep.subr.bf16.mxu0 0
        %4511 = vmatpush1.bf16.msra.mxu0 0
        %4512 = vmatprep.subr.bf16.mxu0 0
        %4513 = vmatpush1.bf16.msra.mxu0 0
        %4514 = vmatprep.subr.bf16.mxu0 0
        %4515 = vmatpush1.bf16.msra.mxu0 0
        %4516 = vmatprep.subr.bf16.mxu0 0
        %4517 = vmatpush1.bf16.msra.mxu0 0
        %4518 = vmatprep.mubr.bf16.mxu0 0
        %4519 = vmatmul.mubr.bf16.gmra.mrb[0].mxu0 %v4352
        %v4520 = vpop.f32.mrb[0].mxu0
        %v4521 = vadd.f32 0.0, %v4520
        %v4522 = vpop.f32.mrb[0].mxu0
        %v4523 = vadd.f32 0.0, %v4522
        %v4524 = vpop.f32.mrb[0].mxu0
        %v4525 = vadd.f32 0.0, %v4524
        %v4526 = vpop.f32.mrb[0].mxu0
        %v4527 = vadd.f32 0.0, %v4526
        %4528 = vmatprep.mubr.bf16.mxu0 0
        %4529 = vmatmul.mubr.bf16.gmra.mrb[0].mxu0 %v4355
        %v4530 = vpop.f32.mrb[0].mxu0
        %v4531 = vadd.f32 0.0, %v4530
        %v4532 = vpop.f32.mrb[0].mxu0
        %v4533 = vadd.f32 0.0, %v4532
        %v4534 = vpop.f32.mrb[0].mxu0
        %v4535 = vadd.f32 0.0, %v4534
        %v4536 = vpop.f32.mrb[0].mxu0
        %v4537 = vadd.f32 0.0, %v4536
        %4538 = vmatprep.mubr.bf16.mxu0 0
        %4539 = vmatmul.mubr.bf16.gmra.mrb[0].mxu0 %v4358
        %v4540 = vpop.f32.mrb[0].mxu0
        %v4541 = vadd.f32 0.0, %v4540
        %v4542 = vpop.f32.mrb[0].mxu0
        %v4543 = vadd.f32 0.0, %v4542
        %v4544 = vpop.f32.mrb[0].mxu0
        %v4545 = vadd.f32 0.0, %v4544
        %v4546 = vpop.f32.mrb[0].mxu0
        %v4547 = vadd.f32 0.0, %v4546
        %4548 = vdwg.mxu0
        %4549 = vmatprep.subr.bf16.mxu0 %v4112
        %4550 = vmatpush1.bf16.msra.mxu0 %v4111
        %4551 = vmatprep.subr.bf16.mxu0 0
        %4552 = vmatpush1.bf16.msra.mxu0 0
        %4553 = vmatprep.subr.bf16.mxu0 0
        %4554 = vmatpush1.bf16.msra.mxu0 0
        %4555 = vmatprep.subr.bf16.mxu0 0
        %4556 = vmatpush1.bf16.msra.mxu0 0
        %4557 = vmatprep.subr.bf16.mxu0 0
        %4558 = vmatpush1.bf16.msra.mxu0 0
        %4559 = vmatprep.subr.bf16.mxu0 0
        %4560 = vmatpush1.bf16.msra.mxu0 0
        %4561 = vmatprep.subr.bf16.mxu0 0
        %4562 = vmatpush1.bf16.msra.mxu0 0
        %4563 = vmatprep.subr.bf16.mxu0 0
        %4564 = vmatpush1.bf16.msra.mxu0 0
        %4565 = vmatprep.subr.bf16.mxu0 0
        %4566 = vmatpush1.bf16.msra.mxu0 0
        %4567 = vmatprep.subr.bf16.mxu0 0
        %4568 = vmatpush1.bf16.msra.mxu0 0
        %4569 = vmatprep.subr.bf16.mxu0 0
        %4570 = vmatpush1.bf16.msra.mxu0 0
        %4571 = vmatprep.subr.bf16.mxu0 0
        %4572 = vmatpush1.bf16.msra.mxu0 0
        %4573 = vmatprep.subr.bf16.mxu0 0
        %4574 = vmatpush1.bf16.msra.mxu0 0
        %4575 = vmatprep.subr.bf16.mxu0 0
        %4576 = vmatpush1.bf16.msra.mxu0 0
        %4577 = vmatprep.subr.bf16.mxu0 0
        %4578 = vmatpush1.bf16.msra.mxu0 0
        %4579 = vmatprep.subr.bf16.mxu0 0
        %4580 = vmatpush1.bf16.msra.mxu0 0
        %4581 = vmatprep.mubr.bf16.mxu0 0
        %4582 = vmatmul.mubr.bf16.gmra.mrb[0].mxu0 %v4352
        %v4583 = vpop.f32.mrb[0].mxu0
        %v4584 = vadd.f32 0.0, %v4583
        %v4585 = vpop.f32.mrb[0].mxu0
        %v4586 = vadd.f32 0.0, %v4585
        %v4587 = vpop.f32.mrb[0].mxu0
        %v4588 = vadd.f32 0.0, %v4587
        %v4589 = vpop.f32.mrb[0].mxu0
        %v4590 = vadd.f32 0.0, %v4589
        %4591 = vmatprep.mubr.bf16.mxu0 0
        %4592 = vmatmul.mubr.bf16.gmra.mrb[0].mxu0 %v4355
        %v4593 = vpop.f32.mrb[0].mxu0
        %v4594 = vadd.f32 0.0, %v4593
        %v4595 = vpop.f32.mrb[0].mxu0
        %v4596 = vadd.f32 0.0, %v4595
        %v4597 = vpop.f32.mrb[0].mxu0
        %v4598 = vadd.f32 0.0, %v4597
        %v4599 = vpop.f32.mrb[0].mxu0
        %v4600 = vadd.f32 0.0, %v4599
        %4601 = vmatprep.mubr.bf16.mxu0 0
        %4602 = vmatmul.mubr.bf16.gmra.mrb[0].mxu0 %v4358
        %v4603 = vpop.f32.mrb[0].mxu0
        %v4604 = vadd.f32 0.0, %v4603
        %v4605 = vpop.f32.mrb[0].mxu0
        %v4606 = vadd.f32 0.0, %v4605
        %v4607 = vpop.f32.mrb[0].mxu0
        %v4608 = vadd.f32 0.0, %v4607
        %v4609 = vpop.f32.mrb[0].mxu0
        %v4610 = vadd.f32 0.0, %v4609
        %4611 = vdwg.mxu0
        %v4612 = vmul.f32 %v4313, %v4395
        %v4613 = vmul.f32 %v4314, %v4397
        %v4614 = vmul.f32 %v4315, %v4458
        %v4615 = vmul.f32 %v4316, %v4460
        %v4616 = vmul.f32 %v4317, %v4521
        %v4617 = vmul.f32 %v4318, %v4523
        %v4618 = vmul.f32 %v4319, %v4584
        %v4619 = vmul.f32 %v4320, %v4586
        %v4620 = vmul.f32 %v4321, %v4399
        %v4621 = vmul.f32 %v4322, %v4401
        %v4622 = vmul.f32 %v4323, %v4462
        %v4623 = vmul.f32 %v4324, %v4464
        %v4624 = vmul.f32 %v4325, %v4525
        %v4625 = vmul.f32 %v4326, %v4527
        %v4626 = vmul.f32 %v4327, %v4588
        %v4627 = vmul.f32 %v4328, %v4590
        %v4628 = vadd.f32 %v4612, %v4620
        %v4629 = vrot.slane %v4628, 4
        %v4630 = vadd.f32 %v4628, %v4629
        %v4631 = vrot.slane %v4630, 2
        %v4632 = vadd.f32 %v4630, %v4631
        %v4633 = vrot.slane %v4632, 1
        %v4634 = vadd.f32 %v4632, %v4633
        %v4635 = vadd.f32 %v4613, %v4621
        %v4636 = vrot.slane %v4635, 4
        %v4637 = vadd.f32 %v4635, %v4636
        %v4638 = vrot.slane %v4637, 2
        %v4639 = vadd.f32 %v4637, %v4638
        %v4640 = vrot.slane %v4639, 1
        %v4641 = vadd.f32 %v4639, %v4640
        %v4642 = vadd.f32 %v4614, %v4622
        %v4643 = vrot.slane %v4642, 4
        %v4644 = vadd.f32 %v4642, %v4643
        %v4645 = vrot.slane %v4644, 2
        %v4646 = vadd.f32 %v4644, %v4645
        %v4647 = vrot.slane %v4646, 1
        %v4648 = vadd.f32 %v4646, %v4647
        %v4649 = vadd.f32 %v4615, %v4623
        %v4650 = vrot.slane %v4649, 4
        %v4651 = vadd.f32 %v4649, %v4650
        %v4652 = vrot.slane %v4651, 2
        %v4653 = vadd.f32 %v4651, %v4652
        %v4654 = vrot.slane %v4653, 1
        %v4655 = vadd.f32 %v4653, %v4654
        %v4656 = vadd.f32 %v4616, %v4624
        %v4657 = vrot.slane %v4656, 4
        %v4658 = vadd.f32 %v4656, %v4657
        %v4659 = vrot.slane %v4658, 2
        %v4660 = vadd.f32 %v4658, %v4659
        %v4661 = vrot.slane %v4660, 1
        %v4662 = vadd.f32 %v4660, %v4661
        %v4663 = vadd.f32 %v4617, %v4625
        %v4664 = vrot.slane %v4663, 4
        %v4665 = vadd.f32 %v4663, %v4664
        %v4666 = vrot.slane %v4665, 2
        %v4667 = vadd.f32 %v4665, %v4666
        %v4668 = vrot.slane %v4667, 1
        %v4669 = vadd.f32 %v4667, %v4668
        %v4670 = vadd.f32 %v4618, %v4626
        %v4671 = vrot.slane %v4670, 4
        %v4672 = vadd.f32 %v4670, %v4671
        %v4673 = vrot.slane %v4672, 2
        %v4674 = vadd.f32 %v4672, %v4673
        %v4675 = vrot.slane %v4674, 1
        %v4676 = vadd.f32 %v4674, %v4675
        %v4677 = vadd.f32 %v4619, %v4627
        %v4678 = vrot.slane %v4677, 4
        %v4679 = vadd.f32 %v4677, %v4678
        %v4680 = vrot.slane %v4679, 2
        %v4681 = vadd.f32 %v4679, %v4680
        %v4682 = vrot.slane %v4681, 1
        %v4683 = vadd.f32 %v4681, %v4682
        %v4692 = vcombine.low %v4634, %v4641
        %v4693 = vcombine.low %v4648, %v4655
        %v4694 = vcombine.low %v4662, %v4669
        %v4695 = vcombine.low %v4676, %v4683
        %v4697 = vunpack.c.l.s4 1966171168
        %v4698 = vunpack.c.0.s8 %v4697
        %v4699 = vlaneseq
        %v4700 = vshrl.u32 %v4699, 7
        %v4701 = vsub.s32 %v4698, %v4700
        %v4702 = vrot.slane %v4692, %v4701
        %v4704 = vunpack.c.l.s4 1966171168
        %v4705 = vunpack.c.0.s8 %v4704
        %v4706 = vlaneseq
        %v4707 = vshrl.u32 %v4706, 7
        %v4708 = vsub.s32 %v4705, %v4707
        %v4709 = vrot.slane %v4693, %v4708
        %v4711 = vunpack.c.l.s4 1966171168
        %v4712 = vunpack.c.0.s8 %v4711
        %v4713 = vlaneseq
        %v4714 = vshrl.u32 %v4713, 7
        %v4715 = vsub.s32 %v4712, %v4714
        %v4716 = vrot.slane %v4694, %v4715
        %v4718 = vunpack.c.l.s4 1966171168
        %v4719 = vunpack.c.0.s8 %v4718
        %v4720 = vlaneseq
        %v4721 = vshrl.u32 %v4720, 7
        %v4722 = vsub.s32 %v4719, %v4721
        %v4723 = vrot.slane %v4695, %v4722
        %v4724 = vcombine.low %v4702, %v4709
        %v4725 = vcombine.low %v4716, %v4723
        %v4727 = vunpack.c.l.s4 1966171168
        %v4728 = vunpack.c.0.s8 %v4727
        %v4729 = vlaneseq
        %v4730 = vshrl.u32 %v4729, 7
        %v4731 = vsub.s32 %v4728, %v4730
        %v4732 = vrot.slane %v4724, %v4731
        %v4734 = vunpack.c.l.s4 1966171168
        %v4735 = vunpack.c.0.s8 %v4734
        %v4736 = vlaneseq
        %v4737 = vshrl.u32 %v4736, 7
        %v4738 = vsub.s32 %v4735, %v4737
        %v4739 = vrot.slane %v4725, %v4738
        %v4740 = vcombine.low %v4732, %v4739
        %s4742 = scalar_lea.vmem %s208, 128 [#allocation2]
        %4743 = vst [vmem:[%s4742] ss:$8 sm:$0xf] %v4740
        %4744 = vst [vmem:[%s4742] ss:$8 sm:$0xf0] %v4740
        %v4745 = vmul.f32 %v4313, %v4405
        %v4746 = vmul.f32 %v4314, %v4407
        %v4747 = vmul.f32 %v4315, %v4468
        %v4748 = vmul.f32 %v4316, %v4470
        %v4749 = vmul.f32 %v4317, %v4531
        %v4750 = vmul.f32 %v4318, %v4533
        %v4751 = vmul.f32 %v4319, %v4594
        %v4752 = vmul.f32 %v4320, %v4596
        %v4753 = vmul.f32 %v4321, %v4409
        %v4754 = vmul.f32 %v4322, %v4411
        %v4755 = vmul.f32 %v4323, %v4472
        %v4756 = vmul.f32 %v4324, %v4474
        %v4757 = vmul.f32 %v4325, %v4535
        %v4758 = vmul.f32 %v4326, %v4537
        %v4759 = vmul.f32 %v4327, %v4598
        %v4760 = vmul.f32 %v4328, %v4600
        %v4761 = vadd.f32 %v4745, %v4753
        %v4762 = vrot.slane %v4761, 4
        %v4763 = vadd.f32 %v4761, %v4762
        %v4764 = vrot.slane %v4763, 2
        %v4765 = vadd.f32 %v4763, %v4764
        %v4766 = vrot.slane %v4765, 1
        %v4767 = vadd.f32 %v4765, %v4766
        %v4768 = vadd.f32 %v4746, %v4754
        %v4769 = vrot.slane %v4768, 4
        %v4770 = vadd.f32 %v4768, %v4769
        %v4771 = vrot.slane %v4770, 2
        %v4772 = vadd.f32 %v4770, %v4771
        %v4773 = vrot.slane %v4772, 1
        %v4774 = vadd.f32 %v4772, %v4773
        %v4775 = vadd.f32 %v4747, %v4755
        %v4776 = vrot.slane %v4775, 4
        %v4777 = vadd.f32 %v4775, %v4776
        %v4778 = vrot.slane %v4777, 2
        %v4779 = vadd.f32 %v4777, %v4778
        %v4780 = vrot.slane %v4779, 1
        %v4781 = vadd.f32 %v4779, %v4780
        %v4782 = vadd.f32 %v4748, %v4756
        %v4783 = vrot.slane %v4782, 4
        %v4784 = vadd.f32 %v4782, %v4783
        %v4785 = vrot.slane %v4784, 2
        %v4786 = vadd.f32 %v4784, %v4785
        %v4787 = vrot.slane %v4786, 1
        %v4788 = vadd.f32 %v4786, %v4787
        %v4789 = vadd.f32 %v4749, %v4757
        %v4790 = vrot.slane %v4789, 4
        %v4791 = vadd.f32 %v4789, %v4790
        %v4792 = vrot.slane %v4791, 2
        %v4793 = vadd.f32 %v4791, %v4792
        %v4794 = vrot.slane %v4793, 1
        %v4795 = vadd.f32 %v4793, %v4794
        %v4796 = vadd.f32 %v4750, %v4758
        %v4797 = vrot.slane %v4796, 4
        %v4798 = vadd.f32 %v4796, %v4797
        %v4799 = vrot.slane %v4798, 2
        %v4800 = vadd.f32 %v4798, %v4799
        %v4801 = vrot.slane %v4800, 1
        %v4802 = vadd.f32 %v4800, %v4801
        %v4803 = vadd.f32 %v4751, %v4759
        %v4804 = vrot.slane %v4803, 4
        %v4805 = vadd.f32 %v4803, %v4804
        %v4806 = vrot.slane %v4805, 2
        %v4807 = vadd.f32 %v4805, %v4806
        %v4808 = vrot.slane %v4807, 1
        %v4809 = vadd.f32 %v4807, %v4808
        %v4810 = vadd.f32 %v4752, %v4760
        %v4811 = vrot.slane %v4810, 4
        %v4812 = vadd.f32 %v4810, %v4811
        %v4813 = vrot.slane %v4812, 2
        %v4814 = vadd.f32 %v4812, %v4813
        %v4815 = vrot.slane %v4814, 1
        %v4816 = vadd.f32 %v4814, %v4815
        %v4825 = vcombine.low %v4767, %v4774
        %v4826 = vcombine.low %v4781, %v4788
        %v4827 = vcombine.low %v4795, %v4802
        %v4828 = vcombine.low %v4809, %v4816
        %v4830 = vunpack.c.l.s4 1966171168
        %v4831 = vunpack.c.0.s8 %v4830
        %v4832 = vlaneseq
        %v4833 = vshrl.u32 %v4832, 7
        %v4834 = vsub.s32 %v4831, %v4833
        %v4835 = vrot.slane %v4825, %v4834
        %v4837 = vunpack.c.l.s4 1966171168
        %v4838 = vunpack.c.0.s8 %v4837
        %v4839 = vlaneseq
        %v4840 = vshrl.u32 %v4839, 7
        %v4841 = vsub.s32 %v4838, %v4840
        %v4842 = vrot.slane %v4826, %v4841
        %v4844 = vunpack.c.l.s4 1966171168
        %v4845 = vunpack.c.0.s8 %v4844
        %v4846 = vlaneseq
        %v4847 = vshrl.u32 %v4846, 7
        %v4848 = vsub.s32 %v4845, %v4847
        %v4849 = vrot.slane %v4827, %v4848
        %v4851 = vunpack.c.l.s4 1966171168
        %v4852 = vunpack.c.0.s8 %v4851
        %v4853 = vlaneseq
        %v4854 = vshrl.u32 %v4853, 7
        %v4855 = vsub.s32 %v4852, %v4854
        %v4856 = vrot.slane %v4828, %v4855
        %v4857 = vcombine.low %v4835, %v4842
        %v4858 = vcombine.low %v4849, %v4856
        %v4860 = vunpack.c.l.s4 1966171168
        %v4861 = vunpack.c.0.s8 %v4860
        %v4862 = vlaneseq
        %v4863 = vshrl.u32 %v4862, 7
        %v4864 = vsub.s32 %v4861, %v4863
        %v4865 = vrot.slane %v4857, %v4864
        %v4867 = vunpack.c.l.s4 1966171168
        %v4868 = vunpack.c.0.s8 %v4867
        %v4869 = vlaneseq
        %v4870 = vshrl.u32 %v4869, 7
        %v4871 = vsub.s32 %v4868, %v4870
        %v4872 = vrot.slane %v4858, %v4871
        %v4873 = vcombine.low %v4865, %v4872
        %s4875 = scalar_lea.vmem %s4742, 1 [#allocation2]
        %4876 = vst [vmem:[%s4875] ss:$8 sm:$0xf] %v4873
        %4877 = vst [vmem:[%s4875] ss:$8 sm:$0xf0] %v4873
        %v4878 = vmul.f32 %v4313, %v4415
        %v4879 = vmul.f32 %v4314, %v4417
        %v4880 = vmul.f32 %v4315, %v4478
        %v4881 = vmul.f32 %v4316, %v4480
        %v4882 = vmul.f32 %v4317, %v4541
        %v4883 = vmul.f32 %v4318, %v4543
        %v4884 = vmul.f32 %v4319, %v4604
        %v4885 = vmul.f32 %v4320, %v4606
        %v4886 = vmul.f32 %v4321, %v4419
        %v4887 = vmul.f32 %v4322, %v4421
        %v4888 = vmul.f32 %v4323, %v4482
        %v4889 = vmul.f32 %v4324, %v4484
        %v4890 = vmul.f32 %v4325, %v4545
        %v4891 = vmul.f32 %v4326, %v4547
        %v4892 = vmul.f32 %v4327, %v4608
        %v4893 = vmul.f32 %v4328, %v4610
        %v4894 = vadd.f32 %v4878, %v4886
        %v4895 = vrot.slane %v4894, 4
        %v4896 = vadd.f32 %v4894, %v4895
        %v4897 = vrot.slane %v4896, 2
        %v4898 = vadd.f32 %v4896, %v4897
        %v4899 = vrot.slane %v4898, 1
        %v4900 = vadd.f32 %v4898, %v4899
        %v4901 = vadd.f32 %v4879, %v4887
        %v4902 = vrot.slane %v4901, 4
        %v4903 = vadd.f32 %v4901, %v4902
        %v4904 = vrot.slane %v4903, 2
        %v4905 = vadd.f32 %v4903, %v4904
        %v4906 = vrot.slane %v4905, 1
        %v4907 = vadd.f32 %v4905, %v4906
        %v4908 = vadd.f32 %v4880, %v4888
        %v4909 = vrot.slane %v4908, 4
        %v4910 = vadd.f32 %v4908, %v4909
        %v4911 = vrot.slane %v4910, 2
        %v4912 = vadd.f32 %v4910, %v4911
        %v4913 = vrot.slane %v4912, 1
        %v4914 = vadd.f32 %v4912, %v4913
        %v4915 = vadd.f32 %v4881, %v4889
        %v4916 = vrot.slane %v4915, 4
        %v4917 = vadd.f32 %v4915, %v4916
        %v4918 = vrot.slane %v4917, 2
        %v4919 = vadd.f32 %v4917, %v4918
        %v4920 = vrot.slane %v4919, 1
        %v4921 = vadd.f32 %v4919, %v4920
        %v4922 = vadd.f32 %v4882, %v4890
        %v4923 = vrot.slane %v4922, 4
        %v4924 = vadd.f32 %v4922, %v4923
        %v4925 = vrot.slane %v4924, 2
        %v4926 = vadd.f32 %v4924, %v4925
        %v4927 = vrot.slane %v4926, 1
        %v4928 = vadd.f32 %v4926, %v4927
        %v4929 = vadd.f32 %v4883, %v4891
        %v4930 = vrot.slane %v4929, 4
        %v4931 = vadd.f32 %v4929, %v4930
        %v4932 = vrot.slane %v4931, 2
        %v4933 = vadd.f32 %v4931, %v4932
        %v4934 = vrot.slane %v4933, 1
        %v4935 = vadd.f32 %v4933, %v4934
        %v4936 = vadd.f32 %v4884, %v4892
        %v4937 = vrot.slane %v4936, 4
        %v4938 = vadd.f32 %v4936, %v4937
        %v4939 = vrot.slane %v4938, 2
        %v4940 = vadd.f32 %v4938, %v4939
        %v4941 = vrot.slane %v4940, 1
        %v4942 = vadd.f32 %v4940, %v4941
        %v4943 = vadd.f32 %v4885, %v4893
        %v4944 = vrot.slane %v4943, 4
        %v4945 = vadd.f32 %v4943, %v4944
        %v4946 = vrot.slane %v4945, 2
        %v4947 = vadd.f32 %v4945, %v4946
        %v4948 = vrot.slane %v4947, 1
        %v4949 = vadd.f32 %v4947, %v4948
        %v4958 = vcombine.low %v4900, %v4907
        %v4959 = vcombine.low %v4914, %v4921
        %v4960 = vcombine.low %v4928, %v4935
        %v4961 = vcombine.low %v4942, %v4949
        %v4963 = vunpack.c.l.s4 1966171168
        %v4964 = vunpack.c.0.s8 %v4963
        %v4965 = vlaneseq
        %v4966 = vshrl.u32 %v4965, 7
        %v4967 = vsub.s32 %v4964, %v4966
        %v4968 = vrot.slane %v4958, %v4967
        %v4970 = vunpack.c.l.s4 1966171168
        %v4971 = vunpack.c.0.s8 %v4970
        %v4972 = vlaneseq
        %v4973 = vshrl.u32 %v4972, 7
        %v4974 = vsub.s32 %v4971, %v4973
        %v4975 = vrot.slane %v4959, %v4974
        %v4977 = vunpack.c.l.s4 1966171168
        %v4978 = vunpack.c.0.s8 %v4977
        %v4979 = vlaneseq
        %v4980 = vshrl.u32 %v4979, 7
        %v4981 = vsub.s32 %v4978, %v4980
        %v4982 = vrot.slane %v4960, %v4981
        %v4984 = vunpack.c.l.s4 1966171168
        %v4985 = vunpack.c.0.s8 %v4984
        %v4986 = vlaneseq
        %v4987 = vshrl.u32 %v4986, 7
        %v4988 = vsub.s32 %v4985, %v4987
        %v4989 = vrot.slane %v4961, %v4988
        %v4990 = vcombine.low %v4968, %v4975
        %v4991 = vcombine.low %v4982, %v4989
        %v4993 = vunpack.c.l.s4 1966171168
        %v4994 = vunpack.c.0.s8 %v4993
        %v4995 = vlaneseq
        %v4996 = vshrl.u32 %v4995, 7
        %v4997 = vsub.s32 %v4994, %v4996
        %v4998 = vrot.slane %v4990, %v4997
        %v5000 = vunpack.c.l.s4 1966171168
        %v5001 = vunpack.c.0.s8 %v5000
        %v5002 = vlaneseq
        %v5003 = vshrl.u32 %v5002, 7
        %v5004 = vsub.s32 %v5001, %v5003
        %v5005 = vrot.slane %v4991, %v5004
        %v5006 = vcombine.low %v4998, %v5005
        %s5008 = scalar_lea.vmem %s4742, 2 [#allocation2]
        %5009 = vst [vmem:[%s5008] ss:$8 sm:$0xf] %v5006
        %5010 = vst [vmem:[%s5008] ss:$8 sm:$0xf0] %v5006
        %v5019 = vcombine.low %v3689, %v3690
        %v5020 = vcombine.low %v3691, %v3692
        %v5021 = vcombine.low %v3693, %v3694
        %v5022 = vcombine.low %v3695, %v3696
        %v5024 = vunpack.c.l.s4 1966171168
        %v5025 = vunpack.c.0.s8 %v5024
        %v5026 = vlaneseq
        %v5027 = vshrl.u32 %v5026, 7
        %v5028 = vsub.s32 %v5025, %v5027
        %v5029 = vrot.slane %v5019, %v5028
        %v5031 = vunpack.c.l.s4 1966171168
        %v5032 = vunpack.c.0.s8 %v5031
        %v5033 = vlaneseq
        %v5034 = vshrl.u32 %v5033, 7
        %v5035 = vsub.s32 %v5032, %v5034
        %v5036 = vrot.slane %v5020, %v5035
        %v5038 = vunpack.c.l.s4 1966171168
        %v5039 = vunpack.c.0.s8 %v5038
        %v5040 = vlaneseq
        %v5041 = vshrl.u32 %v5040, 7
        %v5042 = vsub.s32 %v5039, %v5041
        %v5043 = vrot.slane %v5021, %v5042
        %v5045 = vunpack.c.l.s4 1966171168
        %v5046 = vunpack.c.0.s8 %v5045
        %v5047 = vlaneseq
        %v5048 = vshrl.u32 %v5047, 7
        %v5049 = vsub.s32 %v5046, %v5048
        %v5050 = vrot.slane %v5022, %v5049
        %v5051 = vcombine.low %v5029, %v5036
        %v5052 = vcombine.low %v5043, %v5050
        %v5054 = vunpack.c.l.s4 1966171168
        %v5055 = vunpack.c.0.s8 %v5054
        %v5056 = vlaneseq
        %v5057 = vshrl.u32 %v5056, 7
        %v5058 = vsub.s32 %v5055, %v5057
        %v5059 = vrot.slane %v5051, %v5058
        %v5061 = vunpack.c.l.s4 1966171168
        %v5062 = vunpack.c.0.s8 %v5061
        %v5063 = vlaneseq
        %v5064 = vshrl.u32 %v5063, 7
        %v5065 = vsub.s32 %v5062, %v5064
        %v5066 = vrot.slane %v5052, %v5065
        %v5067 = vcombine.low %v5059, %v5066
        %s5069 = scalar_lea.vmem %s4742, 3 [#allocation2]
        %5070 = vst [vmem:[%s5069] ss:$8 sm:$0xf] %v5067
        %5071 = vst [vmem:[%s5069] ss:$8 sm:$0xf0] %v5067
        %v5080 = vcombine.low %v3753, %v3754
        %v5081 = vcombine.low %v3755, %v3756
        %v5082 = vcombine.low %v3757, %v3758
        %v5083 = vcombine.low %v3759, %v3760
        %v5085 = vunpack.c.l.s4 1966171168
        %v5086 = vunpack.c.0.s8 %v5085
        %v5087 = vlaneseq
        %v5088 = vshrl.u32 %v5087, 7
        %v5089 = vsub.s32 %v5086, %v5088
        %v5090 = vrot.slane %v5080, %v5089
        %v5092 = vunpack.c.l.s4 1966171168
        %v5093 = vunpack.c.0.s8 %v5092
        %v5094 = vlaneseq
        %v5095 = vshrl.u32 %v5094, 7
        %v5096 = vsub.s32 %v5093, %v5095
        %v5097 = vrot.slane %v5081, %v5096
        %v5099 = vunpack.c.l.s4 1966171168
        %v5100 = vunpack.c.0.s8 %v5099
        %v5101 = vlaneseq
        %v5102 = vshrl.u32 %v5101, 7
        %v5103 = vsub.s32 %v5100, %v5102
        %v5104 = vrot.slane %v5082, %v5103
        %v5106 = vunpack.c.l.s4 1966171168
        %v5107 = vunpack.c.0.s8 %v5106
        %v5108 = vlaneseq
        %v5109 = vshrl.u32 %v5108, 7
        %v5110 = vsub.s32 %v5107, %v5109
        %v5111 = vrot.slane %v5083, %v5110
        %v5112 = vcombine.high %v5090, %v5097
        %v5113 = vcombine.high %v5104, %v5111
        %v5115 = vunpack.c.l.s4 1966171168
        %v5116 = vunpack.c.0.s8 %v5115
        %v5117 = vlaneseq
        %v5118 = vshrl.u32 %v5117, 7
        %v5119 = vsub.s32 %v5116, %v5118
        %v5120 = vrot.slane %v5112, %v5119
        %v5122 = vunpack.c.l.s4 1966171168
        %v5123 = vunpack.c.0.s8 %v5122
        %v5124 = vlaneseq
        %v5125 = vshrl.u32 %v5124, 7
        %v5126 = vsub.s32 %v5123, %v5125
        %v5127 = vrot.slane %v5113, %v5126
        %v5128 = vcombine.low %v5120, %v5127
        %s5130 = scalar_lea.vmem %s4742, 4 [#allocation2]
        %5131 = vst [vmem:[%s5130] ss:$8 sm:$0xf] %v5128
        %5132 = vst [vmem:[%s5130] ss:$8 sm:$0xf0] %v5128
        %s5133 = scalar_lea.vmem %s219, 12
        %v5134 = vld [vmem:[%s5133] sm:$0x7]
        %5136 = vset.pattern.permute.xlu0 0
        %5137 = vperm.xlu0 %5136, %v5134
        %v5138 = vpop.permute.xlu0 %5137
        %v5140 = vmul.f32 %v5138, %v249
        %v5141 = vmul.f32 %v5138, %v253
        %v5142 = vmul.f32 %v5138, %v257
        %v5143 = vmul.f32 %v5138, %v261
        %v5144 = vmul.f32 %v5138, %v265
        %v5145 = vmul.f32 %v5138, %v269
        %v5146 = vmul.f32 %v5138, %v273
        %v5147 = vmul.f32 %v5138, %v277
        %5148 = vset.pattern.permute.xlu0 1
        %5149 = vperm.xlu0 %5148, %v5134
        %v5150 = vpop.permute.xlu0 %5149
        %v5152 = vmul.f32 %v5150, %v302
        %v5153 = vmul.f32 %v5150, %v306
        %v5154 = vmul.f32 %v5150, %v310
        %v5155 = vmul.f32 %v5150, %v314
        %v5156 = vmul.f32 %v5150, %v318
        %v5157 = vmul.f32 %v5150, %v322
        %v5158 = vmul.f32 %v5150, %v326
        %v5159 = vmul.f32 %v5150, %v330
        %v5160 = vadd.f32 %v5140, %v5152
        %v5161 = vadd.f32 %v5141, %v5153
        %v5162 = vadd.f32 %v5142, %v5154
        %v5163 = vadd.f32 %v5143, %v5155
        %v5164 = vadd.f32 %v5144, %v5156
        %v5165 = vadd.f32 %v5145, %v5157
        %v5166 = vadd.f32 %v5146, %v5158
        %v5167 = vadd.f32 %v5147, %v5159
        %5168 = vset.pattern.permute.xlu0 2
        %5169 = vperm.xlu0 %5168, %v5134
        %v5170 = vpop.permute.xlu0 %5169
        %v5172 = vmul.f32 %v5170, %v363
        %v5173 = vmul.f32 %v5170, %v367
        %v5174 = vmul.f32 %v5170, %v371
        %v5175 = vmul.f32 %v5170, %v375
        %v5176 = vmul.f32 %v5170, %v379
        %v5177 = vmul.f32 %v5170, %v383
        %v5178 = vmul.f32 %v5170, %v387
        %v5179 = vmul.f32 %v5170, %v391
        %v5180 = vadd.f32 %v5160, %v5172
        %v5181 = vadd.f32 %v5161, %v5173
        %v5182 = vadd.f32 %v5162, %v5174
        %v5183 = vadd.f32 %v5163, %v5175
        %v5184 = vadd.f32 %v5164, %v5176
        %v5185 = vadd.f32 %v5165, %v5177
        %v5186 = vadd.f32 %v5166, %v5178
        %v5187 = vadd.f32 %v5167, %v5179
        %5188 = vset.pattern.permute.xlu0 3
        %5189 = vperm.xlu0 %5188, %v5134
        %v5190 = vpop.permute.xlu0 %5189
        %v5192 = vadd.f32 %v5180, %v5190
        %v5193 = vadd.f32 %v5181, %v5190
        %v5194 = vadd.f32 %v5182, %v5190
        %v5195 = vadd.f32 %v5183, %v5190
        %v5196 = vadd.f32 %v5184, %v5190
        %v5197 = vadd.f32 %v5185, %v5190
        %v5198 = vadd.f32 %v5186, %v5190
        %v5199 = vadd.f32 %v5187, %v5190
        %v5200 = vrcp.pop %v5192
        %v5201 = vmul.f32 1.0, %v5200
        %v5202 = vrcp.pop %v5193
        %v5203 = vmul.f32 1.0, %v5202
        %v5204 = vrcp.pop %v5194
        %v5205 = vmul.f32 1.0, %v5204
        %v5206 = vrcp.pop %v5195
        %v5207 = vmul.f32 1.0, %v5206
        %v5208 = vrcp.pop %v5196
        %v5209 = vmul.f32 1.0, %v5208
        %v5210 = vrcp.pop %v5197
        %v5211 = vmul.f32 1.0, %v5210
        %v5212 = vrcp.pop %v5198
        %v5213 = vmul.f32 1.0, %v5212
        %v5214 = vrcp.pop %v5199
        %v5215 = vmul.f32 1.0, %v5214
        %v5224 = vrot.slane %v5201, 2
        %v5225 = vrot.slane %v5203, 2
        %v5226 = vrot.slane %v5205, 2
        %v5227 = vrot.slane %v5207, 2
        %v5228 = vrot.slane %v5209, 2
        %v5229 = vrot.slane %v5211, 2
        %v5230 = vrot.slane %v5213, 2
        %v5231 = vrot.slane %v5215, 2
        %v5240 = vmul.f32 %v5192, %v5224
        %v5241 = vmul.f32 %v5193, %v5225
        %v5242 = vmul.f32 %v5194, %v5226
        %v5243 = vmul.f32 %v5195, %v5227
        %v5244 = vmul.f32 %v5196, %v5228
        %v5245 = vmul.f32 %v5197, %v5229
        %v5246 = vmul.f32 %v5198, %v5230
        %v5247 = vmul.f32 %v5199, %v5231
        %v5248 = vmul.f32 %v5240, 0.0625
        %v5249 = vmul.f32 %v5241, 0.0625
        %v5250 = vmul.f32 %v5242, 0.0625
        %v5251 = vmul.f32 %v5243, 0.0625
        %v5252 = vmul.f32 %v5244, 0.0625
        %v5253 = vmul.f32 %v5245, 0.0625
        %v5254 = vmul.f32 %v5246, 0.0625
        %v5255 = vmul.f32 %v5247, 0.0625
        %v5256 = vmax.f32 %v5248, 0.0
        %v5257 = vmax.f32 %v5249, 0.0
        %v5258 = vmax.f32 %v5250, 0.0
        %v5259 = vmax.f32 %v5251, 0.0
        %v5260 = vmax.f32 %v5252, 0.0
        %v5261 = vmax.f32 %v5253, 0.0
        %v5262 = vmax.f32 %v5254, 0.0
        %v5263 = vmax.f32 %v5255, 0.0
        %v5264 = vmin.f32 %v5256, 1.0
        %v5265 = vmin.f32 %v5257, 1.0
        %v5266 = vmin.f32 %v5258, 1.0
        %v5267 = vmin.f32 %v5259, 1.0
        %v5268 = vmin.f32 %v5260, 1.0
        %v5269 = vmin.f32 %v5261, 1.0
        %v5270 = vmin.f32 %v5262, 1.0
        %v5271 = vmin.f32 %v5263, 1.0
        %v5272 = vmul.f32 %v5264, 2.0
        %v5273 = vmul.f32 %v5265, 2.0
        %v5274 = vmul.f32 %v5266, 2.0
        %v5275 = vmul.f32 %v5267, 2.0
        %v5276 = vmul.f32 %v5268, 2.0
        %v5277 = vmul.f32 %v5269, 2.0
        %v5278 = vmul.f32 %v5270, 2.0
        %v5279 = vmul.f32 %v5271, 2.0
        %v5280 = vsub.f32 %v5272, 1.0
        %v5281 = vsub.f32 %v5273, 1.0
        %v5282 = vsub.f32 %v5274, 1.0
        %v5283 = vsub.f32 %v5275, 1.0
        %v5284 = vsub.f32 %v5276, 1.0
        %v5285 = vsub.f32 %v5277, 1.0
        %v5286 = vsub.f32 %v5278, 1.0
        %v5287 = vsub.f32 %v5279, 1.0
        %v5288 = vrot.slane %v5201, 1
        %v5289 = vrot.slane %v5203, 1
        %v5290 = vrot.slane %v5205, 1
        %v5291 = vrot.slane %v5207, 1
        %v5292 = vrot.slane %v5209, 1
        %v5293 = vrot.slane %v5211, 1
        %v5294 = vrot.slane %v5213, 1
        %v5295 = vrot.slane %v5215, 1
        %v5304 = vmul.f32 %v5192, %v5288
        %v5305 = vmul.f32 %v5193, %v5289
        %v5306 = vmul.f32 %v5194, %v5290
        %v5307 = vmul.f32 %v5195, %v5291
        %v5308 = vmul.f32 %v5196, %v5292
        %v5309 = vmul.f32 %v5197, %v5293
        %v5310 = vmul.f32 %v5198, %v5294
        %v5311 = vmul.f32 %v5199, %v5295
        %v5312 = vmul.f32 %v5304, 0.0625
        %v5313 = vmul.f32 %v5305, 0.0625
        %v5314 = vmul.f32 %v5306, 0.0625
        %v5315 = vmul.f32 %v5307, 0.0625
        %v5316 = vmul.f32 %v5308, 0.0625
        %v5317 = vmul.f32 %v5309, 0.0625
        %v5318 = vmul.f32 %v5310, 0.0625
        %v5319 = vmul.f32 %v5311, 0.0625
        %v5320 = vmax.f32 %v5312, 0.0
        %v5321 = vmax.f32 %v5313, 0.0
        %v5322 = vmax.f32 %v5314, 0.0
        %v5323 = vmax.f32 %v5315, 0.0
        %v5324 = vmax.f32 %v5316, 0.0
        %v5325 = vmax.f32 %v5317, 0.0
        %v5326 = vmax.f32 %v5318, 0.0
        %v5327 = vmax.f32 %v5319, 0.0
        %v5328 = vmin.f32 %v5320, 1.0
        %v5329 = vmin.f32 %v5321, 1.0
        %v5330 = vmin.f32 %v5322, 1.0
        %v5331 = vmin.f32 %v5323, 1.0
        %v5332 = vmin.f32 %v5324, 1.0
        %v5333 = vmin.f32 %v5325, 1.0
        %v5334 = vmin.f32 %v5326, 1.0
        %v5335 = vmin.f32 %v5327, 1.0
        %v5336 = vmul.f32 %v5328, 2.0
        %v5337 = vmul.f32 %v5329, 2.0
        %v5338 = vmul.f32 %v5330, 2.0
        %v5339 = vmul.f32 %v5331, 2.0
        %v5340 = vmul.f32 %v5332, 2.0
        %v5341 = vmul.f32 %v5333, 2.0
        %v5342 = vmul.f32 %v5334, 2.0
        %v5343 = vmul.f32 %v5335, 2.0
        %v5344 = vsub.f32 %v5336, 1.0
        %v5345 = vsub.f32 %v5337, 1.0
        %v5346 = vsub.f32 %v5338, 1.0
        %v5347 = vsub.f32 %v5339, 1.0
        %v5348 = vsub.f32 %v5340, 1.0
        %v5349 = vsub.f32 %v5341, 1.0
        %v5350 = vsub.f32 %v5342, 1.0
        %v5351 = vsub.f32 %v5343, 1.0
        %v5352 = vadd.f32 %v5280, 1.0
        %v5353 = vadd.f32 %v5281, 1.0
        %v5354 = vadd.f32 %v5282, 1.0
        %v5355 = vadd.f32 %v5283, 1.0
        %v5356 = vadd.f32 %v5284, 1.0
        %v5357 = vadd.f32 %v5285, 1.0
        %v5358 = vadd.f32 %v5286, 1.0
        %v5359 = vadd.f32 %v5287, 1.0
        %v5360 = vmul.f32 %v5352, 16.0
        %v5361 = vmul.f32 %v5353, 16.0
        %v5362 = vmul.f32 %v5354, 16.0
        %v5363 = vmul.f32 %v5355, 16.0
        %v5364 = vmul.f32 %v5356, 16.0
        %v5365 = vmul.f32 %v5357, 16.0
        %v5366 = vmul.f32 %v5358, 16.0
        %v5367 = vmul.f32 %v5359, 16.0
        %v5368 = vsub.f32 %v5360, 1.0
        %v5369 = vsub.f32 %v5361, 1.0
        %v5370 = vsub.f32 %v5362, 1.0
        %v5371 = vsub.f32 %v5363, 1.0
        %v5372 = vsub.f32 %v5364, 1.0
        %v5373 = vsub.f32 %v5365, 1.0
        %v5374 = vsub.f32 %v5366, 1.0
        %v5375 = vsub.f32 %v5367, 1.0
        %v5376 = vmul.f32 %v5368, 0.5
        %v5377 = vmul.f32 %v5369, 0.5
        %v5378 = vmul.f32 %v5370, 0.5
        %v5379 = vmul.f32 %v5371, 0.5
        %v5380 = vmul.f32 %v5372, 0.5
        %v5381 = vmul.f32 %v5373, 0.5
        %v5382 = vmul.f32 %v5374, 0.5
        %v5383 = vmul.f32 %v5375, 0.5
        %v5384 = vadd.f32 %v5344, 1.0
        %v5385 = vadd.f32 %v5345, 1.0
        %v5386 = vadd.f32 %v5346, 1.0
        %v5387 = vadd.f32 %v5347, 1.0
        %v5388 = vadd.f32 %v5348, 1.0
        %v5389 = vadd.f32 %v5349, 1.0
        %v5390 = vadd.f32 %v5350, 1.0
        %v5391 = vadd.f32 %v5351, 1.0
        %v5392 = vmul.f32 %v5384, 16.0
        %v5393 = vmul.f32 %v5385, 16.0
        %v5394 = vmul.f32 %v5386, 16.0
        %v5395 = vmul.f32 %v5387, 16.0
        %v5396 = vmul.f32 %v5388, 16.0
        %v5397 = vmul.f32 %v5389, 16.0
        %v5398 = vmul.f32 %v5390, 16.0
        %v5399 = vmul.f32 %v5391, 16.0
        %v5400 = vsub.f32 %v5392, 1.0
        %v5401 = vsub.f32 %v5393, 1.0
        %v5402 = vsub.f32 %v5394, 1.0
        %v5403 = vsub.f32 %v5395, 1.0
        %v5404 = vsub.f32 %v5396, 1.0
        %v5405 = vsub.f32 %v5397, 1.0
        %v5406 = vsub.f32 %v5398, 1.0
        %v5407 = vsub.f32 %v5399, 1.0
        %v5408 = vmul.f32 %v5400, 0.5
        %v5409 = vmul.f32 %v5401, 0.5
        %v5410 = vmul.f32 %v5402, 0.5
        %v5411 = vmul.f32 %v5403, 0.5
        %v5412 = vmul.f32 %v5404, 0.5
        %v5413 = vmul.f32 %v5405, 0.5
        %v5414 = vmul.f32 %v5406, 0.5
        %v5415 = vmul.f32 %v5407, 0.5
        %v5416 = vfloor.f32 %v5376
        %v5417 = vfloor.f32 %v5377
        %v5418 = vfloor.f32 %v5378
        %v5419 = vfloor.f32 %v5379
        %v5420 = vfloor.f32 %v5380
        %v5421 = vfloor.f32 %v5381
        %v5422 = vfloor.f32 %v5382
        %v5423 = vfloor.f32 %v5383
        %v5424 = vfloor.f32 %v5408
        %v5425 = vfloor.f32 %v5409
        %v5426 = vfloor.f32 %v5410
        %v5427 = vfloor.f32 %v5411
        %v5428 = vfloor.f32 %v5412
        %v5429 = vfloor.f32 %v5413
        %v5430 = vfloor.f32 %v5414
        %v5431 = vfloor.f32 %v5415
        %v5432 = vcvt.f32.s32.to.zero.pseudo %v5416
        %v5433 = vcvt.f32.s32.to.zero.pseudo %v5417
        %v5434 = vcvt.f32.s32.to.zero.pseudo %v5418
        %v5435 = vcvt.f32.s32.to.zero.pseudo %v5419
        %v5436 = vcvt.f32.s32.to.zero.pseudo %v5420
        %v5437 = vcvt.f32.s32.to.zero.pseudo %v5421
        %v5438 = vcvt.f32.s32.to.zero.pseudo %v5422
        %v5439 = vcvt.f32.s32.to.zero.pseudo %v5423
        %v5440 = vcvt.f32.s32.to.zero.pseudo %v5424
        %v5441 = vcvt.f32.s32.to.zero.pseudo %v5425
        %v5442 = vcvt.f32.s32.to.zero.pseudo %v5426
        %v5443 = vcvt.f32.s32.to.zero.pseudo %v5427
        %v5444 = vcvt.f32.s32.to.zero.pseudo %v5428
        %v5445 = vcvt.f32.s32.to.zero.pseudo %v5429
        %v5446 = vcvt.f32.s32.to.zero.pseudo %v5430
        %v5447 = vcvt.f32.s32.to.zero.pseudo %v5431
        %v5448 = vsub.f32 %v5376, %v5416
        %v5449 = vsub.f32 %v5377, %v5417
        %v5450 = vsub.f32 %v5378, %v5418
        %v5451 = vsub.f32 %v5379, %v5419
        %v5452 = vsub.f32 %v5380, %v5420
        %v5453 = vsub.f32 %v5381, %v5421
        %v5454 = vsub.f32 %v5382, %v5422
        %v5455 = vsub.f32 %v5383, %v5423
        %v5456 = vsub.f32 1.0, %v5448
        %v5457 = vsub.f32 1.0, %v5449
        %v5458 = vsub.f32 1.0, %v5450
        %v5459 = vsub.f32 1.0, %v5451
        %v5460 = vsub.f32 1.0, %v5452
        %v5461 = vsub.f32 1.0, %v5453
        %v5462 = vsub.f32 1.0, %v5454
        %v5463 = vsub.f32 1.0, %v5455
        %v5464 = vsub.f32 %v5408, %v5424
        %v5465 = vsub.f32 %v5409, %v5425
        %v5466 = vsub.f32 %v5410, %v5426
        %v5467 = vsub.f32 %v5411, %v5427
        %v5468 = vsub.f32 %v5412, %v5428
        %v5469 = vsub.f32 %v5413, %v5429
        %v5470 = vsub.f32 %v5414, %v5430
        %v5471 = vsub.f32 %v5415, %v5431
        %v5472 = vsub.f32 1.0, %v5464
        %v5473 = vsub.f32 1.0, %v5465
        %v5474 = vsub.f32 1.0, %v5466
        %v5475 = vsub.f32 1.0, %v5467
        %v5476 = vsub.f32 1.0, %v5468
        %v5477 = vsub.f32 1.0, %v5469
        %v5478 = vsub.f32 1.0, %v5470
        %v5479 = vsub.f32 1.0, %v5471
        %v5480 = vlaneseq
        %v5481 = vshrl.u32 %v5480, 7
        %v5482 = vsub.s32 0, %v5481
        %v5483 = vrot.slane %v5432, %v5482
        %v5484 = vlaneseq
        %v5485 = vshrl.u32 %v5484, 7
        %v5486 = vsub.s32 0, %v5485
        %v5487 = vrot.slane %v5433, %v5486
        %v5488 = vlaneseq
        %v5489 = vshrl.u32 %v5488, 7
        %v5490 = vsub.s32 0, %v5489
        %v5491 = vrot.slane %v5434, %v5490
        %v5492 = vlaneseq
        %v5493 = vshrl.u32 %v5492, 7
        %v5494 = vsub.s32 0, %v5493
        %v5495 = vrot.slane %v5435, %v5494
        %v5496 = vlaneseq
        %v5497 = vshrl.u32 %v5496, 7
        %v5498 = vsub.s32 0, %v5497
        %v5499 = vrot.slane %v5436, %v5498
        %v5500 = vlaneseq
        %v5501 = vshrl.u32 %v5500, 7
        %v5502 = vsub.s32 0, %v5501
        %v5503 = vrot.slane %v5437, %v5502
        %v5504 = vlaneseq
        %v5505 = vshrl.u32 %v5504, 7
        %v5506 = vsub.s32 0, %v5505
        %v5507 = vrot.slane %v5438, %v5506
        %v5508 = vlaneseq
        %v5509 = vshrl.u32 %v5508, 7
        %v5510 = vsub.s32 0, %v5509
        %v5511 = vrot.slane %v5439, %v5510
        %vm5512 = vcmp.eq.s32.totalorder %v237, %v5483
        %vm5513 = vcmp.eq.s32.totalorder %v237, %v5487
        %vm5514 = vcmp.eq.s32.totalorder %v237, %v5491
        %vm5515 = vcmp.eq.s32.totalorder %v237, %v5495
        %vm5516 = vcmp.eq.s32.totalorder %v237, %v5499
        %vm5517 = vcmp.eq.s32.totalorder %v237, %v5503
        %vm5518 = vcmp.eq.s32.totalorder %v237, %v5507
        %vm5519 = vcmp.eq.s32.totalorder %v237, %v5511
        %vm5520 = vcmp.eq.s32.totalorder %v238, %v5483
        %vm5521 = vcmp.eq.s32.totalorder %v238, %v5487
        %vm5522 = vcmp.eq.s32.totalorder %v238, %v5491
        %vm5523 = vcmp.eq.s32.totalorder %v238, %v5495
        %vm5524 = vcmp.eq.s32.totalorder %v238, %v5499
        %vm5525 = vcmp.eq.s32.totalorder %v238, %v5503
        %vm5526 = vcmp.eq.s32.totalorder %v238, %v5507
        %vm5527 = vcmp.eq.s32.totalorder %v238, %v5511
        %v5528 = vlaneseq
        %v5529 = vshrl.u32 %v5528, 7
        %v5530 = vsub.s32 0, %v5529
        %v5531 = vrot.slane %v5456, %v5530
        %v5532 = vlaneseq
        %v5533 = vshrl.u32 %v5532, 7
        %v5534 = vsub.s32 0, %v5533
        %v5535 = vrot.slane %v5457, %v5534
        %v5536 = vlaneseq
        %v5537 = vshrl.u32 %v5536, 7
        %v5538 = vsub.s32 0, %v5537
        %v5539 = vrot.slane %v5458, %v5538
        %v5540 = vlaneseq
        %v5541 = vshrl.u32 %v5540, 7
        %v5542 = vsub.s32 0, %v5541
        %v5543 = vrot.slane %v5459, %v5542
        %v5544 = vlaneseq
        %v5545 = vshrl.u32 %v5544, 7
        %v5546 = vsub.s32 0, %v5545
        %v5547 = vrot.slane %v5460, %v5546
        %v5548 = vlaneseq
        %v5549 = vshrl.u32 %v5548, 7
        %v5550 = vsub.s32 0, %v5549
        %v5551 = vrot.slane %v5461, %v5550
        %v5552 = vlaneseq
        %v5553 = vshrl.u32 %v5552, 7
        %v5554 = vsub.s32 0, %v5553
        %v5555 = vrot.slane %v5462, %v5554
        %v5556 = vlaneseq
        %v5557 = vshrl.u32 %v5556, 7
        %v5558 = vsub.s32 0, %v5557
        %v5559 = vrot.slane %v5463, %v5558
        %v5560 = vsel %vm5512, %v5531, 0.0
        %v5561 = vsel %vm5513, %v5535, 0.0
        %v5562 = vsel %vm5514, %v5539, 0.0
        %v5563 = vsel %vm5515, %v5543, 0.0
        %v5564 = vsel %vm5516, %v5547, 0.0
        %v5565 = vsel %vm5517, %v5551, 0.0
        %v5566 = vsel %vm5518, %v5555, 0.0
        %v5567 = vsel %vm5519, %v5559, 0.0
        %v5568 = vsel %vm5520, %v5531, 0.0
        %v5569 = vsel %vm5521, %v5535, 0.0
        %v5570 = vsel %vm5522, %v5539, 0.0
        %v5571 = vsel %vm5523, %v5543, 0.0
        %v5572 = vsel %vm5524, %v5547, 0.0
        %v5573 = vsel %vm5525, %v5551, 0.0
        %v5574 = vsel %vm5526, %v5555, 0.0
        %v5575 = vsel %vm5527, %v5559, 0.0
        %v5576 = vadd.s32 %v5432, 1
        %v5577 = vadd.s32 %v5433, 1
        %v5578 = vadd.s32 %v5434, 1
        %v5579 = vadd.s32 %v5435, 1
        %v5580 = vadd.s32 %v5436, 1
        %v5581 = vadd.s32 %v5437, 1
        %v5582 = vadd.s32 %v5438, 1
        %v5583 = vadd.s32 %v5439, 1
        %v5584 = vlaneseq
        %v5585 = vshrl.u32 %v5584, 7
        %v5586 = vsub.s32 0, %v5585
        %v5587 = vrot.slane %v5576, %v5586
        %v5588 = vlaneseq
        %v5589 = vshrl.u32 %v5588, 7
        %v5590 = vsub.s32 0, %v5589
        %v5591 = vrot.slane %v5577, %v5590
        %v5592 = vlaneseq
        %v5593 = vshrl.u32 %v5592, 7
        %v5594 = vsub.s32 0, %v5593
        %v5595 = vrot.slane %v5578, %v5594
        %v5596 = vlaneseq
        %v5597 = vshrl.u32 %v5596, 7
        %v5598 = vsub.s32 0, %v5597
        %v5599 = vrot.slane %v5579, %v5598
        %v5600 = vlaneseq
        %v5601 = vshrl.u32 %v5600, 7
        %v5602 = vsub.s32 0, %v5601
        %v5603 = vrot.slane %v5580, %v5602
        %v5604 = vlaneseq
        %v5605 = vshrl.u32 %v5604, 7
        %v5606 = vsub.s32 0, %v5605
        %v5607 = vrot.slane %v5581, %v5606
        %v5608 = vlaneseq
        %v5609 = vshrl.u32 %v5608, 7
        %v5610 = vsub.s32 0, %v5609
        %v5611 = vrot.slane %v5582, %v5610
        %v5612 = vlaneseq
        %v5613 = vshrl.u32 %v5612, 7
        %v5614 = vsub.s32 0, %v5613
        %v5615 = vrot.slane %v5583, %v5614
        %vm5616 = vcmp.eq.s32.totalorder %v237, %v5587
        %vm5617 = vcmp.eq.s32.totalorder %v237, %v5591
        %vm5618 = vcmp.eq.s32.totalorder %v237, %v5595
        %vm5619 = vcmp.eq.s32.totalorder %v237, %v5599
        %vm5620 = vcmp.eq.s32.totalorder %v237, %v5603
        %vm5621 = vcmp.eq.s32.totalorder %v237, %v5607
        %vm5622 = vcmp.eq.s32.totalorder %v237, %v5611
        %vm5623 = vcmp.eq.s32.totalorder %v237, %v5615
        %vm5624 = vcmp.eq.s32.totalorder %v238, %v5587
        %vm5625 = vcmp.eq.s32.totalorder %v238, %v5591
        %vm5626 = vcmp.eq.s32.totalorder %v238, %v5595
        %vm5627 = vcmp.eq.s32.totalorder %v238, %v5599
        %vm5628 = vcmp.eq.s32.totalorder %v238, %v5603
        %vm5629 = vcmp.eq.s32.totalorder %v238, %v5607
        %vm5630 = vcmp.eq.s32.totalorder %v238, %v5611
        %vm5631 = vcmp.eq.s32.totalorder %v238, %v5615
        %v5632 = vlaneseq
        %v5633 = vshrl.u32 %v5632, 7
        %v5634 = vsub.s32 0, %v5633
        %v5635 = vrot.slane %v5448, %v5634
        %v5636 = vlaneseq
        %v5637 = vshrl.u32 %v5636, 7
        %v5638 = vsub.s32 0, %v5637
        %v5639 = vrot.slane %v5449, %v5638
        %v5640 = vlaneseq
        %v5641 = vshrl.u32 %v5640, 7
        %v5642 = vsub.s32 0, %v5641
        %v5643 = vrot.slane %v5450, %v5642
        %v5644 = vlaneseq
        %v5645 = vshrl.u32 %v5644, 7
        %v5646 = vsub.s32 0, %v5645
        %v5647 = vrot.slane %v5451, %v5646
        %v5648 = vlaneseq
        %v5649 = vshrl.u32 %v5648, 7
        %v5650 = vsub.s32 0, %v5649
        %v5651 = vrot.slane %v5452, %v5650
        %v5652 = vlaneseq
        %v5653 = vshrl.u32 %v5652, 7
        %v5654 = vsub.s32 0, %v5653
        %v5655 = vrot.slane %v5453, %v5654
        %v5656 = vlaneseq
        %v5657 = vshrl.u32 %v5656, 7
        %v5658 = vsub.s32 0, %v5657
        %v5659 = vrot.slane %v5454, %v5658
        %v5660 = vlaneseq
        %v5661 = vshrl.u32 %v5660, 7
        %v5662 = vsub.s32 0, %v5661
        %v5663 = vrot.slane %v5455, %v5662
        %v5664 = vsel %vm5616, %v5635, 0.0
        %v5665 = vsel %vm5617, %v5639, 0.0
        %v5666 = vsel %vm5618, %v5643, 0.0
        %v5667 = vsel %vm5619, %v5647, 0.0
        %v5668 = vsel %vm5620, %v5651, 0.0
        %v5669 = vsel %vm5621, %v5655, 0.0
        %v5670 = vsel %vm5622, %v5659, 0.0
        %v5671 = vsel %vm5623, %v5663, 0.0
        %v5672 = vsel %vm5624, %v5635, 0.0
        %v5673 = vsel %vm5625, %v5639, 0.0
        %v5674 = vsel %vm5626, %v5643, 0.0
        %v5675 = vsel %vm5627, %v5647, 0.0
        %v5676 = vsel %vm5628, %v5651, 0.0
        %v5677 = vsel %vm5629, %v5655, 0.0
        %v5678 = vsel %vm5630, %v5659, 0.0
        %v5679 = vsel %vm5631, %v5663, 0.0
        %v5680 = vadd.f32 %v5560, %v5664
        %v5681 = vadd.f32 %v5561, %v5665
        %v5682 = vadd.f32 %v5562, %v5666
        %v5683 = vadd.f32 %v5563, %v5667
        %v5684 = vadd.f32 %v5564, %v5668
        %v5685 = vadd.f32 %v5565, %v5669
        %v5686 = vadd.f32 %v5566, %v5670
        %v5687 = vadd.f32 %v5567, %v5671
        %v5688 = vadd.f32 %v5568, %v5672
        %v5689 = vadd.f32 %v5569, %v5673
        %v5690 = vadd.f32 %v5570, %v5674
        %v5691 = vadd.f32 %v5571, %v5675
        %v5692 = vadd.f32 %v5572, %v5676
        %v5693 = vadd.f32 %v5573, %v5677
        %v5694 = vadd.f32 %v5574, %v5678
        %v5695 = vadd.f32 %v5575, %v5679
        %v5696 = vpack.c.bf16 %v5688, %v5680
        %v5697 = vpack.c.bf16 %v5689, %v5681
        %v5698 = vpack.c.bf16 %v5690, %v5682
        %v5699 = vpack.c.bf16 %v5691, %v5683
        %v5700 = vpack.c.bf16 %v5692, %v5684
        %v5701 = vpack.c.bf16 %v5693, %v5685
        %v5702 = vpack.c.bf16 %v5694, %v5686
        %v5703 = vpack.c.bf16 %v5695, %v5687
        %v5704 = vlaneseq
        %v5705 = vshrl.u32 %v5704, 7
        %v5706 = vsub.s32 1, %v5705
        %v5707 = vrot.slane %v5440, %v5706
        %v5708 = vlaneseq
        %v5709 = vshrl.u32 %v5708, 7
        %v5710 = vsub.s32 1, %v5709
        %v5711 = vrot.slane %v5441, %v5710
        %v5712 = vlaneseq
        %v5713 = vshrl.u32 %v5712, 7
        %v5714 = vsub.s32 1, %v5713
        %v5715 = vrot.slane %v5442, %v5714
        %v5716 = vlaneseq
        %v5717 = vshrl.u32 %v5716, 7
        %v5718 = vsub.s32 1, %v5717
        %v5719 = vrot.slane %v5443, %v5718
        %v5720 = vlaneseq
        %v5721 = vshrl.u32 %v5720, 7
        %v5722 = vsub.s32 1, %v5721
        %v5723 = vrot.slane %v5444, %v5722
        %v5724 = vlaneseq
        %v5725 = vshrl.u32 %v5724, 7
        %v5726 = vsub.s32 1, %v5725
        %v5727 = vrot.slane %v5445, %v5726
        %v5728 = vlaneseq
        %v5729 = vshrl.u32 %v5728, 7
        %v5730 = vsub.s32 1, %v5729
        %v5731 = vrot.slane %v5446, %v5730
        %v5732 = vlaneseq
        %v5733 = vshrl.u32 %v5732, 7
        %v5734 = vsub.s32 1, %v5733
        %v5735 = vrot.slane %v5447, %v5734
        %vm5736 = vcmp.eq.s32.totalorder %v237, %v5707
        %vm5737 = vcmp.eq.s32.totalorder %v237, %v5711
        %vm5738 = vcmp.eq.s32.totalorder %v237, %v5715
        %vm5739 = vcmp.eq.s32.totalorder %v237, %v5719
        %vm5740 = vcmp.eq.s32.totalorder %v237, %v5723
        %vm5741 = vcmp.eq.s32.totalorder %v237, %v5727
        %vm5742 = vcmp.eq.s32.totalorder %v237, %v5731
        %vm5743 = vcmp.eq.s32.totalorder %v237, %v5735
        %vm5744 = vcmp.eq.s32.totalorder %v238, %v5707
        %vm5745 = vcmp.eq.s32.totalorder %v238, %v5711
        %vm5746 = vcmp.eq.s32.totalorder %v238, %v5715
        %vm5747 = vcmp.eq.s32.totalorder %v238, %v5719
        %vm5748 = vcmp.eq.s32.totalorder %v238, %v5723
        %vm5749 = vcmp.eq.s32.totalorder %v238, %v5727
        %vm5750 = vcmp.eq.s32.totalorder %v238, %v5731
        %vm5751 = vcmp.eq.s32.totalorder %v238, %v5735
        %v5752 = vlaneseq
        %v5753 = vshrl.u32 %v5752, 7
        %v5754 = vsub.s32 1, %v5753
        %v5755 = vrot.slane %v5472, %v5754
        %v5756 = vlaneseq
        %v5757 = vshrl.u32 %v5756, 7
        %v5758 = vsub.s32 1, %v5757
        %v5759 = vrot.slane %v5473, %v5758
        %v5760 = vlaneseq
        %v5761 = vshrl.u32 %v5760, 7
        %v5762 = vsub.s32 1, %v5761
        %v5763 = vrot.slane %v5474, %v5762
        %v5764 = vlaneseq
        %v5765 = vshrl.u32 %v5764, 7
        %v5766 = vsub.s32 1, %v5765
        %v5767 = vrot.slane %v5475, %v5766
        %v5768 = vlaneseq
        %v5769 = vshrl.u32 %v5768, 7
        %v5770 = vsub.s32 1, %v5769
        %v5771 = vrot.slane %v5476, %v5770
        %v5772 = vlaneseq
        %v5773 = vshrl.u32 %v5772, 7
        %v5774 = vsub.s32 1, %v5773
        %v5775 = vrot.slane %v5477, %v5774
        %v5776 = vlaneseq
        %v5777 = vshrl.u32 %v5776, 7
        %v5778 = vsub.s32 1, %v5777
        %v5779 = vrot.slane %v5478, %v5778
        %v5780 = vlaneseq
        %v5781 = vshrl.u32 %v5780, 7
        %v5782 = vsub.s32 1, %v5781
        %v5783 = vrot.slane %v5479, %v5782
        %v5784 = vsel %vm5736, %v5755, 0.0
        %v5785 = vsel %vm5737, %v5759, 0.0
        %v5786 = vsel %vm5738, %v5763, 0.0
        %v5787 = vsel %vm5739, %v5767, 0.0
        %v5788 = vsel %vm5740, %v5771, 0.0
        %v5789 = vsel %vm5741, %v5775, 0.0
        %v5790 = vsel %vm5742, %v5779, 0.0
        %v5791 = vsel %vm5743, %v5783, 0.0
        %v5792 = vsel %vm5744, %v5755, 0.0
        %v5793 = vsel %vm5745, %v5759, 0.0
        %v5794 = vsel %vm5746, %v5763, 0.0
        %v5795 = vsel %vm5747, %v5767, 0.0
        %v5796 = vsel %vm5748, %v5771, 0.0
        %v5797 = vsel %vm5749, %v5775, 0.0
        %v5798 = vsel %vm5750, %v5779, 0.0
        %v5799 = vsel %vm5751, %v5783, 0.0
        %v5800 = vadd.s32 %v5440, 1
        %v5801 = vadd.s32 %v5441, 1
        %v5802 = vadd.s32 %v5442, 1
        %v5803 = vadd.s32 %v5443, 1
        %v5804 = vadd.s32 %v5444, 1
        %v5805 = vadd.s32 %v5445, 1
        %v5806 = vadd.s32 %v5446, 1
        %v5807 = vadd.s32 %v5447, 1
        %v5808 = vlaneseq
        %v5809 = vshrl.u32 %v5808, 7
        %v5810 = vsub.s32 1, %v5809
        %v5811 = vrot.slane %v5800, %v5810
        %v5812 = vlaneseq
        %v5813 = vshrl.u32 %v5812, 7
        %v5814 = vsub.s32 1, %v5813
        %v5815 = vrot.slane %v5801, %v5814
        %v5816 = vlaneseq
        %v5817 = vshrl.u32 %v5816, 7
        %v5818 = vsub.s32 1, %v5817
        %v5819 = vrot.slane %v5802, %v5818
        %v5820 = vlaneseq
        %v5821 = vshrl.u32 %v5820, 7
        %v5822 = vsub.s32 1, %v5821
        %v5823 = vrot.slane %v5803, %v5822
        %v5824 = vlaneseq
        %v5825 = vshrl.u32 %v5824, 7
        %v5826 = vsub.s32 1, %v5825
        %v5827 = vrot.slane %v5804, %v5826
        %v5828 = vlaneseq
        %v5829 = vshrl.u32 %v5828, 7
        %v5830 = vsub.s32 1, %v5829
        %v5831 = vrot.slane %v5805, %v5830
        %v5832 = vlaneseq
        %v5833 = vshrl.u32 %v5832, 7
        %v5834 = vsub.s32 1, %v5833
        %v5835 = vrot.slane %v5806, %v5834
        %v5836 = vlaneseq
        %v5837 = vshrl.u32 %v5836, 7
        %v5838 = vsub.s32 1, %v5837
        %v5839 = vrot.slane %v5807, %v5838
        %vm5840 = vcmp.eq.s32.totalorder %v237, %v5811
        %vm5841 = vcmp.eq.s32.totalorder %v237, %v5815
        %vm5842 = vcmp.eq.s32.totalorder %v237, %v5819
        %vm5843 = vcmp.eq.s32.totalorder %v237, %v5823
        %vm5844 = vcmp.eq.s32.totalorder %v237, %v5827
        %vm5845 = vcmp.eq.s32.totalorder %v237, %v5831
        %vm5846 = vcmp.eq.s32.totalorder %v237, %v5835
        %vm5847 = vcmp.eq.s32.totalorder %v237, %v5839
        %vm5848 = vcmp.eq.s32.totalorder %v238, %v5811
        %vm5849 = vcmp.eq.s32.totalorder %v238, %v5815
        %vm5850 = vcmp.eq.s32.totalorder %v238, %v5819
        %vm5851 = vcmp.eq.s32.totalorder %v238, %v5823
        %vm5852 = vcmp.eq.s32.totalorder %v238, %v5827
        %vm5853 = vcmp.eq.s32.totalorder %v238, %v5831
        %vm5854 = vcmp.eq.s32.totalorder %v238, %v5835
        %vm5855 = vcmp.eq.s32.totalorder %v238, %v5839
        %v5856 = vlaneseq
        %v5857 = vshrl.u32 %v5856, 7
        %v5858 = vsub.s32 1, %v5857
        %v5859 = vrot.slane %v5464, %v5858
        %v5860 = vlaneseq
        %v5861 = vshrl.u32 %v5860, 7
        %v5862 = vsub.s32 1, %v5861
        %v5863 = vrot.slane %v5465, %v5862
        %v5864 = vlaneseq
        %v5865 = vshrl.u32 %v5864, 7
        %v5866 = vsub.s32 1, %v5865
        %v5867 = vrot.slane %v5466, %v5866
        %v5868 = vlaneseq
        %v5869 = vshrl.u32 %v5868, 7
        %v5870 = vsub.s32 1, %v5869
        %v5871 = vrot.slane %v5467, %v5870
        %v5872 = vlaneseq
        %v5873 = vshrl.u32 %v5872, 7
        %v5874 = vsub.s32 1, %v5873
        %v5875 = vrot.slane %v5468, %v5874
        %v5876 = vlaneseq
        %v5877 = vshrl.u32 %v5876, 7
        %v5878 = vsub.s32 1, %v5877
        %v5879 = vrot.slane %v5469, %v5878
        %v5880 = vlaneseq
        %v5881 = vshrl.u32 %v5880, 7
        %v5882 = vsub.s32 1, %v5881
        %v5883 = vrot.slane %v5470, %v5882
        %v5884 = vlaneseq
        %v5885 = vshrl.u32 %v5884, 7
        %v5886 = vsub.s32 1, %v5885
        %v5887 = vrot.slane %v5471, %v5886
        %v5888 = vsel %vm5840, %v5859, 0.0
        %v5889 = vsel %vm5841, %v5863, 0.0
        %v5890 = vsel %vm5842, %v5867, 0.0
        %v5891 = vsel %vm5843, %v5871, 0.0
        %v5892 = vsel %vm5844, %v5875, 0.0
        %v5893 = vsel %vm5845, %v5879, 0.0
        %v5894 = vsel %vm5846, %v5883, 0.0
        %v5895 = vsel %vm5847, %v5887, 0.0
        %v5896 = vsel %vm5848, %v5859, 0.0
        %v5897 = vsel %vm5849, %v5863, 0.0
        %v5898 = vsel %vm5850, %v5867, 0.0
        %v5899 = vsel %vm5851, %v5871, 0.0
        %v5900 = vsel %vm5852, %v5875, 0.0
        %v5901 = vsel %vm5853, %v5879, 0.0
        %v5902 = vsel %vm5854, %v5883, 0.0
        %v5903 = vsel %vm5855, %v5887, 0.0
        %v5904 = vadd.f32 %v5784, %v5888
        %v5905 = vadd.f32 %v5785, %v5889
        %v5906 = vadd.f32 %v5786, %v5890
        %v5907 = vadd.f32 %v5787, %v5891
        %v5908 = vadd.f32 %v5788, %v5892
        %v5909 = vadd.f32 %v5789, %v5893
        %v5910 = vadd.f32 %v5790, %v5894
        %v5911 = vadd.f32 %v5791, %v5895
        %v5912 = vadd.f32 %v5792, %v5896
        %v5913 = vadd.f32 %v5793, %v5897
        %v5914 = vadd.f32 %v5794, %v5898
        %v5915 = vadd.f32 %v5795, %v5899
        %v5916 = vadd.f32 %v5796, %v5900
        %v5917 = vadd.f32 %v5797, %v5901
        %v5918 = vadd.f32 %v5798, %v5902
        %v5919 = vadd.f32 %v5799, %v5903
        %s5920 = scalar_lea.vmem %s226, 72
        %v5921 = vld [vmem:[%s5920] sm:$0xf]
        %v5922 = vld [vmem:[%s5920 + $0x4] sm:$0xf]
        %v5923 = vld [vmem:[%s5920 + $0x8] sm:$0xf]
        %v5924 = vld [vmem:[%s5920 + $0xc] sm:$0xf]
        %v5925 = vld [vmem:[%s5920 + $0x10] sm:$0xf]
        %v5926 = vld [vmem:[%s5920 + $0x14] sm:$0xf]
        %v5933 = vunpack.c.l.b16 %v5921
        %v5934 = vunpack.c.l.b16 %v5922
        %v5935 = vunpack.c.l.b16 %v5923
        %v5936 = vunpack.c.l.b16 %v5924
        %v5937 = vunpack.c.l.b16 %v5925
        %v5938 = vunpack.c.l.b16 %v5926
        %v5939 = vpack.c.b16 %v5934, %v5933
        %v5940 = vpack.c.b16 %v5936, %v5935
        %v5941 = vpack.c.b16 %v5938, %v5937
        %v5943 = vsel %vm1169, %v5939, 0
        %v5946 = vsel %vm1169, %v5940, 0
        %v5949 = vsel %vm1169, %v5941, 0
        %5951 = vmatprep.subr.bf16.mxu0 %v5697
        %5952 = vmatpush1.bf16.msra.mxu0 %v5696
        %5953 = vmatprep.subr.bf16.mxu0 0
        %5954 = vmatpush1.bf16.msra.mxu0 0
        %5955 = vmatprep.subr.bf16.mxu0 0
        %5956 = vmatpush1.bf16.msra.mxu0 0
        %5957 = vmatprep.subr.bf16.mxu0 0
        %5958 = vmatpush1.bf16.msra.mxu0 0
        %5959 = vmatprep.subr.bf16.mxu0 0
        %5960 = vmatpush1.bf16.msra.mxu0 0
        %5961 = vmatprep.subr.bf16.mxu0 0
        %5962 = vmatpush1.bf16.msra.mxu0 0
        %5963 = vmatprep.subr.bf16.mxu0 0
        %5964 = vmatpush1.bf16.msra.mxu0 0
        %5965 = vmatprep.subr.bf16.mxu0 0
        %5966 = vmatpush1.bf16.msra.mxu0 0
        %5967 = vmatprep.subr.bf16.mxu0 0
        %5968 = vmatpush1.bf16.msra.mxu0 0
        %5969 = vmatprep.subr.bf16.mxu0 0
        %5970 = vmatpush1.bf16.msra.mxu0 0
        %5971 = vmatprep.subr.bf16.mxu0 0
        %5972 = vmatpush1.bf16.msra.mxu0 0
        %5973 = vmatprep.subr.bf16.mxu0 0
        %5974 = vmatpush1.bf16.msra.mxu0 0
        %5975 = vmatprep.subr.bf16.mxu0 0
        %5976 = vmatpush1.bf16.msra.mxu0 0
        %5977 = vmatprep.subr.bf16.mxu0 0
        %5978 = vmatpush1.bf16.msra.mxu0 0
        %5979 = vmatprep.subr.bf16.mxu0 0
        %5980 = vmatpush1.bf16.msra.mxu0 0
        %5981 = vmatprep.subr.bf16.mxu0 0
        %5982 = vmatpush1.bf16.msra.mxu0 0
        %5983 = vmatprep.mubr.bf16.mxu0 0
        %5984 = vmatmul.mubr.bf16.gmra.mrb[0].mxu0 %v5943
        %v5985 = vpop.f32.mrb[0].mxu0
        %v5986 = vadd.f32 0.0, %v5985
        %v5987 = vpop.f32.mrb[0].mxu0
        %v5988 = vadd.f32 0.0, %v5987
        %v5989 = vpop.f32.mrb[0].mxu0
        %v5990 = vadd.f32 0.0, %v5989
        %v5991 = vpop.f32.mrb[0].mxu0
        %v5992 = vadd.f32 0.0, %v5991
        %5993 = vmatprep.mubr.bf16.mxu0 0
        %5994 = vmatmul.mubr.bf16.gmra.mrb[0].mxu0 %v5946
        %v5995 = vpop.f32.mrb[0].mxu0
        %v5996 = vadd.f32 0.0, %v5995
        %v5997 = vpop.f32.mrb[0].mxu0
        %v5998 = vadd.f32 0.0, %v5997
        %v5999 = vpop.f32.mrb[0].mxu0
        %v6000 = vadd.f32 0.0, %v5999
        %v6001 = vpop.f32.mrb[0].mxu0
        %v6002 = vadd.f32 0.0, %v6001
        %6003 = vmatprep.mubr.bf16.mxu0 0
        %6004 = vmatmul.mubr.bf16.gmra.mrb[0].mxu0 %v5949
        %v6005 = vpop.f32.mrb[0].mxu0
        %v6006 = vadd.f32 0.0, %v6005
        %v6007 = vpop.f32.mrb[0].mxu0
        %v6008 = vadd.f32 0.0, %v6007
        %v6009 = vpop.f32.mrb[0].mxu0
        %v6010 = vadd.f32 0.0, %v6009
        %v6011 = vpop.f32.mrb[0].mxu0
        %v6012 = vadd.f32 0.0, %v6011
        %6013 = vdwg.mxu0
        %6014 = vmatprep.subr.bf16.mxu0 %v5699
        %6015 = vmatpush1.bf16.msra.mxu0 %v5698
        %6016 = vmatprep.subr.bf16.mxu0 0
        %6017 = vmatpush1.bf16.msra.mxu0 0
        %6018 = vmatprep.subr.bf16.mxu0 0
        %6019 = vmatpush1.bf16.msra.mxu0 0
        %6020 = vmatprep.subr.bf16.mxu0 0
        %6021 = vmatpush1.bf16.msra.mxu0 0
        %6022 = vmatprep.subr.bf16.mxu0 0
        %6023 = vmatpush1.bf16.msra.mxu0 0
        %6024 = vmatprep.subr.bf16.mxu0 0
        %6025 = vmatpush1.bf16.msra.mxu0 0
        %6026 = vmatprep.subr.bf16.mxu0 0
        %6027 = vmatpush1.bf16.msra.mxu0 0
        %6028 = vmatprep.subr.bf16.mxu0 0
        %6029 = vmatpush1.bf16.msra.mxu0 0
        %6030 = vmatprep.subr.bf16.mxu0 0
        %6031 = vmatpush1.bf16.msra.mxu0 0
        %6032 = vmatprep.subr.bf16.mxu0 0
        %6033 = vmatpush1.bf16.msra.mxu0 0
        %6034 = vmatprep.subr.bf16.mxu0 0
        %6035 = vmatpush1.bf16.msra.mxu0 0
        %6036 = vmatprep.subr.bf16.mxu0 0
        %6037 = vmatpush1.bf16.msra.mxu0 0
        %6038 = vmatprep.subr.bf16.mxu0 0
        %6039 = vmatpush1.bf16.msra.mxu0 0
        %6040 = vmatprep.subr.bf16.mxu0 0
        %6041 = vmatpush1.bf16.msra.mxu0 0
        %6042 = vmatprep.subr.bf16.mxu0 0
        %6043 = vmatpush1.bf16.msra.mxu0 0
        %6044 = vmatprep.subr.bf16.mxu0 0
        %6045 = vmatpush1.bf16.msra.mxu0 0
        %6046 = vmatprep.mubr.bf16.mxu0 0
        %6047 = vmatmul.mubr.bf16.gmra.mrb[0].mxu0 %v5943
        %v6048 = vpop.f32.mrb[0].mxu0
        %v6049 = vadd.f32 0.0, %v6048
        %v6050 = vpop.f32.mrb[0].mxu0
        %v6051 = vadd.f32 0.0, %v6050
        %v6052 = vpop.f32.mrb[0].mxu0
        %v6053 = vadd.f32 0.0, %v6052
        %v6054 = vpop.f32.mrb[0].mxu0
        %v6055 = vadd.f32 0.0, %v6054
        %6056 = vmatprep.mubr.bf16.mxu0 0
        %6057 = vmatmul.mubr.bf16.gmra.mrb[0].mxu0 %v5946
        %v6058 = vpop.f32.mrb[0].mxu0
        %v6059 = vadd.f32 0.0, %v6058
        %v6060 = vpop.f32.mrb[0].mxu0
        %v6061 = vadd.f32 0.0, %v6060
        %v6062 = vpop.f32.mrb[0].mxu0
        %v6063 = vadd.f32 0.0, %v6062
        %v6064 = vpop.f32.mrb[0].mxu0
        %v6065 = vadd.f32 0.0, %v6064
        %6066 = vmatprep.mubr.bf16.mxu0 0
        %6067 = vmatmul.mubr.bf16.gmra.mrb[0].mxu0 %v5949
        %v6068 = vpop.f32.mrb[0].mxu0
        %v6069 = vadd.f32 0.0, %v6068
        %v6070 = vpop.f32.mrb[0].mxu0
        %v6071 = vadd.f32 0.0, %v6070
        %v6072 = vpop.f32.mrb[0].mxu0
        %v6073 = vadd.f32 0.0, %v6072
        %v6074 = vpop.f32.mrb[0].mxu0
        %v6075 = vadd.f32 0.0, %v6074
        %6076 = vdwg.mxu0
        %6077 = vmatprep.subr.bf16.mxu0 %v5701
        %6078 = vmatpush1.bf16.msra.mxu0 %v5700
        %6079 = vmatprep.subr.bf16.mxu0 0
        %6080 = vmatpush1.bf16.msra.mxu0 0
        %6081 = vmatprep.subr.bf16.mxu0 0
        %6082 = vmatpush1.bf16.msra.mxu0 0
        %6083 = vmatprep.subr.bf16.mxu0 0
        %6084 = vmatpush1.bf16.msra.mxu0 0
        %6085 = vmatprep.subr.bf16.mxu0 0
        %6086 = vmatpush1.bf16.msra.mxu0 0
        %6087 = vmatprep.subr.bf16.mxu0 0
        %6088 = vmatpush1.bf16.msra.mxu0 0
        %6089 = vmatprep.subr.bf16.mxu0 0
        %6090 = vmatpush1.bf16.msra.mxu0 0
        %6091 = vmatprep.subr.bf16.mxu0 0
        %6092 = vmatpush1.bf16.msra.mxu0 0
        %6093 = vmatprep.subr.bf16.mxu0 0
        %6094 = vmatpush1.bf16.msra.mxu0 0
        %6095 = vmatprep.subr.bf16.mxu0 0
        %6096 = vmatpush1.bf16.msra.mxu0 0
        %6097 = vmatprep.subr.bf16.mxu0 0
        %6098 = vmatpush1.bf16.msra.mxu0 0
        %6099 = vmatprep.subr.bf16.mxu0 0
        %6100 = vmatpush1.bf16.msra.mxu0 0
        %6101 = vmatprep.subr.bf16.mxu0 0
        %6102 = vmatpush1.bf16.msra.mxu0 0
        %6103 = vmatprep.subr.bf16.mxu0 0
        %6104 = vmatpush1.bf16.msra.mxu0 0
        %6105 = vmatprep.subr.bf16.mxu0 0
        %6106 = vmatpush1.bf16.msra.mxu0 0
        %6107 = vmatprep.subr.bf16.mxu0 0
        %6108 = vmatpush1.bf16.msra.mxu0 0
        %6109 = vmatprep.mubr.bf16.mxu0 0
        %6110 = vmatmul.mubr.bf16.gmra.mrb[0].mxu0 %v5943
        %v6111 = vpop.f32.mrb[0].mxu0
        %v6112 = vadd.f32 0.0, %v6111
        %v6113 = vpop.f32.mrb[0].mxu0
        %v6114 = vadd.f32 0.0, %v6113
        %v6115 = vpop.f32.mrb[0].mxu0
        %v6116 = vadd.f32 0.0, %v6115
        %v6117 = vpop.f32.mrb[0].mxu0
        %v6118 = vadd.f32 0.0, %v6117
        %6119 = vmatprep.mubr.bf16.mxu0 0
        %6120 = vmatmul.mubr.bf16.gmra.mrb[0].mxu0 %v5946
        %v6121 = vpop.f32.mrb[0].mxu0
        %v6122 = vadd.f32 0.0, %v6121
        %v6123 = vpop.f32.mrb[0].mxu0
        %v6124 = vadd.f32 0.0, %v6123
        %v6125 = vpop.f32.mrb[0].mxu0
        %v6126 = vadd.f32 0.0, %v6125
        %v6127 = vpop.f32.mrb[0].mxu0
        %v6128 = vadd.f32 0.0, %v6127
        %6129 = vmatprep.mubr.bf16.mxu0 0
        %6130 = vmatmul.mubr.bf16.gmra.mrb[0].mxu0 %v5949
        %v6131 = vpop.f32.mrb[0].mxu0
        %v6132 = vadd.f32 0.0, %v6131
        %v6133 = vpop.f32.mrb[0].mxu0
        %v6134 = vadd.f32 0.0, %v6133
        %v6135 = vpop.f32.mrb[0].mxu0
        %v6136 = vadd.f32 0.0, %v6135
        %v6137 = vpop.f32.mrb[0].mxu0
        %v6138 = vadd.f32 0.0, %v6137
        %6139 = vdwg.mxu0
        %6140 = vmatprep.subr.bf16.mxu0 %v5703
        %6141 = vmatpush1.bf16.msra.mxu0 %v5702
        %6142 = vmatprep.subr.bf16.mxu0 0
        %6143 = vmatpush1.bf16.msra.mxu0 0
        %6144 = vmatprep.subr.bf16.mxu0 0
        %6145 = vmatpush1.bf16.msra.mxu0 0
        %6146 = vmatprep.subr.bf16.mxu0 0
        %6147 = vmatpush1.bf16.msra.mxu0 0
        %6148 = vmatprep.subr.bf16.mxu0 0
        %6149 = vmatpush1.bf16.msra.mxu0 0
        %6150 = vmatprep.subr.bf16.mxu0 0
        %6151 = vmatpush1.bf16.msra.mxu0 0
        %6152 = vmatprep.subr.bf16.mxu0 0
        %6153 = vmatpush1.bf16.msra.mxu0 0
        %6154 = vmatprep.subr.bf16.mxu0 0
        %6155 = vmatpush1.bf16.msra.mxu0 0
        %6156 = vmatprep.subr.bf16.mxu0 0
        %6157 = vmatpush1.bf16.msra.mxu0 0
        %6158 = vmatprep.subr.bf16.mxu0 0
        %6159 = vmatpush1.bf16.msra.mxu0 0
        %6160 = vmatprep.subr.bf16.mxu0 0
        %6161 = vmatpush1.bf16.msra.mxu0 0
        %6162 = vmatprep.subr.bf16.mxu0 0
        %6163 = vmatpush1.bf16.msra.mxu0 0
        %6164 = vmatprep.subr.bf16.mxu0 0
        %6165 = vmatpush1.bf16.msra.mxu0 0
        %6166 = vmatprep.subr.bf16.mxu0 0
        %6167 = vmatpush1.bf16.msra.mxu0 0
        %6168 = vmatprep.subr.bf16.mxu0 0
        %6169 = vmatpush1.bf16.msra.mxu0 0
        %6170 = vmatprep.subr.bf16.mxu0 0
        %6171 = vmatpush1.bf16.msra.mxu0 0
        %6172 = vmatprep.mubr.bf16.mxu0 0
        %6173 = vmatmul.mubr.bf16.gmra.mrb[0].mxu0 %v5943
        %v6174 = vpop.f32.mrb[0].mxu0
        %v6175 = vadd.f32 0.0, %v6174
        %v6176 = vpop.f32.mrb[0].mxu0
        %v6177 = vadd.f32 0.0, %v6176
        %v6178 = vpop.f32.mrb[0].mxu0
        %v6179 = vadd.f32 0.0, %v6178
        %v6180 = vpop.f32.mrb[0].mxu0
        %v6181 = vadd.f32 0.0, %v6180
        %6182 = vmatprep.mubr.bf16.mxu0 0
        %6183 = vmatmul.mubr.bf16.gmra.mrb[0].mxu0 %v5946
        %v6184 = vpop.f32.mrb[0].mxu0
        %v6185 = vadd.f32 0.0, %v6184
        %v6186 = vpop.f32.mrb[0].mxu0
        %v6187 = vadd.f32 0.0, %v6186
        %v6188 = vpop.f32.mrb[0].mxu0
        %v6189 = vadd.f32 0.0, %v6188
        %v6190 = vpop.f32.mrb[0].mxu0
        %v6191 = vadd.f32 0.0, %v6190
        %6192 = vmatprep.mubr.bf16.mxu0 0
        %6193 = vmatmul.mubr.bf16.gmra.mrb[0].mxu0 %v5949
        %v6194 = vpop.f32.mrb[0].mxu0
        %v6195 = vadd.f32 0.0, %v6194
        %v6196 = vpop.f32.mrb[0].mxu0
        %v6197 = vadd.f32 0.0, %v6196
        %v6198 = vpop.f32.mrb[0].mxu0
        %v6199 = vadd.f32 0.0, %v6198
        %v6200 = vpop.f32.mrb[0].mxu0
        %v6201 = vadd.f32 0.0, %v6200
        %6202 = vdwg.mxu0
        %v6203 = vmul.f32 %v5904, %v5986
        %v6204 = vmul.f32 %v5905, %v5988
        %v6205 = vmul.f32 %v5906, %v6049
        %v6206 = vmul.f32 %v5907, %v6051
        %v6207 = vmul.f32 %v5908, %v6112
        %v6208 = vmul.f32 %v5909, %v6114
        %v6209 = vmul.f32 %v5910, %v6175
        %v6210 = vmul.f32 %v5911, %v6177
        %v6211 = vmul.f32 %v5912, %v5990
        %v6212 = vmul.f32 %v5913, %v5992
        %v6213 = vmul.f32 %v5914, %v6053
        %v6214 = vmul.f32 %v5915, %v6055
        %v6215 = vmul.f32 %v5916, %v6116
        %v6216 = vmul.f32 %v5917, %v6118
        %v6217 = vmul.f32 %v5918, %v6179
        %v6218 = vmul.f32 %v5919, %v6181
        %v6219 = vadd.f32 %v6203, %v6211
        %v6220 = vrot.slane %v6219, 4
        %v6221 = vadd.f32 %v6219, %v6220
        %v6222 = vrot.slane %v6221, 2
        %v6223 = vadd.f32 %v6221, %v6222
        %v6224 = vrot.slane %v6223, 1
        %v6225 = vadd.f32 %v6223, %v6224
        %v6226 = vadd.f32 %v6204, %v6212
        %v6227 = vrot.slane %v6226, 4
        %v6228 = vadd.f32 %v6226, %v6227
        %v6229 = vrot.slane %v6228, 2
        %v6230 = vadd.f32 %v6228, %v6229
        %v6231 = vrot.slane %v6230, 1
        %v6232 = vadd.f32 %v6230, %v6231
        %v6233 = vadd.f32 %v6205, %v6213
        %v6234 = vrot.slane %v6233, 4
        %v6235 = vadd.f32 %v6233, %v6234
        %v6236 = vrot.slane %v6235, 2
        %v6237 = vadd.f32 %v6235, %v6236
        %v6238 = vrot.slane %v6237, 1
        %v6239 = vadd.f32 %v6237, %v6238
        %v6240 = vadd.f32 %v6206, %v6214
        %v6241 = vrot.slane %v6240, 4
        %v6242 = vadd.f32 %v6240, %v6241
        %v6243 = vrot.slane %v6242, 2
        %v6244 = vadd.f32 %v6242, %v6243
        %v6245 = vrot.slane %v6244, 1
        %v6246 = vadd.f32 %v6244, %v6245
        %v6247 = vadd.f32 %v6207, %v6215
        %v6248 = vrot.slane %v6247, 4
        %v6249 = vadd.f32 %v6247, %v6248
        %v6250 = vrot.slane %v6249, 2
        %v6251 = vadd.f32 %v6249, %v6250
        %v6252 = vrot.slane %v6251, 1
        %v6253 = vadd.f32 %v6251, %v6252
        %v6254 = vadd.f32 %v6208, %v6216
        %v6255 = vrot.slane %v6254, 4
        %v6256 = vadd.f32 %v6254, %v6255
        %v6257 = vrot.slane %v6256, 2
        %v6258 = vadd.f32 %v6256, %v6257
        %v6259 = vrot.slane %v6258, 1
        %v6260 = vadd.f32 %v6258, %v6259
        %v6261 = vadd.f32 %v6209, %v6217
        %v6262 = vrot.slane %v6261, 4
        %v6263 = vadd.f32 %v6261, %v6262
        %v6264 = vrot.slane %v6263, 2
        %v6265 = vadd.f32 %v6263, %v6264
        %v6266 = vrot.slane %v6265, 1
        %v6267 = vadd.f32 %v6265, %v6266
        %v6268 = vadd.f32 %v6210, %v6218
        %v6269 = vrot.slane %v6268, 4
        %v6270 = vadd.f32 %v6268, %v6269
        %v6271 = vrot.slane %v6270, 2
        %v6272 = vadd.f32 %v6270, %v6271
        %v6273 = vrot.slane %v6272, 1
        %v6274 = vadd.f32 %v6272, %v6273
        %v6283 = vcombine.low %v6225, %v6232
        %v6284 = vcombine.low %v6239, %v6246
        %v6285 = vcombine.low %v6253, %v6260
        %v6286 = vcombine.low %v6267, %v6274
        %v6288 = vunpack.c.l.s4 1966171168
        %v6289 = vunpack.c.0.s8 %v6288
        %v6290 = vlaneseq
        %v6291 = vshrl.u32 %v6290, 7
        %v6292 = vsub.s32 %v6289, %v6291
        %v6293 = vrot.slane %v6283, %v6292
        %v6295 = vunpack.c.l.s4 1966171168
        %v6296 = vunpack.c.0.s8 %v6295
        %v6297 = vlaneseq
        %v6298 = vshrl.u32 %v6297, 7
        %v6299 = vsub.s32 %v6296, %v6298
        %v6300 = vrot.slane %v6284, %v6299
        %v6302 = vunpack.c.l.s4 1966171168
        %v6303 = vunpack.c.0.s8 %v6302
        %v6304 = vlaneseq
        %v6305 = vshrl.u32 %v6304, 7
        %v6306 = vsub.s32 %v6303, %v6305
        %v6307 = vrot.slane %v6285, %v6306
        %v6309 = vunpack.c.l.s4 1966171168
        %v6310 = vunpack.c.0.s8 %v6309
        %v6311 = vlaneseq
        %v6312 = vshrl.u32 %v6311, 7
        %v6313 = vsub.s32 %v6310, %v6312
        %v6314 = vrot.slane %v6286, %v6313
        %v6315 = vcombine.low %v6293, %v6300
        %v6316 = vcombine.low %v6307, %v6314
        %v6318 = vunpack.c.l.s4 1966171168
        %v6319 = vunpack.c.0.s8 %v6318
        %v6320 = vlaneseq
        %v6321 = vshrl.u32 %v6320, 7
        %v6322 = vsub.s32 %v6319, %v6321
        %v6323 = vrot.slane %v6315, %v6322
        %v6325 = vunpack.c.l.s4 1966171168
        %v6326 = vunpack.c.0.s8 %v6325
        %v6327 = vlaneseq
        %v6328 = vshrl.u32 %v6327, 7
        %v6329 = vsub.s32 %v6326, %v6328
        %v6330 = vrot.slane %v6316, %v6329
        %v6331 = vcombine.low %v6323, %v6330
        %s6333 = scalar_lea.vmem %s208, 192 [#allocation2]
        %6334 = vst [vmem:[%s6333] ss:$8 sm:$0xf] %v6331
        %6335 = vst [vmem:[%s6333] ss:$8 sm:$0xf0] %v6331
        %v6336 = vmul.f32 %v5904, %v5996
        %v6337 = vmul.f32 %v5905, %v5998
        %v6338 = vmul.f32 %v5906, %v6059
        %v6339 = vmul.f32 %v5907, %v6061
        %v6340 = vmul.f32 %v5908, %v6122
        %v6341 = vmul.f32 %v5909, %v6124
        %v6342 = vmul.f32 %v5910, %v6185
        %v6343 = vmul.f32 %v5911, %v6187
        %v6344 = vmul.f32 %v5912, %v6000
        %v6345 = vmul.f32 %v5913, %v6002
        %v6346 = vmul.f32 %v5914, %v6063
        %v6347 = vmul.f32 %v5915, %v6065
        %v6348 = vmul.f32 %v5916, %v6126
        %v6349 = vmul.f32 %v5917, %v6128
        %v6350 = vmul.f32 %v5918, %v6189
        %v6351 = vmul.f32 %v5919, %v6191
        %v6352 = vadd.f32 %v6336, %v6344
        %v6353 = vrot.slane %v6352, 4
        %v6354 = vadd.f32 %v6352, %v6353
        %v6355 = vrot.slane %v6354, 2
        %v6356 = vadd.f32 %v6354, %v6355
        %v6357 = vrot.slane %v6356, 1
        %v6358 = vadd.f32 %v6356, %v6357
        %v6359 = vadd.f32 %v6337, %v6345
        %v6360 = vrot.slane %v6359, 4
        %v6361 = vadd.f32 %v6359, %v6360
        %v6362 = vrot.slane %v6361, 2
        %v6363 = vadd.f32 %v6361, %v6362
        %v6364 = vrot.slane %v6363, 1
        %v6365 = vadd.f32 %v6363, %v6364
        %v6366 = vadd.f32 %v6338, %v6346
        %v6367 = vrot.slane %v6366, 4
        %v6368 = vadd.f32 %v6366, %v6367
        %v6369 = vrot.slane %v6368, 2
        %v6370 = vadd.f32 %v6368, %v6369
        %v6371 = vrot.slane %v6370, 1
        %v6372 = vadd.f32 %v6370, %v6371
        %v6373 = vadd.f32 %v6339, %v6347
        %v6374 = vrot.slane %v6373, 4
        %v6375 = vadd.f32 %v6373, %v6374
        %v6376 = vrot.slane %v6375, 2
        %v6377 = vadd.f32 %v6375, %v6376
        %v6378 = vrot.slane %v6377, 1
        %v6379 = vadd.f32 %v6377, %v6378
        %v6380 = vadd.f32 %v6340, %v6348
        %v6381 = vrot.slane %v6380, 4
        %v6382 = vadd.f32 %v6380, %v6381
        %v6383 = vrot.slane %v6382, 2
        %v6384 = vadd.f32 %v6382, %v6383
        %v6385 = vrot.slane %v6384, 1
        %v6386 = vadd.f32 %v6384, %v6385
        %v6387 = vadd.f32 %v6341, %v6349
        %v6388 = vrot.slane %v6387, 4
        %v6389 = vadd.f32 %v6387, %v6388
        %v6390 = vrot.slane %v6389, 2
        %v6391 = vadd.f32 %v6389, %v6390
        %v6392 = vrot.slane %v6391, 1
        %v6393 = vadd.f32 %v6391, %v6392
        %v6394 = vadd.f32 %v6342, %v6350
        %v6395 = vrot.slane %v6394, 4
        %v6396 = vadd.f32 %v6394, %v6395
        %v6397 = vrot.slane %v6396, 2
        %v6398 = vadd.f32 %v6396, %v6397
        %v6399 = vrot.slane %v6398, 1
        %v6400 = vadd.f32 %v6398, %v6399
        %v6401 = vadd.f32 %v6343, %v6351
        %v6402 = vrot.slane %v6401, 4
        %v6403 = vadd.f32 %v6401, %v6402
        %v6404 = vrot.slane %v6403, 2
        %v6405 = vadd.f32 %v6403, %v6404
        %v6406 = vrot.slane %v6405, 1
        %v6407 = vadd.f32 %v6405, %v6406
        %v6416 = vcombine.low %v6358, %v6365
        %v6417 = vcombine.low %v6372, %v6379
        %v6418 = vcombine.low %v6386, %v6393
        %v6419 = vcombine.low %v6400, %v6407
        %v6421 = vunpack.c.l.s4 1966171168
        %v6422 = vunpack.c.0.s8 %v6421
        %v6423 = vlaneseq
        %v6424 = vshrl.u32 %v6423, 7
        %v6425 = vsub.s32 %v6422, %v6424
        %v6426 = vrot.slane %v6416, %v6425
        %v6428 = vunpack.c.l.s4 1966171168
        %v6429 = vunpack.c.0.s8 %v6428
        %v6430 = vlaneseq
        %v6431 = vshrl.u32 %v6430, 7
        %v6432 = vsub.s32 %v6429, %v6431
        %v6433 = vrot.slane %v6417, %v6432
        %v6435 = vunpack.c.l.s4 1966171168
        %v6436 = vunpack.c.0.s8 %v6435
        %v6437 = vlaneseq
        %v6438 = vshrl.u32 %v6437, 7
        %v6439 = vsub.s32 %v6436, %v6438
        %v6440 = vrot.slane %v6418, %v6439
        %v6442 = vunpack.c.l.s4 1966171168
        %v6443 = vunpack.c.0.s8 %v6442
        %v6444 = vlaneseq
        %v6445 = vshrl.u32 %v6444, 7
        %v6446 = vsub.s32 %v6443, %v6445
        %v6447 = vrot.slane %v6419, %v6446
        %v6448 = vcombine.low %v6426, %v6433
        %v6449 = vcombine.low %v6440, %v6447
        %v6451 = vunpack.c.l.s4 1966171168
        %v6452 = vunpack.c.0.s8 %v6451
        %v6453 = vlaneseq
        %v6454 = vshrl.u32 %v6453, 7
        %v6455 = vsub.s32 %v6452, %v6454
        %v6456 = vrot.slane %v6448, %v6455
        %v6458 = vunpack.c.l.s4 1966171168
        %v6459 = vunpack.c.0.s8 %v6458
        %v6460 = vlaneseq
        %v6461 = vshrl.u32 %v6460, 7
        %v6462 = vsub.s32 %v6459, %v6461
        %v6463 = vrot.slane %v6449, %v6462
        %v6464 = vcombine.low %v6456, %v6463
        %s6466 = scalar_lea.vmem %s6333, 1 [#allocation2]
        %6467 = vst [vmem:[%s6466] ss:$8 sm:$0xf] %v6464
        %6468 = vst [vmem:[%s6466] ss:$8 sm:$0xf0] %v6464
        %v6469 = vmul.f32 %v5904, %v6006
        %v6470 = vmul.f32 %v5905, %v6008
        %v6471 = vmul.f32 %v5906, %v6069
        %v6472 = vmul.f32 %v5907, %v6071
        %v6473 = vmul.f32 %v5908, %v6132
        %v6474 = vmul.f32 %v5909, %v6134
        %v6475 = vmul.f32 %v5910, %v6195
        %v6476 = vmul.f32 %v5911, %v6197
        %v6477 = vmul.f32 %v5912, %v6010
        %v6478 = vmul.f32 %v5913, %v6012
        %v6479 = vmul.f32 %v5914, %v6073
        %v6480 = vmul.f32 %v5915, %v6075
        %v6481 = vmul.f32 %v5916, %v6136
        %v6482 = vmul.f32 %v5917, %v6138
        %v6483 = vmul.f32 %v5918, %v6199
        %v6484 = vmul.f32 %v5919, %v6201
        %v6485 = vadd.f32 %v6469, %v6477
        %v6486 = vrot.slane %v6485, 4
        %v6487 = vadd.f32 %v6485, %v6486
        %v6488 = vrot.slane %v6487, 2
        %v6489 = vadd.f32 %v6487, %v6488
        %v6490 = vrot.slane %v6489, 1
        %v6491 = vadd.f32 %v6489, %v6490
        %v6492 = vadd.f32 %v6470, %v6478
        %v6493 = vrot.slane %v6492, 4
        %v6494 = vadd.f32 %v6492, %v6493
        %v6495 = vrot.slane %v6494, 2
        %v6496 = vadd.f32 %v6494, %v6495
        %v6497 = vrot.slane %v6496, 1
        %v6498 = vadd.f32 %v6496, %v6497
        %v6499 = vadd.f32 %v6471, %v6479
        %v6500 = vrot.slane %v6499, 4
        %v6501 = vadd.f32 %v6499, %v6500
        %v6502 = vrot.slane %v6501, 2
        %v6503 = vadd.f32 %v6501, %v6502
        %v6504 = vrot.slane %v6503, 1
        %v6505 = vadd.f32 %v6503, %v6504
        %v6506 = vadd.f32 %v6472, %v6480
        %v6507 = vrot.slane %v6506, 4
        %v6508 = vadd.f32 %v6506, %v6507
        %v6509 = vrot.slane %v6508, 2
        %v6510 = vadd.f32 %v6508, %v6509
        %v6511 = vrot.slane %v6510, 1
        %v6512 = vadd.f32 %v6510, %v6511
        %v6513 = vadd.f32 %v6473, %v6481
        %v6514 = vrot.slane %v6513, 4
        %v6515 = vadd.f32 %v6513, %v6514
        %v6516 = vrot.slane %v6515, 2
        %v6517 = vadd.f32 %v6515, %v6516
        %v6518 = vrot.slane %v6517, 1
        %v6519 = vadd.f32 %v6517, %v6518
        %v6520 = vadd.f32 %v6474, %v6482
        %v6521 = vrot.slane %v6520, 4
        %v6522 = vadd.f32 %v6520, %v6521
        %v6523 = vrot.slane %v6522, 2
        %v6524 = vadd.f32 %v6522, %v6523
        %v6525 = vrot.slane %v6524, 1
        %v6526 = vadd.f32 %v6524, %v6525
        %v6527 = vadd.f32 %v6475, %v6483
        %v6528 = vrot.slane %v6527, 4
        %v6529 = vadd.f32 %v6527, %v6528
        %v6530 = vrot.slane %v6529, 2
        %v6531 = vadd.f32 %v6529, %v6530
        %v6532 = vrot.slane %v6531, 1
        %v6533 = vadd.f32 %v6531, %v6532
        %v6534 = vadd.f32 %v6476, %v6484
        %v6535 = vrot.slane %v6534, 4
        %v6536 = vadd.f32 %v6534, %v6535
        %v6537 = vrot.slane %v6536, 2
        %v6538 = vadd.f32 %v6536, %v6537
        %v6539 = vrot.slane %v6538, 1
        %v6540 = vadd.f32 %v6538, %v6539
        %v6549 = vcombine.low %v6491, %v6498
        %v6550 = vcombine.low %v6505, %v6512
        %v6551 = vcombine.low %v6519, %v6526
        %v6552 = vcombine.low %v6533, %v6540
        %v6554 = vunpack.c.l.s4 1966171168
        %v6555 = vunpack.c.0.s8 %v6554
        %v6556 = vlaneseq
        %v6557 = vshrl.u32 %v6556, 7
        %v6558 = vsub.s32 %v6555, %v6557
        %v6559 = vrot.slane %v6549, %v6558
        %v6561 = vunpack.c.l.s4 1966171168
        %v6562 = vunpack.c.0.s8 %v6561
        %v6563 = vlaneseq
        %v6564 = vshrl.u32 %v6563, 7
        %v6565 = vsub.s32 %v6562, %v6564
        %v6566 = vrot.slane %v6550, %v6565
        %v6568 = vunpack.c.l.s4 1966171168
        %v6569 = vunpack.c.0.s8 %v6568
        %v6570 = vlaneseq
        %v6571 = vshrl.u32 %v6570, 7
        %v6572 = vsub.s32 %v6569, %v6571
        %v6573 = vrot.slane %v6551, %v6572
        %v6575 = vunpack.c.l.s4 1966171168
        %v6576 = vunpack.c.0.s8 %v6575
        %v6577 = vlaneseq
        %v6578 = vshrl.u32 %v6577, 7
        %v6579 = vsub.s32 %v6576, %v6578
        %v6580 = vrot.slane %v6552, %v6579
        %v6581 = vcombine.low %v6559, %v6566
        %v6582 = vcombine.low %v6573, %v6580
        %v6584 = vunpack.c.l.s4 1966171168
        %v6585 = vunpack.c.0.s8 %v6584
        %v6586 = vlaneseq
        %v6587 = vshrl.u32 %v6586, 7
        %v6588 = vsub.s32 %v6585, %v6587
        %v6589 = vrot.slane %v6581, %v6588
        %v6591 = vunpack.c.l.s4 1966171168
        %v6592 = vunpack.c.0.s8 %v6591
        %v6593 = vlaneseq
        %v6594 = vshrl.u32 %v6593, 7
        %v6595 = vsub.s32 %v6592, %v6594
        %v6596 = vrot.slane %v6582, %v6595
        %v6597 = vcombine.low %v6589, %v6596
        %s6599 = scalar_lea.vmem %s6333, 2 [#allocation2]
        %6600 = vst [vmem:[%s6599] ss:$8 sm:$0xf] %v6597
        %6601 = vst [vmem:[%s6599] ss:$8 sm:$0xf0] %v6597
        %v6610 = vcombine.low %v5280, %v5281
        %v6611 = vcombine.low %v5282, %v5283
        %v6612 = vcombine.low %v5284, %v5285
        %v6613 = vcombine.low %v5286, %v5287
        %v6615 = vunpack.c.l.s4 1966171168
        %v6616 = vunpack.c.0.s8 %v6615
        %v6617 = vlaneseq
        %v6618 = vshrl.u32 %v6617, 7
        %v6619 = vsub.s32 %v6616, %v6618
        %v6620 = vrot.slane %v6610, %v6619
        %v6622 = vunpack.c.l.s4 1966171168
        %v6623 = vunpack.c.0.s8 %v6622
        %v6624 = vlaneseq
        %v6625 = vshrl.u32 %v6624, 7
        %v6626 = vsub.s32 %v6623, %v6625
        %v6627 = vrot.slane %v6611, %v6626
        %v6629 = vunpack.c.l.s4 1966171168
        %v6630 = vunpack.c.0.s8 %v6629
        %v6631 = vlaneseq
        %v6632 = vshrl.u32 %v6631, 7
        %v6633 = vsub.s32 %v6630, %v6632
        %v6634 = vrot.slane %v6612, %v6633
        %v6636 = vunpack.c.l.s4 1966171168
        %v6637 = vunpack.c.0.s8 %v6636
        %v6638 = vlaneseq
        %v6639 = vshrl.u32 %v6638, 7
        %v6640 = vsub.s32 %v6637, %v6639
        %v6641 = vrot.slane %v6613, %v6640
        %v6642 = vcombine.low %v6620, %v6627
        %v6643 = vcombine.low %v6634, %v6641
        %v6645 = vunpack.c.l.s4 1966171168
        %v6646 = vunpack.c.0.s8 %v6645
        %v6647 = vlaneseq
        %v6648 = vshrl.u32 %v6647, 7
        %v6649 = vsub.s32 %v6646, %v6648
        %v6650 = vrot.slane %v6642, %v6649
        %v6652 = vunpack.c.l.s4 1966171168
        %v6653 = vunpack.c.0.s8 %v6652
        %v6654 = vlaneseq
        %v6655 = vshrl.u32 %v6654, 7
        %v6656 = vsub.s32 %v6653, %v6655
        %v6657 = vrot.slane %v6643, %v6656
        %v6658 = vcombine.low %v6650, %v6657
        %s6660 = scalar_lea.vmem %s6333, 3 [#allocation2]
        %6661 = vst [vmem:[%s6660] ss:$8 sm:$0xf] %v6658
        %6662 = vst [vmem:[%s6660] ss:$8 sm:$0xf0] %v6658
        %v6671 = vcombine.low %v5344, %v5345
        %v6672 = vcombine.low %v5346, %v5347
        %v6673 = vcombine.low %v5348, %v5349
        %v6674 = vcombine.low %v5350, %v5351
        %v6676 = vunpack.c.l.s4 1966171168
        %v6677 = vunpack.c.0.s8 %v6676
        %v6678 = vlaneseq
        %v6679 = vshrl.u32 %v6678, 7
        %v6680 = vsub.s32 %v6677, %v6679
        %v6681 = vrot.slane %v6671, %v6680
        %v6683 = vunpack.c.l.s4 1966171168
        %v6684 = vunpack.c.0.s8 %v6683
        %v6685 = vlaneseq
        %v6686 = vshrl.u32 %v6685, 7
        %v6687 = vsub.s32 %v6684, %v6686
        %v6688 = vrot.slane %v6672, %v6687
        %v6690 = vunpack.c.l.s4 1966171168
        %v6691 = vunpack.c.0.s8 %v6690
        %v6692 = vlaneseq
        %v6693 = vshrl.u32 %v6692, 7
        %v6694 = vsub.s32 %v6691, %v6693
        %v6695 = vrot.slane %v6673, %v6694
        %v6697 = vunpack.c.l.s4 1966171168
        %v6698 = vunpack.c.0.s8 %v6697
        %v6699 = vlaneseq
        %v6700 = vshrl.u32 %v6699, 7
        %v6701 = vsub.s32 %v6698, %v6700
        %v6702 = vrot.slane %v6674, %v6701
        %v6703 = vcombine.high %v6681, %v6688
        %v6704 = vcombine.high %v6695, %v6702
        %v6706 = vunpack.c.l.s4 1966171168
        %v6707 = vunpack.c.0.s8 %v6706
        %v6708 = vlaneseq
        %v6709 = vshrl.u32 %v6708, 7
        %v6710 = vsub.s32 %v6707, %v6709
        %v6711 = vrot.slane %v6703, %v6710
        %v6713 = vunpack.c.l.s4 1966171168
        %v6714 = vunpack.c.0.s8 %v6713
        %v6715 = vlaneseq
        %v6716 = vshrl.u32 %v6715, 7
        %v6717 = vsub.s32 %v6714, %v6716
        %v6718 = vrot.slane %v6704, %v6717
        %v6719 = vcombine.low %v6711, %v6718
        %s6721 = scalar_lea.vmem %s6333, 4 [#allocation2]
        %6722 = vst [vmem:[%s6721] ss:$8 sm:$0xf] %v6719
        %6723 = vst [vmem:[%s6721] ss:$8 sm:$0xf0] %v6719
        %s6724 = sand.u32 %s114, 1
        %s6725 = sand.u32 %s114, 1
        %s6726 = smul.addr %s6725, 256
        %s6727 = scalar_lea.vmem [#allocation2], %s6726
        // Predicated region
        $region33: #{tpu_custom_call.1} parent=31 // pred_check
          %p6728 = pneg %p124
        $region34: #{tpu_custom_call.1} parent=31 // pred_check_branch
          %6730 = sbr.rel (%p6728) target = $region36
        $region35: #{tpu_custom_call.1} parent=31 // pred_region
          %s6731 = smul.u32 4, %s18
          %s6732 = smul.u32 8, %s19
          %s6733 = smul.addr %s6731, 16
          %s6734 = sadd.s32 %s6732, %s6733
          %s6735 = smul.addr %s6734, 8
          %s6736 = scalar_lea.vmem %s3, %s6735
          // Predicated region
          $region37: #{tpu_custom_call.1} parent=35 // pred_check
            _
          $region38: #{tpu_custom_call.1} parent=35 // pred_check_branch
            %6738 = sbr.rel (0) target = $region40
          $region39: #{tpu_custom_call.1} parent=35 // pred_region
            // Predicated region
            $region41: #{tpu_custom_call.1} parent=39 // pred_check
              _
            $region42: #{tpu_custom_call.1} parent=39 // pred_check_branch
              %6740 = sbr.rel (0) target = $region44
            $region43: #{tpu_custom_call.1} parent=39 // pred_region
              loop: start=0, step=1, limit=1
              $region45: #{tpu_custom_call.1} parent=43 // loop_pre_header
                _
              $region46: #{tpu_custom_call.1} parent=43 // loop_header
                %s6742 = sphi 0, %s6746
                %p6743 = scmp.ge.s32.totalorder %s6742, 1
                %s6747 = sphi %s6727, %s6727
                %s6748 = sphi %s6736, %s6736
              $region47: #{tpu_custom_call.1} parent=43 // loop_header_branch
                %6745 = sbr.rel (%p6743) target = $region51
              $region48: #{tpu_custom_call.1} parent=43 // loop_body
                %v6749 = vld [vmem:[%s6747] sm:$0xff]
                %6750 = vst [vmem:[%s6748] sm:$0xff] %v6749
                %v6751 = vld [vmem:[%s6747 + $0x8] sm:$0xff]
                %6752 = vst [vmem:[%s6748 + $0x8] sm:$0xff] %v6751
                %v6753 = vld [vmem:[%s6747 + $0x10] sm:$0xff]
                %6754 = vst [vmem:[%s6748 + $0x10] sm:$0xff] %v6753
                %v6755 = vld [vmem:[%s6747 + $0x18] sm:$0xff]
                %6756 = vst [vmem:[%s6748 + $0x18] sm:$0xff] %v6755
                %v6757 = vld [vmem:[%s6747 + $0x20] sm:$0xff]
                %6758 = vst [vmem:[%s6748 + $0x20] sm:$0xff] %v6757
                %v6759 = vld [vmem:[%s6747 + $0x28] sm:$0xff]
                %6760 = vst [vmem:[%s6748 + $0x28] sm:$0xff] %v6759
                %v6761 = vld [vmem:[%s6747 + $0x30] sm:$0xff]
                %6762 = vst [vmem:[%s6748 + $0x30] sm:$0xff] %v6761
                %v6763 = vld [vmem:[%s6747 + $0x38] sm:$0xff]
                %6764 = vst [vmem:[%s6748 + $0x38] sm:$0xff] %v6763
                %v6765 = vld [vmem:[%s6747 + $0x40] sm:$0xff]
                %6766 = vst [vmem:[%s6748 + $0x80] sm:$0xff] %v6765
                %v6767 = vld [vmem:[%s6747 + $0x48] sm:$0xff]
                %6768 = vst [vmem:[%s6748 + $0x88] sm:$0xff] %v6767
                %v6769 = vld [vmem:[%s6747 + $0x50] sm:$0xff]
                %6770 = vst [vmem:[%s6748 + $0x90] sm:$0xff] %v6769
                %v6771 = vld [vmem:[%s6747 + $0x58] sm:$0xff]
                %6772 = vst [vmem:[%s6748 + $0x98] sm:$0xff] %v6771
                %v6773 = vld [vmem:[%s6747 + $0x60] sm:$0xff]
                %6774 = vst [vmem:[%s6748 + $0xa0] sm:$0xff] %v6773
                %v6775 = vld [vmem:[%s6747 + $0x68] sm:$0xff]
                %6776 = vst [vmem:[%s6748 + $0xa8] sm:$0xff] %v6775
                %v6777 = vld [vmem:[%s6747 + $0x70] sm:$0xff]
                %6778 = vst [vmem:[%s6748 + $0xb0] sm:$0xff] %v6777
                %v6779 = vld [vmem:[%s6747 + $0x78] sm:$0xff]
                %6780 = vst [vmem:[%s6748 + $0xb8] sm:$0xff] %v6779
                %v6781 = vld [vmem:[%s6747 + $0x80] sm:$0xff]
                %6782 = vst [vmem:[%s6748 + $0x100] sm:$0xff] %v6781
                %v6783 = vld [vmem:[%s6747 + $0x88] sm:$0xff]
                %6784 = vst [vmem:[%s6748 + $0x108] sm:$0xff] %v6783
                %v6785 = vld [vmem:[%s6747 + $0x90] sm:$0xff]
                %6786 = vst [vmem:[%s6748 + $0x110] sm:$0xff] %v6785
                %v6787 = vld [vmem:[%s6747 + $0x98] sm:$0xff]
                %6788 = vst [vmem:[%s6748 + $0x118] sm:$0xff] %v6787
                %v6789 = vld [vmem:[%s6747 + $0xa0] sm:$0xff]
                %6790 = vst [vmem:[%s6748 + $0x120] sm:$0xff] %v6789
                %v6791 = vld [vmem:[%s6747 + $0xa8] sm:$0xff]
                %6792 = vst [vmem:[%s6748 + $0x128] sm:$0xff] %v6791
                %v6793 = vld [vmem:[%s6747 + $0xb0] sm:$0xff]
                %6794 = vst [vmem:[%s6748 + $0x130] sm:$0xff] %v6793
                %v6795 = vld [vmem:[%s6747 + $0xb8] sm:$0xff]
                %6796 = vst [vmem:[%s6748 + $0x138] sm:$0xff] %v6795
                %v6797 = vld [vmem:[%s6747 + $0xc0] sm:$0xff]
                %6798 = vst [vmem:[%s6748 + $0x180] sm:$0xff] %v6797
                %v6799 = vld [vmem:[%s6747 + $0xc8] sm:$0xff]
                %6800 = vst [vmem:[%s6748 + $0x188] sm:$0xff] %v6799
                %v6801 = vld [vmem:[%s6747 + $0xd0] sm:$0xff]
                %6802 = vst [vmem:[%s6748 + $0x190] sm:$0xff] %v6801
                %v6803 = vld [vmem:[%s6747 + $0xd8] sm:$0xff]
                %6804 = vst [vmem:[%s6748 + $0x198] sm:$0xff] %v6803
                %v6805 = vld [vmem:[%s6747 + $0xe0] sm:$0xff]
                %6806 = vst [vmem:[%s6748 + $0x1a0] sm:$0xff] %v6805
                %v6807 = vld [vmem:[%s6747 + $0xe8] sm:$0xff]
                %6808 = vst [vmem:[%s6748 + $0x1a8] sm:$0xff] %v6807
                %v6809 = vld [vmem:[%s6747 + $0xf0] sm:$0xff]
                %6810 = vst [vmem:[%s6748 + $0x1b0] sm:$0xff] %v6809
                %v6811 = vld [vmem:[%s6747 + $0xf8] sm:$0xff]
                %6812 = vst [vmem:[%s6748 + $0x1b8] sm:$0xff] %v6811
              $region49: #{tpu_custom_call.1} parent=43 // loop_footer
                %s6746 = sadd.s32 1, %s6742
              $region50: #{tpu_custom_call.1} parent=43 // loop_footer_branch
                %6741 = sbr.rel target = $region46
              $region51: #{tpu_custom_call.1} parent=43 // loop_exit
                _
            $region44: #{tpu_custom_call.1} parent=39 // pred_fallthru
              _
            // Predicated region
            $region52: #{tpu_custom_call.1} parent=39 // pred_check
              _
            $region53: #{tpu_custom_call.1} parent=39 // pred_check_branch
              %6814 = sbr.rel target = $region55
            $region54: #{tpu_custom_call.1} parent=39 // pred_region
              _
            $region55: #{tpu_custom_call.1} parent=39 // pred_fallthru
              _
          $region40: #{tpu_custom_call.1} parent=35 // pred_fallthru
            _
          %6815 = vnop
        $region36: #{tpu_custom_call.1} parent=31 // pred_fallthru
          _
      $region32: #{tpu_custom_call.1} parent=5 // pred_fallthru
        _
      %p6816 = scmp.le.s32.totalorder 2, %s9
      // Predicated region
      $region56: #{tpu_custom_call.1} parent=5 // pred_check
        %p6817 = pneg %p6816
      $region57: #{tpu_custom_call.1} parent=5 // pred_check_branch
        %6819 = sbr.rel (%p6817) target = $region59
      $region58: #{tpu_custom_call.1} parent=5 // pred_region
        %s6820 = ssub.s32 %s9, 2
        // Predicated region
        $region60: #{tpu_custom_call.1} parent=58 // pred_check
          %p6821 = pneg %p130
        $region61: #{tpu_custom_call.1} parent=58 // pred_check_branch
          %6823 = sbr.rel (%p6821) target = $region63
        $region62: #{tpu_custom_call.1} parent=58 // pred_region
          %s6824 = sand.u32 %s115, 1
          %s6825 = sand.u32 %s115, 1
          %s6826 = smul.addr %s6825, 256
          %s6827 = scalar_lea.vmem [#allocation2], %s6826
        $region63: #{tpu_custom_call.1} parent=58 // pred_fallthru
          _
      $region59: #{tpu_custom_call.1} parent=5 // pred_fallthru
        _
    $region6: #{tpu_custom_call.1} parent=1 // loop_footer
      %s13 = sadd.s32 1, %s9
    $region7: #{tpu_custom_call.1} parent=1 // loop_footer_branch
      %8 = sbr.rel target = $region3
    $region8: #{tpu_custom_call.1} parent=1 // loop_exit
      _

</llo_original>
